<compile_context>
chip_gen: v7x
topology: tpu7x:2x2x1
jax: 0.10.0
libtpu: 0.0.40
codegen_flags: <defaults>
</compile_context>

<pallas_src>
import functools
import math

import jax
import jax.numpy as jnp
from jax.experimental import pallas as pl
from jax.experimental.pallas import tpu as pltpu

EMBED_DIM = 768
NUM_HEADS = 12
HEAD_DIM = EMBED_DIM // NUM_HEADS
LN_EPS = 1e-5

assert NUM_HEADS % 2 == 0 and (2 * HEAD_DIM) % 128 == 0, "head pairing needs 128-lane slabs"


def _msa_kernel(x_ref, gamma_ref, beta_ref, w_in_ref, b_in_ref,
                w_out_ref, b_out_ref, o_ref, qkv_ref, ctx_ref, *, seq_len):
    """One grid step: `tm = n_seq * seq_len` rows of the flattened (B*S, E) batch."""
    tm = x_ref.shape[0]
    E = EMBED_DIM
    n_seq = tm // seq_len

    # ---- LayerNorm over the last dim (f32 VPU math; eps=1e-5, affine) ----
    x = x_ref[...].astype(jnp.float32)
    mean = jnp.mean(x, axis=-1, keepdims=True)
    xc = x - mean
    var = jnp.mean(xc * xc, axis=-1, keepdims=True)
    xn = xc * jax.lax.rsqrt(var + LN_EPS) * gamma_ref[0] + beta_ref[0]

    # ---- QKV projection: bf16 MXU operands, f32 accumulation, f32 bias add,
    #      then a single bf16 cast into the VMEM scratch.  1/sqrt(HEAD_DIM) is
    #      already folded into the Q third of w_in / b_in (prepare_params). ----
    qkv_ref[...] = (jnp.dot(xn.astype(jnp.bfloat16), w_in_ref[...],
                            preferred_element_type=jnp.float32)
                    + b_in_ref[0]).astype(jnp.bfloat16)

    # ---- per-sequence attention; heads processed in lane-aligned pairs ----
    def attend(r0):
        rows = pl.ds(r0, seq_len)
        for hp in range(NUM_HEADS // 2):
            lo = hp * 2 * HEAD_DIM                              # 128-lane aligned
            q2 = qkv_ref[rows, pl.ds(lo, 2 * HEAD_DIM)]
            k2 = qkv_ref[rows, pl.ds(E + lo, 2 * HEAD_DIM)]
            v2 = qkv_ref[rows, pl.ds(2 * E + lo, 2 * HEAD_DIM)]
            halves = []
            for h in range(2):                                  # split the pair in-register
                sl = slice(h * HEAD_DIM, (h + 1) * HEAD_DIM)
                s = jax.lax.dot_general(                        # q @ k.T, f32 accumulation
                    q2[:, sl], k2[:, sl], (((1,), (1,)), ((), ())),
                    preferred_element_type=jnp.float32)
                s = s - jnp.max(s, axis=-1, keepdims=True)      # f32 softmax math
                p = jnp.exp(s)
                p = p * pl.reciprocal(jnp.sum(p, axis=-1, keepdims=True), approx=True)
                halves.append(jnp.dot(p.astype(jnp.bfloat16), v2[:, sl],
                                      preferred_element_type=jnp.float32))
            # one lane-dense (seq_len, 128) store per head pair
            ctx_ref[rows, pl.ds(lo, 2 * HEAD_DIM)] = jnp.concatenate(
                halves, axis=-1).astype(jnp.bfloat16)

    if n_seq == 1:
        attend(0)                                               # fully static slicing
    else:
        def seq_body(b, carry):
            attend(pl.multiple_of(b * seq_len, seq_len))
            return carry
        jax.lax.fori_loop(0, n_seq, seq_body, 0)

    # ---- output projection (bf16 MXU operands, f32 accumulation) ----
    out = jnp.dot(ctx_ref[...], w_out_ref[...], preferred_element_type=jnp.float32)
    o_ref[...] = (out + b_out_ref[0]).astype(o_ref.dtype)


def _choose_tiling(batch, seq_len, target_rows=256):
    """Pick sequences-per-block (spb) and grid length.

    * aim for ~target_rows rows/block so the projections see a long, MXU-friendly
      M dim (256-multiples suit v6e/v7x; 256 is also a multiple of v5e's 128),
    * keep >= 2 grid steps when batch >= 2 so v7x's two TensorCores both work,
    * round spb up so tm = spb*seq_len satisfies the (8, 128) sublane constraint,
    * the caller pads B*S rows, so spb does not need to divide batch.
    """
    spb = max(1, target_rows // seq_len)
    if batch >= 2:
        spb = min(spb, (batch + 1) // 2)        # guarantees at least 2 grid steps
    else:
        spb = 1
    align = 8 // math.gcd(seq_len, 8)           # tm must be a multiple of 8
    spb = ((spb + align - 1) // align) * align
    grid_b = (batch + spb - 1) // spb
    return spb, grid_b


def prepare_params(gamma, beta, w_in, b_in, w_out, b_out):
    """One-time parameter prep: fold 1/sqrt(HEAD_DIM) into the Q projection and
    convert the matmul weights to bf16 (biases / LN params stay f32)."""
    E = EMBED_DIM
    assert w_in.shape == (E, 3 * E) and w_out.shape == (E, E), \
        "weights must be pre-transposed: y = x @ W (nn.MultiheadAttention stores (3E, E))"
    scale = 1.0 / math.sqrt(HEAD_DIM)
    w_in = w_in.astype(jnp.float32).at[:, :E].multiply(scale)
    b_in = b_in.astype(jnp.float32).at[:, :E].multiply(scale)
    return (gamma.astype(jnp.float32), beta.astype(jnp.float32),
            w_in.astype(jnp.bfloat16), b_in,
            w_out.astype(jnp.bfloat16), b_out.astype(jnp.float32))


def multihead_self_attention(x, gamma, beta, w_in_bf16, b_in, w_out_bf16, b_out,
                             *, target_rows=256):
    """x: (B, S, E). Params must come from prepare_params() (bf16 weights, scale
    folded into Q).  target_rows may be raised to 512-1024 on v6e (128 MiB VMEM)."""
    B, S, E = x.shape
    assert E == EMBED_DIM

    spb, grid_b = _choose_tiling(B, S, target_rows)
    tm = spb * S                              # projection M dim per grid step
    total = B * S
    padded = grid_b * tm

    x2 = x.reshape(total, E)                  # flatten batch into the matmul M dim
    if padded != total:                       # pad whole sequences; dropped at the end
        x2 = jnp.pad(x2, ((0, padded - total), (0, 0)))

    const = lambda i: (0, 0)
    out2 = pl.pallas_call(
        functools.partial(_msa_kernel, seq_len=S),
        out_shape=jax.ShapeDtypeStruct((padded, E), x.dtype),
        grid=(grid_b,),
        in_specs=[
            pl.BlockSpec((tm, E), lambda i: (i, 0)),        # x rows
            pl.BlockSpec((1, E), const),                    # gamma (f32)
            pl.BlockSpec((1, E), const),                    # beta  (f32)
            pl.BlockSpec((E, 3 * E), const),                # w_in  (bf16, Q pre-scaled)
            pl.BlockSpec((1, 3 * E), const),                # b_in  (f32,  Q pre-scaled)
            pl.BlockSpec((E, E), const),                    # w_out (bf16)
            pl.BlockSpec((1, E), const),                    # b_out (f32)
        ],
        out_specs=pl.BlockSpec((tm, E), lambda i: (i, 0)),  # lane-dense 2-D output
        scratch_shapes=[
            pltpu.VMEM((tm, 3 * E), jnp.bfloat16),          # qkv (bf16, cast once)
            pltpu.VMEM((tm, E), jnp.bfloat16),              # ctx (bf16)
        ],
        compiler_params=pltpu.CompilerParams(
            dimension_semantics=("parallel",),
            vmem_limit_bytes=48 * 1024 * 1024,              # fits v7x's 64 MiB VMEM
        ),
    )(x2, gamma, beta, w_in_bf16, b_in, w_out_bf16, b_out)
    return out2[:total].reshape(B, S, E)


def _reference(x, gamma, beta, w_in, b_in, w_out, b_out):
    """Pure-JAX f32 reference mirroring PyTorch LayerNorm + MultiheadAttention."""
    x = x.astype(jnp.float32)
    mean = jnp.mean(x, axis=-1, keepdims=True)
    var = jnp.mean((x - mean) ** 2, axis=-1, keepdims=True)
    xn = (x - mean) / jnp.sqrt(var + LN_EPS) * gamma[0] + beta[0]

    qkv = jnp.einsum('bse,ef->bsf', xn, w_in) + b_in[0]
    q, k, v = jnp.split(qkv, 3, axis=-1)
    B, S, _ = q.shape

    def split_heads(t):
        return t.reshape(B, S, NUM_HEADS, HEAD_DIM).transpose(0, 2, 1, 3)

    qh, kh, vh = split_heads(q), split_heads(k), split_heads(v)
    scores = jnp.einsum('bhqd,bhkd->bhqk', qh, kh) / (HEAD_DIM ** 0.5)
    attn = jax.nn.softmax(scores, axis=-1)
    ctx = jnp.einsum('bhqk,bhkd->bhqd', attn, vh)
    ctx = ctx.transpose(0, 2, 1, 3).reshape(B, S, EMBED_DIM)
    return jnp.einsum('bse,ef->bsf', ctx, w_out) + b_out[0]


if __name__ == "__main__":
    B, S, E = 2, 8, EMBED_DIM

    key = jax.random.PRNGKey(0)
    kx, kwin, kbin, kwout, kbout = jax.random.split(key, 5)

    x = jax.random.normal(kx, (B, S, E), dtype=jnp.float32)

    # LayerNorm params (PyTorch default init: weight=1, bias=0)
    gamma = jnp.ones((1, E), dtype=jnp.float32)
    beta = jnp.zeros((1, E), dtype=jnp.float32)

    # Attention params (synthetic deterministic init; stored pre-transposed so
    # the kernel computes y = x @ W).
    w_in = jax.random.normal(kwin, (E, 3 * E), dtype=jnp.float32) * (1.0 / (E ** 0.5))
    b_in = jax.random.normal(kbin, (1, 3 * E), dtype=jnp.float32) * 0.02
    w_out = jax.random.normal(kwout, (E, E), dtype=jnp.float32) * (1.0 / (E ** 0.5))
    b_out = jax.random.normal(kbout, (1, E), dtype=jnp.float32) * 0.02

    # One-time parameter prep (bf16 weights, 1/sqrt(d) folded into Q).
    params = prepare_params(gamma, beta, w_in, b_in, w_out, b_out)

    out = multihead_self_attention(x, *params)
    out = jax.block_until_ready(out)

    ref = _reference(x, gamma, beta, w_in, b_in, w_out, b_out)
    assert out.shape == (B, S, E)
    # Tolerance accounts for bf16 MXU operands (f32 accumulation) vs f32 reference.
    assert jnp.allclose(out, ref, rtol=3e-2, atol=3e-2), "mismatch vs reference"

    print("KERNEL_OK")
</pallas_src>

<mosaic_0001>
module attributes {stable_mosaic.version = 11 : i64} {
  func.func @_msa_kernel(%arg0: i32, %arg1: memref<8x768xf32, #tpu.memory_space<vmem>>, %arg2: memref<1x768xf32, #tpu.memory_space<vmem>>, %arg3: memref<1x768xf32, #tpu.memory_space<vmem>>, %arg4: memref<768x2304xbf16, #tpu.memory_space<vmem>>, %arg5: memref<1x2304xf32, #tpu.memory_space<vmem>>, %arg6: memref<768x768xbf16, #tpu.memory_space<vmem>>, %arg7: memref<1x768xf32, #tpu.memory_space<vmem>>, %arg8: memref<8x768xf32, #tpu.memory_space<vmem>>, %arg9: memref<8x2304xbf16, #tpu.memory_space<vmem>>, %arg10: memref<8x768xbf16, #tpu.memory_space<vmem>>) attributes {dimension_semantics = [#tpu.dimension_semantics<parallel>], iteration_bounds = array<i64: 2>, scalar_prefetch = 0 : i64, scratch_operands = 2 : i64, tpu.core_type = #tpu.core_type<tc>, window_params = [{transform_indices = @transform_0, window_bounds = array<i64: 8, 768>}, {pipeline_mode = #tpu.pipeline_mode<synchronous>, transform_indices = @transform_1, window_bounds = array<i64: 1, 768>}, {pipeline_mode = #tpu.pipeline_mode<synchronous>, transform_indices = @transform_2, window_bounds = array<i64: 1, 768>}, {pipeline_mode = #tpu.pipeline_mode<synchronous>, transform_indices = @transform_3, window_bounds = array<i64: 768, 2304>}, {pipeline_mode = #tpu.pipeline_mode<synchronous>, transform_indices = @transform_4, window_bounds = array<i64: 1, 2304>}, {pipeline_mode = #tpu.pipeline_mode<synchronous>, transform_indices = @transform_5, window_bounds = array<i64: 768, 768>}, {pipeline_mode = #tpu.pipeline_mode<synchronous>, transform_indices = @transform_6, window_bounds = array<i64: 1, 768>}, {transform_indices = @transform_7, window_bounds = array<i64: 8, 768>}]} {
    %c0 = arith.constant 0 : index
    %c0_0 = arith.constant 0 : index
    %0 = vector.load %arg1[%c0, %c0_0] : memref<8x768xf32, #tpu.memory_space<vmem>>, vector<8x768xf32>
    %cst = arith.constant dense<0.000000e+00> : vector<8xf32>
    %1 = vector.multi_reduction <add>, %0, %cst [1] : vector<8x768xf32> to vector<8xf32>
    %2 = vector.shape_cast %1 : vector<8xf32> to vector<8x1xf32>
    %cst_1 = arith.constant 7.680000e+02 : f32
    %3 = vector.broadcast %cst_1 : f32 to vector<8x1xf32>
    %4 = arith.divf %2, %3 : vector<8x1xf32>
    %5 = vector.broadcast %4 : vector<8x1xf32> to vector<8x768xf32>
    %6 = arith.subf %0, %5 : vector<8x768xf32>
    %7 = arith.mulf %6, %6 : vector<8x768xf32>
    %cst_2 = arith.constant dense<0.000000e+00> : vector<8xf32>
    %8 = vector.multi_reduction <add>, %7, %cst_2 [1] : vector<8x768xf32> to vector<8xf32>
    %9 = vector.shape_cast %8 : vector<8xf32> to vector<8x1xf32>
    %cst_3 = arith.constant 7.680000e+02 : f32
    %10 = vector.broadcast %cst_3 : f32 to vector<8x1xf32>
    %11 = arith.divf %9, %10 : vector<8x1xf32>
    %cst_4 = arith.constant 9.99999974E-6 : f32
    %12 = vector.broadcast %cst_4 : f32 to vector<8x1xf32>
    %13 = arith.addf %11, %12 : vector<8x1xf32>
    %14 = math.rsqrt %13 : vector<8x1xf32>
    %15 = vector.broadcast %14 : vector<8x1xf32> to vector<8x768xf32>
    %16 = arith.mulf %6, %15 : vector<8x768xf32>
    %c0_5 = arith.constant 0 : index
    %c0_6 = arith.constant 0 : index
    %17 = vector.load %arg2[%c0_5, %c0_6] : memref<1x768xf32, #tpu.memory_space<vmem>>, vector<1x768xf32>
    %18 = vector.shape_cast %17 : vector<1x768xf32> to vector<768xf32>
    %19 = vector.shape_cast %18 : vector<768xf32> to vector<1x768xf32>
    %20 = vector.broadcast %19 : vector<1x768xf32> to vector<8x768xf32>
    %21 = arith.mulf %16, %20 : vector<8x768xf32>
    %c0_7 = arith.constant 0 : index
    %c0_8 = arith.constant 0 : index
    %22 = vector.load %arg3[%c0_7, %c0_8] : memref<1x768xf32, #tpu.memory_space<vmem>>, vector<1x768xf32>
    %23 = vector.shape_cast %22 : vector<1x768xf32> to vector<768xf32>
    %24 = vector.shape_cast %23 : vector<768xf32> to vector<1x768xf32>
    %25 = vector.broadcast %24 : vector<1x768xf32> to vector<8x768xf32>
    %26 = arith.addf %21, %25 : vector<8x768xf32>
    %27 = arith.truncf %26 : vector<8x768xf32> to vector<8x768xbf16>
    %c0_9 = arith.constant 0 : index
    %c0_10 = arith.constant 0 : index
    %28 = vector.load %arg4[%c0_9, %c0_10] : memref<768x2304xbf16, #tpu.memory_space<vmem>>, vector<768x2304xbf16>
    %cst_11 = arith.constant dense<0.000000e+00> : vector<8x2304xf32>
    %29 = tpu.matmul %27, %28, %cst_11 {dimension_numbers = #tpu.dot_dimension_numbers<[1], [0], [0], [1], [0, 0, 1, 1], [], []>} : vector<8x768xbf16>, vector<768x2304xbf16>, vector<8x2304xf32> -> vector<8x2304xf32>
    %c0_12 = arith.constant 0 : index
    %c0_13 = arith.constant 0 : index
    %30 = vector.load %arg5[%c0_12, %c0_13] : memref<1x2304xf32, #tpu.memory_space<vmem>>, vector<1x2304xf32>
    %31 = vector.shape_cast %30 : vector<1x2304xf32> to vector<2304xf32>
    %32 = vector.shape_cast %31 : vector<2304xf32> to vector<1x2304xf32>
    %33 = vector.broadcast %32 : vector<1x2304xf32> to vector<8x2304xf32>
    %34 = arith.addf %29, %33 : vector<8x2304xf32>
    %35 = arith.truncf %34 : vector<8x2304xf32> to vector<8x2304xbf16>
    %c0_14 = arith.constant 0 : index
    %c0_15 = arith.constant 0 : index
    %36 = vector.load %arg9[%c0_14, %c0_15] : memref<8x2304xbf16, #tpu.memory_space<vmem>>, vector<8x2304xbf16>
    tpu.vector_store %arg9[%c0_14, %c0_15], %35 {strides = array<i32>} : memref<8x2304xbf16, #tpu.memory_space<vmem>>, vector<8x2304xbf16>,
    %c0_16 = arith.constant 0 : index
    %c0_17 = arith.constant 0 : index
    %37 = vector.load %arg9[%c0_16, %c0_17] : memref<8x2304xbf16, #tpu.memory_space<vmem>>, vector<8x128xbf16>
    %c0_18 = arith.constant 0 : index
    %c768 = arith.constant 768 : index
    %38 = vector.load %arg9[%c0_18, %c768] : memref<8x2304xbf16, #tpu.memory_space<vmem>>, vector<8x128xbf16>
    %c0_19 = arith.constant 0 : index
    %c1536 = arith.constant 1536 : index
    %39 = vector.load %arg9[%c0_19, %c1536] : memref<8x2304xbf16, #tpu.memory_space<vmem>>, vector<8x128xbf16>
    %40 = vector.extract_strided_slice %37 {offsets = [0, 0], sizes = [8, 64], strides = [1, 1]} : vector<8x128xbf16> to vector<8x64xbf16>
    %41 = vector.extract_strided_slice %38 {offsets = [0, 0], sizes = [8, 64], strides = [1, 1]} : vector<8x128xbf16> to vector<8x64xbf16>
    %cst_20 = arith.constant dense<0.000000e+00> : vector<8x8xf32>
    %42 = tpu.matmul %40, %41, %cst_20 {dimension_numbers = #tpu.dot_dimension_numbers<[1], [1], [0], [0], [0, 0, 1, 0], [], []>} : vector<8x64xbf16>, vector<8x64xbf16>, vector<8x8xf32> -> vector<8x8xf32>
    %cst_21 = arith.constant dense<0xFF800000> : vector<8xf32>
    %43 = vector.multi_reduction <maximumf>, %42, %cst_21 [1] : vector<8x8xf32> to vector<8xf32>
    %44 = vector.shape_cast %43 : vector<8xf32> to vector<8x1xf32>
    %45 = vector.broadcast %44 : vector<8x1xf32> to vector<8x8xf32>
    %46 = arith.subf %42, %45 : vector<8x8xf32>
    %47 = math.exp %46 : vector<8x8xf32>
    %cst_22 = arith.constant dense<0.000000e+00> : vector<8xf32>
    %48 = vector.multi_reduction <add>, %47, %cst_22 [1] : vector<8x8xf32> to vector<8xf32>
    %49 = vector.shape_cast %48 : vector<8xf32> to vector<8x1xf32>
    %50 = tpu.reciprocal %49 {approx = true} : vector<8x1xf32> -> vector<8x1xf32>
    %51 = vector.broadcast %50 : vector<8x1xf32> to vector<8x8xf32>
    %52 = arith.mulf %47, %51 : vector<8x8xf32>
    %53 = arith.truncf %52 : vector<8x8xf32> to vector<8x8xbf16>
    %54 = vector.extract_strided_slice %39 {offsets = [0, 0], sizes = [8, 64], strides = [1, 1]} : vector<8x128xbf16> to vector<8x64xbf16>
    %cst_23 = arith.constant dense<0.000000e+00> : vector<8x64xf32>
    %55 = tpu.matmul %53, %54, %cst_23 {dimension_numbers = #tpu.dot_dimension_numbers<[1], [0], [0], [1], [0, 0, 1, 1], [], []>} : vector<8x8xbf16>, vector<8x64xbf16>, vector<8x64xf32> -> vector<8x64xf32>
    %56 = vector.extract_strided_slice %37 {offsets = [0, 64], sizes = [8, 64], strides = [1, 1]} : vector<8x128xbf16> to vector<8x64xbf16>
    %57 = vector.extract_strided_slice %38 {offsets = [0, 64], sizes = [8, 64], strides = [1, 1]} : vector<8x128xbf16> to vector<8x64xbf16>
    %cst_24 = arith.constant dense<0.000000e+00> : vector<8x8xf32>
    %58 = tpu.matmul %56, %57, %cst_24 {dimension_numbers = #tpu.dot_dimension_numbers<[1], [1], [0], [0], [0, 0, 1, 0], [], []>} : vector<8x64xbf16>, vector<8x64xbf16>, vector<8x8xf32> -> vector<8x8xf32>
    %cst_25 = arith.constant dense<0xFF800000> : vector<8xf32>
    %59 = vector.multi_reduction <maximumf>, %58, %cst_25 [1] : vector<8x8xf32> to vector<8xf32>
    %60 = vector.shape_cast %59 : vector<8xf32> to vector<8x1xf32>
    %61 = vector.broadcast %60 : vector<8x1xf32> to vector<8x8xf32>
    %62 = arith.subf %58, %61 : vector<8x8xf32>
    %63 = math.exp %62 : vector<8x8xf32>
    %cst_26 = arith.constant dense<0.000000e+00> : vector<8xf32>
    %64 = vector.multi_reduction <add>, %63, %cst_26 [1] : vector<8x8xf32> to vector<8xf32>
    %65 = vector.shape_cast %64 : vector<8xf32> to vector<8x1xf32>
    %66 = tpu.reciprocal %65 {approx = true} : vector<8x1xf32> -> vector<8x1xf32>
    %67 = vector.broadcast %66 : vector<8x1xf32> to vector<8x8xf32>
    %68 = arith.mulf %63, %67 : vector<8x8xf32>
    %69 = arith.truncf %68 : vector<8x8xf32> to vector<8x8xbf16>
    %70 = vector.extract_strided_slice %39 {offsets = [0, 64], sizes = [8, 64], strides = [1, 1]} : vector<8x128xbf16> to vector<8x64xbf16>
    %cst_27 = arith.constant dense<0.000000e+00> : vector<8x64xf32>
    %71 = tpu.matmul %69, %70, %cst_27 {dimension_numbers = #tpu.dot_dimension_numbers<[1], [0], [0], [1], [0, 0, 1, 1], [], []>} : vector<8x8xbf16>, vector<8x64xbf16>, vector<8x64xf32> -> vector<8x64xf32>
    %72 = tpu.concatenate %55, %71 in 1 : vector<8x64xf32>, vector<8x64xf32> -> vector<8x128xf32>
    %73 = arith.truncf %72 : vector<8x128xf32> to vector<8x128xbf16>
    %c0_28 = arith.constant 0 : index
    %c0_29 = arith.constant 0 : index
    %74 = vector.load %arg10[%c0_28, %c0_29] : memref<8x768xbf16, #tpu.memory_space<vmem>>, vector<8x128xbf16>
    tpu.vector_store %arg10[%c0_28, %c0_29], %73 {strides = array<i32>} : memref<8x768xbf16, #tpu.memory_space<vmem>>, vector<8x128xbf16>,
    %c0_30 = arith.constant 0 : index
    %c128 = arith.constant 128 : index
    %75 = vector.load %arg9[%c0_30, %c128] : memref<8x2304xbf16, #tpu.memory_space<vmem>>, vector<8x128xbf16>
    %c0_31 = arith.constant 0 : index
    %c896 = arith.constant 896 : index
    %76 = vector.load %arg9[%c0_31, %c896] : memref<8x2304xbf16, #tpu.memory_space<vmem>>, vector<8x128xbf16>
    %c0_32 = arith.constant 0 : index
    %c1664 = arith.constant 1664 : index
    %77 = vector.load %arg9[%c0_32, %c1664] : memref<8x2304xbf16, #tpu.memory_space<vmem>>, vector<8x128xbf16>
    %78 = vector.extract_strided_slice %75 {offsets = [0, 0], sizes = [8, 64], strides = [1, 1]} : vector<8x128xbf16> to vector<8x64xbf16>
    %79 = vector.extract_strided_slice %76 {offsets = [0, 0], sizes = [8, 64], strides = [1, 1]} : vector<8x128xbf16> to vector<8x64xbf16>
    %cst_33 = arith.constant dense<0.000000e+00> : vector<8x8xf32>
    %80 = tpu.matmul %78, %79, %cst_33 {dimension_numbers = #tpu.dot_dimension_numbers<[1], [1], [0], [0], [0, 0, 1, 0], [], []>} : vector<8x64xbf16>, vector<8x64xbf16>, vector<8x8xf32> -> vector<8x8xf32>
    %cst_34 = arith.constant dense<0xFF800000> : vector<8xf32>
    %81 = vector.multi_reduction <maximumf>, %80, %cst_34 [1] : vector<8x8xf32> to vector<8xf32>
    %82 = vector.shape_cast %81 : vector<8xf32> to vector<8x1xf32>
    %83 = vector.broadcast %82 : vector<8x1xf32> to vector<8x8xf32>
    %84 = arith.subf %80, %83 : vector<8x8xf32>
    %85 = math.exp %84 : vector<8x8xf32>
    %cst_35 = arith.constant dense<0.000000e+00> : vector<8xf32>
    %86 = vector.multi_reduction <add>, %85, %cst_35 [1] : vector<8x8xf32> to vector<8xf32>
    %87 = vector.shape_cast %86 : vector<8xf32> to vector<8x1xf32>
    %88 = tpu.reciprocal %87 {approx = true} : vector<8x1xf32> -> vector<8x1xf32>
    %89 = vector.broadcast %88 : vector<8x1xf32> to vector<8x8xf32>
    %90 = arith.mulf %85, %89 : vector<8x8xf32>
    %91 = arith.truncf %90 : vector<8x8xf32> to vector<8x8xbf16>
    %92 = vector.extract_strided_slice %77 {offsets = [0, 0], sizes = [8, 64], strides = [1, 1]} : vector<8x128xbf16> to vector<8x64xbf16>
    %cst_36 = arith.constant dense<0.000000e+00> : vector<8x64xf32>
    %93 = tpu.matmul %91, %92, %cst_36 {dimension_numbers = #tpu.dot_dimension_numbers<[1], [0], [0], [1], [0, 0, 1, 1], [], []>} : vector<8x8xbf16>, vector<8x64xbf16>, vector<8x64xf32> -> vector<8x64xf32>
    %94 = vector.extract_strided_slice %75 {offsets = [0, 64], sizes = [8, 64], strides = [1, 1]} : vector<8x128xbf16> to vector<8x64xbf16>
    %95 = vector.extract_strided_slice %76 {offsets = [0, 64], sizes = [8, 64], strides = [1, 1]} : vector<8x128xbf16> to vector<8x64xbf16>
    %cst_37 = arith.constant dense<0.000000e+00> : vector<8x8xf32>
    %96 = tpu.matmul %94, %95, %cst_37 {dimension_numbers = #tpu.dot_dimension_numbers<[1], [1], [0], [0], [0, 0, 1, 0], [], []>} : vector<8x64xbf16>, vector<8x64xbf16>, vector<8x8xf32> -> vector<8x8xf32>
    %cst_38 = arith.constant dense<0xFF800000> : vector<8xf32>
    %97 = vector.multi_reduction <maximumf>, %96, %cst_38 [1] : vector<8x8xf32> to vector<8xf32>
    %98 = vector.shape_cast %97 : vector<8xf32> to vector<8x1xf32>
    %99 = vector.broadcast %98 : vector<8x1xf32> to vector<8x8xf32>
    %100 = arith.subf %96, %99 : vector<8x8xf32>
    %101 = math.exp %100 : vector<8x8xf32>
    %cst_39 = arith.constant dense<0.000000e+00> : vector<8xf32>
    %102 = vector.multi_reduction <add>, %101, %cst_39 [1] : vector<8x8xf32> to vector<8xf32>
    %103 = vector.shape_cast %102 : vector<8xf32> to vector<8x1xf32>
    %104 = tpu.reciprocal %103 {approx = true} : vector<8x1xf32> -> vector<8x1xf32>
    %105 = vector.broadcast %104 : vector<8x1xf32> to vector<8x8xf32>
    %106 = arith.mulf %101, %105 : vector<8x8xf32>
    %107 = arith.truncf %106 : vector<8x8xf32> to vector<8x8xbf16>
    %108 = vector.extract_strided_slice %77 {offsets = [0, 64], sizes = [8, 64], strides = [1, 1]} : vector<8x128xbf16> to vector<8x64xbf16>
    %cst_40 = arith.constant dense<0.000000e+00> : vector<8x64xf32>
    %109 = tpu.matmul %107, %108, %cst_40 {dimension_numbers = #tpu.dot_dimension_numbers<[1], [0], [0], [1], [0, 0, 1, 1], [], []>} : vector<8x8xbf16>, vector<8x64xbf16>, vector<8x64xf32> -> vector<8x64xf32>
    %110 = tpu.concatenate %93, %109 in 1 : vector<8x64xf32>, vector<8x64xf32> -> vector<8x128xf32>
    %111 = arith.truncf %110 : vector<8x128xf32> to vector<8x128xbf16>
    %c0_41 = arith.constant 0 : index
    %c128_42 = arith.constant 128 : index
    %112 = vector.load %arg10[%c0_41, %c128_42] : memref<8x768xbf16, #tpu.memory_space<vmem>>, vector<8x128xbf16>
    tpu.vector_store %arg10[%c0_41, %c128_42], %111 {strides = array<i32>} : memref<8x768xbf16, #tpu.memory_space<vmem>>, vector<8x128xbf16>,
    %c0_43 = arith.constant 0 : index
    %c256 = arith.constant 256 : index
    %113 = vector.load %arg9[%c0_43, %c256] : memref<8x2304xbf16, #tpu.memory_space<vmem>>, vector<8x128xbf16>
    %c0_44 = arith.constant 0 : index
    %c1024 = arith.constant 1024 : index
    %114 = vector.load %arg9[%c0_44, %c1024] : memref<8x2304xbf16, #tpu.memory_space<vmem>>, vector<8x128xbf16>
    %c0_45 = arith.constant 0 : index
    %c1792 = arith.constant 1792 : index
    %115 = vector.load %arg9[%c0_45, %c1792] : memref<8x2304xbf16, #tpu.memory_space<vmem>>, vector<8x128xbf16>
    %116 = vector.extract_strided_slice %113 {offsets = [0, 0], sizes = [8, 64], strides = [1, 1]} : vector<8x128xbf16> to vector<8x64xbf16>
    %117 = vector.extract_strided_slice %114 {offsets = [0, 0], sizes = [8, 64], strides = [1, 1]} : vector<8x128xbf16> to vector<8x64xbf16>
    %cst_46 = arith.constant dense<0.000000e+00> : vector<8x8xf32>
    %118 = tpu.matmul %116, %117, %cst_46 {dimension_numbers = #tpu.dot_dimension_numbers<[1], [1], [0], [0], [0, 0, 1, 0], [], []>} : vector<8x64xbf16>, vector<8x64xbf16>, vector<8x8xf32> -> vector<8x8xf32>
    %cst_47 = arith.constant dense<0xFF800000> : vector<8xf32>
    %119 = vector.multi_reduction <maximumf>, %118, %cst_47 [1] : vector<8x8xf32> to vector<8xf32>
    %120 = vector.shape_cast %119 : vector<8xf32> to vector<8x1xf32>
    %121 = vector.broadcast %120 : vector<8x1xf32> to vector<8x8xf32>
    %122 = arith.subf %118, %121 : vector<8x8xf32>
    %123 = math.exp %122 : vector<8x8xf32>
    %cst_48 = arith.constant dense<0.000000e+00> : vector<8xf32>
    %124 = vector.multi_reduction <add>, %123, %cst_48 [1] : vector<8x8xf32> to vector<8xf32>
    %125 = vector.shape_cast %124 : vector<8xf32> to vector<8x1xf32>
    %126 = tpu.reciprocal %125 {approx = true} : vector<8x1xf32> -> vector<8x1xf32>
    %127 = vector.broadcast %126 : vector<8x1xf32> to vector<8x8xf32>
    %128 = arith.mulf %123, %127 : vector<8x8xf32>
    %129 = arith.truncf %128 : vector<8x8xf32> to vector<8x8xbf16>
    %130 = vector.extract_strided_slice %115 {offsets = [0, 0], sizes = [8, 64], strides = [1, 1]} : vector<8x128xbf16> to vector<8x64xbf16>
    %cst_49 = arith.constant dense<0.000000e+00> : vector<8x64xf32>
    %131 = tpu.matmul %129, %130, %cst_49 {dimension_numbers = #tpu.dot_dimension_numbers<[1], [0], [0], [1], [0, 0, 1, 1], [], []>} : vector<8x8xbf16>, vector<8x64xbf16>, vector<8x64xf32> -> vector<8x64xf32>
    %132 = vector.extract_strided_slice %113 {offsets = [0, 64], sizes = [8, 64], strides = [1, 1]} : vector<8x128xbf16> to vector<8x64xbf16>
    %133 = vector.extract_strided_slice %114 {offsets = [0, 64], sizes = [8, 64], strides = [1, 1]} : vector<8x128xbf16> to vector<8x64xbf16>
    %cst_50 = arith.constant dense<0.000000e+00> : vector<8x8xf32>
    %134 = tpu.matmul %132, %133, %cst_50 {dimension_numbers = #tpu.dot_dimension_numbers<[1], [1], [0], [0], [0, 0, 1, 0], [], []>} : vector<8x64xbf16>, vector<8x64xbf16>, vector<8x8xf32> -> vector<8x8xf32>
    %cst_51 = arith.constant dense<0xFF800000> : vector<8xf32>
    %135 = vector.multi_reduction <maximumf>, %134, %cst_51 [1] : vector<8x8xf32> to vector<8xf32>
    %136 = vector.shape_cast %135 : vector<8xf32> to vector<8x1xf32>
    %137 = vector.broadcast %136 : vector<8x1xf32> to vector<8x8xf32>
    %138 = arith.subf %134, %137 : vector<8x8xf32>
    %139 = math.exp %138 : vector<8x8xf32>
    %cst_52 = arith.constant dense<0.000000e+00> : vector<8xf32>
    %140 = vector.multi_reduction <add>, %139, %cst_52 [1] : vector<8x8xf32> to vector<8xf32>
    %141 = vector.shape_cast %140 : vector<8xf32> to vector<8x1xf32>
    %142 = tpu.reciprocal %141 {approx = true} : vector<8x1xf32> -> vector<8x1xf32>
    %143 = vector.broadcast %142 : vector<8x1xf32> to vector<8x8xf32>
    %144 = arith.mulf %139, %143 : vector<8x8xf32>
    %145 = arith.truncf %144 : vector<8x8xf32> to vector<8x8xbf16>
    %146 = vector.extract_strided_slice %115 {offsets = [0, 64], sizes = [8, 64], strides = [1, 1]} : vector<8x128xbf16> to vector<8x64xbf16>
    %cst_53 = arith.constant dense<0.000000e+00> : vector<8x64xf32>
    %147 = tpu.matmul %145, %146, %cst_53 {dimension_numbers = #tpu.dot_dimension_numbers<[1], [0], [0], [1], [0, 0, 1, 1], [], []>} : vector<8x8xbf16>, vector<8x64xbf16>, vector<8x64xf32> -> vector<8x64xf32>
    %148 = tpu.concatenate %131, %147 in 1 : vector<8x64xf32>, vector<8x64xf32> -> vector<8x128xf32>
    %149 = arith.truncf %148 : vector<8x128xf32> to vector<8x128xbf16>
    %c0_54 = arith.constant 0 : index
    %c256_55 = arith.constant 256 : index
    %150 = vector.load %arg10[%c0_54, %c256_55] : memref<8x768xbf16, #tpu.memory_space<vmem>>, vector<8x128xbf16>
    tpu.vector_store %arg10[%c0_54, %c256_55], %149 {strides = array<i32>} : memref<8x768xbf16, #tpu.memory_space<vmem>>, vector<8x128xbf16>,
    %c0_56 = arith.constant 0 : index
    %c384 = arith.constant 384 : index
    %151 = vector.load %arg9[%c0_56, %c384] : memref<8x2304xbf16, #tpu.memory_space<vmem>>, vector<8x128xbf16>
    %c0_57 = arith.constant 0 : index
    %c1152 = arith.constant 1152 : index
    %152 = vector.load %arg9[%c0_57, %c1152] : memref<8x2304xbf16, #tpu.memory_space<vmem>>, vector<8x128xbf16>
    %c0_58 = arith.constant 0 : index
    %c1920 = arith.constant 1920 : index
    %153 = vector.load %arg9[%c0_58, %c1920] : memref<8x2304xbf16, #tpu.memory_space<vmem>>, vector<8x128xbf16>
    %154 = vector.extract_strided_slice %151 {offsets = [0, 0], sizes = [8, 64], strides = [1, 1]} : vector<8x128xbf16> to vector<8x64xbf16>
    %155 = vector.extract_strided_slice %152 {offsets = [0, 0], sizes = [8, 64], strides = [1, 1]} : vector<8x128xbf16> to vector<8x64xbf16>
    %cst_59 = arith.constant dense<0.000000e+00> : vector<8x8xf32>
    %156 = tpu.matmul %154, %155, %cst_59 {dimension_numbers = #tpu.dot_dimension_numbers<[1], [1], [0], [0], [0, 0, 1, 0], [], []>} : vector<8x64xbf16>, vector<8x64xbf16>, vector<8x8xf32> -> vector<8x8xf32>
    %cst_60 = arith.constant dense<0xFF800000> : vector<8xf32>
    %157 = vector.multi_reduction <maximumf>, %156, %cst_60 [1] : vector<8x8xf32> to vector<8xf32>
    %158 = vector.shape_cast %157 : vector<8xf32> to vector<8x1xf32>
    %159 = vector.broadcast %158 : vector<8x1xf32> to vector<8x8xf32>
    %160 = arith.subf %156, %159 : vector<8x8xf32>
    %161 = math.exp %160 : vector<8x8xf32>
    %cst_61 = arith.constant dense<0.000000e+00> : vector<8xf32>
    %162 = vector.multi_reduction <add>, %161, %cst_61 [1] : vector<8x8xf32> to vector<8xf32>
    %163 = vector.shape_cast %162 : vector<8xf32> to vector<8x1xf32>
    %164 = tpu.reciprocal %163 {approx = true} : vector<8x1xf32> -> vector<8x1xf32>
    %165 = vector.broadcast %164 : vector<8x1xf32> to vector<8x8xf32>
    %166 = arith.mulf %161, %165 : vector<8x8xf32>
    %167 = arith.truncf %166 : vector<8x8xf32> to vector<8x8xbf16>
    %168 = vector.extract_strided_slice %153 {offsets = [0, 0], sizes = [8, 64], strides = [1, 1]} : vector<8x128xbf16> to vector<8x64xbf16>
    %cst_62 = arith.constant dense<0.000000e+00> : vector<8x64xf32>
    %169 = tpu.matmul %167, %168, %cst_62 {dimension_numbers = #tpu.dot_dimension_numbers<[1], [0], [0], [1], [0, 0, 1, 1], [], []>} : vector<8x8xbf16>, vector<8x64xbf16>, vector<8x64xf32> -> vector<8x64xf32>
    %170 = vector.extract_strided_slice %151 {offsets = [0, 64], sizes = [8, 64], strides = [1, 1]} : vector<8x128xbf16> to vector<8x64xbf16>
    %171 = vector.extract_strided_slice %152 {offsets = [0, 64], sizes = [8, 64], strides = [1, 1]} : vector<8x128xbf16> to vector<8x64xbf16>
    %cst_63 = arith.constant dense<0.000000e+00> : vector<8x8xf32>
    %172 = tpu.matmul %170, %171, %cst_63 {dimension_numbers = #tpu.dot_dimension_numbers<[1], [1], [0], [0], [0, 0, 1, 0], [], []>} : vector<8x64xbf16>, vector<8x64xbf16>, vector<8x8xf32> -> vector<8x8xf32>
    %cst_64 = arith.constant dense<0xFF800000> : vector<8xf32>
    %173 = vector.multi_reduction <maximumf>, %172, %cst_64 [1] : vector<8x8xf32> to vector<8xf32>
    %174 = vector.shape_cast %173 : vector<8xf32> to vector<8x1xf32>
    %175 = vector.broadcast %174 : vector<8x1xf32> to vector<8x8xf32>
    %176 = arith.subf %172, %175 : vector<8x8xf32>
    %177 = math.exp %176 : vector<8x8xf32>
    %cst_65 = arith.constant dense<0.000000e+00> : vector<8xf32>
    %178 = vector.multi_reduction <add>, %177, %cst_65 [1] : vector<8x8xf32> to vector<8xf32>
    %179 = vector.shape_cast %178 : vector<8xf32> to vector<8x1xf32>
    %180 = tpu.reciprocal %179 {approx = true} : vector<8x1xf32> -> vector<8x1xf32>
    %181 = vector.broadcast %180 : vector<8x1xf32> to vector<8x8xf32>
    %182 = arith.mulf %177, %181 : vector<8x8xf32>
    %183 = arith.truncf %182 : vector<8x8xf32> to vector<8x8xbf16>
    %184 = vector.extract_strided_slice %153 {offsets = [0, 64], sizes = [8, 64], strides = [1, 1]} : vector<8x128xbf16> to vector<8x64xbf16>
    %cst_66 = arith.constant dense<0.000000e+00> : vector<8x64xf32>
    %185 = tpu.matmul %183, %184, %cst_66 {dimension_numbers = #tpu.dot_dimension_numbers<[1], [0], [0], [1], [0, 0, 1, 1], [], []>} : vector<8x8xbf16>, vector<8x64xbf16>, vector<8x64xf32> -> vector<8x64xf32>
    %186 = tpu.concatenate %169, %185 in 1 : vector<8x64xf32>, vector<8x64xf32> -> vector<8x128xf32>
    %187 = arith.truncf %186 : vector<8x128xf32> to vector<8x128xbf16>
    %c0_67 = arith.constant 0 : index
    %c384_68 = arith.constant 384 : index
    %188 = vector.load %arg10[%c0_67, %c384_68] : memref<8x768xbf16, #tpu.memory_space<vmem>>, vector<8x128xbf16>
    tpu.vector_store %arg10[%c0_67, %c384_68], %187 {strides = array<i32>} : memref<8x768xbf16, #tpu.memory_space<vmem>>, vector<8x128xbf16>,
    %c0_69 = arith.constant 0 : index
    %c512 = arith.constant 512 : index
    %189 = vector.load %arg9[%c0_69, %c512] : memref<8x2304xbf16, #tpu.memory_space<vmem>>, vector<8x128xbf16>
    %c0_70 = arith.constant 0 : index
    %c1280 = arith.constant 1280 : index
    %190 = vector.load %arg9[%c0_70, %c1280] : memref<8x2304xbf16, #tpu.memory_space<vmem>>, vector<8x128xbf16>
    %c0_71 = arith.constant 0 : index
    %c2048 = arith.constant 2048 : index
    %191 = vector.load %arg9[%c0_71, %c2048] : memref<8x2304xbf16, #tpu.memory_space<vmem>>, vector<8x128xbf16>
    %192 = vector.extract_strided_slice %189 {offsets = [0, 0], sizes = [8, 64], strides = [1, 1]} : vector<8x128xbf16> to vector<8x64xbf16>
    %193 = vector.extract_strided_slice %190 {offsets = [0, 0], sizes = [8, 64], strides = [1, 1]} : vector<8x128xbf16> to vector<8x64xbf16>
    %cst_72 = arith.constant dense<0.000000e+00> : vector<8x8xf32>
    %194 = tpu.matmul %192, %193, %cst_72 {dimension_numbers = #tpu.dot_dimension_numbers<[1], [1], [0], [0], [0, 0, 1, 0], [], []>} : vector<8x64xbf16>, vector<8x64xbf16>, vector<8x8xf32> -> vector<8x8xf32>
    %cst_73 = arith.constant dense<0xFF800000> : vector<8xf32>
    %195 = vector.multi_reduction <maximumf>, %194, %cst_73 [1] : vector<8x8xf32> to vector<8xf32>
    %196 = vector.shape_cast %195 : vector<8xf32> to vector<8x1xf32>
    %197 = vector.broadcast %196 : vector<8x1xf32> to vector<8x8xf32>
    %198 = arith.subf %194, %197 : vector<8x8xf32>
    %199 = math.exp %198 : vector<8x8xf32>
    %cst_74 = arith.constant dense<0.000000e+00> : vector<8xf32>
    %200 = vector.multi_reduction <add>, %199, %cst_74 [1] : vector<8x8xf32> to vector<8xf32>
    %201 = vector.shape_cast %200 : vector<8xf32> to vector<8x1xf32>
    %202 = tpu.reciprocal %201 {approx = true} : vector<8x1xf32> -> vector<8x1xf32>
    %203 = vector.broadcast %202 : vector<8x1xf32> to vector<8x8xf32>
    %204 = arith.mulf %199, %203 : vector<8x8xf32>
    %205 = arith.truncf %204 : vector<8x8xf32> to vector<8x8xbf16>
    %206 = vector.extract_strided_slice %191 {offsets = [0, 0], sizes = [8, 64], strides = [1, 1]} : vector<8x128xbf16> to vector<8x64xbf16>
    %cst_75 = arith.constant dense<0.000000e+00> : vector<8x64xf32>
    %207 = tpu.matmul %205, %206, %cst_75 {dimension_numbers = #tpu.dot_dimension_numbers<[1], [0], [0], [1], [0, 0, 1, 1], [], []>} : vector<8x8xbf16>, vector<8x64xbf16>, vector<8x64xf32> -> vector<8x64xf32>
    %208 = vector.extract_strided_slice %189 {offsets = [0, 64], sizes = [8, 64], strides = [1, 1]} : vector<8x128xbf16> to vector<8x64xbf16>
    %209 = vector.extract_strided_slice %190 {offsets = [0, 64], sizes = [8, 64], strides = [1, 1]} : vector<8x128xbf16> to vector<8x64xbf16>
    %cst_76 = arith.constant dense<0.000000e+00> : vector<8x8xf32>
    %210 = tpu.matmul %208, %209, %cst_76 {dimension_numbers = #tpu.dot_dimension_numbers<[1], [1], [0], [0], [0, 0, 1, 0], [], []>} : vector<8x64xbf16>, vector<8x64xbf16>, vector<8x8xf32> -> vector<8x8xf32>
    %cst_77 = arith.constant dense<0xFF800000> : vector<8xf32>
    %211 = vector.multi_reduction <maximumf>, %210, %cst_77 [1] : vector<8x8xf32> to vector<8xf32>
    %212 = vector.shape_cast %211 : vector<8xf32> to vector<8x1xf32>
    %213 = vector.broadcast %212 : vector<8x1xf32> to vector<8x8xf32>
    %214 = arith.subf %210, %213 : vector<8x8xf32>
    %215 = math.exp %214 : vector<8x8xf32>
    %cst_78 = arith.constant dense<0.000000e+00> : vector<8xf32>
    %216 = vector.multi_reduction <add>, %215, %cst_78 [1] : vector<8x8xf32> to vector<8xf32>
    %217 = vector.shape_cast %216 : vector<8xf32> to vector<8x1xf32>
    %218 = tpu.reciprocal %217 {approx = true} : vector<8x1xf32> -> vector<8x1xf32>
    %219 = vector.broadcast %218 : vector<8x1xf32> to vector<8x8xf32>
    %220 = arith.mulf %215, %219 : vector<8x8xf32>
    %221 = arith.truncf %220 : vector<8x8xf32> to vector<8x8xbf16>
    %222 = vector.extract_strided_slice %191 {offsets = [0, 64], sizes = [8, 64], strides = [1, 1]} : vector<8x128xbf16> to vector<8x64xbf16>
    %cst_79 = arith.constant dense<0.000000e+00> : vector<8x64xf32>
    %223 = tpu.matmul %221, %222, %cst_79 {dimension_numbers = #tpu.dot_dimension_numbers<[1], [0], [0], [1], [0, 0, 1, 1], [], []>} : vector<8x8xbf16>, vector<8x64xbf16>, vector<8x64xf32> -> vector<8x64xf32>
    %224 = tpu.concatenate %207, %223 in 1 : vector<8x64xf32>, vector<8x64xf32> -> vector<8x128xf32>
    %225 = arith.truncf %224 : vector<8x128xf32> to vector<8x128xbf16>
    %c0_80 = arith.constant 0 : index
    %c512_81 = arith.constant 512 : index
    %226 = vector.load %arg10[%c0_80, %c512_81] : memref<8x768xbf16, #tpu.memory_space<vmem>>, vector<8x128xbf16>
    tpu.vector_store %arg10[%c0_80, %c512_81], %225 {strides = array<i32>} : memref<8x768xbf16, #tpu.memory_space<vmem>>, vector<8x128xbf16>,
    %c0_82 = arith.constant 0 : index
    %c640 = arith.constant 640 : index
    %227 = vector.load %arg9[%c0_82, %c640] : memref<8x2304xbf16, #tpu.memory_space<vmem>>, vector<8x128xbf16>
    %c0_83 = arith.constant 0 : index
    %c1408 = arith.constant 1408 : index
    %228 = vector.load %arg9[%c0_83, %c1408] : memref<8x2304xbf16, #tpu.memory_space<vmem>>, vector<8x128xbf16>
    %c0_84 = arith.constant 0 : index
    %c2176 = arith.constant 2176 : index
    %229 = vector.load %arg9[%c0_84, %c2176] : memref<8x2304xbf16, #tpu.memory_space<vmem>>, vector<8x128xbf16>
    %230 = vector.extract_strided_slice %227 {offsets = [0, 0], sizes = [8, 64], strides = [1, 1]} : vector<8x128xbf16> to vector<8x64xbf16>
    %231 = vector.extract_strided_slice %228 {offsets = [0, 0], sizes = [8, 64], strides = [1, 1]} : vector<8x128xbf16> to vector<8x64xbf16>
    %cst_85 = arith.constant dense<0.000000e+00> : vector<8x8xf32>
    %232 = tpu.matmul %230, %231, %cst_85 {dimension_numbers = #tpu.dot_dimension_numbers<[1], [1], [0], [0], [0, 0, 1, 0], [], []>} : vector<8x64xbf16>, vector<8x64xbf16>, vector<8x8xf32> -> vector<8x8xf32>
    %cst_86 = arith.constant dense<0xFF800000> : vector<8xf32>
    %233 = vector.multi_reduction <maximumf>, %232, %cst_86 [1] : vector<8x8xf32> to vector<8xf32>
    %234 = vector.shape_cast %233 : vector<8xf32> to vector<8x1xf32>
    %235 = vector.broadcast %234 : vector<8x1xf32> to vector<8x8xf32>
    %236 = arith.subf %232, %235 : vector<8x8xf32>
    %237 = math.exp %236 : vector<8x8xf32>
    %cst_87 = arith.constant dense<0.000000e+00> : vector<8xf32>
    %238 = vector.multi_reduction <add>, %237, %cst_87 [1] : vector<8x8xf32> to vector<8xf32>
    %239 = vector.shape_cast %238 : vector<8xf32> to vector<8x1xf32>
    %240 = tpu.reciprocal %239 {approx = true} : vector<8x1xf32> -> vector<8x1xf32>
    %241 = vector.broadcast %240 : vector<8x1xf32> to vector<8x8xf32>
    %242 = arith.mulf %237, %241 : vector<8x8xf32>
    %243 = arith.truncf %242 : vector<8x8xf32> to vector<8x8xbf16>
    %244 = vector.extract_strided_slice %229 {offsets = [0, 0], sizes = [8, 64], strides = [1, 1]} : vector<8x128xbf16> to vector<8x64xbf16>
    %cst_88 = arith.constant dense<0.000000e+00> : vector<8x64xf32>
    %245 = tpu.matmul %243, %244, %cst_88 {dimension_numbers = #tpu.dot_dimension_numbers<[1], [0], [0], [1], [0, 0, 1, 1], [], []>} : vector<8x8xbf16>, vector<8x64xbf16>, vector<8x64xf32> -> vector<8x64xf32>
    %246 = vector.extract_strided_slice %227 {offsets = [0, 64], sizes = [8, 64], strides = [1, 1]} : vector<8x128xbf16> to vector<8x64xbf16>
    %247 = vector.extract_strided_slice %228 {offsets = [0, 64], sizes = [8, 64], strides = [1, 1]} : vector<8x128xbf16> to vector<8x64xbf16>
    %cst_89 = arith.constant dense<0.000000e+00> : vector<8x8xf32>
    %248 = tpu.matmul %246, %247, %cst_89 {dimension_numbers = #tpu.dot_dimension_numbers<[1], [1], [0], [0], [0, 0, 1, 0], [], []>} : vector<8x64xbf16>, vector<8x64xbf16>, vector<8x8xf32> -> vector<8x8xf32>
    %cst_90 = arith.constant dense<0xFF800000> : vector<8xf32>
    %249 = vector.multi_reduction <maximumf>, %248, %cst_90 [1] : vector<8x8xf32> to vector<8xf32>
    %250 = vector.shape_cast %249 : vector<8xf32> to vector<8x1xf32>
    %251 = vector.broadcast %250 : vector<8x1xf32> to vector<8x8xf32>
    %252 = arith.subf %248, %251 : vector<8x8xf32>
    %253 = math.exp %252 : vector<8x8xf32>
    %cst_91 = arith.constant dense<0.000000e+00> : vector<8xf32>
    %254 = vector.multi_reduction <add>, %253, %cst_91 [1] : vector<8x8xf32> to vector<8xf32>
    %255 = vector.shape_cast %254 : vector<8xf32> to vector<8x1xf32>
    %256 = tpu.reciprocal %255 {approx = true} : vector<8x1xf32> -> vector<8x1xf32>
    %257 = vector.broadcast %256 : vector<8x1xf32> to vector<8x8xf32>
    %258 = arith.mulf %253, %257 : vector<8x8xf32>
    %259 = arith.truncf %258 : vector<8x8xf32> to vector<8x8xbf16>
    %260 = vector.extract_strided_slice %229 {offsets = [0, 64], sizes = [8, 64], strides = [1, 1]} : vector<8x128xbf16> to vector<8x64xbf16>
    %cst_92 = arith.constant dense<0.000000e+00> : vector<8x64xf32>
    %261 = tpu.matmul %259, %260, %cst_92 {dimension_numbers = #tpu.dot_dimension_numbers<[1], [0], [0], [1], [0, 0, 1, 1], [], []>} : vector<8x8xbf16>, vector<8x64xbf16>, vector<8x64xf32> -> vector<8x64xf32>
    %262 = tpu.concatenate %245, %261 in 1 : vector<8x64xf32>, vector<8x64xf32> -> vector<8x128xf32>
    %263 = arith.truncf %262 : vector<8x128xf32> to vector<8x128xbf16>
    %c0_93 = arith.constant 0 : index
    %c640_94 = arith.constant 640 : index
    %264 = vector.load %arg10[%c0_93, %c640_94] : memref<8x768xbf16, #tpu.memory_space<vmem>>, vector<8x128xbf16>
    tpu.vector_store %arg10[%c0_93, %c640_94], %263 {strides = array<i32>} : memref<8x768xbf16, #tpu.memory_space<vmem>>, vector<8x128xbf16>,
    %c0_95 = arith.constant 0 : index
    %c0_96 = arith.constant 0 : index
    %265 = vector.load %arg10[%c0_95, %c0_96] : memref<8x768xbf16, #tpu.memory_space<vmem>>, vector<8x768xbf16>
    %c0_97 = arith.constant 0 : index
    %c0_98 = arith.constant 0 : index
    %266 = vector.load %arg6[%c0_97, %c0_98] : memref<768x768xbf16, #tpu.memory_space<vmem>>, vector<768x768xbf16>
    %cst_99 = arith.constant dense<0.000000e+00> : vector<8x768xf32>
    %267 = tpu.matmul %265, %266, %cst_99 {dimension_numbers = #tpu.dot_dimension_numbers<[1], [0], [0], [1], [0, 0, 1, 1], [], []>} : vector<8x768xbf16>, vector<768x768xbf16>, vector<8x768xf32> -> vector<8x768xf32>
    %c0_100 = arith.constant 0 : index
    %c0_101 = arith.constant 0 : index
    %268 = vector.load %arg7[%c0_100, %c0_101] : memref<1x768xf32, #tpu.memory_space<vmem>>, vector<1x768xf32>
    %269 = vector.shape_cast %268 : vector<1x768xf32> to vector<768xf32>
    %270 = vector.shape_cast %269 : vector<768xf32> to vector<1x768xf32>
    %271 = vector.broadcast %270 : vector<1x768xf32> to vector<8x768xf32>
    %272 = arith.addf %267, %271 : vector<8x768xf32>
    %c0_102 = arith.constant 0 : index
    %c0_103 = arith.constant 0 : index
    %273 = vector.load %arg8[%c0_102, %c0_103] : memref<8x768xf32, #tpu.memory_space<vmem>>, vector<8x768xf32>
    tpu.vector_store %arg8[%c0_102, %c0_103], %272 {strides = array<i32>} : memref<8x768xf32, #tpu.memory_space<vmem>>, vector<8x768xf32>,
    return
  }
  func.func @transform_0(%arg0: i32) -> (i32, i32) {
    %c0_i32 = arith.constant 0 : i32
    %c0_i32_0 = arith.constant 0 : i32
    return %arg0, %c0_i32 : i32, i32
  }
  func.func @transform_1(%arg0: i32) -> (i32, i32) {
    %c0_i32 = arith.constant 0 : i32
    %c0_i32_0 = arith.constant 0 : i32
    %c0_i32_1 = arith.constant 0 : i32
    return %c0_i32, %c0_i32_0 : i32, i32
  }
  func.func @transform_2(%arg0: i32) -> (i32, i32) {
    %c0_i32 = arith.constant 0 : i32
    %c0_i32_0 = arith.constant 0 : i32
    %c0_i32_1 = arith.constant 0 : i32
    return %c0_i32, %c0_i32_0 : i32, i32
  }
  func.func @transform_3(%arg0: i32) -> (i32, i32) {
    %c0_i32 = arith.constant 0 : i32
    %c0_i32_0 = arith.constant 0 : i32
    %c0_i32_1 = arith.constant 0 : i32
    return %c0_i32, %c0_i32_0 : i32, i32
  }
  func.func @transform_4(%arg0: i32) -> (i32, i32) {
    %c0_i32 = arith.constant 0 : i32
    %c0_i32_0 = arith.constant 0 : i32
    %c0_i32_1 = arith.constant 0 : i32
    return %c0_i32, %c0_i32_0 : i32, i32
  }
  func.func @transform_5(%arg0: i32) -> (i32, i32) {
    %c0_i32 = arith.constant 0 : i32
    %c0_i32_0 = arith.constant 0 : i32
    %c0_i32_1 = arith.constant 0 : i32
    return %c0_i32, %c0_i32_0 : i32, i32
  }
  func.func @transform_6(%arg0: i32) -> (i32, i32) {
    %c0_i32 = arith.constant 0 : i32
    %c0_i32_0 = arith.constant 0 : i32
    %c0_i32_1 = arith.constant 0 : i32
    return %c0_i32, %c0_i32_0 : i32, i32
  }
  func.func @transform_7(%arg0: i32) -> (i32, i32) {
    %c0_i32 = arith.constant 0 : i32
    %c0_i32_0 = arith.constant 0 : i32
    return %arg0, %c0_i32 : i32, i32
  }
}

</mosaic_0001>

<llo_original>
// kernel: tpu_custom_call.1
$region0: #{tpu_custom_call.1}
  #allocation0 [shape = 'u32[]', space=smem, size = 0x4, offset = 0x4, fixed_abs, tag = 'smem constant byte address 0x4 - core index']
  #allocation1 [shape = 'u32[144,128]{1,0:T(1,128)}', space=vmem, size = 0x12000, scoped, tag = 'internal scratch']
  #allocation2 [shape = 'bf16[8,2304]{1,0:T(8,128)(2,1)}', space=vmem, size = 0x9000, scoped, tag = 'scratch operand']
  #allocation3 [shape = 'bf16[8,768]{1,0:T(8,128)(2,1)}', space=vmem, size = 0x3000, scoped, tag = 'scratch operand']
  %s0 = inlined_call_operand.hbm [shape: f32[16,768], index: 0, kind: input, shape index: {}]
  %s1 = inlined_call_operand.hbm [shape: f32[1,768], index: 1, kind: input, shape index: {}]
  %s2 = inlined_call_operand.hbm [shape: f32[1,768], index: 2, kind: input, shape index: {}]
  %s3 = inlined_call_operand.hbm [shape: bf16[768,2304], index: 3, kind: input, shape index: {}]
  %s4 = inlined_call_operand.hbm [shape: f32[1,2304], index: 4, kind: input, shape index: {}]
  %s5 = inlined_call_operand.hbm [shape: bf16[768,768], index: 5, kind: input, shape index: {}]
  %s6 = inlined_call_operand.hbm [shape: f32[1,768], index: 6, kind: input, shape index: {}]
  %s7 = inlined_call_operand.hbm [shape: f32[16,768], index: 7, kind: output, shape index: {}]
  %s8 = sld [smem:[#allocation0]]
  $region89: #{tpu_custom_call.1} parent=0
    _
  %s10 = ssub.s32 1, %s8
  %s11 = scalar_select 0, %s10, %s8
  $region1: #{tpu_custom_call.1} parent=0
    #allocation4 [shape = 'u8[49152]{0}', space=vmem, size = 0xc000, scoped, tag = 'input window, operand 0']
    #allocation5 [shape = 's32[2]{0}', space=sflag, size = 0x8, scoped, tag = 'scoped memory for tpu_custom_call.1']
    #allocation6 [shape = 's32[2]{0}', space=sflag, size = 0x8, scoped, tag = 'scoped memory for tpu_custom_call.1']
    #allocation7 [shape = 'u8[3072]{0}', space=vmem, size = 0xc00, scoped, tag = 'input window, operand 1, single buffered']
    #allocation8 [shape = 's32[1]{0}', space=sflag, size = 0x4, scoped, tag = 'scoped memory for tpu_custom_call.1']
    #allocation9 [shape = 'u8[3072]{0}', space=vmem, size = 0xc00, scoped, tag = 'input window, operand 2, single buffered']
    #allocation10 [shape = 'u8[3538944]{0}', space=vmem, size = 0x360000, scoped, tag = 'input window, operand 3, single buffered']
    #allocation11 [shape = 's32[1]{0}', space=sflag, size = 0x4, scoped, tag = 'scoped memory for tpu_custom_call.1']
    #allocation12 [shape = 'u8[9216]{0}', space=vmem, size = 0x2400, scoped, tag = 'input window, operand 4, single buffered']
    #allocation13 [shape = 'u8[1179648]{0}', space=vmem, size = 0x120000, scoped, tag = 'input window, operand 5, single buffered']
    #allocation14 [shape = 's32[1]{0}', space=sflag, size = 0x4, scoped, tag = 'scoped memory for tpu_custom_call.1']
    #allocation15 [shape = 'u8[3072]{0}', space=vmem, size = 0xc00, scoped, tag = 'input window, operand 6, single buffered']
    #allocation16 [shape = 'u8[49152]{0}', space=vmem, size = 0xc000, scoped, tag = 'output window, operand 0']
    %12 = vsyncpa [#allocation5], 0
    %s13 = scalar_lea.sflag [#allocation5], 1
    %14 = vsyncpa %s13, 0
    %15 = vsyncpa [#allocation8], 0
    %16 = vsyncpa [#allocation11], 0
    %17 = vsyncpa [#allocation14], 0
    %18 = vsyncpa [#allocation6], 0
    %s19 = scalar_lea.sflag [#allocation6], 1
    %20 = vsyncpa %s19, 0
    loop: start=0, step=1, limit=4
    $region2: #{tpu_custom_call.1} parent=1 // loop_pre_header
      _
    $region3: #{tpu_custom_call.1} parent=1 // loop_header
      %s22 = sphi 0, %s26
      %p23 = scmp.ge.s32.totalorder %s22, 4
      %s32 = sphi 0, %s34
      %s35 = sphi 0, %s32
      %s36 = sphi 0, %s35
      %s52 = sphi 0, %s36
      %s56 = sphi 0, %s56
      %s58 = sphi 0, %s56
      %s59 = sphi 0, %s58
      %s73 = sphi 0, %s59
      %s77 = sphi 0, %s77
      %s79 = sphi 0, %s77
      %s80 = sphi 0, %s79
      %s94 = sphi 0, %s80
      %s98 = sphi 0, %s98
      %s100 = sphi 0, %s98
      %s101 = sphi 0, %s100
      %s115 = sphi 0, %s101
      %s119 = sphi 0, %s119
      %s121 = sphi 0, %s119
      %s122 = sphi 0, %s121
      %s136 = sphi 0, %s122
      %s140 = sphi 0, %s140
      %s142 = sphi 0, %s140
      %s143 = sphi 0, %s142
      %s157 = sphi 0, %s143
      %s161 = sphi 0, %s161
      %s163 = sphi 0, %s161
      %s164 = sphi 0, %s163
      %s178 = sphi 0, %s164
      %s184 = sphi 0, %s186
      %s187 = sphi 0, %s184
      %s188 = sphi 0, %s187
      %s204 = sphi 0, %s188
    $region4: #{tpu_custom_call.1} parent=1 // loop_header_branch
      %25 = sbr.rel (%p23) target = $region8
    $region5: #{tpu_custom_call.1} parent=1 // loop_body
      %s27 = ssub.s32 %s22, 1
      %s28 = ssub.s32 %s22, 2
      %s29 = sadd.s32 %s22, 1
      %s30 = ssub.s32 %s22, %s29
      %p31 = scmp.eq.s32.totalorder %s30, 0
      %s33 = sadd.s32 %s32, 1
      %s34 = scalar_select %p31, %s32, %s33
      %p37 = pneg %p31
      %p38 = scmp.eq.s32.totalorder %s22, 1
      %p39 = por %p37, %p38
      %p40 = scmp.ne.s32.totalorder %s32, %s35
      %p41 = scmp.eq.s32.totalorder %s22, 0
      %p42 = por %p40, %p41
      %p43 = scmp.ne.s32.totalorder %s32, %s35
      %p44 = scmp.eq.s32.totalorder %s27, 1
      %p45 = por %p43, %p44
      %p46 = scmp.ne.s32.totalorder %s35, %s36
      %p47 = scmp.eq.s32.totalorder %s27, 0
      %p48 = por %p46, %p47
      %p49 = scmp.ne.s32.totalorder %s35, %s36
      %p50 = scmp.eq.s32.totalorder %s28, 1
      %p51 = por %p49, %p50
      %p53 = scmp.ne.s32.totalorder %s36, %s52
      %p54 = scmp.eq.s32.totalorder %s28, 0
      %p55 = por %p53, %p54
      %s57 = sadd.s32 %s56, 1
      %p60 = scmp.eq.s32.totalorder %s22, 1
      %p61 = scmp.ne.s32.totalorder %s56, %s58
      %p62 = scmp.eq.s32.totalorder %s22, 0
      %p63 = por %p61, %p62
      %p64 = scmp.ne.s32.totalorder %s56, %s58
      %p65 = scmp.eq.s32.totalorder %s27, 1
      %p66 = por %p64, %p65
      %p67 = scmp.ne.s32.totalorder %s58, %s59
      %p68 = scmp.eq.s32.totalorder %s27, 0
      %p69 = por %p67, %p68
      %p70 = scmp.ne.s32.totalorder %s58, %s59
      %p71 = scmp.eq.s32.totalorder %s28, 1
      %p72 = por %p70, %p71
      %p74 = scmp.ne.s32.totalorder %s59, %s73
      %p75 = scmp.eq.s32.totalorder %s28, 0
      %p76 = por %p74, %p75
      %s78 = sadd.s32 %s77, 1
      %p81 = scmp.eq.s32.totalorder %s22, 1
      %p82 = scmp.ne.s32.totalorder %s77, %s79
      %p83 = scmp.eq.s32.totalorder %s22, 0
      %p84 = por %p82, %p83
      %p85 = scmp.ne.s32.totalorder %s77, %s79
      %p86 = scmp.eq.s32.totalorder %s27, 1
      %p87 = por %p85, %p86
      %p88 = scmp.ne.s32.totalorder %s79, %s80
      %p89 = scmp.eq.s32.totalorder %s27, 0
      %p90 = por %p88, %p89
      %p91 = scmp.ne.s32.totalorder %s79, %s80
      %p92 = scmp.eq.s32.totalorder %s28, 1
      %p93 = por %p91, %p92
      %p95 = scmp.ne.s32.totalorder %s80, %s94
      %p96 = scmp.eq.s32.totalorder %s28, 0
      %p97 = por %p95, %p96
      %s99 = sadd.s32 %s98, 1
      %p102 = scmp.eq.s32.totalorder %s22, 1
      %p103 = scmp.ne.s32.totalorder %s98, %s100
      %p104 = scmp.eq.s32.totalorder %s22, 0
      %p105 = por %p103, %p104
      %p106 = scmp.ne.s32.totalorder %s98, %s100
      %p107 = scmp.eq.s32.totalorder %s27, 1
      %p108 = por %p106, %p107
      %p109 = scmp.ne.s32.totalorder %s100, %s101
      %p110 = scmp.eq.s32.totalorder %s27, 0
      %p111 = por %p109, %p110
      %p112 = scmp.ne.s32.totalorder %s100, %s101
      %p113 = scmp.eq.s32.totalorder %s28, 1
      %p114 = por %p112, %p113
      %p116 = scmp.ne.s32.totalorder %s101, %s115
      %p117 = scmp.eq.s32.totalorder %s28, 0
      %p118 = por %p116, %p117
      %s120 = sadd.s32 %s119, 1
      %p123 = scmp.eq.s32.totalorder %s22, 1
      %p124 = scmp.ne.s32.totalorder %s119, %s121
      %p125 = scmp.eq.s32.totalorder %s22, 0
      %p126 = por %p124, %p125
      %p127 = scmp.ne.s32.totalorder %s119, %s121
      %p128 = scmp.eq.s32.totalorder %s27, 1
      %p129 = por %p127, %p128
      %p130 = scmp.ne.s32.totalorder %s121, %s122
      %p131 = scmp.eq.s32.totalorder %s27, 0
      %p132 = por %p130, %p131
      %p133 = scmp.ne.s32.totalorder %s121, %s122
      %p134 = scmp.eq.s32.totalorder %s28, 1
      %p135 = por %p133, %p134
      %p137 = scmp.ne.s32.totalorder %s122, %s136
      %p138 = scmp.eq.s32.totalorder %s28, 0
      %p139 = por %p137, %p138
      %s141 = sadd.s32 %s140, 1
      %p144 = scmp.eq.s32.totalorder %s22, 1
      %p145 = scmp.ne.s32.totalorder %s140, %s142
      %p146 = scmp.eq.s32.totalorder %s22, 0
      %p147 = por %p145, %p146
      %p148 = scmp.ne.s32.totalorder %s140, %s142
      %p149 = scmp.eq.s32.totalorder %s27, 1
      %p150 = por %p148, %p149
      %p151 = scmp.ne.s32.totalorder %s142, %s143
      %p152 = scmp.eq.s32.totalorder %s27, 0
      %p153 = por %p151, %p152
      %p154 = scmp.ne.s32.totalorder %s142, %s143
      %p155 = scmp.eq.s32.totalorder %s28, 1
      %p156 = por %p154, %p155
      %p158 = scmp.ne.s32.totalorder %s143, %s157
      %p159 = scmp.eq.s32.totalorder %s28, 0
      %p160 = por %p158, %p159
      %s162 = sadd.s32 %s161, 1
      %p165 = scmp.eq.s32.totalorder %s22, 1
      %p166 = scmp.ne.s32.totalorder %s161, %s163
      %p167 = scmp.eq.s32.totalorder %s22, 0
      %p168 = por %p166, %p167
      %p169 = scmp.ne.s32.totalorder %s161, %s163
      %p170 = scmp.eq.s32.totalorder %s27, 1
      %p171 = por %p169, %p170
      %p172 = scmp.ne.s32.totalorder %s163, %s164
      %p173 = scmp.eq.s32.totalorder %s27, 0
      %p174 = por %p172, %p173
      %p175 = scmp.ne.s32.totalorder %s163, %s164
      %p176 = scmp.eq.s32.totalorder %s28, 1
      %p177 = por %p175, %p176
      %p179 = scmp.ne.s32.totalorder %s164, %s178
      %p180 = scmp.eq.s32.totalorder %s28, 0
      %p181 = por %p179, %p180
      %s182 = ssub.s32 %s22, %s29
      %p183 = scmp.eq.s32.totalorder %s182, 0
      %s185 = sadd.s32 %s184, 1
      %s186 = scalar_select %p183, %s184, %s185
      %p189 = pneg %p183
      %p190 = scmp.eq.s32.totalorder %s22, 1
      %p191 = por %p189, %p190
      %p192 = scmp.ne.s32.totalorder %s184, %s187
      %p193 = scmp.eq.s32.totalorder %s22, 0
      %p194 = por %p192, %p193
      %p195 = scmp.ne.s32.totalorder %s184, %s187
      %p196 = scmp.eq.s32.totalorder %s27, 1
      %p197 = por %p195, %p196
      %p198 = scmp.ne.s32.totalorder %s187, %s188
      %p199 = scmp.eq.s32.totalorder %s27, 0
      %p200 = por %p198, %p199
      %p201 = scmp.ne.s32.totalorder %s187, %s188
      %p202 = scmp.eq.s32.totalorder %s28, 1
      %p203 = por %p201, %p202
      %p205 = scmp.ne.s32.totalorder %s188, %s204
      %p206 = scmp.eq.s32.totalorder %s28, 0
      %p207 = por %p205, %p206
      %p208 = scmp.le.s32.totalorder 1, %s22
      %p209 = scmp.lt.s32.totalorder %s22, 3
      %p210 = pnand %p208, %p209
      %p211 = pneg %p210
      // Predicated region
      $region9: #{tpu_custom_call.1} parent=5 // pred_check
        _
      $region10: #{tpu_custom_call.1} parent=5 // pred_check_branch
        %213 = sbr.rel (%p210) target = $region12
      $region11: #{tpu_custom_call.1} parent=5 // pred_region
        %s214 = ssub.s32 %s22, 1
        // Predicated region
        $region13: #{tpu_custom_call.1} parent=11 // pred_check
          %p215 = pneg %p69
        $region14: #{tpu_custom_call.1} parent=11 // pred_check_branch
          %217 = sbr.rel (%p215) target = $region16
        $region15: #{tpu_custom_call.1} parent=11 // pred_region
          %s219 = ssub.s32 96, 96
          %220 = vsyncadd [#allocation8], %s219
          %s222 = sshll.u32 [#allocation7], 4
          %s223 = int_to_ptr.vmem [resolvable:$true] %s222
          %225 = dma.hbm_to_vmem [thread:$0]  %s1, 96, %s223, [#allocation8]
        $region16: #{tpu_custom_call.1} parent=11 // pred_fallthru
          _
        // Predicated region
        $region17: #{tpu_custom_call.1} parent=11 // pred_check
          %p226 = pneg %p90
        $region18: #{tpu_custom_call.1} parent=11 // pred_check_branch
          %228 = sbr.rel (%p226) target = $region20
        $region19: #{tpu_custom_call.1} parent=11 // pred_region
          %s230 = ssub.s32 96, 96
          %231 = vsyncadd [#allocation8], %s230
          %s233 = sshll.u32 [#allocation9], 4
          %s234 = int_to_ptr.vmem [resolvable:$true] %s233
          %236 = dma.hbm_to_vmem [thread:$0]  %s2, 96, %s234, [#allocation8]
        $region20: #{tpu_custom_call.1} parent=11 // pred_fallthru
          _
        // Predicated region
        $region21: #{tpu_custom_call.1} parent=11 // pred_check
          %p237 = pneg %p111
        $region22: #{tpu_custom_call.1} parent=11 // pred_check_branch
          %239 = sbr.rel (%p237) target = $region24
        $region23: #{tpu_custom_call.1} parent=11 // pred_region
          %s241 = ssub.s32 110592, 110592
          %242 = vsyncadd [#allocation11], %s241
          %s243 = sshll.u32 [#allocation10], 4
          %s244 = int_to_ptr.vmem [resolvable:$true] %s243
          %249 = dma.hbm_to_vmem [thread:$0]  %s3, 110592, %s244, [#allocation11], 1152, 1152, 72
        $region24: #{tpu_custom_call.1} parent=11 // pred_fallthru
          _
        // Predicated region
        $region25: #{tpu_custom_call.1} parent=11 // pred_check
          %p250 = pneg %p132
        $region26: #{tpu_custom_call.1} parent=11 // pred_check_branch
          %252 = sbr.rel (%p250) target = $region28
        $region27: #{tpu_custom_call.1} parent=11 // pred_region
          %s254 = ssub.s32 288, 288
          %255 = vsyncadd [#allocation11], %s254
          %s257 = sshll.u32 [#allocation12], 4
          %s258 = int_to_ptr.vmem [resolvable:$true] %s257
          %260 = dma.hbm_to_vmem [thread:$0]  %s4, 288, %s258, [#allocation11]
        $region28: #{tpu_custom_call.1} parent=11 // pred_fallthru
          _
        // Predicated region
        $region29: #{tpu_custom_call.1} parent=11 // pred_check
          %p261 = pneg %p153
        $region30: #{tpu_custom_call.1} parent=11 // pred_check_branch
          %263 = sbr.rel (%p261) target = $region32
        $region31: #{tpu_custom_call.1} parent=11 // pred_region
          %s265 = ssub.s32 36864, 36864
          %266 = vsyncadd [#allocation14], %s265
          %s267 = sshll.u32 [#allocation13], 4
          %s268 = int_to_ptr.vmem [resolvable:$true] %s267
          %273 = dma.hbm_to_vmem [thread:$0]  %s5, 36864, %s268, [#allocation14], 384, 384, 24
        $region32: #{tpu_custom_call.1} parent=11 // pred_fallthru
          _
        // Predicated region
        $region33: #{tpu_custom_call.1} parent=11 // pred_check
          %p274 = pneg %p174
        $region34: #{tpu_custom_call.1} parent=11 // pred_check_branch
          %276 = sbr.rel (%p274) target = $region36
        $region35: #{tpu_custom_call.1} parent=11 // pred_region
          %s278 = ssub.s32 96, 96
          %279 = vsyncadd [#allocation14], %s278
          %s281 = sshll.u32 [#allocation15], 4
          %s282 = int_to_ptr.vmem [resolvable:$true] %s281
          %284 = dma.hbm_to_vmem [thread:$0]  %s6, 96, %s282, [#allocation14]
        $region36: #{tpu_custom_call.1} parent=11 // pred_fallthru
          _
      $region12: #{tpu_custom_call.1} parent=5 // pred_fallthru
        _
      %p285 = scmp.lt.s32.totalorder %s22, 2
      // Predicated region
      $region37: #{tpu_custom_call.1} parent=5 // pred_check
        %p286 = pneg %p285
      $region38: #{tpu_custom_call.1} parent=5 // pred_check_branch
        %288 = sbr.rel (%p286) target = $region40
      $region39: #{tpu_custom_call.1} parent=5 // pred_region
        // Predicated region
        $region41: #{tpu_custom_call.1} parent=39 // pred_check
          %p289 = pneg %p42
        $region42: #{tpu_custom_call.1} parent=39 // pred_check_branch
          %291 = sbr.rel (%p289) target = $region44
        $region43: #{tpu_custom_call.1} parent=39 // pred_region
          %s292 = sand.u32 %s32, 1
          %s293 = scalar_lea.sflag [#allocation5], %s292
          %s294 = sand.u32 %s32, 1
          %s295 = smul.addr %s294, 48
          %s296 = scalar_lea.vmem [#allocation4], %s295
          %s298 = ssub.s32 768, 768
          %299 = vsyncadd %s293, %s298
          %s300 = smul.addr %s22, 6
          %s301 = smul.addr %s300, 128
          %s302 = scalar_lea.hbm %s0, %s301
          %s304 = sshll.u32 %s296, 4
          %s305 = int_to_ptr.vmem [resolvable:$true] %s304
          %307 = dma.hbm_to_vmem [thread:$0]  %s302, 768, %s305, %s293
        $region44: #{tpu_custom_call.1} parent=39 // pred_fallthru
          _
      $region40: #{tpu_custom_call.1} parent=5 // pred_fallthru
        _
      %p308 = scmp.le.s32.totalorder 1, %s22
      %p309 = scmp.lt.s32.totalorder %s22, 3
      %p310 = pnand %p308, %p309
      %p311 = pneg %p310
      // Predicated region
      $region45: #{tpu_custom_call.1} parent=5 // pred_check
        _
      $region46: #{tpu_custom_call.1} parent=5 // pred_check_branch
        %313 = sbr.rel (%p310) target = $region48
      $region47: #{tpu_custom_call.1} parent=5 // pred_region
        %s314 = ssub.s32 %s22, 1
        %s315 = sand.u32 %s35, 1
        %s316 = scalar_lea.sflag [#allocation5], %s315
        %s317 = sand.u32 %s35, 1
        %s318 = smul.addr %s317, 48
        %s319 = scalar_lea.vmem [#allocation4], %s318
        // Predicated region
        $region49: #{tpu_custom_call.1} parent=47 // pred_check
          %p320 = pneg %p48
        $region50: #{tpu_custom_call.1} parent=47 // pred_check_branch
          %322 = sbr.rel (%p320) target = $region52
        $region51: #{tpu_custom_call.1} parent=47 // pred_region
          %323 = dma.done %s316, 768
        $region52: #{tpu_custom_call.1} parent=47 // pred_fallthru
          _
        // Predicated region
        $region53: #{tpu_custom_call.1} parent=47 // pred_check
          %p324 = pneg %p69
        $region54: #{tpu_custom_call.1} parent=47 // pred_check_branch
          %326 = sbr.rel (%p324) target = $region56
        $region55: #{tpu_custom_call.1} parent=47 // pred_region
          %327 = dma.done [#allocation8], 96
        $region56: #{tpu_custom_call.1} parent=47 // pred_fallthru
          _
        // Predicated region
        $region57: #{tpu_custom_call.1} parent=47 // pred_check
          %p328 = pneg %p90
        $region58: #{tpu_custom_call.1} parent=47 // pred_check_branch
          %330 = sbr.rel (%p328) target = $region60
        $region59: #{tpu_custom_call.1} parent=47 // pred_region
          %331 = dma.done [#allocation8], 96
        $region60: #{tpu_custom_call.1} parent=47 // pred_fallthru
          _
        // Predicated region
        $region61: #{tpu_custom_call.1} parent=47 // pred_check
          %p332 = pneg %p111
        $region62: #{tpu_custom_call.1} parent=47 // pred_check_branch
          %334 = sbr.rel (%p332) target = $region64
        $region63: #{tpu_custom_call.1} parent=47 // pred_region
          %335 = dma.done [#allocation11], 110592
        $region64: #{tpu_custom_call.1} parent=47 // pred_fallthru
          _
        // Predicated region
        $region65: #{tpu_custom_call.1} parent=47 // pred_check
          %p336 = pneg %p132
        $region66: #{tpu_custom_call.1} parent=47 // pred_check_branch
          %338 = sbr.rel (%p336) target = $region68
        $region67: #{tpu_custom_call.1} parent=47 // pred_region
          %339 = dma.done [#allocation11], 288
        $region68: #{tpu_custom_call.1} parent=47 // pred_fallthru
          _
        // Predicated region
        $region69: #{tpu_custom_call.1} parent=47 // pred_check
          %p340 = pneg %p153
        $region70: #{tpu_custom_call.1} parent=47 // pred_check_branch
          %342 = sbr.rel (%p340) target = $region72
        $region71: #{tpu_custom_call.1} parent=47 // pred_region
          %343 = dma.done [#allocation14], 36864
        $region72: #{tpu_custom_call.1} parent=47 // pred_fallthru
          _
        // Predicated region
        $region73: #{tpu_custom_call.1} parent=47 // pred_check
          %p344 = pneg %p174
        $region74: #{tpu_custom_call.1} parent=47 // pred_check_branch
          %346 = sbr.rel (%p344) target = $region76
        $region75: #{tpu_custom_call.1} parent=47 // pred_region
          %347 = dma.done [#allocation14], 96
        $region76: #{tpu_custom_call.1} parent=47 // pred_fallthru
          _
        %s348 = sand.u32 %s35, 1
        %s349 = scalar_lea.sflag [#allocation5], %s348
        %s350 = sand.u32 %s35, 1
        %s351 = smul.addr %s350, 48
        %s352 = scalar_lea.vmem [#allocation4], %s351
        %p353 = pneg %p48
        %p354 = pneg %p45
        %p355 = pneg %p69
        %p356 = pneg %p66
        %p357 = pneg %p90
        %p358 = pneg %p87
        %p359 = pneg %p111
        %p360 = pneg %p108
        %p361 = pneg %p132
        %p362 = pneg %p129
        %p363 = pneg %p153
        %p364 = pneg %p150
        %p365 = pneg %p174
        %p366 = pneg %p171
        %p367 = pneg %p200
        %p368 = pneg %p197
        %s369 = sand.u32 %s187, 1
        %s370 = scalar_lea.sflag [#allocation6], %s369
        %s371 = sand.u32 %s187, 1
        %s372 = smul.addr %s371, 48
        %s373 = scalar_lea.vmem [#allocation16], %s372
        %v375 = vld [vmem:[%s319] sm:$0xff]
        %v376 = vld [vmem:[%s319 + $0x8] sm:$0xff]
        %v377 = vld [vmem:[%s319 + $0x10] sm:$0xff]
        %v378 = vld [vmem:[%s319 + $0x18] sm:$0xff]
        %v379 = vld [vmem:[%s319 + $0x20] sm:$0xff]
        %v380 = vld [vmem:[%s319 + $0x28] sm:$0xff]
        %v381 = vadd.f32 %v375, %v376
        %v382 = vadd.f32 %v381, %v377
        %v383 = vadd.f32 %v382, %v378
        %v384 = vadd.f32 %v383, %v379
        %v385 = vadd.f32 %v384, %v380
        %386 = vadd.xlane.f32.xlu0 %v385
        %v387 = vpop.xlane.xlu0 %386
        %v388 = vrcp.pop 768.0
        %v389 = vmul.f32 %v387, %v388
        %v390 = vsub.f32 %v375, %v389
        %v391 = vsub.f32 %v376, %v389
        %v392 = vsub.f32 %v377, %v389
        %v393 = vsub.f32 %v378, %v389
        %v394 = vsub.f32 %v379, %v389
        %v395 = vsub.f32 %v380, %v389
        %v396 = vmul.f32 %v390, %v390
        %v397 = vmul.f32 %v391, %v391
        %v398 = vmul.f32 %v392, %v392
        %v399 = vmul.f32 %v393, %v393
        %v400 = vmul.f32 %v394, %v394
        %v401 = vmul.f32 %v395, %v395
        %v402 = vadd.f32 %v396, %v397
        %v403 = vadd.f32 %v402, %v398
        %v404 = vadd.f32 %v403, %v399
        %v405 = vadd.f32 %v404, %v400
        %v406 = vadd.f32 %v405, %v401
        %407 = vadd.xlane.f32.xlu0 %v406
        %v408 = vpop.xlane.xlu0 %407
        %v409 = vmul.f32 %v408, %v388
        %v410 = vadd.f32 %v409, 1e-05
        %v411 = vrsqrt.pop %v410
        %v412 = vmul.f32 %v390, %v411
        %v413 = vmul.f32 %v391, %v411
        %v414 = vmul.f32 %v392, %v411
        %v415 = vmul.f32 %v393, %v411
        %v416 = vmul.f32 %v394, %v411
        %v417 = vmul.f32 %v395, %v411
        %v418 = vld [vmem:[#allocation7] sm:$0x3f]
        %v420 = vlaneseq
        %v421 = vshrl.u32 %v420, 7
        %v422 = vsub.s32 0, %v421
        %v423 = vrot.slane %v418, %v422
        %v424 = vlaneseq
        %v425 = vshrl.u32 %v424, 7
        %v426 = vsub.s32 1, %v425
        %v427 = vrot.slane %v418, %v426
        %v428 = vlaneseq
        %v429 = vshrl.u32 %v428, 7
        %v430 = vsub.s32 2, %v429
        %v431 = vrot.slane %v418, %v430
        %v432 = vlaneseq
        %v433 = vshrl.u32 %v432, 7
        %v434 = vsub.s32 3, %v433
        %v435 = vrot.slane %v418, %v434
        %v436 = vlaneseq
        %v437 = vshrl.u32 %v436, 7
        %v438 = vsub.s32 4, %v437
        %v439 = vrot.slane %v418, %v438
        %v440 = vlaneseq
        %v441 = vshrl.u32 %v440, 7
        %v442 = vsub.s32 5, %v441
        %v443 = vrot.slane %v418, %v442
        %v450 = vmul.f32 %v412, %v423
        %v451 = vmul.f32 %v413, %v427
        %v452 = vmul.f32 %v414, %v431
        %v453 = vmul.f32 %v415, %v435
        %v454 = vmul.f32 %v416, %v439
        %v455 = vmul.f32 %v417, %v443
        %v456 = vld [vmem:[#allocation9] sm:$0x3f]
        %v458 = vlaneseq
        %v459 = vshrl.u32 %v458, 7
        %v460 = vsub.s32 0, %v459
        %v461 = vrot.slane %v456, %v460
        %v462 = vlaneseq
        %v463 = vshrl.u32 %v462, 7
        %v464 = vsub.s32 1, %v463
        %v465 = vrot.slane %v456, %v464
        %v466 = vlaneseq
        %v467 = vshrl.u32 %v466, 7
        %v468 = vsub.s32 2, %v467
        %v469 = vrot.slane %v456, %v468
        %v470 = vlaneseq
        %v471 = vshrl.u32 %v470, 7
        %v472 = vsub.s32 3, %v471
        %v473 = vrot.slane %v456, %v472
        %v474 = vlaneseq
        %v475 = vshrl.u32 %v474, 7
        %v476 = vsub.s32 4, %v475
        %v477 = vrot.slane %v456, %v476
        %v478 = vlaneseq
        %v479 = vshrl.u32 %v478, 7
        %v480 = vsub.s32 5, %v479
        %v481 = vrot.slane %v456, %v480
        %v488 = vadd.f32 %v450, %v461
        %v489 = vadd.f32 %v451, %v465
        %v490 = vadd.f32 %v452, %v469
        %v491 = vadd.f32 %v453, %v473
        %v492 = vadd.f32 %v454, %v477
        %v493 = vadd.f32 %v455, %v481
        %v494 = vpack.c.bf16 %v488, %v488
        %v495 = vpack.c.bf16 %v489, %v489
        %v496 = vpack.c.bf16 %v490, %v490
        %v497 = vpack.c.bf16 %v491, %v491
        %v498 = vpack.c.bf16 %v492, %v492
        %v499 = vpack.c.bf16 %v493, %v493
        %v500 = vld [vmem:[#allocation10] sm:$0xff]
        %v501 = vld [vmem:[#allocation10 + $0x8] sm:$0xff]
        %v502 = vld [vmem:[#allocation10 + $0x10] sm:$0xff]
        %v503 = vld [vmem:[#allocation10 + $0x18] sm:$0xff]
        %v504 = vld [vmem:[#allocation10 + $0x20] sm:$0xff]
        %v505 = vld [vmem:[#allocation10 + $0x28] sm:$0xff]
        %v506 = vld [vmem:[#allocation10 + $0x30] sm:$0xff]
        %v507 = vld [vmem:[#allocation10 + $0x38] sm:$0xff]
        %v508 = vld [vmem:[#allocation10 + $0x40] sm:$0xff]
        %v509 = vld [vmem:[#allocation10 + $0x48] sm:$0xff]
        %v510 = vld [vmem:[#allocation10 + $0x50] sm:$0xff]
        %v511 = vld [vmem:[#allocation10 + $0x58] sm:$0xff]
        %v512 = vld [vmem:[#allocation10 + $0x60] sm:$0xff]
        %v513 = vld [vmem:[#allocation10 + $0x68] sm:$0xff]
        %v514 = vld [vmem:[#allocation10 + $0x70] sm:$0xff]
        %v515 = vld [vmem:[#allocation10 + $0x78] sm:$0xff]
        %v516 = vld [vmem:[#allocation10 + $0x80] sm:$0xff]
        %v517 = vld [vmem:[#allocation10 + $0x88] sm:$0xff]
        %v518 = vld [vmem:[#allocation10 + $0x90] sm:$0xff]
        %v519 = vld [vmem:[#allocation10 + $0x98] sm:$0xff]
        %v520 = vld [vmem:[#allocation10 + $0xa0] sm:$0xff]
        %v521 = vld [vmem:[#allocation10 + $0xa8] sm:$0xff]
        %v522 = vld [vmem:[#allocation10 + $0xb0] sm:$0xff]
        %v523 = vld [vmem:[#allocation10 + $0xb8] sm:$0xff]
        %v524 = vld [vmem:[#allocation10 + $0xc0] sm:$0xff]
        %v525 = vld [vmem:[#allocation10 + $0xc8] sm:$0xff]
        %v526 = vld [vmem:[#allocation10 + $0xd0] sm:$0xff]
        %v527 = vld [vmem:[#allocation10 + $0xd8] sm:$0xff]
        %v528 = vld [vmem:[#allocation10 + $0xe0] sm:$0xff]
        %v529 = vld [vmem:[#allocation10 + $0xe8] sm:$0xff]
        %v530 = vld [vmem:[#allocation10 + $0xf0] sm:$0xff]
        %v531 = vld [vmem:[#allocation10 + $0xf8] sm:$0xff]
        %v532 = vld [vmem:[#allocation10 + $0x100] sm:$0xff]
        %v533 = vld [vmem:[#allocation10 + $0x108] sm:$0xff]
        %v534 = vld [vmem:[#allocation10 + $0x110] sm:$0xff]
        %v535 = vld [vmem:[#allocation10 + $0x118] sm:$0xff]
        %v536 = vld [vmem:[#allocation10 + $0x120] sm:$0xff]
        %v537 = vld [vmem:[#allocation10 + $0x128] sm:$0xff]
        %v538 = vld [vmem:[#allocation10 + $0x130] sm:$0xff]
        %v539 = vld [vmem:[#allocation10 + $0x138] sm:$0xff]
        %v540 = vld [vmem:[#allocation10 + $0x140] sm:$0xff]
        %v541 = vld [vmem:[#allocation10 + $0x148] sm:$0xff]
        %v542 = vld [vmem:[#allocation10 + $0x150] sm:$0xff]
        %v543 = vld [vmem:[#allocation10 + $0x158] sm:$0xff]
        %v544 = vld [vmem:[#allocation10 + $0x160] sm:$0xff]
        %v545 = vld [vmem:[#allocation10 + $0x168] sm:$0xff]
        %v546 = vld [vmem:[#allocation10 + $0x170] sm:$0xff]
        %v547 = vld [vmem:[#allocation10 + $0x178] sm:$0xff]
        %v548 = vld [vmem:[#allocation10 + $0x180] sm:$0xff]
        %v549 = vld [vmem:[#allocation10 + $0x188] sm:$0xff]
        %v550 = vld [vmem:[#allocation10 + $0x190] sm:$0xff]
        %v551 = vld [vmem:[#allocation10 + $0x198] sm:$0xff]
        %v552 = vld [vmem:[#allocation10 + $0x1a0] sm:$0xff]
        %v553 = vld [vmem:[#allocation10 + $0x1a8] sm:$0xff]
        %v554 = vld [vmem:[#allocation10 + $0x1b0] sm:$0xff]
        %v555 = vld [vmem:[#allocation10 + $0x1b8] sm:$0xff]
        %v556 = vld [vmem:[#allocation10 + $0x1c0] sm:$0xff]
        %v557 = vld [vmem:[#allocation10 + $0x1c8] sm:$0xff]
        %v558 = vld [vmem:[#allocation10 + $0x1d0] sm:$0xff]
        %v559 = vld [vmem:[#allocation10 + $0x1d8] sm:$0xff]
        %v560 = vld [vmem:[#allocation10 + $0x1e0] sm:$0xff]
        %v561 = vld [vmem:[#allocation10 + $0x1e8] sm:$0xff]
        %v562 = vld [vmem:[#allocation10 + $0x1f0] sm:$0xff]
        %v563 = vld [vmem:[#allocation10 + $0x1f8] sm:$0xff]
        %v564 = vld [vmem:[#allocation10 + $0x200] sm:$0xff]
        %v565 = vld [vmem:[#allocation10 + $0x208] sm:$0xff]
        %v566 = vld [vmem:[#allocation10 + $0x210] sm:$0xff]
        %v567 = vld [vmem:[#allocation10 + $0x218] sm:$0xff]
        %v568 = vld [vmem:[#allocation10 + $0x220] sm:$0xff]
        %v569 = vld [vmem:[#allocation10 + $0x228] sm:$0xff]
        %v570 = vld [vmem:[#allocation10 + $0x230] sm:$0xff]
        %v571 = vld [vmem:[#allocation10 + $0x238] sm:$0xff]
        %v572 = vld [vmem:[#allocation10 + $0x240] sm:$0xff]
        %v573 = vld [vmem:[#allocation10 + $0x248] sm:$0xff]
        %v574 = vld [vmem:[#allocation10 + $0x250] sm:$0xff]
        %v575 = vld [vmem:[#allocation10 + $0x258] sm:$0xff]
        %v576 = vld [vmem:[#allocation10 + $0x260] sm:$0xff]
        %v577 = vld [vmem:[#allocation10 + $0x268] sm:$0xff]
        %v578 = vld [vmem:[#allocation10 + $0x270] sm:$0xff]
        %v579 = vld [vmem:[#allocation10 + $0x278] sm:$0xff]
        %v580 = vld [vmem:[#allocation10 + $0x280] sm:$0xff]
        %v581 = vld [vmem:[#allocation10 + $0x288] sm:$0xff]
        %v582 = vld [vmem:[#allocation10 + $0x290] sm:$0xff]
        %v583 = vld [vmem:[#allocation10 + $0x298] sm:$0xff]
        %v584 = vld [vmem:[#allocation10 + $0x2a0] sm:$0xff]
        %v585 = vld [vmem:[#allocation10 + $0x2a8] sm:$0xff]
        %v586 = vld [vmem:[#allocation10 + $0x2b0] sm:$0xff]
        %v587 = vld [vmem:[#allocation10 + $0x2b8] sm:$0xff]
        %v588 = vld [vmem:[#allocation10 + $0x2c0] sm:$0xff]
        %v589 = vld [vmem:[#allocation10 + $0x2c8] sm:$0xff]
        %v590 = vld [vmem:[#allocation10 + $0x2d0] sm:$0xff]
        %v591 = vld [vmem:[#allocation10 + $0x2d8] sm:$0xff]
        %v592 = vld [vmem:[#allocation10 + $0x2e0] sm:$0xff]
        %v593 = vld [vmem:[#allocation10 + $0x2e8] sm:$0xff]
        %v594 = vld [vmem:[#allocation10 + $0x2f0] sm:$0xff]
        %v595 = vld [vmem:[#allocation10 + $0x2f8] sm:$0xff]
        %v596 = vld [vmem:[#allocation10 + $0x300] sm:$0xff]
        %v597 = vld [vmem:[#allocation10 + $0x308] sm:$0xff]
        %v598 = vld [vmem:[#allocation10 + $0x310] sm:$0xff]
        %v599 = vld [vmem:[#allocation10 + $0x318] sm:$0xff]
        %v600 = vld [vmem:[#allocation10 + $0x320] sm:$0xff]
        %v601 = vld [vmem:[#allocation10 + $0x328] sm:$0xff]
        %v602 = vld [vmem:[#allocation10 + $0x330] sm:$0xff]
        %v603 = vld [vmem:[#allocation10 + $0x338] sm:$0xff]
        %v604 = vld [vmem:[#allocation10 + $0x340] sm:$0xff]
        %v605 = vld [vmem:[#allocation10 + $0x348] sm:$0xff]
        %v606 = vld [vmem:[#allocation10 + $0x350] sm:$0xff]
        %v607 = vld [vmem:[#allocation10 + $0x358] sm:$0xff]
        %v608 = vld [vmem:[#allocation10 + $0x360] sm:$0xff]
        %v609 = vld [vmem:[#allocation10 + $0x368] sm:$0xff]
        %v610 = vld [vmem:[#allocation10 + $0x370] sm:$0xff]
        %v611 = vld [vmem:[#allocation10 + $0x378] sm:$0xff]
        %v612 = vld [vmem:[#allocation10 + $0x380] sm:$0xff]
        %v613 = vld [vmem:[#allocation10 + $0x388] sm:$0xff]
        %v614 = vld [vmem:[#allocation10 + $0x390] sm:$0xff]
        %v615 = vld [vmem:[#allocation10 + $0x398] sm:$0xff]
        %v616 = vld [vmem:[#allocation10 + $0x3a0] sm:$0xff]
        %v617 = vld [vmem:[#allocation10 + $0x3a8] sm:$0xff]
        %v618 = vld [vmem:[#allocation10 + $0x3b0] sm:$0xff]
        %v619 = vld [vmem:[#allocation10 + $0x3b8] sm:$0xff]
        %v620 = vld [vmem:[#allocation10 + $0x3c0] sm:$0xff]
        %v621 = vld [vmem:[#allocation10 + $0x3c8] sm:$0xff]
        %v622 = vld [vmem:[#allocation10 + $0x3d0] sm:$0xff]
        %v623 = vld [vmem:[#allocation10 + $0x3d8] sm:$0xff]
        %v624 = vld [vmem:[#allocation10 + $0x3e0] sm:$0xff]
        %v625 = vld [vmem:[#allocation10 + $0x3e8] sm:$0xff]
        %v626 = vld [vmem:[#allocation10 + $0x3f0] sm:$0xff]
        %v627 = vld [vmem:[#allocation10 + $0x3f8] sm:$0xff]
        %v628 = vld [vmem:[#allocation10 + $0x400] sm:$0xff]
        %v629 = vld [vmem:[#allocation10 + $0x408] sm:$0xff]
        %v630 = vld [vmem:[#allocation10 + $0x410] sm:$0xff]
        %v631 = vld [vmem:[#allocation10 + $0x418] sm:$0xff]
        %v632 = vld [vmem:[#allocation10 + $0x420] sm:$0xff]
        %v633 = vld [vmem:[#allocation10 + $0x428] sm:$0xff]
        %v634 = vld [vmem:[#allocation10 + $0x430] sm:$0xff]
        %v635 = vld [vmem:[#allocation10 + $0x438] sm:$0xff]
        %v636 = vld [vmem:[#allocation10 + $0x440] sm:$0xff]
        %v637 = vld [vmem:[#allocation10 + $0x448] sm:$0xff]
        %v638 = vld [vmem:[#allocation10 + $0x450] sm:$0xff]
        %v639 = vld [vmem:[#allocation10 + $0x458] sm:$0xff]
        %v640 = vld [vmem:[#allocation10 + $0x460] sm:$0xff]
        %v641 = vld [vmem:[#allocation10 + $0x468] sm:$0xff]
        %v642 = vld [vmem:[#allocation10 + $0x470] sm:$0xff]
        %v643 = vld [vmem:[#allocation10 + $0x478] sm:$0xff]
        %v644 = vld [vmem:[#allocation10 + $0x480] sm:$0xff]
        %v645 = vld [vmem:[#allocation10 + $0x488] sm:$0xff]
        %v646 = vld [vmem:[#allocation10 + $0x490] sm:$0xff]
        %v647 = vld [vmem:[#allocation10 + $0x498] sm:$0xff]
        %v648 = vld [vmem:[#allocation10 + $0x4a0] sm:$0xff]
        %v649 = vld [vmem:[#allocation10 + $0x4a8] sm:$0xff]
        %v650 = vld [vmem:[#allocation10 + $0x4b0] sm:$0xff]
        %v651 = vld [vmem:[#allocation10 + $0x4b8] sm:$0xff]
        %v652 = vld [vmem:[#allocation10 + $0x4c0] sm:$0xff]
        %v653 = vld [vmem:[#allocation10 + $0x4c8] sm:$0xff]
        %v654 = vld [vmem:[#allocation10 + $0x4d0] sm:$0xff]
        %v655 = vld [vmem:[#allocation10 + $0x4d8] sm:$0xff]
        %v656 = vld [vmem:[#allocation10 + $0x4e0] sm:$0xff]
        %v657 = vld [vmem:[#allocation10 + $0x4e8] sm:$0xff]
        %v658 = vld [vmem:[#allocation10 + $0x4f0] sm:$0xff]
        %v659 = vld [vmem:[#allocation10 + $0x4f8] sm:$0xff]
        %v660 = vld [vmem:[#allocation10 + $0x500] sm:$0xff]
        %v661 = vld [vmem:[#allocation10 + $0x508] sm:$0xff]
        %v662 = vld [vmem:[#allocation10 + $0x510] sm:$0xff]
        %v663 = vld [vmem:[#allocation10 + $0x518] sm:$0xff]
        %v664 = vld [vmem:[#allocation10 + $0x520] sm:$0xff]
        %v665 = vld [vmem:[#allocation10 + $0x528] sm:$0xff]
        %v666 = vld [vmem:[#allocation10 + $0x530] sm:$0xff]
        %v667 = vld [vmem:[#allocation10 + $0x538] sm:$0xff]
        %v668 = vld [vmem:[#allocation10 + $0x540] sm:$0xff]
        %v669 = vld [vmem:[#allocation10 + $0x548] sm:$0xff]
        %v670 = vld [vmem:[#allocation10 + $0x550] sm:$0xff]
        %v671 = vld [vmem:[#allocation10 + $0x558] sm:$0xff]
        %v672 = vld [vmem:[#allocation10 + $0x560] sm:$0xff]
        %v673 = vld [vmem:[#allocation10 + $0x568] sm:$0xff]
        %v674 = vld [vmem:[#allocation10 + $0x570] sm:$0xff]
        %v675 = vld [vmem:[#allocation10 + $0x578] sm:$0xff]
        %v676 = vld [vmem:[#allocation10 + $0x580] sm:$0xff]
        %v677 = vld [vmem:[#allocation10 + $0x588] sm:$0xff]
        %v678 = vld [vmem:[#allocation10 + $0x590] sm:$0xff]
        %v679 = vld [vmem:[#allocation10 + $0x598] sm:$0xff]
        %v680 = vld [vmem:[#allocation10 + $0x5a0] sm:$0xff]
        %v681 = vld [vmem:[#allocation10 + $0x5a8] sm:$0xff]
        %v682 = vld [vmem:[#allocation10 + $0x5b0] sm:$0xff]
        %v683 = vld [vmem:[#allocation10 + $0x5b8] sm:$0xff]
        %v684 = vld [vmem:[#allocation10 + $0x5c0] sm:$0xff]
        %v685 = vld [vmem:[#allocation10 + $0x5c8] sm:$0xff]
        %v686 = vld [vmem:[#allocation10 + $0x5d0] sm:$0xff]
        %v687 = vld [vmem:[#allocation10 + $0x5d8] sm:$0xff]
        %v688 = vld [vmem:[#allocation10 + $0x5e0] sm:$0xff]
        %v689 = vld [vmem:[#allocation10 + $0x5e8] sm:$0xff]
        %v690 = vld [vmem:[#allocation10 + $0x5f0] sm:$0xff]
        %v691 = vld [vmem:[#allocation10 + $0x5f8] sm:$0xff]
        %v692 = vld [vmem:[#allocation10 + $0x600] sm:$0xff]
        %v693 = vld [vmem:[#allocation10 + $0x608] sm:$0xff]
        %v694 = vld [vmem:[#allocation10 + $0x610] sm:$0xff]
        %v695 = vld [vmem:[#allocation10 + $0x618] sm:$0xff]
        %v696 = vld [vmem:[#allocation10 + $0x620] sm:$0xff]
        %v697 = vld [vmem:[#allocation10 + $0x628] sm:$0xff]
        %v698 = vld [vmem:[#allocation10 + $0x630] sm:$0xff]
        %v699 = vld [vmem:[#allocation10 + $0x638] sm:$0xff]
        %v700 = vld [vmem:[#allocation10 + $0x640] sm:$0xff]
        %v701 = vld [vmem:[#allocation10 + $0x648] sm:$0xff]
        %v702 = vld [vmem:[#allocation10 + $0x650] sm:$0xff]
        %v703 = vld [vmem:[#allocation10 + $0x658] sm:$0xff]
        %v704 = vld [vmem:[#allocation10 + $0x660] sm:$0xff]
        %v705 = vld [vmem:[#allocation10 + $0x668] sm:$0xff]
        %v706 = vld [vmem:[#allocation10 + $0x670] sm:$0xff]
        %v707 = vld [vmem:[#allocation10 + $0x678] sm:$0xff]
        %v708 = vld [vmem:[#allocation10 + $0x680] sm:$0xff]
        %v709 = vld [vmem:[#allocation10 + $0x688] sm:$0xff]
        %v710 = vld [vmem:[#allocation10 + $0x690] sm:$0xff]
        %v711 = vld [vmem:[#allocation10 + $0x698] sm:$0xff]
        %v712 = vld [vmem:[#allocation10 + $0x6a0] sm:$0xff]
        %v713 = vld [vmem:[#allocation10 + $0x6a8] sm:$0xff]
        %v714 = vld [vmem:[#allocation10 + $0x6b0] sm:$0xff]
        %v715 = vld [vmem:[#allocation10 + $0x6b8] sm:$0xff]
        %v716 = vld [vmem:[#allocation10 + $0x6c0] sm:$0xff]
        %v717 = vld [vmem:[#allocation10 + $0x6c8] sm:$0xff]
        %v718 = vld [vmem:[#allocation10 + $0x6d0] sm:$0xff]
        %v719 = vld [vmem:[#allocation10 + $0x6d8] sm:$0xff]
        %v720 = vld [vmem:[#allocation10 + $0x6e0] sm:$0xff]
        %v721 = vld [vmem:[#allocation10 + $0x6e8] sm:$0xff]
        %v722 = vld [vmem:[#allocation10 + $0x6f0] sm:$0xff]
        %v723 = vld [vmem:[#allocation10 + $0x6f8] sm:$0xff]
        %v724 = vld [vmem:[#allocation10 + $0x700] sm:$0xff]
        %v725 = vld [vmem:[#allocation10 + $0x708] sm:$0xff]
        %v726 = vld [vmem:[#allocation10 + $0x710] sm:$0xff]
        %v727 = vld [vmem:[#allocation10 + $0x718] sm:$0xff]
        %v728 = vld [vmem:[#allocation10 + $0x720] sm:$0xff]
        %v729 = vld [vmem:[#allocation10 + $0x728] sm:$0xff]
        %v730 = vld [vmem:[#allocation10 + $0x730] sm:$0xff]
        %v731 = vld [vmem:[#allocation10 + $0x738] sm:$0xff]
        %v732 = vld [vmem:[#allocation10 + $0x740] sm:$0xff]
        %v733 = vld [vmem:[#allocation10 + $0x748] sm:$0xff]
        %v734 = vld [vmem:[#allocation10 + $0x750] sm:$0xff]
        %v735 = vld [vmem:[#allocation10 + $0x758] sm:$0xff]
        %v736 = vld [vmem:[#allocation10 + $0x760] sm:$0xff]
        %v737 = vld [vmem:[#allocation10 + $0x768] sm:$0xff]
        %v738 = vld [vmem:[#allocation10 + $0x770] sm:$0xff]
        %v739 = vld [vmem:[#allocation10 + $0x778] sm:$0xff]
        %v740 = vld [vmem:[#allocation10 + $0x780] sm:$0xff]
        %v741 = vld [vmem:[#allocation10 + $0x788] sm:$0xff]
        %v742 = vld [vmem:[#allocation10 + $0x790] sm:$0xff]
        %v743 = vld [vmem:[#allocation10 + $0x798] sm:$0xff]
        %v744 = vld [vmem:[#allocation10 + $0x7a0] sm:$0xff]
        %v745 = vld [vmem:[#allocation10 + $0x7a8] sm:$0xff]
        %v746 = vld [vmem:[#allocation10 + $0x7b0] sm:$0xff]
        %v747 = vld [vmem:[#allocation10 + $0x7b8] sm:$0xff]
        %v748 = vld [vmem:[#allocation10 + $0x7c0] sm:$0xff]
        %v749 = vld [vmem:[#allocation10 + $0x7c8] sm:$0xff]
        %v750 = vld [vmem:[#allocation10 + $0x7d0] sm:$0xff]
        %v751 = vld [vmem:[#allocation10 + $0x7d8] sm:$0xff]
        %v752 = vld [vmem:[#allocation10 + $0x7e0] sm:$0xff]
        %v753 = vld [vmem:[#allocation10 + $0x7e8] sm:$0xff]
        %v754 = vld [vmem:[#allocation10 + $0x7f0] sm:$0xff]
        %v755 = vld [vmem:[#allocation10 + $0x7f8] sm:$0xff]
        %v756 = vld [vmem:[#allocation10 + $0x800] sm:$0xff]
        %v757 = vld [vmem:[#allocation10 + $0x808] sm:$0xff]
        %v758 = vld [vmem:[#allocation10 + $0x810] sm:$0xff]
        %v759 = vld [vmem:[#allocation10 + $0x818] sm:$0xff]
        %v760 = vld [vmem:[#allocation10 + $0x820] sm:$0xff]
        %v761 = vld [vmem:[#allocation10 + $0x828] sm:$0xff]
        %v762 = vld [vmem:[#allocation10 + $0x830] sm:$0xff]
        %v763 = vld [vmem:[#allocation10 + $0x838] sm:$0xff]
        %v764 = vld [vmem:[#allocation10 + $0x840] sm:$0xff]
        %v765 = vld [vmem:[#allocation10 + $0x848] sm:$0xff]
        %v766 = vld [vmem:[#allocation10 + $0x850] sm:$0xff]
        %v767 = vld [vmem:[#allocation10 + $0x858] sm:$0xff]
        %v768 = vld [vmem:[#allocation10 + $0x860] sm:$0xff]
        %v769 = vld [vmem:[#allocation10 + $0x868] sm:$0xff]
        %v770 = vld [vmem:[#allocation10 + $0x870] sm:$0xff]
        %v771 = vld [vmem:[#allocation10 + $0x878] sm:$0xff]
        %v772 = vld [vmem:[#allocation10 + $0x880] sm:$0xff]
        %v773 = vld [vmem:[#allocation10 + $0x888] sm:$0xff]
        %v774 = vld [vmem:[#allocation10 + $0x890] sm:$0xff]
        %v775 = vld [vmem:[#allocation10 + $0x898] sm:$0xff]
        %v776 = vld [vmem:[#allocation10 + $0x8a0] sm:$0xff]
        %v777 = vld [vmem:[#allocation10 + $0x8a8] sm:$0xff]
        %v778 = vld [vmem:[#allocation10 + $0x8b0] sm:$0xff]
        %v779 = vld [vmem:[#allocation10 + $0x8b8] sm:$0xff]
        %v780 = vld [vmem:[#allocation10 + $0x8c0] sm:$0xff]
        %v781 = vld [vmem:[#allocation10 + $0x8c8] sm:$0xff]
        %v782 = vld [vmem:[#allocation10 + $0x8d0] sm:$0xff]
        %v783 = vld [vmem:[#allocation10 + $0x8d8] sm:$0xff]
        %v784 = vld [vmem:[#allocation10 + $0x8e0] sm:$0xff]
        %v785 = vld [vmem:[#allocation10 + $0x8e8] sm:$0xff]
        %v786 = vld [vmem:[#allocation10 + $0x8f0] sm:$0xff]
        %v787 = vld [vmem:[#allocation10 + $0x8f8] sm:$0xff]
        %v788 = vld [vmem:[#allocation10 + $0x900] sm:$0xff]
        %v789 = vld [vmem:[#allocation10 + $0x908] sm:$0xff]
        %v790 = vld [vmem:[#allocation10 + $0x910] sm:$0xff]
        %v791 = vld [vmem:[#allocation10 + $0x918] sm:$0xff]
        %v792 = vld [vmem:[#allocation10 + $0x920] sm:$0xff]
        %v793 = vld [vmem:[#allocation10 + $0x928] sm:$0xff]
        %v794 = vld [vmem:[#allocation10 + $0x930] sm:$0xff]
        %v795 = vld [vmem:[#allocation10 + $0x938] sm:$0xff]
        %v796 = vld [vmem:[#allocation10 + $0x940] sm:$0xff]
        %v797 = vld [vmem:[#allocation10 + $0x948] sm:$0xff]
        %v798 = vld [vmem:[#allocation10 + $0x950] sm:$0xff]
        %v799 = vld [vmem:[#allocation10 + $0x958] sm:$0xff]
        %v800 = vld [vmem:[#allocation10 + $0x960] sm:$0xff]
        %v801 = vld [vmem:[#allocation10 + $0x968] sm:$0xff]
        %v802 = vld [vmem:[#allocation10 + $0x970] sm:$0xff]
        %v803 = vld [vmem:[#allocation10 + $0x978] sm:$0xff]
        %v804 = vld [vmem:[#allocation10 + $0x980] sm:$0xff]
        %v805 = vld [vmem:[#allocation10 + $0x988] sm:$0xff]
        %v806 = vld [vmem:[#allocation10 + $0x990] sm:$0xff]
        %v807 = vld [vmem:[#allocation10 + $0x998] sm:$0xff]
        %v808 = vld [vmem:[#allocation10 + $0x9a0] sm:$0xff]
        %v809 = vld [vmem:[#allocation10 + $0x9a8] sm:$0xff]
        %v810 = vld [vmem:[#allocation10 + $0x9b0] sm:$0xff]
        %v811 = vld [vmem:[#allocation10 + $0x9b8] sm:$0xff]
        %v812 = vld [vmem:[#allocation10 + $0x9c0] sm:$0xff]
        %v813 = vld [vmem:[#allocation10 + $0x9c8] sm:$0xff]
        %v814 = vld [vmem:[#allocation10 + $0x9d0] sm:$0xff]
        %v815 = vld [vmem:[#allocation10 + $0x9d8] sm:$0xff]
        %v816 = vld [vmem:[#allocation10 + $0x9e0] sm:$0xff]
        %v817 = vld [vmem:[#allocation10 + $0x9e8] sm:$0xff]
        %v818 = vld [vmem:[#allocation10 + $0x9f0] sm:$0xff]
        %v819 = vld [vmem:[#allocation10 + $0x9f8] sm:$0xff]
        %v820 = vld [vmem:[#allocation10 + $0xa00] sm:$0xff]
        %v821 = vld [vmem:[#allocation10 + $0xa08] sm:$0xff]
        %v822 = vld [vmem:[#allocation10 + $0xa10] sm:$0xff]
        %v823 = vld [vmem:[#allocation10 + $0xa18] sm:$0xff]
        %v824 = vld [vmem:[#allocation10 + $0xa20] sm:$0xff]
        %v825 = vld [vmem:[#allocation10 + $0xa28] sm:$0xff]
        %v826 = vld [vmem:[#allocation10 + $0xa30] sm:$0xff]
        %v827 = vld [vmem:[#allocation10 + $0xa38] sm:$0xff]
        %v828 = vld [vmem:[#allocation10 + $0xa40] sm:$0xff]
        %v829 = vld [vmem:[#allocation10 + $0xa48] sm:$0xff]
        %v830 = vld [vmem:[#allocation10 + $0xa50] sm:$0xff]
        %v831 = vld [vmem:[#allocation10 + $0xa58] sm:$0xff]
        %v832 = vld [vmem:[#allocation10 + $0xa60] sm:$0xff]
        %v833 = vld [vmem:[#allocation10 + $0xa68] sm:$0xff]
        %v834 = vld [vmem:[#allocation10 + $0xa70] sm:$0xff]
        %v835 = vld [vmem:[#allocation10 + $0xa78] sm:$0xff]
        %v836 = vld [vmem:[#allocation10 + $0xa80] sm:$0xff]
        %v837 = vld [vmem:[#allocation10 + $0xa88] sm:$0xff]
        %v838 = vld [vmem:[#allocation10 + $0xa90] sm:$0xff]
        %v839 = vld [vmem:[#allocation10 + $0xa98] sm:$0xff]
        %v840 = vld [vmem:[#allocation10 + $0xaa0] sm:$0xff]
        %v841 = vld [vmem:[#allocation10 + $0xaa8] sm:$0xff]
        %v842 = vld [vmem:[#allocation10 + $0xab0] sm:$0xff]
        %v843 = vld [vmem:[#allocation10 + $0xab8] sm:$0xff]
        %v844 = vld [vmem:[#allocation10 + $0xac0] sm:$0xff]
        %v845 = vld [vmem:[#allocation10 + $0xac8] sm:$0xff]
        %v846 = vld [vmem:[#allocation10 + $0xad0] sm:$0xff]
        %v847 = vld [vmem:[#allocation10 + $0xad8] sm:$0xff]
        %v848 = vld [vmem:[#allocation10 + $0xae0] sm:$0xff]
        %v849 = vld [vmem:[#allocation10 + $0xae8] sm:$0xff]
        %v850 = vld [vmem:[#allocation10 + $0xaf0] sm:$0xff]
        %v851 = vld [vmem:[#allocation10 + $0xaf8] sm:$0xff]
        %v852 = vld [vmem:[#allocation10 + $0xb00] sm:$0xff]
        %v853 = vld [vmem:[#allocation10 + $0xb08] sm:$0xff]
        %v854 = vld [vmem:[#allocation10 + $0xb10] sm:$0xff]
        %v855 = vld [vmem:[#allocation10 + $0xb18] sm:$0xff]
        %v856 = vld [vmem:[#allocation10 + $0xb20] sm:$0xff]
        %v857 = vld [vmem:[#allocation10 + $0xb28] sm:$0xff]
        %v858 = vld [vmem:[#allocation10 + $0xb30] sm:$0xff]
        %v859 = vld [vmem:[#allocation10 + $0xb38] sm:$0xff]
        %v860 = vld [vmem:[#allocation10 + $0xb40] sm:$0xff]
        %v861 = vld [vmem:[#allocation10 + $0xb48] sm:$0xff]
        %v862 = vld [vmem:[#allocation10 + $0xb50] sm:$0xff]
        %v863 = vld [vmem:[#allocation10 + $0xb58] sm:$0xff]
        %v864 = vld [vmem:[#allocation10 + $0xb60] sm:$0xff]
        %v865 = vld [vmem:[#allocation10 + $0xb68] sm:$0xff]
        %v866 = vld [vmem:[#allocation10 + $0xb70] sm:$0xff]
        %v867 = vld [vmem:[#allocation10 + $0xb78] sm:$0xff]
        %v868 = vld [vmem:[#allocation10 + $0xb80] sm:$0xff]
        %v869 = vld [vmem:[#allocation10 + $0xb88] sm:$0xff]
        %v870 = vld [vmem:[#allocation10 + $0xb90] sm:$0xff]
        %v871 = vld [vmem:[#allocation10 + $0xb98] sm:$0xff]
        %v872 = vld [vmem:[#allocation10 + $0xba0] sm:$0xff]
        %v873 = vld [vmem:[#allocation10 + $0xba8] sm:$0xff]
        %v874 = vld [vmem:[#allocation10 + $0xbb0] sm:$0xff]
        %v875 = vld [vmem:[#allocation10 + $0xbb8] sm:$0xff]
        %v876 = vld [vmem:[#allocation10 + $0xbc0] sm:$0xff]
        %v877 = vld [vmem:[#allocation10 + $0xbc8] sm:$0xff]
        %v878 = vld [vmem:[#allocation10 + $0xbd0] sm:$0xff]
        %v879 = vld [vmem:[#allocation10 + $0xbd8] sm:$0xff]
        %v880 = vld [vmem:[#allocation10 + $0xbe0] sm:$0xff]
        %v881 = vld [vmem:[#allocation10 + $0xbe8] sm:$0xff]
        %v882 = vld [vmem:[#allocation10 + $0xbf0] sm:$0xff]
        %v883 = vld [vmem:[#allocation10 + $0xbf8] sm:$0xff]
        %v884 = vld [vmem:[#allocation10 + $0xc00] sm:$0xff]
        %v885 = vld [vmem:[#allocation10 + $0xc08] sm:$0xff]
        %v886 = vld [vmem:[#allocation10 + $0xc10] sm:$0xff]
        %v887 = vld [vmem:[#allocation10 + $0xc18] sm:$0xff]
        %v888 = vld [vmem:[#allocation10 + $0xc20] sm:$0xff]
        %v889 = vld [vmem:[#allocation10 + $0xc28] sm:$0xff]
        %v890 = vld [vmem:[#allocation10 + $0xc30] sm:$0xff]
        %v891 = vld [vmem:[#allocation10 + $0xc38] sm:$0xff]
        %v892 = vld [vmem:[#allocation10 + $0xc40] sm:$0xff]
        %v893 = vld [vmem:[#allocation10 + $0xc48] sm:$0xff]
        %v894 = vld [vmem:[#allocation10 + $0xc50] sm:$0xff]
        %v895 = vld [vmem:[#allocation10 + $0xc58] sm:$0xff]
        %v896 = vld [vmem:[#allocation10 + $0xc60] sm:$0xff]
        %v897 = vld [vmem:[#allocation10 + $0xc68] sm:$0xff]
        %v898 = vld [vmem:[#allocation10 + $0xc70] sm:$0xff]
        %v899 = vld [vmem:[#allocation10 + $0xc78] sm:$0xff]
        %v900 = vld [vmem:[#allocation10 + $0xc80] sm:$0xff]
        %v901 = vld [vmem:[#allocation10 + $0xc88] sm:$0xff]
        %v902 = vld [vmem:[#allocation10 + $0xc90] sm:$0xff]
        %v903 = vld [vmem:[#allocation10 + $0xc98] sm:$0xff]
        %v904 = vld [vmem:[#allocation10 + $0xca0] sm:$0xff]
        %v905 = vld [vmem:[#allocation10 + $0xca8] sm:$0xff]
        %v906 = vld [vmem:[#allocation10 + $0xcb0] sm:$0xff]
        %v907 = vld [vmem:[#allocation10 + $0xcb8] sm:$0xff]
        %v908 = vld [vmem:[#allocation10 + $0xcc0] sm:$0xff]
        %v909 = vld [vmem:[#allocation10 + $0xcc8] sm:$0xff]
        %v910 = vld [vmem:[#allocation10 + $0xcd0] sm:$0xff]
        %v911 = vld [vmem:[#allocation10 + $0xcd8] sm:$0xff]
        %v912 = vld [vmem:[#allocation10 + $0xce0] sm:$0xff]
        %v913 = vld [vmem:[#allocation10 + $0xce8] sm:$0xff]
        %v914 = vld [vmem:[#allocation10 + $0xcf0] sm:$0xff]
        %v915 = vld [vmem:[#allocation10 + $0xcf8] sm:$0xff]
        %v916 = vld [vmem:[#allocation10 + $0xd00] sm:$0xff]
        %v917 = vld [vmem:[#allocation10 + $0xd08] sm:$0xff]
        %v918 = vld [vmem:[#allocation10 + $0xd10] sm:$0xff]
        %v919 = vld [vmem:[#allocation10 + $0xd18] sm:$0xff]
        %v920 = vld [vmem:[#allocation10 + $0xd20] sm:$0xff]
        %v921 = vld [vmem:[#allocation10 + $0xd28] sm:$0xff]
        %v922 = vld [vmem:[#allocation10 + $0xd30] sm:$0xff]
        %v923 = vld [vmem:[#allocation10 + $0xd38] sm:$0xff]
        %v924 = vld [vmem:[#allocation10 + $0xd40] sm:$0xff]
        %v925 = vld [vmem:[#allocation10 + $0xd48] sm:$0xff]
        %v926 = vld [vmem:[#allocation10 + $0xd50] sm:$0xff]
        %v927 = vld [vmem:[#allocation10 + $0xd58] sm:$0xff]
        %v928 = vld [vmem:[#allocation10 + $0xd60] sm:$0xff]
        %v929 = vld [vmem:[#allocation10 + $0xd68] sm:$0xff]
        %v930 = vld [vmem:[#allocation10 + $0xd70] sm:$0xff]
        %v931 = vld [vmem:[#allocation10 + $0xd78] sm:$0xff]
        %v932 = vld [vmem:[#allocation10 + $0xd80] sm:$0xff]
        %v933 = vld [vmem:[#allocation10 + $0xd88] sm:$0xff]
        %v934 = vld [vmem:[#allocation10 + $0xd90] sm:$0xff]
        %v935 = vld [vmem:[#allocation10 + $0xd98] sm:$0xff]
        %v936 = vld [vmem:[#allocation10 + $0xda0] sm:$0xff]
        %v937 = vld [vmem:[#allocation10 + $0xda8] sm:$0xff]
        %v938 = vld [vmem:[#allocation10 + $0xdb0] sm:$0xff]
        %v939 = vld [vmem:[#allocation10 + $0xdb8] sm:$0xff]
        %v940 = vld [vmem:[#allocation10 + $0xdc0] sm:$0xff]
        %v941 = vld [vmem:[#allocation10 + $0xdc8] sm:$0xff]
        %v942 = vld [vmem:[#allocation10 + $0xdd0] sm:$0xff]
        %v943 = vld [vmem:[#allocation10 + $0xdd8] sm:$0xff]
        %v944 = vld [vmem:[#allocation10 + $0xde0] sm:$0xff]
        %v945 = vld [vmem:[#allocation10 + $0xde8] sm:$0xff]
        %v946 = vld [vmem:[#allocation10 + $0xdf0] sm:$0xff]
        %v947 = vld [vmem:[#allocation10 + $0xdf8] sm:$0xff]
        %v948 = vld [vmem:[#allocation10 + $0xe00] sm:$0xff]
        %v949 = vld [vmem:[#allocation10 + $0xe08] sm:$0xff]
        %v950 = vld [vmem:[#allocation10 + $0xe10] sm:$0xff]
        %v951 = vld [vmem:[#allocation10 + $0xe18] sm:$0xff]
        %v952 = vld [vmem:[#allocation10 + $0xe20] sm:$0xff]
        %v953 = vld [vmem:[#allocation10 + $0xe28] sm:$0xff]
        %v954 = vld [vmem:[#allocation10 + $0xe30] sm:$0xff]
        %v955 = vld [vmem:[#allocation10 + $0xe38] sm:$0xff]
        %v956 = vld [vmem:[#allocation10 + $0xe40] sm:$0xff]
        %v957 = vld [vmem:[#allocation10 + $0xe48] sm:$0xff]
        %v958 = vld [vmem:[#allocation10 + $0xe50] sm:$0xff]
        %v959 = vld [vmem:[#allocation10 + $0xe58] sm:$0xff]
        %v960 = vld [vmem:[#allocation10 + $0xe60] sm:$0xff]
        %v961 = vld [vmem:[#allocation10 + $0xe68] sm:$0xff]
        %v962 = vld [vmem:[#allocation10 + $0xe70] sm:$0xff]
        %v963 = vld [vmem:[#allocation10 + $0xe78] sm:$0xff]
        %v964 = vld [vmem:[#allocation10 + $0xe80] sm:$0xff]
        %v965 = vld [vmem:[#allocation10 + $0xe88] sm:$0xff]
        %v966 = vld [vmem:[#allocation10 + $0xe90] sm:$0xff]
        %v967 = vld [vmem:[#allocation10 + $0xe98] sm:$0xff]
        %v968 = vld [vmem:[#allocation10 + $0xea0] sm:$0xff]
        %v969 = vld [vmem:[#allocation10 + $0xea8] sm:$0xff]
        %v970 = vld [vmem:[#allocation10 + $0xeb0] sm:$0xff]
        %v971 = vld [vmem:[#allocation10 + $0xeb8] sm:$0xff]
        %v972 = vld [vmem:[#allocation10 + $0xec0] sm:$0xff]
        %v973 = vld [vmem:[#allocation10 + $0xec8] sm:$0xff]
        %v974 = vld [vmem:[#allocation10 + $0xed0] sm:$0xff]
        %v975 = vld [vmem:[#allocation10 + $0xed8] sm:$0xff]
        %v976 = vld [vmem:[#allocation10 + $0xee0] sm:$0xff]
        %v977 = vld [vmem:[#allocation10 + $0xee8] sm:$0xff]
        %v978 = vld [vmem:[#allocation10 + $0xef0] sm:$0xff]
        %v979 = vld [vmem:[#allocation10 + $0xef8] sm:$0xff]
        %v980 = vld [vmem:[#allocation10 + $0xf00] sm:$0xff]
        %v981 = vld [vmem:[#allocation10 + $0xf08] sm:$0xff]
        %v982 = vld [vmem:[#allocation10 + $0xf10] sm:$0xff]
        %v983 = vld [vmem:[#allocation10 + $0xf18] sm:$0xff]
        %v984 = vld [vmem:[#allocation10 + $0xf20] sm:$0xff]
        %v985 = vld [vmem:[#allocation10 + $0xf28] sm:$0xff]
        %v986 = vld [vmem:[#allocation10 + $0xf30] sm:$0xff]
        %v987 = vld [vmem:[#allocation10 + $0xf38] sm:$0xff]
        %v988 = vld [vmem:[#allocation10 + $0xf40] sm:$0xff]
        %v989 = vld [vmem:[#allocation10 + $0xf48] sm:$0xff]
        %v990 = vld [vmem:[#allocation10 + $0xf50] sm:$0xff]
        %v991 = vld [vmem:[#allocation10 + $0xf58] sm:$0xff]
        %v992 = vld [vmem:[#allocation10 + $0xf60] sm:$0xff]
        %v993 = vld [vmem:[#allocation10 + $0xf68] sm:$0xff]
        %v994 = vld [vmem:[#allocation10 + $0xf70] sm:$0xff]
        %v995 = vld [vmem:[#allocation10 + $0xf78] sm:$0xff]
        %v996 = vld [vmem:[#allocation10 + $0xf80] sm:$0xff]
        %v997 = vld [vmem:[#allocation10 + $0xf88] sm:$0xff]
        %v998 = vld [vmem:[#allocation10 + $0xf90] sm:$0xff]
        %v999 = vld [vmem:[#allocation10 + $0xf98] sm:$0xff]
        %v1000 = vld [vmem:[#allocation10 + $0xfa0] sm:$0xff]
        %v1001 = vld [vmem:[#allocation10 + $0xfa8] sm:$0xff]
        %v1002 = vld [vmem:[#allocation10 + $0xfb0] sm:$0xff]
        %v1003 = vld [vmem:[#allocation10 + $0xfb8] sm:$0xff]
        %v1004 = vld [vmem:[#allocation10 + $0xfc0] sm:$0xff]
        %v1005 = vld [vmem:[#allocation10 + $0xfc8] sm:$0xff]
        %v1006 = vld [vmem:[#allocation10 + $0xfd0] sm:$0xff]
        %v1007 = vld [vmem:[#allocation10 + $0xfd8] sm:$0xff]
        %v1008 = vld [vmem:[#allocation10 + $0xfe0] sm:$0xff]
        %v1009 = vld [vmem:[#allocation10 + $0xfe8] sm:$0xff]
        %v1010 = vld [vmem:[#allocation10 + $0xff0] sm:$0xff]
        %v1011 = vld [vmem:[#allocation10 + $0xff8] sm:$0xff]
        %v1012 = vld [vmem:[#allocation10 + $0x1000] sm:$0xff]
        %v1013 = vld [vmem:[#allocation10 + $0x1008] sm:$0xff]
        %v1014 = vld [vmem:[#allocation10 + $0x1010] sm:$0xff]
        %v1015 = vld [vmem:[#allocation10 + $0x1018] sm:$0xff]
        %v1016 = vld [vmem:[#allocation10 + $0x1020] sm:$0xff]
        %v1017 = vld [vmem:[#allocation10 + $0x1028] sm:$0xff]
        %v1018 = vld [vmem:[#allocation10 + $0x1030] sm:$0xff]
        %v1019 = vld [vmem:[#allocation10 + $0x1038] sm:$0xff]
        %v1020 = vld [vmem:[#allocation10 + $0x1040] sm:$0xff]
        %v1021 = vld [vmem:[#allocation10 + $0x1048] sm:$0xff]
        %v1022 = vld [vmem:[#allocation10 + $0x1050] sm:$0xff]
        %v1023 = vld [vmem:[#allocation10 + $0x1058] sm:$0xff]
        %v1024 = vld [vmem:[#allocation10 + $0x1060] sm:$0xff]
        %v1025 = vld [vmem:[#allocation10 + $0x1068] sm:$0xff]
        %v1026 = vld [vmem:[#allocation10 + $0x1070] sm:$0xff]
        %v1027 = vld [vmem:[#allocation10 + $0x1078] sm:$0xff]
        %v1028 = vld [vmem:[#allocation10 + $0x1080] sm:$0xff]
        %v1029 = vld [vmem:[#allocation10 + $0x1088] sm:$0xff]
        %v1030 = vld [vmem:[#allocation10 + $0x1090] sm:$0xff]
        %v1031 = vld [vmem:[#allocation10 + $0x1098] sm:$0xff]
        %v1032 = vld [vmem:[#allocation10 + $0x10a0] sm:$0xff]
        %v1033 = vld [vmem:[#allocation10 + $0x10a8] sm:$0xff]
        %v1034 = vld [vmem:[#allocation10 + $0x10b0] sm:$0xff]
        %v1035 = vld [vmem:[#allocation10 + $0x10b8] sm:$0xff]
        %v1036 = vld [vmem:[#allocation10 + $0x10c0] sm:$0xff]
        %v1037 = vld [vmem:[#allocation10 + $0x10c8] sm:$0xff]
        %v1038 = vld [vmem:[#allocation10 + $0x10d0] sm:$0xff]
        %v1039 = vld [vmem:[#allocation10 + $0x10d8] sm:$0xff]
        %v1040 = vld [vmem:[#allocation10 + $0x10e0] sm:$0xff]
        %v1041 = vld [vmem:[#allocation10 + $0x10e8] sm:$0xff]
        %v1042 = vld [vmem:[#allocation10 + $0x10f0] sm:$0xff]
        %v1043 = vld [vmem:[#allocation10 + $0x10f8] sm:$0xff]
        %v1044 = vld [vmem:[#allocation10 + $0x1100] sm:$0xff]
        %v1045 = vld [vmem:[#allocation10 + $0x1108] sm:$0xff]
        %v1046 = vld [vmem:[#allocation10 + $0x1110] sm:$0xff]
        %v1047 = vld [vmem:[#allocation10 + $0x1118] sm:$0xff]
        %v1048 = vld [vmem:[#allocation10 + $0x1120] sm:$0xff]
        %v1049 = vld [vmem:[#allocation10 + $0x1128] sm:$0xff]
        %v1050 = vld [vmem:[#allocation10 + $0x1130] sm:$0xff]
        %v1051 = vld [vmem:[#allocation10 + $0x1138] sm:$0xff]
        %v1052 = vld [vmem:[#allocation10 + $0x1140] sm:$0xff]
        %v1053 = vld [vmem:[#allocation10 + $0x1148] sm:$0xff]
        %v1054 = vld [vmem:[#allocation10 + $0x1150] sm:$0xff]
        %v1055 = vld [vmem:[#allocation10 + $0x1158] sm:$0xff]
        %v1056 = vld [vmem:[#allocation10 + $0x1160] sm:$0xff]
        %v1057 = vld [vmem:[#allocation10 + $0x1168] sm:$0xff]
        %v1058 = vld [vmem:[#allocation10 + $0x1170] sm:$0xff]
        %v1059 = vld [vmem:[#allocation10 + $0x1178] sm:$0xff]
        %v1060 = vld [vmem:[#allocation10 + $0x1180] sm:$0xff]
        %v1061 = vld [vmem:[#allocation10 + $0x1188] sm:$0xff]
        %v1062 = vld [vmem:[#allocation10 + $0x1190] sm:$0xff]
        %v1063 = vld [vmem:[#allocation10 + $0x1198] sm:$0xff]
        %v1064 = vld [vmem:[#allocation10 + $0x11a0] sm:$0xff]
        %v1065 = vld [vmem:[#allocation10 + $0x11a8] sm:$0xff]
        %v1066 = vld [vmem:[#allocation10 + $0x11b0] sm:$0xff]
        %v1067 = vld [vmem:[#allocation10 + $0x11b8] sm:$0xff]
        %v1068 = vld [vmem:[#allocation10 + $0x11c0] sm:$0xff]
        %v1069 = vld [vmem:[#allocation10 + $0x11c8] sm:$0xff]
        %v1070 = vld [vmem:[#allocation10 + $0x11d0] sm:$0xff]
        %v1071 = vld [vmem:[#allocation10 + $0x11d8] sm:$0xff]
        %v1072 = vld [vmem:[#allocation10 + $0x11e0] sm:$0xff]
        %v1073 = vld [vmem:[#allocation10 + $0x11e8] sm:$0xff]
        %v1074 = vld [vmem:[#allocation10 + $0x11f0] sm:$0xff]
        %v1075 = vld [vmem:[#allocation10 + $0x11f8] sm:$0xff]
        %v1076 = vld [vmem:[#allocation10 + $0x1200] sm:$0xff]
        %v1077 = vld [vmem:[#allocation10 + $0x1208] sm:$0xff]
        %v1078 = vld [vmem:[#allocation10 + $0x1210] sm:$0xff]
        %v1079 = vld [vmem:[#allocation10 + $0x1218] sm:$0xff]
        %v1080 = vld [vmem:[#allocation10 + $0x1220] sm:$0xff]
        %v1081 = vld [vmem:[#allocation10 + $0x1228] sm:$0xff]
        %v1082 = vld [vmem:[#allocation10 + $0x1230] sm:$0xff]
        %v1083 = vld [vmem:[#allocation10 + $0x1238] sm:$0xff]
        %v1084 = vld [vmem:[#allocation10 + $0x1240] sm:$0xff]
        %v1085 = vld [vmem:[#allocation10 + $0x1248] sm:$0xff]
        %v1086 = vld [vmem:[#allocation10 + $0x1250] sm:$0xff]
        %v1087 = vld [vmem:[#allocation10 + $0x1258] sm:$0xff]
        %v1088 = vld [vmem:[#allocation10 + $0x1260] sm:$0xff]
        %v1089 = vld [vmem:[#allocation10 + $0x1268] sm:$0xff]
        %v1090 = vld [vmem:[#allocation10 + $0x1270] sm:$0xff]
        %v1091 = vld [vmem:[#allocation10 + $0x1278] sm:$0xff]
        %v1092 = vld [vmem:[#allocation10 + $0x1280] sm:$0xff]
        %v1093 = vld [vmem:[#allocation10 + $0x1288] sm:$0xff]
        %v1094 = vld [vmem:[#allocation10 + $0x1290] sm:$0xff]
        %v1095 = vld [vmem:[#allocation10 + $0x1298] sm:$0xff]
        %v1096 = vld [vmem:[#allocation10 + $0x12a0] sm:$0xff]
        %v1097 = vld [vmem:[#allocation10 + $0x12a8] sm:$0xff]
        %v1098 = vld [vmem:[#allocation10 + $0x12b0] sm:$0xff]
        %v1099 = vld [vmem:[#allocation10 + $0x12b8] sm:$0xff]
        %v1100 = vld [vmem:[#allocation10 + $0x12c0] sm:$0xff]
        %v1101 = vld [vmem:[#allocation10 + $0x12c8] sm:$0xff]
        %v1102 = vld [vmem:[#allocation10 + $0x12d0] sm:$0xff]
        %v1103 = vld [vmem:[#allocation10 + $0x12d8] sm:$0xff]
        %v1104 = vld [vmem:[#allocation10 + $0x12e0] sm:$0xff]
        %v1105 = vld [vmem:[#allocation10 + $0x12e8] sm:$0xff]
        %v1106 = vld [vmem:[#allocation10 + $0x12f0] sm:$0xff]
        %v1107 = vld [vmem:[#allocation10 + $0x12f8] sm:$0xff]
        %v1108 = vld [vmem:[#allocation10 + $0x1300] sm:$0xff]
        %v1109 = vld [vmem:[#allocation10 + $0x1308] sm:$0xff]
        %v1110 = vld [vmem:[#allocation10 + $0x1310] sm:$0xff]
        %v1111 = vld [vmem:[#allocation10 + $0x1318] sm:$0xff]
        %v1112 = vld [vmem:[#allocation10 + $0x1320] sm:$0xff]
        %v1113 = vld [vmem:[#allocation10 + $0x1328] sm:$0xff]
        %v1114 = vld [vmem:[#allocation10 + $0x1330] sm:$0xff]
        %v1115 = vld [vmem:[#allocation10 + $0x1338] sm:$0xff]
        %v1116 = vld [vmem:[#allocation10 + $0x1340] sm:$0xff]
        %v1117 = vld [vmem:[#allocation10 + $0x1348] sm:$0xff]
        %v1118 = vld [vmem:[#allocation10 + $0x1350] sm:$0xff]
        %v1119 = vld [vmem:[#allocation10 + $0x1358] sm:$0xff]
        %v1120 = vld [vmem:[#allocation10 + $0x1360] sm:$0xff]
        %v1121 = vld [vmem:[#allocation10 + $0x1368] sm:$0xff]
        %v1122 = vld [vmem:[#allocation10 + $0x1370] sm:$0xff]
        %v1123 = vld [vmem:[#allocation10 + $0x1378] sm:$0xff]
        %v1124 = vld [vmem:[#allocation10 + $0x1380] sm:$0xff]
        %v1125 = vld [vmem:[#allocation10 + $0x1388] sm:$0xff]
        %v1126 = vld [vmem:[#allocation10 + $0x1390] sm:$0xff]
        %v1127 = vld [vmem:[#allocation10 + $0x1398] sm:$0xff]
        %v1128 = vld [vmem:[#allocation10 + $0x13a0] sm:$0xff]
        %v1129 = vld [vmem:[#allocation10 + $0x13a8] sm:$0xff]
        %v1130 = vld [vmem:[#allocation10 + $0x13b0] sm:$0xff]
        %v1131 = vld [vmem:[#allocation10 + $0x13b8] sm:$0xff]
        %v1132 = vld [vmem:[#allocation10 + $0x13c0] sm:$0xff]
        %v1133 = vld [vmem:[#allocation10 + $0x13c8] sm:$0xff]
        %v1134 = vld [vmem:[#allocation10 + $0x13d0] sm:$0xff]
        %v1135 = vld [vmem:[#allocation10 + $0x13d8] sm:$0xff]
        %v1136 = vld [vmem:[#allocation10 + $0x13e0] sm:$0xff]
        %v1137 = vld [vmem:[#allocation10 + $0x13e8] sm:$0xff]
        %v1138 = vld [vmem:[#allocation10 + $0x13f0] sm:$0xff]
        %v1139 = vld [vmem:[#allocation10 + $0x13f8] sm:$0xff]
        %v1140 = vld [vmem:[#allocation10 + $0x1400] sm:$0xff]
        %v1141 = vld [vmem:[#allocation10 + $0x1408] sm:$0xff]
        %v1142 = vld [vmem:[#allocation10 + $0x1410] sm:$0xff]
        %v1143 = vld [vmem:[#allocation10 + $0x1418] sm:$0xff]
        %v1144 = vld [vmem:[#allocation10 + $0x1420] sm:$0xff]
        %v1145 = vld [vmem:[#allocation10 + $0x1428] sm:$0xff]
        %v1146 = vld [vmem:[#allocation10 + $0x1430] sm:$0xff]
        %v1147 = vld [vmem:[#allocation10 + $0x1438] sm:$0xff]
        %v1148 = vld [vmem:[#allocation10 + $0x1440] sm:$0xff]
        %v1149 = vld [vmem:[#allocation10 + $0x1448] sm:$0xff]
        %v1150 = vld [vmem:[#allocation10 + $0x1450] sm:$0xff]
        %v1151 = vld [vmem:[#allocation10 + $0x1458] sm:$0xff]
        %v1152 = vld [vmem:[#allocation10 + $0x1460] sm:$0xff]
        %v1153 = vld [vmem:[#allocation10 + $0x1468] sm:$0xff]
        %v1154 = vld [vmem:[#allocation10 + $0x1470] sm:$0xff]
        %v1155 = vld [vmem:[#allocation10 + $0x1478] sm:$0xff]
        %v1156 = vld [vmem:[#allocation10 + $0x1480] sm:$0xff]
        %v1157 = vld [vmem:[#allocation10 + $0x1488] sm:$0xff]
        %v1158 = vld [vmem:[#allocation10 + $0x1490] sm:$0xff]
        %v1159 = vld [vmem:[#allocation10 + $0x1498] sm:$0xff]
        %v1160 = vld [vmem:[#allocation10 + $0x14a0] sm:$0xff]
        %v1161 = vld [vmem:[#allocation10 + $0x14a8] sm:$0xff]
        %v1162 = vld [vmem:[#allocation10 + $0x14b0] sm:$0xff]
        %v1163 = vld [vmem:[#allocation10 + $0x14b8] sm:$0xff]
        %v1164 = vld [vmem:[#allocation10 + $0x14c0] sm:$0xff]
        %v1165 = vld [vmem:[#allocation10 + $0x14c8] sm:$0xff]
        %v1166 = vld [vmem:[#allocation10 + $0x14d0] sm:$0xff]
        %v1167 = vld [vmem:[#allocation10 + $0x14d8] sm:$0xff]
        %v1168 = vld [vmem:[#allocation10 + $0x14e0] sm:$0xff]
        %v1169 = vld [vmem:[#allocation10 + $0x14e8] sm:$0xff]
        %v1170 = vld [vmem:[#allocation10 + $0x14f0] sm:$0xff]
        %v1171 = vld [vmem:[#allocation10 + $0x14f8] sm:$0xff]
        %v1172 = vld [vmem:[#allocation10 + $0x1500] sm:$0xff]
        %v1173 = vld [vmem:[#allocation10 + $0x1508] sm:$0xff]
        %v1174 = vld [vmem:[#allocation10 + $0x1510] sm:$0xff]
        %v1175 = vld [vmem:[#allocation10 + $0x1518] sm:$0xff]
        %v1176 = vld [vmem:[#allocation10 + $0x1520] sm:$0xff]
        %v1177 = vld [vmem:[#allocation10 + $0x1528] sm:$0xff]
        %v1178 = vld [vmem:[#allocation10 + $0x1530] sm:$0xff]
        %v1179 = vld [vmem:[#allocation10 + $0x1538] sm:$0xff]
        %v1180 = vld [vmem:[#allocation10 + $0x1540] sm:$0xff]
        %v1181 = vld [vmem:[#allocation10 + $0x1548] sm:$0xff]
        %v1182 = vld [vmem:[#allocation10 + $0x1550] sm:$0xff]
        %v1183 = vld [vmem:[#allocation10 + $0x1558] sm:$0xff]
        %v1184 = vld [vmem:[#allocation10 + $0x1560] sm:$0xff]
        %v1185 = vld [vmem:[#allocation10 + $0x1568] sm:$0xff]
        %v1186 = vld [vmem:[#allocation10 + $0x1570] sm:$0xff]
        %v1187 = vld [vmem:[#allocation10 + $0x1578] sm:$0xff]
        %v1188 = vld [vmem:[#allocation10 + $0x1580] sm:$0xff]
        %v1189 = vld [vmem:[#allocation10 + $0x1588] sm:$0xff]
        %v1190 = vld [vmem:[#allocation10 + $0x1590] sm:$0xff]
        %v1191 = vld [vmem:[#allocation10 + $0x1598] sm:$0xff]
        %v1192 = vld [vmem:[#allocation10 + $0x15a0] sm:$0xff]
        %v1193 = vld [vmem:[#allocation10 + $0x15a8] sm:$0xff]
        %v1194 = vld [vmem:[#allocation10 + $0x15b0] sm:$0xff]
        %v1195 = vld [vmem:[#allocation10 + $0x15b8] sm:$0xff]
        %v1196 = vld [vmem:[#allocation10 + $0x15c0] sm:$0xff]
        %v1197 = vld [vmem:[#allocation10 + $0x15c8] sm:$0xff]
        %v1198 = vld [vmem:[#allocation10 + $0x15d0] sm:$0xff]
        %v1199 = vld [vmem:[#allocation10 + $0x15d8] sm:$0xff]
        %v1200 = vld [vmem:[#allocation10 + $0x15e0] sm:$0xff]
        %v1201 = vld [vmem:[#allocation10 + $0x15e8] sm:$0xff]
        %v1202 = vld [vmem:[#allocation10 + $0x15f0] sm:$0xff]
        %v1203 = vld [vmem:[#allocation10 + $0x15f8] sm:$0xff]
        %v1204 = vld [vmem:[#allocation10 + $0x1600] sm:$0xff]
        %v1205 = vld [vmem:[#allocation10 + $0x1608] sm:$0xff]
        %v1206 = vld [vmem:[#allocation10 + $0x1610] sm:$0xff]
        %v1207 = vld [vmem:[#allocation10 + $0x1618] sm:$0xff]
        %v1208 = vld [vmem:[#allocation10 + $0x1620] sm:$0xff]
        %v1209 = vld [vmem:[#allocation10 + $0x1628] sm:$0xff]
        %v1210 = vld [vmem:[#allocation10 + $0x1630] sm:$0xff]
        %v1211 = vld [vmem:[#allocation10 + $0x1638] sm:$0xff]
        %v1212 = vld [vmem:[#allocation10 + $0x1640] sm:$0xff]
        %v1213 = vld [vmem:[#allocation10 + $0x1648] sm:$0xff]
        %v1214 = vld [vmem:[#allocation10 + $0x1650] sm:$0xff]
        %v1215 = vld [vmem:[#allocation10 + $0x1658] sm:$0xff]
        %v1216 = vld [vmem:[#allocation10 + $0x1660] sm:$0xff]
        %v1217 = vld [vmem:[#allocation10 + $0x1668] sm:$0xff]
        %v1218 = vld [vmem:[#allocation10 + $0x1670] sm:$0xff]
        %v1219 = vld [vmem:[#allocation10 + $0x1678] sm:$0xff]
        %v1220 = vld [vmem:[#allocation10 + $0x1680] sm:$0xff]
        %v1221 = vld [vmem:[#allocation10 + $0x1688] sm:$0xff]
        %v1222 = vld [vmem:[#allocation10 + $0x1690] sm:$0xff]
        %v1223 = vld [vmem:[#allocation10 + $0x1698] sm:$0xff]
        %v1224 = vld [vmem:[#allocation10 + $0x16a0] sm:$0xff]
        %v1225 = vld [vmem:[#allocation10 + $0x16a8] sm:$0xff]
        %v1226 = vld [vmem:[#allocation10 + $0x16b0] sm:$0xff]
        %v1227 = vld [vmem:[#allocation10 + $0x16b8] sm:$0xff]
        %v1228 = vld [vmem:[#allocation10 + $0x16c0] sm:$0xff]
        %v1229 = vld [vmem:[#allocation10 + $0x16c8] sm:$0xff]
        %v1230 = vld [vmem:[#allocation10 + $0x16d0] sm:$0xff]
        %v1231 = vld [vmem:[#allocation10 + $0x16d8] sm:$0xff]
        %v1232 = vld [vmem:[#allocation10 + $0x16e0] sm:$0xff]
        %v1233 = vld [vmem:[#allocation10 + $0x16e8] sm:$0xff]
        %v1234 = vld [vmem:[#allocation10 + $0x16f0] sm:$0xff]
        %v1235 = vld [vmem:[#allocation10 + $0x16f8] sm:$0xff]
        %v1236 = vld [vmem:[#allocation10 + $0x1700] sm:$0xff]
        %v1237 = vld [vmem:[#allocation10 + $0x1708] sm:$0xff]
        %v1238 = vld [vmem:[#allocation10 + $0x1710] sm:$0xff]
        %v1239 = vld [vmem:[#allocation10 + $0x1718] sm:$0xff]
        %v1240 = vld [vmem:[#allocation10 + $0x1720] sm:$0xff]
        %v1241 = vld [vmem:[#allocation10 + $0x1728] sm:$0xff]
        %v1242 = vld [vmem:[#allocation10 + $0x1730] sm:$0xff]
        %v1243 = vld [vmem:[#allocation10 + $0x1738] sm:$0xff]
        %v1244 = vld [vmem:[#allocation10 + $0x1740] sm:$0xff]
        %v1245 = vld [vmem:[#allocation10 + $0x1748] sm:$0xff]
        %v1246 = vld [vmem:[#allocation10 + $0x1750] sm:$0xff]
        %v1247 = vld [vmem:[#allocation10 + $0x1758] sm:$0xff]
        %v1248 = vld [vmem:[#allocation10 + $0x1760] sm:$0xff]
        %v1249 = vld [vmem:[#allocation10 + $0x1768] sm:$0xff]
        %v1250 = vld [vmem:[#allocation10 + $0x1770] sm:$0xff]
        %v1251 = vld [vmem:[#allocation10 + $0x1778] sm:$0xff]
        %v1252 = vld [vmem:[#allocation10 + $0x1780] sm:$0xff]
        %v1253 = vld [vmem:[#allocation10 + $0x1788] sm:$0xff]
        %v1254 = vld [vmem:[#allocation10 + $0x1790] sm:$0xff]
        %v1255 = vld [vmem:[#allocation10 + $0x1798] sm:$0xff]
        %v1256 = vld [vmem:[#allocation10 + $0x17a0] sm:$0xff]
        %v1257 = vld [vmem:[#allocation10 + $0x17a8] sm:$0xff]
        %v1258 = vld [vmem:[#allocation10 + $0x17b0] sm:$0xff]
        %v1259 = vld [vmem:[#allocation10 + $0x17b8] sm:$0xff]
        %v1260 = vld [vmem:[#allocation10 + $0x17c0] sm:$0xff]
        %v1261 = vld [vmem:[#allocation10 + $0x17c8] sm:$0xff]
        %v1262 = vld [vmem:[#allocation10 + $0x17d0] sm:$0xff]
        %v1263 = vld [vmem:[#allocation10 + $0x17d8] sm:$0xff]
        %v1264 = vld [vmem:[#allocation10 + $0x17e0] sm:$0xff]
        %v1265 = vld [vmem:[#allocation10 + $0x17e8] sm:$0xff]
        %v1266 = vld [vmem:[#allocation10 + $0x17f0] sm:$0xff]
        %v1267 = vld [vmem:[#allocation10 + $0x17f8] sm:$0xff]
        %v1268 = vld [vmem:[#allocation10 + $0x1800] sm:$0xff]
        %v1269 = vld [vmem:[#allocation10 + $0x1808] sm:$0xff]
        %v1270 = vld [vmem:[#allocation10 + $0x1810] sm:$0xff]
        %v1271 = vld [vmem:[#allocation10 + $0x1818] sm:$0xff]
        %v1272 = vld [vmem:[#allocation10 + $0x1820] sm:$0xff]
        %v1273 = vld [vmem:[#allocation10 + $0x1828] sm:$0xff]
        %v1274 = vld [vmem:[#allocation10 + $0x1830] sm:$0xff]
        %v1275 = vld [vmem:[#allocation10 + $0x1838] sm:$0xff]
        %v1276 = vld [vmem:[#allocation10 + $0x1840] sm:$0xff]
        %v1277 = vld [vmem:[#allocation10 + $0x1848] sm:$0xff]
        %v1278 = vld [vmem:[#allocation10 + $0x1850] sm:$0xff]
        %v1279 = vld [vmem:[#allocation10 + $0x1858] sm:$0xff]
        %v1280 = vld [vmem:[#allocation10 + $0x1860] sm:$0xff]
        %v1281 = vld [vmem:[#allocation10 + $0x1868] sm:$0xff]
        %v1282 = vld [vmem:[#allocation10 + $0x1870] sm:$0xff]
        %v1283 = vld [vmem:[#allocation10 + $0x1878] sm:$0xff]
        %v1284 = vld [vmem:[#allocation10 + $0x1880] sm:$0xff]
        %v1285 = vld [vmem:[#allocation10 + $0x1888] sm:$0xff]
        %v1286 = vld [vmem:[#allocation10 + $0x1890] sm:$0xff]
        %v1287 = vld [vmem:[#allocation10 + $0x1898] sm:$0xff]
        %v1288 = vld [vmem:[#allocation10 + $0x18a0] sm:$0xff]
        %v1289 = vld [vmem:[#allocation10 + $0x18a8] sm:$0xff]
        %v1290 = vld [vmem:[#allocation10 + $0x18b0] sm:$0xff]
        %v1291 = vld [vmem:[#allocation10 + $0x18b8] sm:$0xff]
        %v1292 = vld [vmem:[#allocation10 + $0x18c0] sm:$0xff]
        %v1293 = vld [vmem:[#allocation10 + $0x18c8] sm:$0xff]
        %v1294 = vld [vmem:[#allocation10 + $0x18d0] sm:$0xff]
        %v1295 = vld [vmem:[#allocation10 + $0x18d8] sm:$0xff]
        %v1296 = vld [vmem:[#allocation10 + $0x18e0] sm:$0xff]
        %v1297 = vld [vmem:[#allocation10 + $0x18e8] sm:$0xff]
        %v1298 = vld [vmem:[#allocation10 + $0x18f0] sm:$0xff]
        %v1299 = vld [vmem:[#allocation10 + $0x18f8] sm:$0xff]
        %v1300 = vld [vmem:[#allocation10 + $0x1900] sm:$0xff]
        %v1301 = vld [vmem:[#allocation10 + $0x1908] sm:$0xff]
        %v1302 = vld [vmem:[#allocation10 + $0x1910] sm:$0xff]
        %v1303 = vld [vmem:[#allocation10 + $0x1918] sm:$0xff]
        %v1304 = vld [vmem:[#allocation10 + $0x1920] sm:$0xff]
        %v1305 = vld [vmem:[#allocation10 + $0x1928] sm:$0xff]
        %v1306 = vld [vmem:[#allocation10 + $0x1930] sm:$0xff]
        %v1307 = vld [vmem:[#allocation10 + $0x1938] sm:$0xff]
        %v1308 = vld [vmem:[#allocation10 + $0x1940] sm:$0xff]
        %v1309 = vld [vmem:[#allocation10 + $0x1948] sm:$0xff]
        %v1310 = vld [vmem:[#allocation10 + $0x1950] sm:$0xff]
        %v1311 = vld [vmem:[#allocation10 + $0x1958] sm:$0xff]
        %v1312 = vld [vmem:[#allocation10 + $0x1960] sm:$0xff]
        %v1313 = vld [vmem:[#allocation10 + $0x1968] sm:$0xff]
        %v1314 = vld [vmem:[#allocation10 + $0x1970] sm:$0xff]
        %v1315 = vld [vmem:[#allocation10 + $0x1978] sm:$0xff]
        %v1316 = vld [vmem:[#allocation10 + $0x1980] sm:$0xff]
        %v1317 = vld [vmem:[#allocation10 + $0x1988] sm:$0xff]
        %v1318 = vld [vmem:[#allocation10 + $0x1990] sm:$0xff]
        %v1319 = vld [vmem:[#allocation10 + $0x1998] sm:$0xff]
        %v1320 = vld [vmem:[#allocation10 + $0x19a0] sm:$0xff]
        %v1321 = vld [vmem:[#allocation10 + $0x19a8] sm:$0xff]
        %v1322 = vld [vmem:[#allocation10 + $0x19b0] sm:$0xff]
        %v1323 = vld [vmem:[#allocation10 + $0x19b8] sm:$0xff]
        %v1324 = vld [vmem:[#allocation10 + $0x19c0] sm:$0xff]
        %v1325 = vld [vmem:[#allocation10 + $0x19c8] sm:$0xff]
        %v1326 = vld [vmem:[#allocation10 + $0x19d0] sm:$0xff]
        %v1327 = vld [vmem:[#allocation10 + $0x19d8] sm:$0xff]
        %v1328 = vld [vmem:[#allocation10 + $0x19e0] sm:$0xff]
        %v1329 = vld [vmem:[#allocation10 + $0x19e8] sm:$0xff]
        %v1330 = vld [vmem:[#allocation10 + $0x19f0] sm:$0xff]
        %v1331 = vld [vmem:[#allocation10 + $0x19f8] sm:$0xff]
        %v1332 = vld [vmem:[#allocation10 + $0x1a00] sm:$0xff]
        %v1333 = vld [vmem:[#allocation10 + $0x1a08] sm:$0xff]
        %v1334 = vld [vmem:[#allocation10 + $0x1a10] sm:$0xff]
        %v1335 = vld [vmem:[#allocation10 + $0x1a18] sm:$0xff]
        %v1336 = vld [vmem:[#allocation10 + $0x1a20] sm:$0xff]
        %v1337 = vld [vmem:[#allocation10 + $0x1a28] sm:$0xff]
        %v1338 = vld [vmem:[#allocation10 + $0x1a30] sm:$0xff]
        %v1339 = vld [vmem:[#allocation10 + $0x1a38] sm:$0xff]
        %v1340 = vld [vmem:[#allocation10 + $0x1a40] sm:$0xff]
        %v1341 = vld [vmem:[#allocation10 + $0x1a48] sm:$0xff]
        %v1342 = vld [vmem:[#allocation10 + $0x1a50] sm:$0xff]
        %v1343 = vld [vmem:[#allocation10 + $0x1a58] sm:$0xff]
        %v1344 = vld [vmem:[#allocation10 + $0x1a60] sm:$0xff]
        %v1345 = vld [vmem:[#allocation10 + $0x1a68] sm:$0xff]
        %v1346 = vld [vmem:[#allocation10 + $0x1a70] sm:$0xff]
        %v1347 = vld [vmem:[#allocation10 + $0x1a78] sm:$0xff]
        %v1348 = vld [vmem:[#allocation10 + $0x1a80] sm:$0xff]
        %v1349 = vld [vmem:[#allocation10 + $0x1a88] sm:$0xff]
        %v1350 = vld [vmem:[#allocation10 + $0x1a90] sm:$0xff]
        %v1351 = vld [vmem:[#allocation10 + $0x1a98] sm:$0xff]
        %v1352 = vld [vmem:[#allocation10 + $0x1aa0] sm:$0xff]
        %v1353 = vld [vmem:[#allocation10 + $0x1aa8] sm:$0xff]
        %v1354 = vld [vmem:[#allocation10 + $0x1ab0] sm:$0xff]
        %v1355 = vld [vmem:[#allocation10 + $0x1ab8] sm:$0xff]
        %v1356 = vld [vmem:[#allocation10 + $0x1ac0] sm:$0xff]
        %v1357 = vld [vmem:[#allocation10 + $0x1ac8] sm:$0xff]
        %v1358 = vld [vmem:[#allocation10 + $0x1ad0] sm:$0xff]
        %v1359 = vld [vmem:[#allocation10 + $0x1ad8] sm:$0xff]
        %v1360 = vld [vmem:[#allocation10 + $0x1ae0] sm:$0xff]
        %v1361 = vld [vmem:[#allocation10 + $0x1ae8] sm:$0xff]
        %v1362 = vld [vmem:[#allocation10 + $0x1af0] sm:$0xff]
        %v1363 = vld [vmem:[#allocation10 + $0x1af8] sm:$0xff]
        %v1364 = vld [vmem:[#allocation12] sm:$0xff]
        %v1365 = vld [vmem:[#allocation12 + $0x8] sm:$0xff]
        %v1366 = vld [vmem:[#allocation12 + $0x10] sm:$0x3]
        %v1370 = vlaneseq
        %v1371 = vshrl.u32 %v1370, 7
        %v1372 = vsub.s32 0, %v1371
        %v1373 = vrot.slane %v1364, %v1372
        %v1374 = vlaneseq
        %v1375 = vshrl.u32 %v1374, 7
        %v1376 = vsub.s32 1, %v1375
        %v1377 = vrot.slane %v1364, %v1376
        %v1378 = vlaneseq
        %v1379 = vshrl.u32 %v1378, 7
        %v1380 = vsub.s32 2, %v1379
        %v1381 = vrot.slane %v1364, %v1380
        %v1382 = vlaneseq
        %v1383 = vshrl.u32 %v1382, 7
        %v1384 = vsub.s32 3, %v1383
        %v1385 = vrot.slane %v1364, %v1384
        %v1386 = vlaneseq
        %v1387 = vshrl.u32 %v1386, 7
        %v1388 = vsub.s32 4, %v1387
        %v1389 = vrot.slane %v1364, %v1388
        %v1390 = vlaneseq
        %v1391 = vshrl.u32 %v1390, 7
        %v1392 = vsub.s32 5, %v1391
        %v1393 = vrot.slane %v1364, %v1392
        %v1394 = vlaneseq
        %v1395 = vshrl.u32 %v1394, 7
        %v1396 = vsub.s32 6, %v1395
        %v1397 = vrot.slane %v1364, %v1396
        %v1398 = vlaneseq
        %v1399 = vshrl.u32 %v1398, 7
        %v1400 = vsub.s32 7, %v1399
        %v1401 = vrot.slane %v1364, %v1400
        %v1402 = vlaneseq
        %v1403 = vshrl.u32 %v1402, 7
        %v1404 = vsub.s32 0, %v1403
        %v1405 = vrot.slane %v1365, %v1404
        %v1406 = vlaneseq
        %v1407 = vshrl.u32 %v1406, 7
        %v1408 = vsub.s32 1, %v1407
        %v1409 = vrot.slane %v1365, %v1408
        %v1410 = vlaneseq
        %v1411 = vshrl.u32 %v1410, 7
        %v1412 = vsub.s32 2, %v1411
        %v1413 = vrot.slane %v1365, %v1412
        %v1414 = vlaneseq
        %v1415 = vshrl.u32 %v1414, 7
        %v1416 = vsub.s32 3, %v1415
        %v1417 = vrot.slane %v1365, %v1416
        %v1418 = vlaneseq
        %v1419 = vshrl.u32 %v1418, 7
        %v1420 = vsub.s32 4, %v1419
        %v1421 = vrot.slane %v1365, %v1420
        %v1422 = vlaneseq
        %v1423 = vshrl.u32 %v1422, 7
        %v1424 = vsub.s32 5, %v1423
        %v1425 = vrot.slane %v1365, %v1424
        %v1426 = vlaneseq
        %v1427 = vshrl.u32 %v1426, 7
        %v1428 = vsub.s32 6, %v1427
        %v1429 = vrot.slane %v1365, %v1428
        %v1430 = vlaneseq
        %v1431 = vshrl.u32 %v1430, 7
        %v1432 = vsub.s32 7, %v1431
        %v1433 = vrot.slane %v1365, %v1432
        %v1434 = vlaneseq
        %v1435 = vshrl.u32 %v1434, 7
        %v1436 = vsub.s32 0, %v1435
        %v1437 = vrot.slane %v1366, %v1436
        %v1438 = vlaneseq
        %v1439 = vshrl.u32 %v1438, 7
        %v1440 = vsub.s32 1, %v1439
        %v1441 = vrot.slane %v1366, %v1440
        %v2324 = vunpack.c.l.b16 %v500
        %v2325 = vunpack.c.h.b16 %v500
        %v2326 = vunpack.c.l.b16 %v501
        %v2327 = vunpack.c.h.b16 %v501
        %v2328 = vunpack.c.l.b16 %v502
        %v2329 = vunpack.c.h.b16 %v502
        %v2330 = vunpack.c.l.b16 %v503
        %v2331 = vunpack.c.h.b16 %v503
        %v2332 = vunpack.c.l.b16 %v504
        %v2333 = vunpack.c.h.b16 %v504
        %v2334 = vunpack.c.l.b16 %v505
        %v2335 = vunpack.c.h.b16 %v505
        %v2336 = vunpack.c.l.b16 %v506
        %v2337 = vunpack.c.h.b16 %v506
        %v2338 = vunpack.c.l.b16 %v507
        %v2339 = vunpack.c.h.b16 %v507
        %v2340 = vunpack.c.l.b16 %v508
        %v2341 = vunpack.c.h.b16 %v508
        %v2342 = vunpack.c.l.b16 %v509
        %v2343 = vunpack.c.h.b16 %v509
        %v2344 = vunpack.c.l.b16 %v510
        %v2345 = vunpack.c.h.b16 %v510
        %v2346 = vunpack.c.l.b16 %v511
        %v2347 = vunpack.c.h.b16 %v511
        %v2348 = vunpack.c.l.b16 %v512
        %v2349 = vunpack.c.h.b16 %v512
        %v2350 = vunpack.c.l.b16 %v513
        %v2351 = vunpack.c.h.b16 %v513
        %v2352 = vunpack.c.l.b16 %v514
        %v2353 = vunpack.c.h.b16 %v514
        %v2354 = vunpack.c.l.b16 %v515
        %v2355 = vunpack.c.h.b16 %v515
        %v2356 = vunpack.c.l.b16 %v516
        %v2357 = vunpack.c.h.b16 %v516
        %v2358 = vunpack.c.l.b16 %v517
        %v2359 = vunpack.c.h.b16 %v517
        %v2360 = vunpack.c.l.b16 %v518
        %v2361 = vunpack.c.h.b16 %v518
        %v2362 = vunpack.c.l.b16 %v519
        %v2363 = vunpack.c.h.b16 %v519
        %v2364 = vunpack.c.l.b16 %v520
        %v2365 = vunpack.c.h.b16 %v520
        %v2366 = vunpack.c.l.b16 %v521
        %v2367 = vunpack.c.h.b16 %v521
        %v2368 = vunpack.c.l.b16 %v522
        %v2369 = vunpack.c.h.b16 %v522
        %v2370 = vunpack.c.l.b16 %v523
        %v2371 = vunpack.c.h.b16 %v523
        %v2372 = vunpack.c.l.b16 %v524
        %v2373 = vunpack.c.h.b16 %v524
        %v2374 = vunpack.c.l.b16 %v525
        %v2375 = vunpack.c.h.b16 %v525
        %v2376 = vunpack.c.l.b16 %v526
        %v2377 = vunpack.c.h.b16 %v526
        %v2378 = vunpack.c.l.b16 %v527
        %v2379 = vunpack.c.h.b16 %v527
        %v2380 = vunpack.c.l.b16 %v528
        %v2381 = vunpack.c.h.b16 %v528
        %v2382 = vunpack.c.l.b16 %v529
        %v2383 = vunpack.c.h.b16 %v529
        %v2384 = vunpack.c.l.b16 %v530
        %v2385 = vunpack.c.h.b16 %v530
        %v2386 = vunpack.c.l.b16 %v531
        %v2387 = vunpack.c.h.b16 %v531
        %v2388 = vunpack.c.l.b16 %v532
        %v2389 = vunpack.c.h.b16 %v532
        %v2390 = vunpack.c.l.b16 %v533
        %v2391 = vunpack.c.h.b16 %v533
        %v2392 = vunpack.c.l.b16 %v534
        %v2393 = vunpack.c.h.b16 %v534
        %v2394 = vunpack.c.l.b16 %v535
        %v2395 = vunpack.c.h.b16 %v535
        %v2396 = vunpack.c.l.b16 %v536
        %v2397 = vunpack.c.h.b16 %v536
        %v2398 = vunpack.c.l.b16 %v537
        %v2399 = vunpack.c.h.b16 %v537
        %v2400 = vunpack.c.l.b16 %v538
        %v2401 = vunpack.c.h.b16 %v538
        %v2402 = vunpack.c.l.b16 %v539
        %v2403 = vunpack.c.h.b16 %v539
        %v2404 = vunpack.c.l.b16 %v540
        %v2405 = vunpack.c.h.b16 %v540
        %v2406 = vunpack.c.l.b16 %v541
        %v2407 = vunpack.c.h.b16 %v541
        %v2408 = vunpack.c.l.b16 %v542
        %v2409 = vunpack.c.h.b16 %v542
        %v2410 = vunpack.c.l.b16 %v543
        %v2411 = vunpack.c.h.b16 %v543
        %v2412 = vunpack.c.l.b16 %v544
        %v2413 = vunpack.c.h.b16 %v544
        %v2414 = vunpack.c.l.b16 %v545
        %v2415 = vunpack.c.h.b16 %v545
        %v2416 = vunpack.c.l.b16 %v546
        %v2417 = vunpack.c.h.b16 %v546
        %v2418 = vunpack.c.l.b16 %v547
        %v2419 = vunpack.c.h.b16 %v547
        %v2420 = vunpack.c.l.b16 %v548
        %v2421 = vunpack.c.h.b16 %v548
        %v2422 = vunpack.c.l.b16 %v549
        %v2423 = vunpack.c.h.b16 %v549
        %v2424 = vunpack.c.l.b16 %v550
        %v2425 = vunpack.c.h.b16 %v550
        %v2426 = vunpack.c.l.b16 %v551
        %v2427 = vunpack.c.h.b16 %v551
        %v2428 = vunpack.c.l.b16 %v552
        %v2429 = vunpack.c.h.b16 %v552
        %v2430 = vunpack.c.l.b16 %v553
        %v2431 = vunpack.c.h.b16 %v553
        %v2432 = vunpack.c.l.b16 %v554
        %v2433 = vunpack.c.h.b16 %v554
        %v2434 = vunpack.c.l.b16 %v555
        %v2435 = vunpack.c.h.b16 %v555
        %v2436 = vunpack.c.l.b16 %v556
        %v2437 = vunpack.c.h.b16 %v556
        %v2438 = vunpack.c.l.b16 %v557
        %v2439 = vunpack.c.h.b16 %v557
        %v2440 = vunpack.c.l.b16 %v558
        %v2441 = vunpack.c.h.b16 %v558
        %v2442 = vunpack.c.l.b16 %v559
        %v2443 = vunpack.c.h.b16 %v559
        %v2444 = vunpack.c.l.b16 %v560
        %v2445 = vunpack.c.h.b16 %v560
        %v2446 = vunpack.c.l.b16 %v561
        %v2447 = vunpack.c.h.b16 %v561
        %v2448 = vunpack.c.l.b16 %v562
        %v2449 = vunpack.c.h.b16 %v562
        %v2450 = vunpack.c.l.b16 %v563
        %v2451 = vunpack.c.h.b16 %v563
        %v2452 = vunpack.c.l.b16 %v564
        %v2453 = vunpack.c.h.b16 %v564
        %v2454 = vunpack.c.l.b16 %v565
        %v2455 = vunpack.c.h.b16 %v565
        %v2456 = vunpack.c.l.b16 %v566
        %v2457 = vunpack.c.h.b16 %v566
        %v2458 = vunpack.c.l.b16 %v567
        %v2459 = vunpack.c.h.b16 %v567
        %v2460 = vunpack.c.l.b16 %v568
        %v2461 = vunpack.c.h.b16 %v568
        %v2462 = vunpack.c.l.b16 %v569
        %v2463 = vunpack.c.h.b16 %v569
        %v2464 = vunpack.c.l.b16 %v570
        %v2465 = vunpack.c.h.b16 %v570
        %v2466 = vunpack.c.l.b16 %v571
        %v2467 = vunpack.c.h.b16 %v571
        %v2468 = vunpack.c.l.b16 %v572
        %v2469 = vunpack.c.h.b16 %v572
        %v2470 = vunpack.c.l.b16 %v573
        %v2471 = vunpack.c.h.b16 %v573
        %v2472 = vunpack.c.l.b16 %v574
        %v2473 = vunpack.c.h.b16 %v574
        %v2474 = vunpack.c.l.b16 %v575
        %v2475 = vunpack.c.h.b16 %v575
        %v2476 = vunpack.c.l.b16 %v576
        %v2477 = vunpack.c.h.b16 %v576
        %v2478 = vunpack.c.l.b16 %v577
        %v2479 = vunpack.c.h.b16 %v577
        %v2480 = vunpack.c.l.b16 %v578
        %v2481 = vunpack.c.h.b16 %v578
        %v2482 = vunpack.c.l.b16 %v579
        %v2483 = vunpack.c.h.b16 %v579
        %v2484 = vunpack.c.l.b16 %v580
        %v2485 = vunpack.c.h.b16 %v580
        %v2486 = vunpack.c.l.b16 %v581
        %v2487 = vunpack.c.h.b16 %v581
        %v2488 = vunpack.c.l.b16 %v582
        %v2489 = vunpack.c.h.b16 %v582
        %v2490 = vunpack.c.l.b16 %v583
        %v2491 = vunpack.c.h.b16 %v583
        %v2492 = vunpack.c.l.b16 %v584
        %v2493 = vunpack.c.h.b16 %v584
        %v2494 = vunpack.c.l.b16 %v585
        %v2495 = vunpack.c.h.b16 %v585
        %v2496 = vunpack.c.l.b16 %v586
        %v2497 = vunpack.c.h.b16 %v586
        %v2498 = vunpack.c.l.b16 %v587
        %v2499 = vunpack.c.h.b16 %v587
        %v2500 = vunpack.c.l.b16 %v588
        %v2501 = vunpack.c.h.b16 %v588
        %v2502 = vunpack.c.l.b16 %v589
        %v2503 = vunpack.c.h.b16 %v589
        %v2504 = vunpack.c.l.b16 %v590
        %v2505 = vunpack.c.h.b16 %v590
        %v2506 = vunpack.c.l.b16 %v591
        %v2507 = vunpack.c.h.b16 %v591
        %v2508 = vunpack.c.l.b16 %v592
        %v2509 = vunpack.c.h.b16 %v592
        %v2510 = vunpack.c.l.b16 %v593
        %v2511 = vunpack.c.h.b16 %v593
        %v2512 = vunpack.c.l.b16 %v594
        %v2513 = vunpack.c.h.b16 %v594
        %v2514 = vunpack.c.l.b16 %v595
        %v2515 = vunpack.c.h.b16 %v595
        %v2516 = vunpack.c.l.b16 %v596
        %v2517 = vunpack.c.h.b16 %v596
        %v2518 = vunpack.c.l.b16 %v597
        %v2519 = vunpack.c.h.b16 %v597
        %v2520 = vunpack.c.l.b16 %v598
        %v2521 = vunpack.c.h.b16 %v598
        %v2522 = vunpack.c.l.b16 %v599
        %v2523 = vunpack.c.h.b16 %v599
        %v2524 = vunpack.c.l.b16 %v600
        %v2525 = vunpack.c.h.b16 %v600
        %v2526 = vunpack.c.l.b16 %v601
        %v2527 = vunpack.c.h.b16 %v601
        %v2528 = vunpack.c.l.b16 %v602
        %v2529 = vunpack.c.h.b16 %v602
        %v2530 = vunpack.c.l.b16 %v603
        %v2531 = vunpack.c.h.b16 %v603
        %v2532 = vunpack.c.l.b16 %v604
        %v2533 = vunpack.c.h.b16 %v604
        %v2534 = vunpack.c.l.b16 %v605
        %v2535 = vunpack.c.h.b16 %v605
        %v2536 = vunpack.c.l.b16 %v606
        %v2537 = vunpack.c.h.b16 %v606
        %v2538 = vunpack.c.l.b16 %v607
        %v2539 = vunpack.c.h.b16 %v607
        %v2540 = vunpack.c.l.b16 %v608
        %v2541 = vunpack.c.h.b16 %v608
        %v2542 = vunpack.c.l.b16 %v609
        %v2543 = vunpack.c.h.b16 %v609
        %v2544 = vunpack.c.l.b16 %v610
        %v2545 = vunpack.c.h.b16 %v610
        %v2546 = vunpack.c.l.b16 %v611
        %v2547 = vunpack.c.h.b16 %v611
        %v2548 = vunpack.c.l.b16 %v612
        %v2549 = vunpack.c.h.b16 %v612
        %v2550 = vunpack.c.l.b16 %v613
        %v2551 = vunpack.c.h.b16 %v613
        %v2552 = vunpack.c.l.b16 %v614
        %v2553 = vunpack.c.h.b16 %v614
        %v2554 = vunpack.c.l.b16 %v615
        %v2555 = vunpack.c.h.b16 %v615
        %v2556 = vunpack.c.l.b16 %v616
        %v2557 = vunpack.c.h.b16 %v616
        %v2558 = vunpack.c.l.b16 %v617
        %v2559 = vunpack.c.h.b16 %v617
        %v2560 = vunpack.c.l.b16 %v618
        %v2561 = vunpack.c.h.b16 %v618
        %v2562 = vunpack.c.l.b16 %v619
        %v2563 = vunpack.c.h.b16 %v619
        %v2564 = vunpack.c.l.b16 %v620
        %v2565 = vunpack.c.h.b16 %v620
        %v2566 = vunpack.c.l.b16 %v621
        %v2567 = vunpack.c.h.b16 %v621
        %v2568 = vunpack.c.l.b16 %v622
        %v2569 = vunpack.c.h.b16 %v622
        %v2570 = vunpack.c.l.b16 %v623
        %v2571 = vunpack.c.h.b16 %v623
        %v2572 = vunpack.c.l.b16 %v624
        %v2573 = vunpack.c.h.b16 %v624
        %v2574 = vunpack.c.l.b16 %v625
        %v2575 = vunpack.c.h.b16 %v625
        %v2576 = vunpack.c.l.b16 %v626
        %v2577 = vunpack.c.h.b16 %v626
        %v2578 = vunpack.c.l.b16 %v627
        %v2579 = vunpack.c.h.b16 %v627
        %v2580 = vunpack.c.l.b16 %v628
        %v2581 = vunpack.c.h.b16 %v628
        %v2582 = vunpack.c.l.b16 %v629
        %v2583 = vunpack.c.h.b16 %v629
        %v2584 = vunpack.c.l.b16 %v630
        %v2585 = vunpack.c.h.b16 %v630
        %v2586 = vunpack.c.l.b16 %v631
        %v2587 = vunpack.c.h.b16 %v631
        %v2588 = vunpack.c.l.b16 %v632
        %v2589 = vunpack.c.h.b16 %v632
        %v2590 = vunpack.c.l.b16 %v633
        %v2591 = vunpack.c.h.b16 %v633
        %v2592 = vunpack.c.l.b16 %v634
        %v2593 = vunpack.c.h.b16 %v634
        %v2594 = vunpack.c.l.b16 %v635
        %v2595 = vunpack.c.h.b16 %v635
        %v2596 = vunpack.c.l.b16 %v636
        %v2597 = vunpack.c.h.b16 %v636
        %v2598 = vunpack.c.l.b16 %v637
        %v2599 = vunpack.c.h.b16 %v637
        %v2600 = vunpack.c.l.b16 %v638
        %v2601 = vunpack.c.h.b16 %v638
        %v2602 = vunpack.c.l.b16 %v639
        %v2603 = vunpack.c.h.b16 %v639
        %v2604 = vunpack.c.l.b16 %v640
        %v2605 = vunpack.c.h.b16 %v640
        %v2606 = vunpack.c.l.b16 %v641
        %v2607 = vunpack.c.h.b16 %v641
        %v2608 = vunpack.c.l.b16 %v642
        %v2609 = vunpack.c.h.b16 %v642
        %v2610 = vunpack.c.l.b16 %v643
        %v2611 = vunpack.c.h.b16 %v643
        %v2612 = vunpack.c.l.b16 %v644
        %v2613 = vunpack.c.h.b16 %v644
        %v2614 = vunpack.c.l.b16 %v645
        %v2615 = vunpack.c.h.b16 %v645
        %v2616 = vunpack.c.l.b16 %v646
        %v2617 = vunpack.c.h.b16 %v646
        %v2618 = vunpack.c.l.b16 %v647
        %v2619 = vunpack.c.h.b16 %v647
        %v2620 = vunpack.c.l.b16 %v648
        %v2621 = vunpack.c.h.b16 %v648
        %v2622 = vunpack.c.l.b16 %v649
        %v2623 = vunpack.c.h.b16 %v649
        %v2624 = vunpack.c.l.b16 %v650
        %v2625 = vunpack.c.h.b16 %v650
        %v2626 = vunpack.c.l.b16 %v651
        %v2627 = vunpack.c.h.b16 %v651
        %v2628 = vunpack.c.l.b16 %v652
        %v2629 = vunpack.c.h.b16 %v652
        %v2630 = vunpack.c.l.b16 %v653
        %v2631 = vunpack.c.h.b16 %v653
        %v2632 = vunpack.c.l.b16 %v654
        %v2633 = vunpack.c.h.b16 %v654
        %v2634 = vunpack.c.l.b16 %v655
        %v2635 = vunpack.c.h.b16 %v655
        %v2636 = vunpack.c.l.b16 %v656
        %v2637 = vunpack.c.h.b16 %v656
        %v2638 = vunpack.c.l.b16 %v657
        %v2639 = vunpack.c.h.b16 %v657
        %v2640 = vunpack.c.l.b16 %v658
        %v2641 = vunpack.c.h.b16 %v658
        %v2642 = vunpack.c.l.b16 %v659
        %v2643 = vunpack.c.h.b16 %v659
        %v2644 = vunpack.c.l.b16 %v660
        %v2645 = vunpack.c.h.b16 %v660
        %v2646 = vunpack.c.l.b16 %v661
        %v2647 = vunpack.c.h.b16 %v661
        %v2648 = vunpack.c.l.b16 %v662
        %v2649 = vunpack.c.h.b16 %v662
        %v2650 = vunpack.c.l.b16 %v663
        %v2651 = vunpack.c.h.b16 %v663
        %v2652 = vunpack.c.l.b16 %v664
        %v2653 = vunpack.c.h.b16 %v664
        %v2654 = vunpack.c.l.b16 %v665
        %v2655 = vunpack.c.h.b16 %v665
        %v2656 = vunpack.c.l.b16 %v666
        %v2657 = vunpack.c.h.b16 %v666
        %v2658 = vunpack.c.l.b16 %v667
        %v2659 = vunpack.c.h.b16 %v667
        %v2660 = vunpack.c.l.b16 %v668
        %v2661 = vunpack.c.h.b16 %v668
        %v2662 = vunpack.c.l.b16 %v669
        %v2663 = vunpack.c.h.b16 %v669
        %v2664 = vunpack.c.l.b16 %v670
        %v2665 = vunpack.c.h.b16 %v670
        %v2666 = vunpack.c.l.b16 %v671
        %v2667 = vunpack.c.h.b16 %v671
        %v2668 = vunpack.c.l.b16 %v672
        %v2669 = vunpack.c.h.b16 %v672
        %v2670 = vunpack.c.l.b16 %v673
        %v2671 = vunpack.c.h.b16 %v673
        %v2672 = vunpack.c.l.b16 %v674
        %v2673 = vunpack.c.h.b16 %v674
        %v2674 = vunpack.c.l.b16 %v675
        %v2675 = vunpack.c.h.b16 %v675
        %v2676 = vunpack.c.l.b16 %v676
        %v2677 = vunpack.c.h.b16 %v676
        %v2678 = vunpack.c.l.b16 %v677
        %v2679 = vunpack.c.h.b16 %v677
        %v2680 = vunpack.c.l.b16 %v678
        %v2681 = vunpack.c.h.b16 %v678
        %v2682 = vunpack.c.l.b16 %v679
        %v2683 = vunpack.c.h.b16 %v679
        %v2684 = vunpack.c.l.b16 %v680
        %v2685 = vunpack.c.h.b16 %v680
        %v2686 = vunpack.c.l.b16 %v681
        %v2687 = vunpack.c.h.b16 %v681
        %v2688 = vunpack.c.l.b16 %v682
        %v2689 = vunpack.c.h.b16 %v682
        %v2690 = vunpack.c.l.b16 %v683
        %v2691 = vunpack.c.h.b16 %v683
        %v2692 = vunpack.c.l.b16 %v684
        %v2693 = vunpack.c.h.b16 %v684
        %v2694 = vunpack.c.l.b16 %v685
        %v2695 = vunpack.c.h.b16 %v685
        %v2696 = vunpack.c.l.b16 %v686
        %v2697 = vunpack.c.h.b16 %v686
        %v2698 = vunpack.c.l.b16 %v687
        %v2699 = vunpack.c.h.b16 %v687
        %v2700 = vunpack.c.l.b16 %v688
        %v2701 = vunpack.c.h.b16 %v688
        %v2702 = vunpack.c.l.b16 %v689
        %v2703 = vunpack.c.h.b16 %v689
        %v2704 = vunpack.c.l.b16 %v690
        %v2705 = vunpack.c.h.b16 %v690
        %v2706 = vunpack.c.l.b16 %v691
        %v2707 = vunpack.c.h.b16 %v691
        %v2708 = vunpack.c.l.b16 %v692
        %v2709 = vunpack.c.h.b16 %v692
        %v2710 = vunpack.c.l.b16 %v693
        %v2711 = vunpack.c.h.b16 %v693
        %v2712 = vunpack.c.l.b16 %v694
        %v2713 = vunpack.c.h.b16 %v694
        %v2714 = vunpack.c.l.b16 %v695
        %v2715 = vunpack.c.h.b16 %v695
        %v2716 = vunpack.c.l.b16 %v696
        %v2717 = vunpack.c.h.b16 %v696
        %v2718 = vunpack.c.l.b16 %v697
        %v2719 = vunpack.c.h.b16 %v697
        %v2720 = vunpack.c.l.b16 %v698
        %v2721 = vunpack.c.h.b16 %v698
        %v2722 = vunpack.c.l.b16 %v699
        %v2723 = vunpack.c.h.b16 %v699
        %v2724 = vunpack.c.l.b16 %v700
        %v2725 = vunpack.c.h.b16 %v700
        %v2726 = vunpack.c.l.b16 %v701
        %v2727 = vunpack.c.h.b16 %v701
        %v2728 = vunpack.c.l.b16 %v702
        %v2729 = vunpack.c.h.b16 %v702
        %v2730 = vunpack.c.l.b16 %v703
        %v2731 = vunpack.c.h.b16 %v703
        %v2732 = vunpack.c.l.b16 %v704
        %v2733 = vunpack.c.h.b16 %v704
        %v2734 = vunpack.c.l.b16 %v705
        %v2735 = vunpack.c.h.b16 %v705
        %v2736 = vunpack.c.l.b16 %v706
        %v2737 = vunpack.c.h.b16 %v706
        %v2738 = vunpack.c.l.b16 %v707
        %v2739 = vunpack.c.h.b16 %v707
        %v2740 = vunpack.c.l.b16 %v708
        %v2741 = vunpack.c.h.b16 %v708
        %v2742 = vunpack.c.l.b16 %v709
        %v2743 = vunpack.c.h.b16 %v709
        %v2744 = vunpack.c.l.b16 %v710
        %v2745 = vunpack.c.h.b16 %v710
        %v2746 = vunpack.c.l.b16 %v711
        %v2747 = vunpack.c.h.b16 %v711
        %v2748 = vunpack.c.l.b16 %v712
        %v2749 = vunpack.c.h.b16 %v712
        %v2750 = vunpack.c.l.b16 %v713
        %v2751 = vunpack.c.h.b16 %v713
        %v2752 = vunpack.c.l.b16 %v714
        %v2753 = vunpack.c.h.b16 %v714
        %v2754 = vunpack.c.l.b16 %v715
        %v2755 = vunpack.c.h.b16 %v715
        %v2756 = vunpack.c.l.b16 %v716
        %v2757 = vunpack.c.h.b16 %v716
        %v2758 = vunpack.c.l.b16 %v717
        %v2759 = vunpack.c.h.b16 %v717
        %v2760 = vunpack.c.l.b16 %v718
        %v2761 = vunpack.c.h.b16 %v718
        %v2762 = vunpack.c.l.b16 %v719
        %v2763 = vunpack.c.h.b16 %v719
        %v2764 = vunpack.c.l.b16 %v720
        %v2765 = vunpack.c.h.b16 %v720
        %v2766 = vunpack.c.l.b16 %v721
        %v2767 = vunpack.c.h.b16 %v721
        %v2768 = vunpack.c.l.b16 %v722
        %v2769 = vunpack.c.h.b16 %v722
        %v2770 = vunpack.c.l.b16 %v723
        %v2771 = vunpack.c.h.b16 %v723
        %v2772 = vunpack.c.l.b16 %v724
        %v2773 = vunpack.c.h.b16 %v724
        %v2774 = vunpack.c.l.b16 %v725
        %v2775 = vunpack.c.h.b16 %v725
        %v2776 = vunpack.c.l.b16 %v726
        %v2777 = vunpack.c.h.b16 %v726
        %v2778 = vunpack.c.l.b16 %v727
        %v2779 = vunpack.c.h.b16 %v727
        %v2780 = vunpack.c.l.b16 %v728
        %v2781 = vunpack.c.h.b16 %v728
        %v2782 = vunpack.c.l.b16 %v729
        %v2783 = vunpack.c.h.b16 %v729
        %v2784 = vunpack.c.l.b16 %v730
        %v2785 = vunpack.c.h.b16 %v730
        %v2786 = vunpack.c.l.b16 %v731
        %v2787 = vunpack.c.h.b16 %v731
        %v2788 = vunpack.c.l.b16 %v732
        %v2789 = vunpack.c.h.b16 %v732
        %v2790 = vunpack.c.l.b16 %v733
        %v2791 = vunpack.c.h.b16 %v733
        %v2792 = vunpack.c.l.b16 %v734
        %v2793 = vunpack.c.h.b16 %v734
        %v2794 = vunpack.c.l.b16 %v735
        %v2795 = vunpack.c.h.b16 %v735
        %v2796 = vunpack.c.l.b16 %v736
        %v2797 = vunpack.c.h.b16 %v736
        %v2798 = vunpack.c.l.b16 %v737
        %v2799 = vunpack.c.h.b16 %v737
        %v2800 = vunpack.c.l.b16 %v738
        %v2801 = vunpack.c.h.b16 %v738
        %v2802 = vunpack.c.l.b16 %v739
        %v2803 = vunpack.c.h.b16 %v739
        %v2804 = vunpack.c.l.b16 %v740
        %v2805 = vunpack.c.h.b16 %v740
        %v2806 = vunpack.c.l.b16 %v741
        %v2807 = vunpack.c.h.b16 %v741
        %v2808 = vunpack.c.l.b16 %v742
        %v2809 = vunpack.c.h.b16 %v742
        %v2810 = vunpack.c.l.b16 %v743
        %v2811 = vunpack.c.h.b16 %v743
        %v2812 = vunpack.c.l.b16 %v744
        %v2813 = vunpack.c.h.b16 %v744
        %v2814 = vunpack.c.l.b16 %v745
        %v2815 = vunpack.c.h.b16 %v745
        %v2816 = vunpack.c.l.b16 %v746
        %v2817 = vunpack.c.h.b16 %v746
        %v2818 = vunpack.c.l.b16 %v747
        %v2819 = vunpack.c.h.b16 %v747
        %v2820 = vunpack.c.l.b16 %v748
        %v2821 = vunpack.c.h.b16 %v748
        %v2822 = vunpack.c.l.b16 %v749
        %v2823 = vunpack.c.h.b16 %v749
        %v2824 = vunpack.c.l.b16 %v750
        %v2825 = vunpack.c.h.b16 %v750
        %v2826 = vunpack.c.l.b16 %v751
        %v2827 = vunpack.c.h.b16 %v751
        %v2828 = vunpack.c.l.b16 %v752
        %v2829 = vunpack.c.h.b16 %v752
        %v2830 = vunpack.c.l.b16 %v753
        %v2831 = vunpack.c.h.b16 %v753
        %v2832 = vunpack.c.l.b16 %v754
        %v2833 = vunpack.c.h.b16 %v754
        %v2834 = vunpack.c.l.b16 %v755
        %v2835 = vunpack.c.h.b16 %v755
        %v2836 = vunpack.c.l.b16 %v756
        %v2837 = vunpack.c.h.b16 %v756
        %v2838 = vunpack.c.l.b16 %v757
        %v2839 = vunpack.c.h.b16 %v757
        %v2840 = vunpack.c.l.b16 %v758
        %v2841 = vunpack.c.h.b16 %v758
        %v2842 = vunpack.c.l.b16 %v759
        %v2843 = vunpack.c.h.b16 %v759
        %v2844 = vunpack.c.l.b16 %v760
        %v2845 = vunpack.c.h.b16 %v760
        %v2846 = vunpack.c.l.b16 %v761
        %v2847 = vunpack.c.h.b16 %v761
        %v2848 = vunpack.c.l.b16 %v762
        %v2849 = vunpack.c.h.b16 %v762
        %v2850 = vunpack.c.l.b16 %v763
        %v2851 = vunpack.c.h.b16 %v763
        %v2852 = vunpack.c.l.b16 %v764
        %v2853 = vunpack.c.h.b16 %v764
        %v2854 = vunpack.c.l.b16 %v765
        %v2855 = vunpack.c.h.b16 %v765
        %v2856 = vunpack.c.l.b16 %v766
        %v2857 = vunpack.c.h.b16 %v766
        %v2858 = vunpack.c.l.b16 %v767
        %v2859 = vunpack.c.h.b16 %v767
        %v2860 = vunpack.c.l.b16 %v768
        %v2861 = vunpack.c.h.b16 %v768
        %v2862 = vunpack.c.l.b16 %v769
        %v2863 = vunpack.c.h.b16 %v769
        %v2864 = vunpack.c.l.b16 %v770
        %v2865 = vunpack.c.h.b16 %v770
        %v2866 = vunpack.c.l.b16 %v771
        %v2867 = vunpack.c.h.b16 %v771
        %v2868 = vunpack.c.l.b16 %v772
        %v2869 = vunpack.c.h.b16 %v772
        %v2870 = vunpack.c.l.b16 %v773
        %v2871 = vunpack.c.h.b16 %v773
        %v2872 = vunpack.c.l.b16 %v774
        %v2873 = vunpack.c.h.b16 %v774
        %v2874 = vunpack.c.l.b16 %v775
        %v2875 = vunpack.c.h.b16 %v775
        %v2876 = vunpack.c.l.b16 %v776
        %v2877 = vunpack.c.h.b16 %v776
        %v2878 = vunpack.c.l.b16 %v777
        %v2879 = vunpack.c.h.b16 %v777
        %v2880 = vunpack.c.l.b16 %v778
        %v2881 = vunpack.c.h.b16 %v778
        %v2882 = vunpack.c.l.b16 %v779
        %v2883 = vunpack.c.h.b16 %v779
        %v2884 = vunpack.c.l.b16 %v780
        %v2885 = vunpack.c.h.b16 %v780
        %v2886 = vunpack.c.l.b16 %v781
        %v2887 = vunpack.c.h.b16 %v781
        %v2888 = vunpack.c.l.b16 %v782
        %v2889 = vunpack.c.h.b16 %v782
        %v2890 = vunpack.c.l.b16 %v783
        %v2891 = vunpack.c.h.b16 %v783
        %v2892 = vunpack.c.l.b16 %v784
        %v2893 = vunpack.c.h.b16 %v784
        %v2894 = vunpack.c.l.b16 %v785
        %v2895 = vunpack.c.h.b16 %v785
        %v2896 = vunpack.c.l.b16 %v786
        %v2897 = vunpack.c.h.b16 %v786
        %v2898 = vunpack.c.l.b16 %v787
        %v2899 = vunpack.c.h.b16 %v787
        %v2900 = vunpack.c.l.b16 %v788
        %v2901 = vunpack.c.h.b16 %v788
        %v2902 = vunpack.c.l.b16 %v789
        %v2903 = vunpack.c.h.b16 %v789
        %v2904 = vunpack.c.l.b16 %v790
        %v2905 = vunpack.c.h.b16 %v790
        %v2906 = vunpack.c.l.b16 %v791
        %v2907 = vunpack.c.h.b16 %v791
        %v2908 = vunpack.c.l.b16 %v792
        %v2909 = vunpack.c.h.b16 %v792
        %v2910 = vunpack.c.l.b16 %v793
        %v2911 = vunpack.c.h.b16 %v793
        %v2912 = vunpack.c.l.b16 %v794
        %v2913 = vunpack.c.h.b16 %v794
        %v2914 = vunpack.c.l.b16 %v795
        %v2915 = vunpack.c.h.b16 %v795
        %v2916 = vunpack.c.l.b16 %v796
        %v2917 = vunpack.c.h.b16 %v796
        %v2918 = vunpack.c.l.b16 %v797
        %v2919 = vunpack.c.h.b16 %v797
        %v2920 = vunpack.c.l.b16 %v798
        %v2921 = vunpack.c.h.b16 %v798
        %v2922 = vunpack.c.l.b16 %v799
        %v2923 = vunpack.c.h.b16 %v799
        %v2924 = vunpack.c.l.b16 %v800
        %v2925 = vunpack.c.h.b16 %v800
        %v2926 = vunpack.c.l.b16 %v801
        %v2927 = vunpack.c.h.b16 %v801
        %v2928 = vunpack.c.l.b16 %v802
        %v2929 = vunpack.c.h.b16 %v802
        %v2930 = vunpack.c.l.b16 %v803
        %v2931 = vunpack.c.h.b16 %v803
        %v2932 = vunpack.c.l.b16 %v804
        %v2933 = vunpack.c.h.b16 %v804
        %v2934 = vunpack.c.l.b16 %v805
        %v2935 = vunpack.c.h.b16 %v805
        %v2936 = vunpack.c.l.b16 %v806
        %v2937 = vunpack.c.h.b16 %v806
        %v2938 = vunpack.c.l.b16 %v807
        %v2939 = vunpack.c.h.b16 %v807
        %v2940 = vunpack.c.l.b16 %v808
        %v2941 = vunpack.c.h.b16 %v808
        %v2942 = vunpack.c.l.b16 %v809
        %v2943 = vunpack.c.h.b16 %v809
        %v2944 = vunpack.c.l.b16 %v810
        %v2945 = vunpack.c.h.b16 %v810
        %v2946 = vunpack.c.l.b16 %v811
        %v2947 = vunpack.c.h.b16 %v811
        %v2948 = vunpack.c.l.b16 %v812
        %v2949 = vunpack.c.h.b16 %v812
        %v2950 = vunpack.c.l.b16 %v813
        %v2951 = vunpack.c.h.b16 %v813
        %v2952 = vunpack.c.l.b16 %v814
        %v2953 = vunpack.c.h.b16 %v814
        %v2954 = vunpack.c.l.b16 %v815
        %v2955 = vunpack.c.h.b16 %v815
        %v2956 = vunpack.c.l.b16 %v816
        %v2957 = vunpack.c.h.b16 %v816
        %v2958 = vunpack.c.l.b16 %v817
        %v2959 = vunpack.c.h.b16 %v817
        %v2960 = vunpack.c.l.b16 %v818
        %v2961 = vunpack.c.h.b16 %v818
        %v2962 = vunpack.c.l.b16 %v819
        %v2963 = vunpack.c.h.b16 %v819
        %v2964 = vunpack.c.l.b16 %v820
        %v2965 = vunpack.c.h.b16 %v820
        %v2966 = vunpack.c.l.b16 %v821
        %v2967 = vunpack.c.h.b16 %v821
        %v2968 = vunpack.c.l.b16 %v822
        %v2969 = vunpack.c.h.b16 %v822
        %v2970 = vunpack.c.l.b16 %v823
        %v2971 = vunpack.c.h.b16 %v823
        %v2972 = vunpack.c.l.b16 %v824
        %v2973 = vunpack.c.h.b16 %v824
        %v2974 = vunpack.c.l.b16 %v825
        %v2975 = vunpack.c.h.b16 %v825
        %v2976 = vunpack.c.l.b16 %v826
        %v2977 = vunpack.c.h.b16 %v826
        %v2978 = vunpack.c.l.b16 %v827
        %v2979 = vunpack.c.h.b16 %v827
        %v2980 = vunpack.c.l.b16 %v828
        %v2981 = vunpack.c.h.b16 %v828
        %v2982 = vunpack.c.l.b16 %v829
        %v2983 = vunpack.c.h.b16 %v829
        %v2984 = vunpack.c.l.b16 %v830
        %v2985 = vunpack.c.h.b16 %v830
        %v2986 = vunpack.c.l.b16 %v831
        %v2987 = vunpack.c.h.b16 %v831
        %v2988 = vunpack.c.l.b16 %v832
        %v2989 = vunpack.c.h.b16 %v832
        %v2990 = vunpack.c.l.b16 %v833
        %v2991 = vunpack.c.h.b16 %v833
        %v2992 = vunpack.c.l.b16 %v834
        %v2993 = vunpack.c.h.b16 %v834
        %v2994 = vunpack.c.l.b16 %v835
        %v2995 = vunpack.c.h.b16 %v835
        %v2996 = vunpack.c.l.b16 %v836
        %v2997 = vunpack.c.h.b16 %v836
        %v2998 = vunpack.c.l.b16 %v837
        %v2999 = vunpack.c.h.b16 %v837
        %v3000 = vunpack.c.l.b16 %v838
        %v3001 = vunpack.c.h.b16 %v838
        %v3002 = vunpack.c.l.b16 %v839
        %v3003 = vunpack.c.h.b16 %v839
        %v3004 = vunpack.c.l.b16 %v840
        %v3005 = vunpack.c.h.b16 %v840
        %v3006 = vunpack.c.l.b16 %v841
        %v3007 = vunpack.c.h.b16 %v841
        %v3008 = vunpack.c.l.b16 %v842
        %v3009 = vunpack.c.h.b16 %v842
        %v3010 = vunpack.c.l.b16 %v843
        %v3011 = vunpack.c.h.b16 %v843
        %v3012 = vunpack.c.l.b16 %v844
        %v3013 = vunpack.c.h.b16 %v844
        %v3014 = vunpack.c.l.b16 %v845
        %v3015 = vunpack.c.h.b16 %v845
        %v3016 = vunpack.c.l.b16 %v846
        %v3017 = vunpack.c.h.b16 %v846
        %v3018 = vunpack.c.l.b16 %v847
        %v3019 = vunpack.c.h.b16 %v847
        %v3020 = vunpack.c.l.b16 %v848
        %v3021 = vunpack.c.h.b16 %v848
        %v3022 = vunpack.c.l.b16 %v849
        %v3023 = vunpack.c.h.b16 %v849
        %v3024 = vunpack.c.l.b16 %v850
        %v3025 = vunpack.c.h.b16 %v850
        %v3026 = vunpack.c.l.b16 %v851
        %v3027 = vunpack.c.h.b16 %v851
        %v3028 = vunpack.c.l.b16 %v852
        %v3029 = vunpack.c.h.b16 %v852
        %v3030 = vunpack.c.l.b16 %v853
        %v3031 = vunpack.c.h.b16 %v853
        %v3032 = vunpack.c.l.b16 %v854
        %v3033 = vunpack.c.h.b16 %v854
        %v3034 = vunpack.c.l.b16 %v855
        %v3035 = vunpack.c.h.b16 %v855
        %v3036 = vunpack.c.l.b16 %v856
        %v3037 = vunpack.c.h.b16 %v856
        %v3038 = vunpack.c.l.b16 %v857
        %v3039 = vunpack.c.h.b16 %v857
        %v3040 = vunpack.c.l.b16 %v858
        %v3041 = vunpack.c.h.b16 %v858
        %v3042 = vunpack.c.l.b16 %v859
        %v3043 = vunpack.c.h.b16 %v859
        %v3044 = vunpack.c.l.b16 %v860
        %v3045 = vunpack.c.h.b16 %v860
        %v3046 = vunpack.c.l.b16 %v861
        %v3047 = vunpack.c.h.b16 %v861
        %v3048 = vunpack.c.l.b16 %v862
        %v3049 = vunpack.c.h.b16 %v862
        %v3050 = vunpack.c.l.b16 %v863
        %v3051 = vunpack.c.h.b16 %v863
        %v3052 = vunpack.c.l.b16 %v864
        %v3053 = vunpack.c.h.b16 %v864
        %v3054 = vunpack.c.l.b16 %v865
        %v3055 = vunpack.c.h.b16 %v865
        %v3056 = vunpack.c.l.b16 %v866
        %v3057 = vunpack.c.h.b16 %v866
        %v3058 = vunpack.c.l.b16 %v867
        %v3059 = vunpack.c.h.b16 %v867
        %v3060 = vunpack.c.l.b16 %v868
        %v3061 = vunpack.c.h.b16 %v868
        %v3062 = vunpack.c.l.b16 %v869
        %v3063 = vunpack.c.h.b16 %v869
        %v3064 = vunpack.c.l.b16 %v870
        %v3065 = vunpack.c.h.b16 %v870
        %v3066 = vunpack.c.l.b16 %v871
        %v3067 = vunpack.c.h.b16 %v871
        %v3068 = vunpack.c.l.b16 %v872
        %v3069 = vunpack.c.h.b16 %v872
        %v3070 = vunpack.c.l.b16 %v873
        %v3071 = vunpack.c.h.b16 %v873
        %v3072 = vunpack.c.l.b16 %v874
        %v3073 = vunpack.c.h.b16 %v874
        %v3074 = vunpack.c.l.b16 %v875
        %v3075 = vunpack.c.h.b16 %v875
        %v3076 = vunpack.c.l.b16 %v876
        %v3077 = vunpack.c.h.b16 %v876
        %v3078 = vunpack.c.l.b16 %v877
        %v3079 = vunpack.c.h.b16 %v877
        %v3080 = vunpack.c.l.b16 %v878
        %v3081 = vunpack.c.h.b16 %v878
        %v3082 = vunpack.c.l.b16 %v879
        %v3083 = vunpack.c.h.b16 %v879
        %v3084 = vunpack.c.l.b16 %v880
        %v3085 = vunpack.c.h.b16 %v880
        %v3086 = vunpack.c.l.b16 %v881
        %v3087 = vunpack.c.h.b16 %v881
        %v3088 = vunpack.c.l.b16 %v882
        %v3089 = vunpack.c.h.b16 %v882
        %v3090 = vunpack.c.l.b16 %v883
        %v3091 = vunpack.c.h.b16 %v883
        %v3092 = vunpack.c.l.b16 %v884
        %v3093 = vunpack.c.h.b16 %v884
        %v3094 = vunpack.c.l.b16 %v885
        %v3095 = vunpack.c.h.b16 %v885
        %v3096 = vunpack.c.l.b16 %v886
        %v3097 = vunpack.c.h.b16 %v886
        %v3098 = vunpack.c.l.b16 %v887
        %v3099 = vunpack.c.h.b16 %v887
        %v3100 = vunpack.c.l.b16 %v888
        %v3101 = vunpack.c.h.b16 %v888
        %v3102 = vunpack.c.l.b16 %v889
        %v3103 = vunpack.c.h.b16 %v889
        %v3104 = vunpack.c.l.b16 %v890
        %v3105 = vunpack.c.h.b16 %v890
        %v3106 = vunpack.c.l.b16 %v891
        %v3107 = vunpack.c.h.b16 %v891
        %v3108 = vunpack.c.l.b16 %v892
        %v3109 = vunpack.c.h.b16 %v892
        %v3110 = vunpack.c.l.b16 %v893
        %v3111 = vunpack.c.h.b16 %v893
        %v3112 = vunpack.c.l.b16 %v894
        %v3113 = vunpack.c.h.b16 %v894
        %v3114 = vunpack.c.l.b16 %v895
        %v3115 = vunpack.c.h.b16 %v895
        %v3116 = vunpack.c.l.b16 %v896
        %v3117 = vunpack.c.h.b16 %v896
        %v3118 = vunpack.c.l.b16 %v897
        %v3119 = vunpack.c.h.b16 %v897
        %v3120 = vunpack.c.l.b16 %v898
        %v3121 = vunpack.c.h.b16 %v898
        %v3122 = vunpack.c.l.b16 %v899
        %v3123 = vunpack.c.h.b16 %v899
        %v3124 = vunpack.c.l.b16 %v900
        %v3125 = vunpack.c.h.b16 %v900
        %v3126 = vunpack.c.l.b16 %v901
        %v3127 = vunpack.c.h.b16 %v901
        %v3128 = vunpack.c.l.b16 %v902
        %v3129 = vunpack.c.h.b16 %v902
        %v3130 = vunpack.c.l.b16 %v903
        %v3131 = vunpack.c.h.b16 %v903
        %v3132 = vunpack.c.l.b16 %v904
        %v3133 = vunpack.c.h.b16 %v904
        %v3134 = vunpack.c.l.b16 %v905
        %v3135 = vunpack.c.h.b16 %v905
        %v3136 = vunpack.c.l.b16 %v906
        %v3137 = vunpack.c.h.b16 %v906
        %v3138 = vunpack.c.l.b16 %v907
        %v3139 = vunpack.c.h.b16 %v907
        %v3140 = vunpack.c.l.b16 %v908
        %v3141 = vunpack.c.h.b16 %v908
        %v3142 = vunpack.c.l.b16 %v909
        %v3143 = vunpack.c.h.b16 %v909
        %v3144 = vunpack.c.l.b16 %v910
        %v3145 = vunpack.c.h.b16 %v910
        %v3146 = vunpack.c.l.b16 %v911
        %v3147 = vunpack.c.h.b16 %v911
        %v3148 = vunpack.c.l.b16 %v912
        %v3149 = vunpack.c.h.b16 %v912
        %v3150 = vunpack.c.l.b16 %v913
        %v3151 = vunpack.c.h.b16 %v913
        %v3152 = vunpack.c.l.b16 %v914
        %v3153 = vunpack.c.h.b16 %v914
        %v3154 = vunpack.c.l.b16 %v915
        %v3155 = vunpack.c.h.b16 %v915
        %v3156 = vunpack.c.l.b16 %v916
        %v3157 = vunpack.c.h.b16 %v916
        %v3158 = vunpack.c.l.b16 %v917
        %v3159 = vunpack.c.h.b16 %v917
        %v3160 = vunpack.c.l.b16 %v918
        %v3161 = vunpack.c.h.b16 %v918
        %v3162 = vunpack.c.l.b16 %v919
        %v3163 = vunpack.c.h.b16 %v919
        %v3164 = vunpack.c.l.b16 %v920
        %v3165 = vunpack.c.h.b16 %v920
        %v3166 = vunpack.c.l.b16 %v921
        %v3167 = vunpack.c.h.b16 %v921
        %v3168 = vunpack.c.l.b16 %v922
        %v3169 = vunpack.c.h.b16 %v922
        %v3170 = vunpack.c.l.b16 %v923
        %v3171 = vunpack.c.h.b16 %v923
        %v3172 = vunpack.c.l.b16 %v924
        %v3173 = vunpack.c.h.b16 %v924
        %v3174 = vunpack.c.l.b16 %v925
        %v3175 = vunpack.c.h.b16 %v925
        %v3176 = vunpack.c.l.b16 %v926
        %v3177 = vunpack.c.h.b16 %v926
        %v3178 = vunpack.c.l.b16 %v927
        %v3179 = vunpack.c.h.b16 %v927
        %v3180 = vunpack.c.l.b16 %v928
        %v3181 = vunpack.c.h.b16 %v928
        %v3182 = vunpack.c.l.b16 %v929
        %v3183 = vunpack.c.h.b16 %v929
        %v3184 = vunpack.c.l.b16 %v930
        %v3185 = vunpack.c.h.b16 %v930
        %v3186 = vunpack.c.l.b16 %v931
        %v3187 = vunpack.c.h.b16 %v931
        %v3188 = vunpack.c.l.b16 %v932
        %v3189 = vunpack.c.h.b16 %v932
        %v3190 = vunpack.c.l.b16 %v933
        %v3191 = vunpack.c.h.b16 %v933
        %v3192 = vunpack.c.l.b16 %v934
        %v3193 = vunpack.c.h.b16 %v934
        %v3194 = vunpack.c.l.b16 %v935
        %v3195 = vunpack.c.h.b16 %v935
        %v3196 = vunpack.c.l.b16 %v936
        %v3197 = vunpack.c.h.b16 %v936
        %v3198 = vunpack.c.l.b16 %v937
        %v3199 = vunpack.c.h.b16 %v937
        %v3200 = vunpack.c.l.b16 %v938
        %v3201 = vunpack.c.h.b16 %v938
        %v3202 = vunpack.c.l.b16 %v939
        %v3203 = vunpack.c.h.b16 %v939
        %v3204 = vunpack.c.l.b16 %v940
        %v3205 = vunpack.c.h.b16 %v940
        %v3206 = vunpack.c.l.b16 %v941
        %v3207 = vunpack.c.h.b16 %v941
        %v3208 = vunpack.c.l.b16 %v942
        %v3209 = vunpack.c.h.b16 %v942
        %v3210 = vunpack.c.l.b16 %v943
        %v3211 = vunpack.c.h.b16 %v943
        %v3212 = vunpack.c.l.b16 %v944
        %v3213 = vunpack.c.h.b16 %v944
        %v3214 = vunpack.c.l.b16 %v945
        %v3215 = vunpack.c.h.b16 %v945
        %v3216 = vunpack.c.l.b16 %v946
        %v3217 = vunpack.c.h.b16 %v946
        %v3218 = vunpack.c.l.b16 %v947
        %v3219 = vunpack.c.h.b16 %v947
        %v3220 = vunpack.c.l.b16 %v948
        %v3221 = vunpack.c.h.b16 %v948
        %v3222 = vunpack.c.l.b16 %v949
        %v3223 = vunpack.c.h.b16 %v949
        %v3224 = vunpack.c.l.b16 %v950
        %v3225 = vunpack.c.h.b16 %v950
        %v3226 = vunpack.c.l.b16 %v951
        %v3227 = vunpack.c.h.b16 %v951
        %v3228 = vunpack.c.l.b16 %v952
        %v3229 = vunpack.c.h.b16 %v952
        %v3230 = vunpack.c.l.b16 %v953
        %v3231 = vunpack.c.h.b16 %v953
        %v3232 = vunpack.c.l.b16 %v954
        %v3233 = vunpack.c.h.b16 %v954
        %v3234 = vunpack.c.l.b16 %v955
        %v3235 = vunpack.c.h.b16 %v955
        %v3236 = vunpack.c.l.b16 %v956
        %v3237 = vunpack.c.h.b16 %v956
        %v3238 = vunpack.c.l.b16 %v957
        %v3239 = vunpack.c.h.b16 %v957
        %v3240 = vunpack.c.l.b16 %v958
        %v3241 = vunpack.c.h.b16 %v958
        %v3242 = vunpack.c.l.b16 %v959
        %v3243 = vunpack.c.h.b16 %v959
        %v3244 = vunpack.c.l.b16 %v960
        %v3245 = vunpack.c.h.b16 %v960
        %v3246 = vunpack.c.l.b16 %v961
        %v3247 = vunpack.c.h.b16 %v961
        %v3248 = vunpack.c.l.b16 %v962
        %v3249 = vunpack.c.h.b16 %v962
        %v3250 = vunpack.c.l.b16 %v963
        %v3251 = vunpack.c.h.b16 %v963
        %v3252 = vunpack.c.l.b16 %v964
        %v3253 = vunpack.c.h.b16 %v964
        %v3254 = vunpack.c.l.b16 %v965
        %v3255 = vunpack.c.h.b16 %v965
        %v3256 = vunpack.c.l.b16 %v966
        %v3257 = vunpack.c.h.b16 %v966
        %v3258 = vunpack.c.l.b16 %v967
        %v3259 = vunpack.c.h.b16 %v967
        %v3260 = vunpack.c.l.b16 %v968
        %v3261 = vunpack.c.h.b16 %v968
        %v3262 = vunpack.c.l.b16 %v969
        %v3263 = vunpack.c.h.b16 %v969
        %v3264 = vunpack.c.l.b16 %v970
        %v3265 = vunpack.c.h.b16 %v970
        %v3266 = vunpack.c.l.b16 %v971
        %v3267 = vunpack.c.h.b16 %v971
        %v3268 = vunpack.c.l.b16 %v972
        %v3269 = vunpack.c.h.b16 %v972
        %v3270 = vunpack.c.l.b16 %v973
        %v3271 = vunpack.c.h.b16 %v973
        %v3272 = vunpack.c.l.b16 %v974
        %v3273 = vunpack.c.h.b16 %v974
        %v3274 = vunpack.c.l.b16 %v975
        %v3275 = vunpack.c.h.b16 %v975
        %v3276 = vunpack.c.l.b16 %v976
        %v3277 = vunpack.c.h.b16 %v976
        %v3278 = vunpack.c.l.b16 %v977
        %v3279 = vunpack.c.h.b16 %v977
        %v3280 = vunpack.c.l.b16 %v978
        %v3281 = vunpack.c.h.b16 %v978
        %v3282 = vunpack.c.l.b16 %v979
        %v3283 = vunpack.c.h.b16 %v979
        %v3284 = vunpack.c.l.b16 %v980
        %v3285 = vunpack.c.h.b16 %v980
        %v3286 = vunpack.c.l.b16 %v981
        %v3287 = vunpack.c.h.b16 %v981
        %v3288 = vunpack.c.l.b16 %v982
        %v3289 = vunpack.c.h.b16 %v982
        %v3290 = vunpack.c.l.b16 %v983
        %v3291 = vunpack.c.h.b16 %v983
        %v3292 = vunpack.c.l.b16 %v984
        %v3293 = vunpack.c.h.b16 %v984
        %v3294 = vunpack.c.l.b16 %v985
        %v3295 = vunpack.c.h.b16 %v985
        %v3296 = vunpack.c.l.b16 %v986
        %v3297 = vunpack.c.h.b16 %v986
        %v3298 = vunpack.c.l.b16 %v987
        %v3299 = vunpack.c.h.b16 %v987
        %v3300 = vunpack.c.l.b16 %v988
        %v3301 = vunpack.c.h.b16 %v988
        %v3302 = vunpack.c.l.b16 %v989
        %v3303 = vunpack.c.h.b16 %v989
        %v3304 = vunpack.c.l.b16 %v990
        %v3305 = vunpack.c.h.b16 %v990
        %v3306 = vunpack.c.l.b16 %v991
        %v3307 = vunpack.c.h.b16 %v991
        %v3308 = vunpack.c.l.b16 %v992
        %v3309 = vunpack.c.h.b16 %v992
        %v3310 = vunpack.c.l.b16 %v993
        %v3311 = vunpack.c.h.b16 %v993
        %v3312 = vunpack.c.l.b16 %v994
        %v3313 = vunpack.c.h.b16 %v994
        %v3314 = vunpack.c.l.b16 %v995
        %v3315 = vunpack.c.h.b16 %v995
        %v3316 = vunpack.c.l.b16 %v996
        %v3317 = vunpack.c.h.b16 %v996
        %v3318 = vunpack.c.l.b16 %v997
        %v3319 = vunpack.c.h.b16 %v997
        %v3320 = vunpack.c.l.b16 %v998
        %v3321 = vunpack.c.h.b16 %v998
        %v3322 = vunpack.c.l.b16 %v999
        %v3323 = vunpack.c.h.b16 %v999
        %v3324 = vunpack.c.l.b16 %v1000
        %v3325 = vunpack.c.h.b16 %v1000
        %v3326 = vunpack.c.l.b16 %v1001
        %v3327 = vunpack.c.h.b16 %v1001
        %v3328 = vunpack.c.l.b16 %v1002
        %v3329 = vunpack.c.h.b16 %v1002
        %v3330 = vunpack.c.l.b16 %v1003
        %v3331 = vunpack.c.h.b16 %v1003
        %v3332 = vunpack.c.l.b16 %v1004
        %v3333 = vunpack.c.h.b16 %v1004
        %v3334 = vunpack.c.l.b16 %v1005
        %v3335 = vunpack.c.h.b16 %v1005
        %v3336 = vunpack.c.l.b16 %v1006
        %v3337 = vunpack.c.h.b16 %v1006
        %v3338 = vunpack.c.l.b16 %v1007
        %v3339 = vunpack.c.h.b16 %v1007
        %v3340 = vunpack.c.l.b16 %v1008
        %v3341 = vunpack.c.h.b16 %v1008
        %v3342 = vunpack.c.l.b16 %v1009
        %v3343 = vunpack.c.h.b16 %v1009
        %v3344 = vunpack.c.l.b16 %v1010
        %v3345 = vunpack.c.h.b16 %v1010
        %v3346 = vunpack.c.l.b16 %v1011
        %v3347 = vunpack.c.h.b16 %v1011
        %v3348 = vunpack.c.l.b16 %v1012
        %v3349 = vunpack.c.h.b16 %v1012
        %v3350 = vunpack.c.l.b16 %v1013
        %v3351 = vunpack.c.h.b16 %v1013
        %v3352 = vunpack.c.l.b16 %v1014
        %v3353 = vunpack.c.h.b16 %v1014
        %v3354 = vunpack.c.l.b16 %v1015
        %v3355 = vunpack.c.h.b16 %v1015
        %v3356 = vunpack.c.l.b16 %v1016
        %v3357 = vunpack.c.h.b16 %v1016
        %v3358 = vunpack.c.l.b16 %v1017
        %v3359 = vunpack.c.h.b16 %v1017
        %v3360 = vunpack.c.l.b16 %v1018
        %v3361 = vunpack.c.h.b16 %v1018
        %v3362 = vunpack.c.l.b16 %v1019
        %v3363 = vunpack.c.h.b16 %v1019
        %v3364 = vunpack.c.l.b16 %v1020
        %v3365 = vunpack.c.h.b16 %v1020
        %v3366 = vunpack.c.l.b16 %v1021
        %v3367 = vunpack.c.h.b16 %v1021
        %v3368 = vunpack.c.l.b16 %v1022
        %v3369 = vunpack.c.h.b16 %v1022
        %v3370 = vunpack.c.l.b16 %v1023
        %v3371 = vunpack.c.h.b16 %v1023
        %v3372 = vunpack.c.l.b16 %v1024
        %v3373 = vunpack.c.h.b16 %v1024
        %v3374 = vunpack.c.l.b16 %v1025
        %v3375 = vunpack.c.h.b16 %v1025
        %v3376 = vunpack.c.l.b16 %v1026
        %v3377 = vunpack.c.h.b16 %v1026
        %v3378 = vunpack.c.l.b16 %v1027
        %v3379 = vunpack.c.h.b16 %v1027
        %v3380 = vunpack.c.l.b16 %v1028
        %v3381 = vunpack.c.h.b16 %v1028
        %v3382 = vunpack.c.l.b16 %v1029
        %v3383 = vunpack.c.h.b16 %v1029
        %v3384 = vunpack.c.l.b16 %v1030
        %v3385 = vunpack.c.h.b16 %v1030
        %v3386 = vunpack.c.l.b16 %v1031
        %v3387 = vunpack.c.h.b16 %v1031
        %v3388 = vunpack.c.l.b16 %v1032
        %v3389 = vunpack.c.h.b16 %v1032
        %v3390 = vunpack.c.l.b16 %v1033
        %v3391 = vunpack.c.h.b16 %v1033
        %v3392 = vunpack.c.l.b16 %v1034
        %v3393 = vunpack.c.h.b16 %v1034
        %v3394 = vunpack.c.l.b16 %v1035
        %v3395 = vunpack.c.h.b16 %v1035
        %v3396 = vunpack.c.l.b16 %v1036
        %v3397 = vunpack.c.h.b16 %v1036
        %v3398 = vunpack.c.l.b16 %v1037
        %v3399 = vunpack.c.h.b16 %v1037
        %v3400 = vunpack.c.l.b16 %v1038
        %v3401 = vunpack.c.h.b16 %v1038
        %v3402 = vunpack.c.l.b16 %v1039
        %v3403 = vunpack.c.h.b16 %v1039
        %v3404 = vunpack.c.l.b16 %v1040
        %v3405 = vunpack.c.h.b16 %v1040
        %v3406 = vunpack.c.l.b16 %v1041
        %v3407 = vunpack.c.h.b16 %v1041
        %v3408 = vunpack.c.l.b16 %v1042
        %v3409 = vunpack.c.h.b16 %v1042
        %v3410 = vunpack.c.l.b16 %v1043
        %v3411 = vunpack.c.h.b16 %v1043
        %v3412 = vunpack.c.l.b16 %v1044
        %v3413 = vunpack.c.h.b16 %v1044
        %v3414 = vunpack.c.l.b16 %v1045
        %v3415 = vunpack.c.h.b16 %v1045
        %v3416 = vunpack.c.l.b16 %v1046
        %v3417 = vunpack.c.h.b16 %v1046
        %v3418 = vunpack.c.l.b16 %v1047
        %v3419 = vunpack.c.h.b16 %v1047
        %v3420 = vunpack.c.l.b16 %v1048
        %v3421 = vunpack.c.h.b16 %v1048
        %v3422 = vunpack.c.l.b16 %v1049
        %v3423 = vunpack.c.h.b16 %v1049
        %v3424 = vunpack.c.l.b16 %v1050
        %v3425 = vunpack.c.h.b16 %v1050
        %v3426 = vunpack.c.l.b16 %v1051
        %v3427 = vunpack.c.h.b16 %v1051
        %v3428 = vunpack.c.l.b16 %v1052
        %v3429 = vunpack.c.h.b16 %v1052
        %v3430 = vunpack.c.l.b16 %v1053
        %v3431 = vunpack.c.h.b16 %v1053
        %v3432 = vunpack.c.l.b16 %v1054
        %v3433 = vunpack.c.h.b16 %v1054
        %v3434 = vunpack.c.l.b16 %v1055
        %v3435 = vunpack.c.h.b16 %v1055
        %v3436 = vunpack.c.l.b16 %v1056
        %v3437 = vunpack.c.h.b16 %v1056
        %v3438 = vunpack.c.l.b16 %v1057
        %v3439 = vunpack.c.h.b16 %v1057
        %v3440 = vunpack.c.l.b16 %v1058
        %v3441 = vunpack.c.h.b16 %v1058
        %v3442 = vunpack.c.l.b16 %v1059
        %v3443 = vunpack.c.h.b16 %v1059
        %v3444 = vunpack.c.l.b16 %v1060
        %v3445 = vunpack.c.h.b16 %v1060
        %v3446 = vunpack.c.l.b16 %v1061
        %v3447 = vunpack.c.h.b16 %v1061
        %v3448 = vunpack.c.l.b16 %v1062
        %v3449 = vunpack.c.h.b16 %v1062
        %v3450 = vunpack.c.l.b16 %v1063
        %v3451 = vunpack.c.h.b16 %v1063
        %v3452 = vunpack.c.l.b16 %v1064
        %v3453 = vunpack.c.h.b16 %v1064
        %v3454 = vunpack.c.l.b16 %v1065
        %v3455 = vunpack.c.h.b16 %v1065
        %v3456 = vunpack.c.l.b16 %v1066
        %v3457 = vunpack.c.h.b16 %v1066
        %v3458 = vunpack.c.l.b16 %v1067
        %v3459 = vunpack.c.h.b16 %v1067
        %v3460 = vunpack.c.l.b16 %v1068
        %v3461 = vunpack.c.h.b16 %v1068
        %v3462 = vunpack.c.l.b16 %v1069
        %v3463 = vunpack.c.h.b16 %v1069
        %v3464 = vunpack.c.l.b16 %v1070
        %v3465 = vunpack.c.h.b16 %v1070
        %v3466 = vunpack.c.l.b16 %v1071
        %v3467 = vunpack.c.h.b16 %v1071
        %v3468 = vunpack.c.l.b16 %v1072
        %v3469 = vunpack.c.h.b16 %v1072
        %v3470 = vunpack.c.l.b16 %v1073
        %v3471 = vunpack.c.h.b16 %v1073
        %v3472 = vunpack.c.l.b16 %v1074
        %v3473 = vunpack.c.h.b16 %v1074
        %v3474 = vunpack.c.l.b16 %v1075
        %v3475 = vunpack.c.h.b16 %v1075
        %v3476 = vunpack.c.l.b16 %v1076
        %v3477 = vunpack.c.h.b16 %v1076
        %v3478 = vunpack.c.l.b16 %v1077
        %v3479 = vunpack.c.h.b16 %v1077
        %v3480 = vunpack.c.l.b16 %v1078
        %v3481 = vunpack.c.h.b16 %v1078
        %v3482 = vunpack.c.l.b16 %v1079
        %v3483 = vunpack.c.h.b16 %v1079
        %v3484 = vunpack.c.l.b16 %v1080
        %v3485 = vunpack.c.h.b16 %v1080
        %v3486 = vunpack.c.l.b16 %v1081
        %v3487 = vunpack.c.h.b16 %v1081
        %v3488 = vunpack.c.l.b16 %v1082
        %v3489 = vunpack.c.h.b16 %v1082
        %v3490 = vunpack.c.l.b16 %v1083
        %v3491 = vunpack.c.h.b16 %v1083
        %v3492 = vunpack.c.l.b16 %v1084
        %v3493 = vunpack.c.h.b16 %v1084
        %v3494 = vunpack.c.l.b16 %v1085
        %v3495 = vunpack.c.h.b16 %v1085
        %v3496 = vunpack.c.l.b16 %v1086
        %v3497 = vunpack.c.h.b16 %v1086
        %v3498 = vunpack.c.l.b16 %v1087
        %v3499 = vunpack.c.h.b16 %v1087
        %v3500 = vunpack.c.l.b16 %v1088
        %v3501 = vunpack.c.h.b16 %v1088
        %v3502 = vunpack.c.l.b16 %v1089
        %v3503 = vunpack.c.h.b16 %v1089
        %v3504 = vunpack.c.l.b16 %v1090
        %v3505 = vunpack.c.h.b16 %v1090
        %v3506 = vunpack.c.l.b16 %v1091
        %v3507 = vunpack.c.h.b16 %v1091
        %v3508 = vunpack.c.l.b16 %v1092
        %v3509 = vunpack.c.h.b16 %v1092
        %v3510 = vunpack.c.l.b16 %v1093
        %v3511 = vunpack.c.h.b16 %v1093
        %v3512 = vunpack.c.l.b16 %v1094
        %v3513 = vunpack.c.h.b16 %v1094
        %v3514 = vunpack.c.l.b16 %v1095
        %v3515 = vunpack.c.h.b16 %v1095
        %v3516 = vunpack.c.l.b16 %v1096
        %v3517 = vunpack.c.h.b16 %v1096
        %v3518 = vunpack.c.l.b16 %v1097
        %v3519 = vunpack.c.h.b16 %v1097
        %v3520 = vunpack.c.l.b16 %v1098
        %v3521 = vunpack.c.h.b16 %v1098
        %v3522 = vunpack.c.l.b16 %v1099
        %v3523 = vunpack.c.h.b16 %v1099
        %v3524 = vunpack.c.l.b16 %v1100
        %v3525 = vunpack.c.h.b16 %v1100
        %v3526 = vunpack.c.l.b16 %v1101
        %v3527 = vunpack.c.h.b16 %v1101
        %v3528 = vunpack.c.l.b16 %v1102
        %v3529 = vunpack.c.h.b16 %v1102
        %v3530 = vunpack.c.l.b16 %v1103
        %v3531 = vunpack.c.h.b16 %v1103
        %v3532 = vunpack.c.l.b16 %v1104
        %v3533 = vunpack.c.h.b16 %v1104
        %v3534 = vunpack.c.l.b16 %v1105
        %v3535 = vunpack.c.h.b16 %v1105
        %v3536 = vunpack.c.l.b16 %v1106
        %v3537 = vunpack.c.h.b16 %v1106
        %v3538 = vunpack.c.l.b16 %v1107
        %v3539 = vunpack.c.h.b16 %v1107
        %v3540 = vunpack.c.l.b16 %v1108
        %v3541 = vunpack.c.h.b16 %v1108
        %v3542 = vunpack.c.l.b16 %v1109
        %v3543 = vunpack.c.h.b16 %v1109
        %v3544 = vunpack.c.l.b16 %v1110
        %v3545 = vunpack.c.h.b16 %v1110
        %v3546 = vunpack.c.l.b16 %v1111
        %v3547 = vunpack.c.h.b16 %v1111
        %v3548 = vunpack.c.l.b16 %v1112
        %v3549 = vunpack.c.h.b16 %v1112
        %v3550 = vunpack.c.l.b16 %v1113
        %v3551 = vunpack.c.h.b16 %v1113
        %v3552 = vunpack.c.l.b16 %v1114
        %v3553 = vunpack.c.h.b16 %v1114
        %v3554 = vunpack.c.l.b16 %v1115
        %v3555 = vunpack.c.h.b16 %v1115
        %v3556 = vunpack.c.l.b16 %v1116
        %v3557 = vunpack.c.h.b16 %v1116
        %v3558 = vunpack.c.l.b16 %v1117
        %v3559 = vunpack.c.h.b16 %v1117
        %v3560 = vunpack.c.l.b16 %v1118
        %v3561 = vunpack.c.h.b16 %v1118
        %v3562 = vunpack.c.l.b16 %v1119
        %v3563 = vunpack.c.h.b16 %v1119
        %v3564 = vunpack.c.l.b16 %v1120
        %v3565 = vunpack.c.h.b16 %v1120
        %v3566 = vunpack.c.l.b16 %v1121
        %v3567 = vunpack.c.h.b16 %v1121
        %v3568 = vunpack.c.l.b16 %v1122
        %v3569 = vunpack.c.h.b16 %v1122
        %v3570 = vunpack.c.l.b16 %v1123
        %v3571 = vunpack.c.h.b16 %v1123
        %v3572 = vunpack.c.l.b16 %v1124
        %v3573 = vunpack.c.h.b16 %v1124
        %v3574 = vunpack.c.l.b16 %v1125
        %v3575 = vunpack.c.h.b16 %v1125
        %v3576 = vunpack.c.l.b16 %v1126
        %v3577 = vunpack.c.h.b16 %v1126
        %v3578 = vunpack.c.l.b16 %v1127
        %v3579 = vunpack.c.h.b16 %v1127
        %v3580 = vunpack.c.l.b16 %v1128
        %v3581 = vunpack.c.h.b16 %v1128
        %v3582 = vunpack.c.l.b16 %v1129
        %v3583 = vunpack.c.h.b16 %v1129
        %v3584 = vunpack.c.l.b16 %v1130
        %v3585 = vunpack.c.h.b16 %v1130
        %v3586 = vunpack.c.l.b16 %v1131
        %v3587 = vunpack.c.h.b16 %v1131
        %v3588 = vunpack.c.l.b16 %v1132
        %v3589 = vunpack.c.h.b16 %v1132
        %v3590 = vunpack.c.l.b16 %v1133
        %v3591 = vunpack.c.h.b16 %v1133
        %v3592 = vunpack.c.l.b16 %v1134
        %v3593 = vunpack.c.h.b16 %v1134
        %v3594 = vunpack.c.l.b16 %v1135
        %v3595 = vunpack.c.h.b16 %v1135
        %v3596 = vunpack.c.l.b16 %v1136
        %v3597 = vunpack.c.h.b16 %v1136
        %v3598 = vunpack.c.l.b16 %v1137
        %v3599 = vunpack.c.h.b16 %v1137
        %v3600 = vunpack.c.l.b16 %v1138
        %v3601 = vunpack.c.h.b16 %v1138
        %v3602 = vunpack.c.l.b16 %v1139
        %v3603 = vunpack.c.h.b16 %v1139
        %v3604 = vunpack.c.l.b16 %v1140
        %v3605 = vunpack.c.h.b16 %v1140
        %v3606 = vunpack.c.l.b16 %v1141
        %v3607 = vunpack.c.h.b16 %v1141
        %v3608 = vunpack.c.l.b16 %v1142
        %v3609 = vunpack.c.h.b16 %v1142
        %v3610 = vunpack.c.l.b16 %v1143
        %v3611 = vunpack.c.h.b16 %v1143
        %v3612 = vunpack.c.l.b16 %v1144
        %v3613 = vunpack.c.h.b16 %v1144
        %v3614 = vunpack.c.l.b16 %v1145
        %v3615 = vunpack.c.h.b16 %v1145
        %v3616 = vunpack.c.l.b16 %v1146
        %v3617 = vunpack.c.h.b16 %v1146
        %v3618 = vunpack.c.l.b16 %v1147
        %v3619 = vunpack.c.h.b16 %v1147
        %v3620 = vunpack.c.l.b16 %v1148
        %v3621 = vunpack.c.h.b16 %v1148
        %v3622 = vunpack.c.l.b16 %v1149
        %v3623 = vunpack.c.h.b16 %v1149
        %v3624 = vunpack.c.l.b16 %v1150
        %v3625 = vunpack.c.h.b16 %v1150
        %v3626 = vunpack.c.l.b16 %v1151
        %v3627 = vunpack.c.h.b16 %v1151
        %v3628 = vunpack.c.l.b16 %v1152
        %v3629 = vunpack.c.h.b16 %v1152
        %v3630 = vunpack.c.l.b16 %v1153
        %v3631 = vunpack.c.h.b16 %v1153
        %v3632 = vunpack.c.l.b16 %v1154
        %v3633 = vunpack.c.h.b16 %v1154
        %v3634 = vunpack.c.l.b16 %v1155
        %v3635 = vunpack.c.h.b16 %v1155
        %v3636 = vunpack.c.l.b16 %v1156
        %v3637 = vunpack.c.h.b16 %v1156
        %v3638 = vunpack.c.l.b16 %v1157
        %v3639 = vunpack.c.h.b16 %v1157
        %v3640 = vunpack.c.l.b16 %v1158
        %v3641 = vunpack.c.h.b16 %v1158
        %v3642 = vunpack.c.l.b16 %v1159
        %v3643 = vunpack.c.h.b16 %v1159
        %v3644 = vunpack.c.l.b16 %v1160
        %v3645 = vunpack.c.h.b16 %v1160
        %v3646 = vunpack.c.l.b16 %v1161
        %v3647 = vunpack.c.h.b16 %v1161
        %v3648 = vunpack.c.l.b16 %v1162
        %v3649 = vunpack.c.h.b16 %v1162
        %v3650 = vunpack.c.l.b16 %v1163
        %v3651 = vunpack.c.h.b16 %v1163
        %v3652 = vunpack.c.l.b16 %v1164
        %v3653 = vunpack.c.h.b16 %v1164
        %v3654 = vunpack.c.l.b16 %v1165
        %v3655 = vunpack.c.h.b16 %v1165
        %v3656 = vunpack.c.l.b16 %v1166
        %v3657 = vunpack.c.h.b16 %v1166
        %v3658 = vunpack.c.l.b16 %v1167
        %v3659 = vunpack.c.h.b16 %v1167
        %v3660 = vunpack.c.l.b16 %v1168
        %v3661 = vunpack.c.h.b16 %v1168
        %v3662 = vunpack.c.l.b16 %v1169
        %v3663 = vunpack.c.h.b16 %v1169
        %v3664 = vunpack.c.l.b16 %v1170
        %v3665 = vunpack.c.h.b16 %v1170
        %v3666 = vunpack.c.l.b16 %v1171
        %v3667 = vunpack.c.h.b16 %v1171
        %v3668 = vunpack.c.l.b16 %v1172
        %v3669 = vunpack.c.h.b16 %v1172
        %v3670 = vunpack.c.l.b16 %v1173
        %v3671 = vunpack.c.h.b16 %v1173
        %v3672 = vunpack.c.l.b16 %v1174
        %v3673 = vunpack.c.h.b16 %v1174
        %v3674 = vunpack.c.l.b16 %v1175
        %v3675 = vunpack.c.h.b16 %v1175
        %v3676 = vunpack.c.l.b16 %v1176
        %v3677 = vunpack.c.h.b16 %v1176
        %v3678 = vunpack.c.l.b16 %v1177
        %v3679 = vunpack.c.h.b16 %v1177
        %v3680 = vunpack.c.l.b16 %v1178
        %v3681 = vunpack.c.h.b16 %v1178
        %v3682 = vunpack.c.l.b16 %v1179
        %v3683 = vunpack.c.h.b16 %v1179
        %v3684 = vunpack.c.l.b16 %v1180
        %v3685 = vunpack.c.h.b16 %v1180
        %v3686 = vunpack.c.l.b16 %v1181
        %v3687 = vunpack.c.h.b16 %v1181
        %v3688 = vunpack.c.l.b16 %v1182
        %v3689 = vunpack.c.h.b16 %v1182
        %v3690 = vunpack.c.l.b16 %v1183
        %v3691 = vunpack.c.h.b16 %v1183
        %v3692 = vunpack.c.l.b16 %v1184
        %v3693 = vunpack.c.h.b16 %v1184
        %v3694 = vunpack.c.l.b16 %v1185
        %v3695 = vunpack.c.h.b16 %v1185
        %v3696 = vunpack.c.l.b16 %v1186
        %v3697 = vunpack.c.h.b16 %v1186
        %v3698 = vunpack.c.l.b16 %v1187
        %v3699 = vunpack.c.h.b16 %v1187
        %v3700 = vunpack.c.l.b16 %v1188
        %v3701 = vunpack.c.h.b16 %v1188
        %v3702 = vunpack.c.l.b16 %v1189
        %v3703 = vunpack.c.h.b16 %v1189
        %v3704 = vunpack.c.l.b16 %v1190
        %v3705 = vunpack.c.h.b16 %v1190
        %v3706 = vunpack.c.l.b16 %v1191
        %v3707 = vunpack.c.h.b16 %v1191
        %v3708 = vunpack.c.l.b16 %v1192
        %v3709 = vunpack.c.h.b16 %v1192
        %v3710 = vunpack.c.l.b16 %v1193
        %v3711 = vunpack.c.h.b16 %v1193
        %v3712 = vunpack.c.l.b16 %v1194
        %v3713 = vunpack.c.h.b16 %v1194
        %v3714 = vunpack.c.l.b16 %v1195
        %v3715 = vunpack.c.h.b16 %v1195
        %v3716 = vunpack.c.l.b16 %v1196
        %v3717 = vunpack.c.h.b16 %v1196
        %v3718 = vunpack.c.l.b16 %v1197
        %v3719 = vunpack.c.h.b16 %v1197
        %v3720 = vunpack.c.l.b16 %v1198
        %v3721 = vunpack.c.h.b16 %v1198
        %v3722 = vunpack.c.l.b16 %v1199
        %v3723 = vunpack.c.h.b16 %v1199
        %v3724 = vunpack.c.l.b16 %v1200
        %v3725 = vunpack.c.h.b16 %v1200
        %v3726 = vunpack.c.l.b16 %v1201
        %v3727 = vunpack.c.h.b16 %v1201
        %v3728 = vunpack.c.l.b16 %v1202
        %v3729 = vunpack.c.h.b16 %v1202
        %v3730 = vunpack.c.l.b16 %v1203
        %v3731 = vunpack.c.h.b16 %v1203
        %v3732 = vunpack.c.l.b16 %v1204
        %v3733 = vunpack.c.h.b16 %v1204
        %v3734 = vunpack.c.l.b16 %v1205
        %v3735 = vunpack.c.h.b16 %v1205
        %v3736 = vunpack.c.l.b16 %v1206
        %v3737 = vunpack.c.h.b16 %v1206
        %v3738 = vunpack.c.l.b16 %v1207
        %v3739 = vunpack.c.h.b16 %v1207
        %v3740 = vunpack.c.l.b16 %v1208
        %v3741 = vunpack.c.h.b16 %v1208
        %v3742 = vunpack.c.l.b16 %v1209
        %v3743 = vunpack.c.h.b16 %v1209
        %v3744 = vunpack.c.l.b16 %v1210
        %v3745 = vunpack.c.h.b16 %v1210
        %v3746 = vunpack.c.l.b16 %v1211
        %v3747 = vunpack.c.h.b16 %v1211
        %v3748 = vunpack.c.l.b16 %v1212
        %v3749 = vunpack.c.h.b16 %v1212
        %v3750 = vunpack.c.l.b16 %v1213
        %v3751 = vunpack.c.h.b16 %v1213
        %v3752 = vunpack.c.l.b16 %v1214
        %v3753 = vunpack.c.h.b16 %v1214
        %v3754 = vunpack.c.l.b16 %v1215
        %v3755 = vunpack.c.h.b16 %v1215
        %v3756 = vunpack.c.l.b16 %v1216
        %v3757 = vunpack.c.h.b16 %v1216
        %v3758 = vunpack.c.l.b16 %v1217
        %v3759 = vunpack.c.h.b16 %v1217
        %v3760 = vunpack.c.l.b16 %v1218
        %v3761 = vunpack.c.h.b16 %v1218
        %v3762 = vunpack.c.l.b16 %v1219
        %v3763 = vunpack.c.h.b16 %v1219
        %v3764 = vunpack.c.l.b16 %v1220
        %v3765 = vunpack.c.h.b16 %v1220
        %v3766 = vunpack.c.l.b16 %v1221
        %v3767 = vunpack.c.h.b16 %v1221
        %v3768 = vunpack.c.l.b16 %v1222
        %v3769 = vunpack.c.h.b16 %v1222
        %v3770 = vunpack.c.l.b16 %v1223
        %v3771 = vunpack.c.h.b16 %v1223
        %v3772 = vunpack.c.l.b16 %v1224
        %v3773 = vunpack.c.h.b16 %v1224
        %v3774 = vunpack.c.l.b16 %v1225
        %v3775 = vunpack.c.h.b16 %v1225
        %v3776 = vunpack.c.l.b16 %v1226
        %v3777 = vunpack.c.h.b16 %v1226
        %v3778 = vunpack.c.l.b16 %v1227
        %v3779 = vunpack.c.h.b16 %v1227
        %v3780 = vunpack.c.l.b16 %v1228
        %v3781 = vunpack.c.h.b16 %v1228
        %v3782 = vunpack.c.l.b16 %v1229
        %v3783 = vunpack.c.h.b16 %v1229
        %v3784 = vunpack.c.l.b16 %v1230
        %v3785 = vunpack.c.h.b16 %v1230
        %v3786 = vunpack.c.l.b16 %v1231
        %v3787 = vunpack.c.h.b16 %v1231
        %v3788 = vunpack.c.l.b16 %v1232
        %v3789 = vunpack.c.h.b16 %v1232
        %v3790 = vunpack.c.l.b16 %v1233
        %v3791 = vunpack.c.h.b16 %v1233
        %v3792 = vunpack.c.l.b16 %v1234
        %v3793 = vunpack.c.h.b16 %v1234
        %v3794 = vunpack.c.l.b16 %v1235
        %v3795 = vunpack.c.h.b16 %v1235
        %v3796 = vunpack.c.l.b16 %v1236
        %v3797 = vunpack.c.h.b16 %v1236
        %v3798 = vunpack.c.l.b16 %v1237
        %v3799 = vunpack.c.h.b16 %v1237
        %v3800 = vunpack.c.l.b16 %v1238
        %v3801 = vunpack.c.h.b16 %v1238
        %v3802 = vunpack.c.l.b16 %v1239
        %v3803 = vunpack.c.h.b16 %v1239
        %v3804 = vunpack.c.l.b16 %v1240
        %v3805 = vunpack.c.h.b16 %v1240
        %v3806 = vunpack.c.l.b16 %v1241
        %v3807 = vunpack.c.h.b16 %v1241
        %v3808 = vunpack.c.l.b16 %v1242
        %v3809 = vunpack.c.h.b16 %v1242
        %v3810 = vunpack.c.l.b16 %v1243
        %v3811 = vunpack.c.h.b16 %v1243
        %v3812 = vunpack.c.l.b16 %v1244
        %v3813 = vunpack.c.h.b16 %v1244
        %v3814 = vunpack.c.l.b16 %v1245
        %v3815 = vunpack.c.h.b16 %v1245
        %v3816 = vunpack.c.l.b16 %v1246
        %v3817 = vunpack.c.h.b16 %v1246
        %v3818 = vunpack.c.l.b16 %v1247
        %v3819 = vunpack.c.h.b16 %v1247
        %v3820 = vunpack.c.l.b16 %v1248
        %v3821 = vunpack.c.h.b16 %v1248
        %v3822 = vunpack.c.l.b16 %v1249
        %v3823 = vunpack.c.h.b16 %v1249
        %v3824 = vunpack.c.l.b16 %v1250
        %v3825 = vunpack.c.h.b16 %v1250
        %v3826 = vunpack.c.l.b16 %v1251
        %v3827 = vunpack.c.h.b16 %v1251
        %v3828 = vunpack.c.l.b16 %v1252
        %v3829 = vunpack.c.h.b16 %v1252
        %v3830 = vunpack.c.l.b16 %v1253
        %v3831 = vunpack.c.h.b16 %v1253
        %v3832 = vunpack.c.l.b16 %v1254
        %v3833 = vunpack.c.h.b16 %v1254
        %v3834 = vunpack.c.l.b16 %v1255
        %v3835 = vunpack.c.h.b16 %v1255
        %v3836 = vunpack.c.l.b16 %v1256
        %v3837 = vunpack.c.h.b16 %v1256
        %v3838 = vunpack.c.l.b16 %v1257
        %v3839 = vunpack.c.h.b16 %v1257
        %v3840 = vunpack.c.l.b16 %v1258
        %v3841 = vunpack.c.h.b16 %v1258
        %v3842 = vunpack.c.l.b16 %v1259
        %v3843 = vunpack.c.h.b16 %v1259
        %v3844 = vunpack.c.l.b16 %v1260
        %v3845 = vunpack.c.h.b16 %v1260
        %v3846 = vunpack.c.l.b16 %v1261
        %v3847 = vunpack.c.h.b16 %v1261
        %v3848 = vunpack.c.l.b16 %v1262
        %v3849 = vunpack.c.h.b16 %v1262
        %v3850 = vunpack.c.l.b16 %v1263
        %v3851 = vunpack.c.h.b16 %v1263
        %v3852 = vunpack.c.l.b16 %v1264
        %v3853 = vunpack.c.h.b16 %v1264
        %v3854 = vunpack.c.l.b16 %v1265
        %v3855 = vunpack.c.h.b16 %v1265
        %v3856 = vunpack.c.l.b16 %v1266
        %v3857 = vunpack.c.h.b16 %v1266
        %v3858 = vunpack.c.l.b16 %v1267
        %v3859 = vunpack.c.h.b16 %v1267
        %v3860 = vunpack.c.l.b16 %v1268
        %v3861 = vunpack.c.h.b16 %v1268
        %v3862 = vunpack.c.l.b16 %v1269
        %v3863 = vunpack.c.h.b16 %v1269
        %v3864 = vunpack.c.l.b16 %v1270
        %v3865 = vunpack.c.h.b16 %v1270
        %v3866 = vunpack.c.l.b16 %v1271
        %v3867 = vunpack.c.h.b16 %v1271
        %v3868 = vunpack.c.l.b16 %v1272
        %v3869 = vunpack.c.h.b16 %v1272
        %v3870 = vunpack.c.l.b16 %v1273
        %v3871 = vunpack.c.h.b16 %v1273
        %v3872 = vunpack.c.l.b16 %v1274
        %v3873 = vunpack.c.h.b16 %v1274
        %v3874 = vunpack.c.l.b16 %v1275
        %v3875 = vunpack.c.h.b16 %v1275
        %v3876 = vunpack.c.l.b16 %v1276
        %v3877 = vunpack.c.h.b16 %v1276
        %v3878 = vunpack.c.l.b16 %v1277
        %v3879 = vunpack.c.h.b16 %v1277
        %v3880 = vunpack.c.l.b16 %v1278
        %v3881 = vunpack.c.h.b16 %v1278
        %v3882 = vunpack.c.l.b16 %v1279
        %v3883 = vunpack.c.h.b16 %v1279
        %v3884 = vunpack.c.l.b16 %v1280
        %v3885 = vunpack.c.h.b16 %v1280
        %v3886 = vunpack.c.l.b16 %v1281
        %v3887 = vunpack.c.h.b16 %v1281
        %v3888 = vunpack.c.l.b16 %v1282
        %v3889 = vunpack.c.h.b16 %v1282
        %v3890 = vunpack.c.l.b16 %v1283
        %v3891 = vunpack.c.h.b16 %v1283
        %v3892 = vunpack.c.l.b16 %v1284
        %v3893 = vunpack.c.h.b16 %v1284
        %v3894 = vunpack.c.l.b16 %v1285
        %v3895 = vunpack.c.h.b16 %v1285
        %v3896 = vunpack.c.l.b16 %v1286
        %v3897 = vunpack.c.h.b16 %v1286
        %v3898 = vunpack.c.l.b16 %v1287
        %v3899 = vunpack.c.h.b16 %v1287
        %v3900 = vunpack.c.l.b16 %v1288
        %v3901 = vunpack.c.h.b16 %v1288
        %v3902 = vunpack.c.l.b16 %v1289
        %v3903 = vunpack.c.h.b16 %v1289
        %v3904 = vunpack.c.l.b16 %v1290
        %v3905 = vunpack.c.h.b16 %v1290
        %v3906 = vunpack.c.l.b16 %v1291
        %v3907 = vunpack.c.h.b16 %v1291
        %v3908 = vunpack.c.l.b16 %v1292
        %v3909 = vunpack.c.h.b16 %v1292
        %v3910 = vunpack.c.l.b16 %v1293
        %v3911 = vunpack.c.h.b16 %v1293
        %v3912 = vunpack.c.l.b16 %v1294
        %v3913 = vunpack.c.h.b16 %v1294
        %v3914 = vunpack.c.l.b16 %v1295
        %v3915 = vunpack.c.h.b16 %v1295
        %v3916 = vunpack.c.l.b16 %v1296
        %v3917 = vunpack.c.h.b16 %v1296
        %v3918 = vunpack.c.l.b16 %v1297
        %v3919 = vunpack.c.h.b16 %v1297
        %v3920 = vunpack.c.l.b16 %v1298
        %v3921 = vunpack.c.h.b16 %v1298
        %v3922 = vunpack.c.l.b16 %v1299
        %v3923 = vunpack.c.h.b16 %v1299
        %v3924 = vunpack.c.l.b16 %v1300
        %v3925 = vunpack.c.h.b16 %v1300
        %v3926 = vunpack.c.l.b16 %v1301
        %v3927 = vunpack.c.h.b16 %v1301
        %v3928 = vunpack.c.l.b16 %v1302
        %v3929 = vunpack.c.h.b16 %v1302
        %v3930 = vunpack.c.l.b16 %v1303
        %v3931 = vunpack.c.h.b16 %v1303
        %v3932 = vunpack.c.l.b16 %v1304
        %v3933 = vunpack.c.h.b16 %v1304
        %v3934 = vunpack.c.l.b16 %v1305
        %v3935 = vunpack.c.h.b16 %v1305
        %v3936 = vunpack.c.l.b16 %v1306
        %v3937 = vunpack.c.h.b16 %v1306
        %v3938 = vunpack.c.l.b16 %v1307
        %v3939 = vunpack.c.h.b16 %v1307
        %v3940 = vunpack.c.l.b16 %v1308
        %v3941 = vunpack.c.h.b16 %v1308
        %v3942 = vunpack.c.l.b16 %v1309
        %v3943 = vunpack.c.h.b16 %v1309
        %v3944 = vunpack.c.l.b16 %v1310
        %v3945 = vunpack.c.h.b16 %v1310
        %v3946 = vunpack.c.l.b16 %v1311
        %v3947 = vunpack.c.h.b16 %v1311
        %v3948 = vunpack.c.l.b16 %v1312
        %v3949 = vunpack.c.h.b16 %v1312
        %v3950 = vunpack.c.l.b16 %v1313
        %v3951 = vunpack.c.h.b16 %v1313
        %v3952 = vunpack.c.l.b16 %v1314
        %v3953 = vunpack.c.h.b16 %v1314
        %v3954 = vunpack.c.l.b16 %v1315
        %v3955 = vunpack.c.h.b16 %v1315
        %v3956 = vunpack.c.l.b16 %v1316
        %v3957 = vunpack.c.h.b16 %v1316
        %v3958 = vunpack.c.l.b16 %v1317
        %v3959 = vunpack.c.h.b16 %v1317
        %v3960 = vunpack.c.l.b16 %v1318
        %v3961 = vunpack.c.h.b16 %v1318
        %v3962 = vunpack.c.l.b16 %v1319
        %v3963 = vunpack.c.h.b16 %v1319
        %v3964 = vunpack.c.l.b16 %v1320
        %v3965 = vunpack.c.h.b16 %v1320
        %v3966 = vunpack.c.l.b16 %v1321
        %v3967 = vunpack.c.h.b16 %v1321
        %v3968 = vunpack.c.l.b16 %v1322
        %v3969 = vunpack.c.h.b16 %v1322
        %v3970 = vunpack.c.l.b16 %v1323
        %v3971 = vunpack.c.h.b16 %v1323
        %v3972 = vunpack.c.l.b16 %v1324
        %v3973 = vunpack.c.h.b16 %v1324
        %v3974 = vunpack.c.l.b16 %v1325
        %v3975 = vunpack.c.h.b16 %v1325
        %v3976 = vunpack.c.l.b16 %v1326
        %v3977 = vunpack.c.h.b16 %v1326
        %v3978 = vunpack.c.l.b16 %v1327
        %v3979 = vunpack.c.h.b16 %v1327
        %v3980 = vunpack.c.l.b16 %v1328
        %v3981 = vunpack.c.h.b16 %v1328
        %v3982 = vunpack.c.l.b16 %v1329
        %v3983 = vunpack.c.h.b16 %v1329
        %v3984 = vunpack.c.l.b16 %v1330
        %v3985 = vunpack.c.h.b16 %v1330
        %v3986 = vunpack.c.l.b16 %v1331
        %v3987 = vunpack.c.h.b16 %v1331
        %v3988 = vunpack.c.l.b16 %v1332
        %v3989 = vunpack.c.h.b16 %v1332
        %v3990 = vunpack.c.l.b16 %v1333
        %v3991 = vunpack.c.h.b16 %v1333
        %v3992 = vunpack.c.l.b16 %v1334
        %v3993 = vunpack.c.h.b16 %v1334
        %v3994 = vunpack.c.l.b16 %v1335
        %v3995 = vunpack.c.h.b16 %v1335
        %v3996 = vunpack.c.l.b16 %v1336
        %v3997 = vunpack.c.h.b16 %v1336
        %v3998 = vunpack.c.l.b16 %v1337
        %v3999 = vunpack.c.h.b16 %v1337
        %v4000 = vunpack.c.l.b16 %v1338
        %v4001 = vunpack.c.h.b16 %v1338
        %v4002 = vunpack.c.l.b16 %v1339
        %v4003 = vunpack.c.h.b16 %v1339
        %v4004 = vunpack.c.l.b16 %v1340
        %v4005 = vunpack.c.h.b16 %v1340
        %v4006 = vunpack.c.l.b16 %v1341
        %v4007 = vunpack.c.h.b16 %v1341
        %v4008 = vunpack.c.l.b16 %v1342
        %v4009 = vunpack.c.h.b16 %v1342
        %v4010 = vunpack.c.l.b16 %v1343
        %v4011 = vunpack.c.h.b16 %v1343
        %v4012 = vunpack.c.l.b16 %v1344
        %v4013 = vunpack.c.h.b16 %v1344
        %v4014 = vunpack.c.l.b16 %v1345
        %v4015 = vunpack.c.h.b16 %v1345
        %v4016 = vunpack.c.l.b16 %v1346
        %v4017 = vunpack.c.h.b16 %v1346
        %v4018 = vunpack.c.l.b16 %v1347
        %v4019 = vunpack.c.h.b16 %v1347
        %v4020 = vunpack.c.l.b16 %v1348
        %v4021 = vunpack.c.h.b16 %v1348
        %v4022 = vunpack.c.l.b16 %v1349
        %v4023 = vunpack.c.h.b16 %v1349
        %v4024 = vunpack.c.l.b16 %v1350
        %v4025 = vunpack.c.h.b16 %v1350
        %v4026 = vunpack.c.l.b16 %v1351
        %v4027 = vunpack.c.h.b16 %v1351
        %v4028 = vunpack.c.l.b16 %v1352
        %v4029 = vunpack.c.h.b16 %v1352
        %v4030 = vunpack.c.l.b16 %v1353
        %v4031 = vunpack.c.h.b16 %v1353
        %v4032 = vunpack.c.l.b16 %v1354
        %v4033 = vunpack.c.h.b16 %v1354
        %v4034 = vunpack.c.l.b16 %v1355
        %v4035 = vunpack.c.h.b16 %v1355
        %v4036 = vunpack.c.l.b16 %v1356
        %v4037 = vunpack.c.h.b16 %v1356
        %v4038 = vunpack.c.l.b16 %v1357
        %v4039 = vunpack.c.h.b16 %v1357
        %v4040 = vunpack.c.l.b16 %v1358
        %v4041 = vunpack.c.h.b16 %v1358
        %v4042 = vunpack.c.l.b16 %v1359
        %v4043 = vunpack.c.h.b16 %v1359
        %v4044 = vunpack.c.l.b16 %v1360
        %v4045 = vunpack.c.h.b16 %v1360
        %v4046 = vunpack.c.l.b16 %v1361
        %v4047 = vunpack.c.h.b16 %v1361
        %v4048 = vunpack.c.l.b16 %v1362
        %v4049 = vunpack.c.h.b16 %v1362
        %v4050 = vunpack.c.l.b16 %v1363
        %v4051 = vunpack.c.h.b16 %v1363
        %v4052 = vpack.c.b16 %v2342, %v2324
        %v4053 = vpack.c.b16 %v2343, %v2325
        %v4054 = vpack.c.b16 %v2344, %v2326
        %v4055 = vpack.c.b16 %v2345, %v2327
        %v4056 = vpack.c.b16 %v2346, %v2328
        %v4057 = vpack.c.b16 %v2347, %v2329
        %v4058 = vpack.c.b16 %v2348, %v2330
        %v4059 = vpack.c.b16 %v2349, %v2331
        %v4060 = vpack.c.b16 %v2350, %v2332
        %v4061 = vpack.c.b16 %v2351, %v2333
        %v4062 = vpack.c.b16 %v2352, %v2334
        %v4063 = vpack.c.b16 %v2353, %v2335
        %v4064 = vpack.c.b16 %v2354, %v2336
        %v4065 = vpack.c.b16 %v2355, %v2337
        %v4066 = vpack.c.b16 %v2356, %v2338
        %v4067 = vpack.c.b16 %v2357, %v2339
        %v4068 = vpack.c.b16 %v2358, %v2340
        %v4069 = vpack.c.b16 %v2359, %v2341
        %v4070 = vpack.c.b16 %v2378, %v2360
        %v4071 = vpack.c.b16 %v2379, %v2361
        %v4072 = vpack.c.b16 %v2380, %v2362
        %v4073 = vpack.c.b16 %v2381, %v2363
        %v4074 = vpack.c.b16 %v2382, %v2364
        %v4075 = vpack.c.b16 %v2383, %v2365
        %v4076 = vpack.c.b16 %v2384, %v2366
        %v4077 = vpack.c.b16 %v2385, %v2367
        %v4078 = vpack.c.b16 %v2386, %v2368
        %v4079 = vpack.c.b16 %v2387, %v2369
        %v4080 = vpack.c.b16 %v2388, %v2370
        %v4081 = vpack.c.b16 %v2389, %v2371
        %v4082 = vpack.c.b16 %v2390, %v2372
        %v4083 = vpack.c.b16 %v2391, %v2373
        %v4084 = vpack.c.b16 %v2392, %v2374
        %v4085 = vpack.c.b16 %v2393, %v2375
        %v4086 = vpack.c.b16 %v2394, %v2376
        %v4087 = vpack.c.b16 %v2395, %v2377
        %v4088 = vpack.c.b16 %v2414, %v2396
        %v4089 = vpack.c.b16 %v2415, %v2397
        %v4090 = vpack.c.b16 %v2416, %v2398
        %v4091 = vpack.c.b16 %v2417, %v2399
        %v4092 = vpack.c.b16 %v2418, %v2400
        %v4093 = vpack.c.b16 %v2419, %v2401
        %v4094 = vpack.c.b16 %v2420, %v2402
        %v4095 = vpack.c.b16 %v2421, %v2403
        %v4096 = vpack.c.b16 %v2422, %v2404
        %v4097 = vpack.c.b16 %v2423, %v2405
        %v4098 = vpack.c.b16 %v2424, %v2406
        %v4099 = vpack.c.b16 %v2425, %v2407
        %v4100 = vpack.c.b16 %v2426, %v2408
        %v4101 = vpack.c.b16 %v2427, %v2409
        %v4102 = vpack.c.b16 %v2428, %v2410
        %v4103 = vpack.c.b16 %v2429, %v2411
        %v4104 = vpack.c.b16 %v2430, %v2412
        %v4105 = vpack.c.b16 %v2431, %v2413
        %v4106 = vpack.c.b16 %v2450, %v2432
        %v4107 = vpack.c.b16 %v2451, %v2433
        %v4108 = vpack.c.b16 %v2452, %v2434
        %v4109 = vpack.c.b16 %v2453, %v2435
        %v4110 = vpack.c.b16 %v2454, %v2436
        %v4111 = vpack.c.b16 %v2455, %v2437
        %v4112 = vpack.c.b16 %v2456, %v2438
        %v4113 = vpack.c.b16 %v2457, %v2439
        %v4114 = vpack.c.b16 %v2458, %v2440
        %v4115 = vpack.c.b16 %v2459, %v2441
        %v4116 = vpack.c.b16 %v2460, %v2442
        %v4117 = vpack.c.b16 %v2461, %v2443
        %v4118 = vpack.c.b16 %v2462, %v2444
        %v4119 = vpack.c.b16 %v2463, %v2445
        %v4120 = vpack.c.b16 %v2464, %v2446
        %v4121 = vpack.c.b16 %v2465, %v2447
        %v4122 = vpack.c.b16 %v2466, %v2448
        %v4123 = vpack.c.b16 %v2467, %v2449
        %v4124 = vpack.c.b16 %v2486, %v2468
        %v4125 = vpack.c.b16 %v2487, %v2469
        %v4126 = vpack.c.b16 %v2488, %v2470
        %v4127 = vpack.c.b16 %v2489, %v2471
        %v4128 = vpack.c.b16 %v2490, %v2472
        %v4129 = vpack.c.b16 %v2491, %v2473
        %v4130 = vpack.c.b16 %v2492, %v2474
        %v4131 = vpack.c.b16 %v2493, %v2475
        %v4132 = vpack.c.b16 %v2494, %v2476
        %v4133 = vpack.c.b16 %v2495, %v2477
        %v4134 = vpack.c.b16 %v2496, %v2478
        %v4135 = vpack.c.b16 %v2497, %v2479
        %v4136 = vpack.c.b16 %v2498, %v2480
        %v4137 = vpack.c.b16 %v2499, %v2481
        %v4138 = vpack.c.b16 %v2500, %v2482
        %v4139 = vpack.c.b16 %v2501, %v2483
        %v4140 = vpack.c.b16 %v2502, %v2484
        %v4141 = vpack.c.b16 %v2503, %v2485
        %v4142 = vpack.c.b16 %v2522, %v2504
        %v4143 = vpack.c.b16 %v2523, %v2505
        %v4144 = vpack.c.b16 %v2524, %v2506
        %v4145 = vpack.c.b16 %v2525, %v2507
        %v4146 = vpack.c.b16 %v2526, %v2508
        %v4147 = vpack.c.b16 %v2527, %v2509
        %v4148 = vpack.c.b16 %v2528, %v2510
        %v4149 = vpack.c.b16 %v2529, %v2511
        %v4150 = vpack.c.b16 %v2530, %v2512
        %v4151 = vpack.c.b16 %v2531, %v2513
        %v4152 = vpack.c.b16 %v2532, %v2514
        %v4153 = vpack.c.b16 %v2533, %v2515
        %v4154 = vpack.c.b16 %v2534, %v2516
        %v4155 = vpack.c.b16 %v2535, %v2517
        %v4156 = vpack.c.b16 %v2536, %v2518
        %v4157 = vpack.c.b16 %v2537, %v2519
        %v4158 = vpack.c.b16 %v2538, %v2520
        %v4159 = vpack.c.b16 %v2539, %v2521
        %v4160 = vpack.c.b16 %v2558, %v2540
        %v4161 = vpack.c.b16 %v2559, %v2541
        %v4162 = vpack.c.b16 %v2560, %v2542
        %v4163 = vpack.c.b16 %v2561, %v2543
        %v4164 = vpack.c.b16 %v2562, %v2544
        %v4165 = vpack.c.b16 %v2563, %v2545
        %v4166 = vpack.c.b16 %v2564, %v2546
        %v4167 = vpack.c.b16 %v2565, %v2547
        %v4168 = vpack.c.b16 %v2566, %v2548
        %v4169 = vpack.c.b16 %v2567, %v2549
        %v4170 = vpack.c.b16 %v2568, %v2550
        %v4171 = vpack.c.b16 %v2569, %v2551
        %v4172 = vpack.c.b16 %v2570, %v2552
        %v4173 = vpack.c.b16 %v2571, %v2553
        %v4174 = vpack.c.b16 %v2572, %v2554
        %v4175 = vpack.c.b16 %v2573, %v2555
        %v4176 = vpack.c.b16 %v2574, %v2556
        %v4177 = vpack.c.b16 %v2575, %v2557
        %v4178 = vpack.c.b16 %v2594, %v2576
        %v4179 = vpack.c.b16 %v2595, %v2577
        %v4180 = vpack.c.b16 %v2596, %v2578
        %v4181 = vpack.c.b16 %v2597, %v2579
        %v4182 = vpack.c.b16 %v2598, %v2580
        %v4183 = vpack.c.b16 %v2599, %v2581
        %v4184 = vpack.c.b16 %v2600, %v2582
        %v4185 = vpack.c.b16 %v2601, %v2583
        %v4186 = vpack.c.b16 %v2602, %v2584
        %v4187 = vpack.c.b16 %v2603, %v2585
        %v4188 = vpack.c.b16 %v2604, %v2586
        %v4189 = vpack.c.b16 %v2605, %v2587
        %v4190 = vpack.c.b16 %v2606, %v2588
        %v4191 = vpack.c.b16 %v2607, %v2589
        %v4192 = vpack.c.b16 %v2608, %v2590
        %v4193 = vpack.c.b16 %v2609, %v2591
        %v4194 = vpack.c.b16 %v2610, %v2592
        %v4195 = vpack.c.b16 %v2611, %v2593
        %v4196 = vpack.c.b16 %v2630, %v2612
        %v4197 = vpack.c.b16 %v2631, %v2613
        %v4198 = vpack.c.b16 %v2632, %v2614
        %v4199 = vpack.c.b16 %v2633, %v2615
        %v4200 = vpack.c.b16 %v2634, %v2616
        %v4201 = vpack.c.b16 %v2635, %v2617
        %v4202 = vpack.c.b16 %v2636, %v2618
        %v4203 = vpack.c.b16 %v2637, %v2619
        %v4204 = vpack.c.b16 %v2638, %v2620
        %v4205 = vpack.c.b16 %v2639, %v2621
        %v4206 = vpack.c.b16 %v2640, %v2622
        %v4207 = vpack.c.b16 %v2641, %v2623
        %v4208 = vpack.c.b16 %v2642, %v2624
        %v4209 = vpack.c.b16 %v2643, %v2625
        %v4210 = vpack.c.b16 %v2644, %v2626
        %v4211 = vpack.c.b16 %v2645, %v2627
        %v4212 = vpack.c.b16 %v2646, %v2628
        %v4213 = vpack.c.b16 %v2647, %v2629
        %v4214 = vpack.c.b16 %v2666, %v2648
        %v4215 = vpack.c.b16 %v2667, %v2649
        %v4216 = vpack.c.b16 %v2668, %v2650
        %v4217 = vpack.c.b16 %v2669, %v2651
        %v4218 = vpack.c.b16 %v2670, %v2652
        %v4219 = vpack.c.b16 %v2671, %v2653
        %v4220 = vpack.c.b16 %v2672, %v2654
        %v4221 = vpack.c.b16 %v2673, %v2655
        %v4222 = vpack.c.b16 %v2674, %v2656
        %v4223 = vpack.c.b16 %v2675, %v2657
        %v4224 = vpack.c.b16 %v2676, %v2658
        %v4225 = vpack.c.b16 %v2677, %v2659
        %v4226 = vpack.c.b16 %v2678, %v2660
        %v4227 = vpack.c.b16 %v2679, %v2661
        %v4228 = vpack.c.b16 %v2680, %v2662
        %v4229 = vpack.c.b16 %v2681, %v2663
        %v4230 = vpack.c.b16 %v2682, %v2664
        %v4231 = vpack.c.b16 %v2683, %v2665
        %v4232 = vpack.c.b16 %v2702, %v2684
        %v4233 = vpack.c.b16 %v2703, %v2685
        %v4234 = vpack.c.b16 %v2704, %v2686
        %v4235 = vpack.c.b16 %v2705, %v2687
        %v4236 = vpack.c.b16 %v2706, %v2688
        %v4237 = vpack.c.b16 %v2707, %v2689
        %v4238 = vpack.c.b16 %v2708, %v2690
        %v4239 = vpack.c.b16 %v2709, %v2691
        %v4240 = vpack.c.b16 %v2710, %v2692
        %v4241 = vpack.c.b16 %v2711, %v2693
        %v4242 = vpack.c.b16 %v2712, %v2694
        %v4243 = vpack.c.b16 %v2713, %v2695
        %v4244 = vpack.c.b16 %v2714, %v2696
        %v4245 = vpack.c.b16 %v2715, %v2697
        %v4246 = vpack.c.b16 %v2716, %v2698
        %v4247 = vpack.c.b16 %v2717, %v2699
        %v4248 = vpack.c.b16 %v2718, %v2700
        %v4249 = vpack.c.b16 %v2719, %v2701
        %v4250 = vpack.c.b16 %v2738, %v2720
        %v4251 = vpack.c.b16 %v2739, %v2721
        %v4252 = vpack.c.b16 %v2740, %v2722
        %v4253 = vpack.c.b16 %v2741, %v2723
        %v4254 = vpack.c.b16 %v2742, %v2724
        %v4255 = vpack.c.b16 %v2743, %v2725
        %v4256 = vpack.c.b16 %v2744, %v2726
        %v4257 = vpack.c.b16 %v2745, %v2727
        %v4258 = vpack.c.b16 %v2746, %v2728
        %v4259 = vpack.c.b16 %v2747, %v2729
        %v4260 = vpack.c.b16 %v2748, %v2730
        %v4261 = vpack.c.b16 %v2749, %v2731
        %v4262 = vpack.c.b16 %v2750, %v2732
        %v4263 = vpack.c.b16 %v2751, %v2733
        %v4264 = vpack.c.b16 %v2752, %v2734
        %v4265 = vpack.c.b16 %v2753, %v2735
        %v4266 = vpack.c.b16 %v2754, %v2736
        %v4267 = vpack.c.b16 %v2755, %v2737
        %v4268 = vpack.c.b16 %v2774, %v2756
        %v4269 = vpack.c.b16 %v2775, %v2757
        %v4270 = vpack.c.b16 %v2776, %v2758
        %v4271 = vpack.c.b16 %v2777, %v2759
        %v4272 = vpack.c.b16 %v2778, %v2760
        %v4273 = vpack.c.b16 %v2779, %v2761
        %v4274 = vpack.c.b16 %v2780, %v2762
        %v4275 = vpack.c.b16 %v2781, %v2763
        %v4276 = vpack.c.b16 %v2782, %v2764
        %v4277 = vpack.c.b16 %v2783, %v2765
        %v4278 = vpack.c.b16 %v2784, %v2766
        %v4279 = vpack.c.b16 %v2785, %v2767
        %v4280 = vpack.c.b16 %v2786, %v2768
        %v4281 = vpack.c.b16 %v2787, %v2769
        %v4282 = vpack.c.b16 %v2788, %v2770
        %v4283 = vpack.c.b16 %v2789, %v2771
        %v4284 = vpack.c.b16 %v2790, %v2772
        %v4285 = vpack.c.b16 %v2791, %v2773
        %v4286 = vpack.c.b16 %v2810, %v2792
        %v4287 = vpack.c.b16 %v2811, %v2793
        %v4288 = vpack.c.b16 %v2812, %v2794
        %v4289 = vpack.c.b16 %v2813, %v2795
        %v4290 = vpack.c.b16 %v2814, %v2796
        %v4291 = vpack.c.b16 %v2815, %v2797
        %v4292 = vpack.c.b16 %v2816, %v2798
        %v4293 = vpack.c.b16 %v2817, %v2799
        %v4294 = vpack.c.b16 %v2818, %v2800
        %v4295 = vpack.c.b16 %v2819, %v2801
        %v4296 = vpack.c.b16 %v2820, %v2802
        %v4297 = vpack.c.b16 %v2821, %v2803
        %v4298 = vpack.c.b16 %v2822, %v2804
        %v4299 = vpack.c.b16 %v2823, %v2805
        %v4300 = vpack.c.b16 %v2824, %v2806
        %v4301 = vpack.c.b16 %v2825, %v2807
        %v4302 = vpack.c.b16 %v2826, %v2808
        %v4303 = vpack.c.b16 %v2827, %v2809
        %v4304 = vpack.c.b16 %v2846, %v2828
        %v4305 = vpack.c.b16 %v2847, %v2829
        %v4306 = vpack.c.b16 %v2848, %v2830
        %v4307 = vpack.c.b16 %v2849, %v2831
        %v4308 = vpack.c.b16 %v2850, %v2832
        %v4309 = vpack.c.b16 %v2851, %v2833
        %v4310 = vpack.c.b16 %v2852, %v2834
        %v4311 = vpack.c.b16 %v2853, %v2835
        %v4312 = vpack.c.b16 %v2854, %v2836
        %v4313 = vpack.c.b16 %v2855, %v2837
        %v4314 = vpack.c.b16 %v2856, %v2838
        %v4315 = vpack.c.b16 %v2857, %v2839
        %v4316 = vpack.c.b16 %v2858, %v2840
        %v4317 = vpack.c.b16 %v2859, %v2841
        %v4318 = vpack.c.b16 %v2860, %v2842
        %v4319 = vpack.c.b16 %v2861, %v2843
        %v4320 = vpack.c.b16 %v2862, %v2844
        %v4321 = vpack.c.b16 %v2863, %v2845
        %v4322 = vpack.c.b16 %v2882, %v2864
        %v4323 = vpack.c.b16 %v2883, %v2865
        %v4324 = vpack.c.b16 %v2884, %v2866
        %v4325 = vpack.c.b16 %v2885, %v2867
        %v4326 = vpack.c.b16 %v2886, %v2868
        %v4327 = vpack.c.b16 %v2887, %v2869
        %v4328 = vpack.c.b16 %v2888, %v2870
        %v4329 = vpack.c.b16 %v2889, %v2871
        %v4330 = vpack.c.b16 %v2890, %v2872
        %v4331 = vpack.c.b16 %v2891, %v2873
        %v4332 = vpack.c.b16 %v2892, %v2874
        %v4333 = vpack.c.b16 %v2893, %v2875
        %v4334 = vpack.c.b16 %v2894, %v2876
        %v4335 = vpack.c.b16 %v2895, %v2877
        %v4336 = vpack.c.b16 %v2896, %v2878
        %v4337 = vpack.c.b16 %v2897, %v2879
        %v4338 = vpack.c.b16 %v2898, %v2880
        %v4339 = vpack.c.b16 %v2899, %v2881
        %v4340 = vpack.c.b16 %v2918, %v2900
        %v4341 = vpack.c.b16 %v2919, %v2901
        %v4342 = vpack.c.b16 %v2920, %v2902
        %v4343 = vpack.c.b16 %v2921, %v2903
        %v4344 = vpack.c.b16 %v2922, %v2904
        %v4345 = vpack.c.b16 %v2923, %v2905
        %v4346 = vpack.c.b16 %v2924, %v2906
        %v4347 = vpack.c.b16 %v2925, %v2907
        %v4348 = vpack.c.b16 %v2926, %v2908
        %v4349 = vpack.c.b16 %v2927, %v2909
        %v4350 = vpack.c.b16 %v2928, %v2910
        %v4351 = vpack.c.b16 %v2929, %v2911
        %v4352 = vpack.c.b16 %v2930, %v2912
        %v4353 = vpack.c.b16 %v2931, %v2913
        %v4354 = vpack.c.b16 %v2932, %v2914
        %v4355 = vpack.c.b16 %v2933, %v2915
        %v4356 = vpack.c.b16 %v2934, %v2916
        %v4357 = vpack.c.b16 %v2935, %v2917
        %v4358 = vpack.c.b16 %v2954, %v2936
        %v4359 = vpack.c.b16 %v2955, %v2937
        %v4360 = vpack.c.b16 %v2956, %v2938
        %v4361 = vpack.c.b16 %v2957, %v2939
        %v4362 = vpack.c.b16 %v2958, %v2940
        %v4363 = vpack.c.b16 %v2959, %v2941
        %v4364 = vpack.c.b16 %v2960, %v2942
        %v4365 = vpack.c.b16 %v2961, %v2943
        %v4366 = vpack.c.b16 %v2962, %v2944
        %v4367 = vpack.c.b16 %v2963, %v2945
        %v4368 = vpack.c.b16 %v2964, %v2946
        %v4369 = vpack.c.b16 %v2965, %v2947
        %v4370 = vpack.c.b16 %v2966, %v2948
        %v4371 = vpack.c.b16 %v2967, %v2949
        %v4372 = vpack.c.b16 %v2968, %v2950
        %v4373 = vpack.c.b16 %v2969, %v2951
        %v4374 = vpack.c.b16 %v2970, %v2952
        %v4375 = vpack.c.b16 %v2971, %v2953
        %v4376 = vpack.c.b16 %v2990, %v2972
        %v4377 = vpack.c.b16 %v2991, %v2973
        %v4378 = vpack.c.b16 %v2992, %v2974
        %v4379 = vpack.c.b16 %v2993, %v2975
        %v4380 = vpack.c.b16 %v2994, %v2976
        %v4381 = vpack.c.b16 %v2995, %v2977
        %v4382 = vpack.c.b16 %v2996, %v2978
        %v4383 = vpack.c.b16 %v2997, %v2979
        %v4384 = vpack.c.b16 %v2998, %v2980
        %v4385 = vpack.c.b16 %v2999, %v2981
        %v4386 = vpack.c.b16 %v3000, %v2982
        %v4387 = vpack.c.b16 %v3001, %v2983
        %v4388 = vpack.c.b16 %v3002, %v2984
        %v4389 = vpack.c.b16 %v3003, %v2985
        %v4390 = vpack.c.b16 %v3004, %v2986
        %v4391 = vpack.c.b16 %v3005, %v2987
        %v4392 = vpack.c.b16 %v3006, %v2988
        %v4393 = vpack.c.b16 %v3007, %v2989
        %v4394 = vpack.c.b16 %v3026, %v3008
        %v4395 = vpack.c.b16 %v3027, %v3009
        %v4396 = vpack.c.b16 %v3028, %v3010
        %v4397 = vpack.c.b16 %v3029, %v3011
        %v4398 = vpack.c.b16 %v3030, %v3012
        %v4399 = vpack.c.b16 %v3031, %v3013
        %v4400 = vpack.c.b16 %v3032, %v3014
        %v4401 = vpack.c.b16 %v3033, %v3015
        %v4402 = vpack.c.b16 %v3034, %v3016
        %v4403 = vpack.c.b16 %v3035, %v3017
        %v4404 = vpack.c.b16 %v3036, %v3018
        %v4405 = vpack.c.b16 %v3037, %v3019
        %v4406 = vpack.c.b16 %v3038, %v3020
        %v4407 = vpack.c.b16 %v3039, %v3021
        %v4408 = vpack.c.b16 %v3040, %v3022
        %v4409 = vpack.c.b16 %v3041, %v3023
        %v4410 = vpack.c.b16 %v3042, %v3024
        %v4411 = vpack.c.b16 %v3043, %v3025
        %v4412 = vpack.c.b16 %v3062, %v3044
        %v4413 = vpack.c.b16 %v3063, %v3045
        %v4414 = vpack.c.b16 %v3064, %v3046
        %v4415 = vpack.c.b16 %v3065, %v3047
        %v4416 = vpack.c.b16 %v3066, %v3048
        %v4417 = vpack.c.b16 %v3067, %v3049
        %v4418 = vpack.c.b16 %v3068, %v3050
        %v4419 = vpack.c.b16 %v3069, %v3051
        %v4420 = vpack.c.b16 %v3070, %v3052
        %v4421 = vpack.c.b16 %v3071, %v3053
        %v4422 = vpack.c.b16 %v3072, %v3054
        %v4423 = vpack.c.b16 %v3073, %v3055
        %v4424 = vpack.c.b16 %v3074, %v3056
        %v4425 = vpack.c.b16 %v3075, %v3057
        %v4426 = vpack.c.b16 %v3076, %v3058
        %v4427 = vpack.c.b16 %v3077, %v3059
        %v4428 = vpack.c.b16 %v3078, %v3060
        %v4429 = vpack.c.b16 %v3079, %v3061
        %v4430 = vpack.c.b16 %v3098, %v3080
        %v4431 = vpack.c.b16 %v3099, %v3081
        %v4432 = vpack.c.b16 %v3100, %v3082
        %v4433 = vpack.c.b16 %v3101, %v3083
        %v4434 = vpack.c.b16 %v3102, %v3084
        %v4435 = vpack.c.b16 %v3103, %v3085
        %v4436 = vpack.c.b16 %v3104, %v3086
        %v4437 = vpack.c.b16 %v3105, %v3087
        %v4438 = vpack.c.b16 %v3106, %v3088
        %v4439 = vpack.c.b16 %v3107, %v3089
        %v4440 = vpack.c.b16 %v3108, %v3090
        %v4441 = vpack.c.b16 %v3109, %v3091
        %v4442 = vpack.c.b16 %v3110, %v3092
        %v4443 = vpack.c.b16 %v3111, %v3093
        %v4444 = vpack.c.b16 %v3112, %v3094
        %v4445 = vpack.c.b16 %v3113, %v3095
        %v4446 = vpack.c.b16 %v3114, %v3096
        %v4447 = vpack.c.b16 %v3115, %v3097
        %v4448 = vpack.c.b16 %v3134, %v3116
        %v4449 = vpack.c.b16 %v3135, %v3117
        %v4450 = vpack.c.b16 %v3136, %v3118
        %v4451 = vpack.c.b16 %v3137, %v3119
        %v4452 = vpack.c.b16 %v3138, %v3120
        %v4453 = vpack.c.b16 %v3139, %v3121
        %v4454 = vpack.c.b16 %v3140, %v3122
        %v4455 = vpack.c.b16 %v3141, %v3123
        %v4456 = vpack.c.b16 %v3142, %v3124
        %v4457 = vpack.c.b16 %v3143, %v3125
        %v4458 = vpack.c.b16 %v3144, %v3126
        %v4459 = vpack.c.b16 %v3145, %v3127
        %v4460 = vpack.c.b16 %v3146, %v3128
        %v4461 = vpack.c.b16 %v3147, %v3129
        %v4462 = vpack.c.b16 %v3148, %v3130
        %v4463 = vpack.c.b16 %v3149, %v3131
        %v4464 = vpack.c.b16 %v3150, %v3132
        %v4465 = vpack.c.b16 %v3151, %v3133
        %v4466 = vpack.c.b16 %v3170, %v3152
        %v4467 = vpack.c.b16 %v3171, %v3153
        %v4468 = vpack.c.b16 %v3172, %v3154
        %v4469 = vpack.c.b16 %v3173, %v3155
        %v4470 = vpack.c.b16 %v3174, %v3156
        %v4471 = vpack.c.b16 %v3175, %v3157
        %v4472 = vpack.c.b16 %v3176, %v3158
        %v4473 = vpack.c.b16 %v3177, %v3159
        %v4474 = vpack.c.b16 %v3178, %v3160
        %v4475 = vpack.c.b16 %v3179, %v3161
        %v4476 = vpack.c.b16 %v3180, %v3162
        %v4477 = vpack.c.b16 %v3181, %v3163
        %v4478 = vpack.c.b16 %v3182, %v3164
        %v4479 = vpack.c.b16 %v3183, %v3165
        %v4480 = vpack.c.b16 %v3184, %v3166
        %v4481 = vpack.c.b16 %v3185, %v3167
        %v4482 = vpack.c.b16 %v3186, %v3168
        %v4483 = vpack.c.b16 %v3187, %v3169
        %v4484 = vpack.c.b16 %v3206, %v3188
        %v4485 = vpack.c.b16 %v3207, %v3189
        %v4486 = vpack.c.b16 %v3208, %v3190
        %v4487 = vpack.c.b16 %v3209, %v3191
        %v4488 = vpack.c.b16 %v3210, %v3192
        %v4489 = vpack.c.b16 %v3211, %v3193
        %v4490 = vpack.c.b16 %v3212, %v3194
        %v4491 = vpack.c.b16 %v3213, %v3195
        %v4492 = vpack.c.b16 %v3214, %v3196
        %v4493 = vpack.c.b16 %v3215, %v3197
        %v4494 = vpack.c.b16 %v3216, %v3198
        %v4495 = vpack.c.b16 %v3217, %v3199
        %v4496 = vpack.c.b16 %v3218, %v3200
        %v4497 = vpack.c.b16 %v3219, %v3201
        %v4498 = vpack.c.b16 %v3220, %v3202
        %v4499 = vpack.c.b16 %v3221, %v3203
        %v4500 = vpack.c.b16 %v3222, %v3204
        %v4501 = vpack.c.b16 %v3223, %v3205
        %v4502 = vpack.c.b16 %v3242, %v3224
        %v4503 = vpack.c.b16 %v3243, %v3225
        %v4504 = vpack.c.b16 %v3244, %v3226
        %v4505 = vpack.c.b16 %v3245, %v3227
        %v4506 = vpack.c.b16 %v3246, %v3228
        %v4507 = vpack.c.b16 %v3247, %v3229
        %v4508 = vpack.c.b16 %v3248, %v3230
        %v4509 = vpack.c.b16 %v3249, %v3231
        %v4510 = vpack.c.b16 %v3250, %v3232
        %v4511 = vpack.c.b16 %v3251, %v3233
        %v4512 = vpack.c.b16 %v3252, %v3234
        %v4513 = vpack.c.b16 %v3253, %v3235
        %v4514 = vpack.c.b16 %v3254, %v3236
        %v4515 = vpack.c.b16 %v3255, %v3237
        %v4516 = vpack.c.b16 %v3256, %v3238
        %v4517 = vpack.c.b16 %v3257, %v3239
        %v4518 = vpack.c.b16 %v3258, %v3240
        %v4519 = vpack.c.b16 %v3259, %v3241
        %v4520 = vpack.c.b16 %v3278, %v3260
        %v4521 = vpack.c.b16 %v3279, %v3261
        %v4522 = vpack.c.b16 %v3280, %v3262
        %v4523 = vpack.c.b16 %v3281, %v3263
        %v4524 = vpack.c.b16 %v3282, %v3264
        %v4525 = vpack.c.b16 %v3283, %v3265
        %v4526 = vpack.c.b16 %v3284, %v3266
        %v4527 = vpack.c.b16 %v3285, %v3267
        %v4528 = vpack.c.b16 %v3286, %v3268
        %v4529 = vpack.c.b16 %v3287, %v3269
        %v4530 = vpack.c.b16 %v3288, %v3270
        %v4531 = vpack.c.b16 %v3289, %v3271
        %v4532 = vpack.c.b16 %v3290, %v3272
        %v4533 = vpack.c.b16 %v3291, %v3273
        %v4534 = vpack.c.b16 %v3292, %v3274
        %v4535 = vpack.c.b16 %v3293, %v3275
        %v4536 = vpack.c.b16 %v3294, %v3276
        %v4537 = vpack.c.b16 %v3295, %v3277
        %v4538 = vpack.c.b16 %v3314, %v3296
        %v4539 = vpack.c.b16 %v3315, %v3297
        %v4540 = vpack.c.b16 %v3316, %v3298
        %v4541 = vpack.c.b16 %v3317, %v3299
        %v4542 = vpack.c.b16 %v3318, %v3300
        %v4543 = vpack.c.b16 %v3319, %v3301
        %v4544 = vpack.c.b16 %v3320, %v3302
        %v4545 = vpack.c.b16 %v3321, %v3303
        %v4546 = vpack.c.b16 %v3322, %v3304
        %v4547 = vpack.c.b16 %v3323, %v3305
        %v4548 = vpack.c.b16 %v3324, %v3306
        %v4549 = vpack.c.b16 %v3325, %v3307
        %v4550 = vpack.c.b16 %v3326, %v3308
        %v4551 = vpack.c.b16 %v3327, %v3309
        %v4552 = vpack.c.b16 %v3328, %v3310
        %v4553 = vpack.c.b16 %v3329, %v3311
        %v4554 = vpack.c.b16 %v3330, %v3312
        %v4555 = vpack.c.b16 %v3331, %v3313
        %v4556 = vpack.c.b16 %v3350, %v3332
        %v4557 = vpack.c.b16 %v3351, %v3333
        %v4558 = vpack.c.b16 %v3352, %v3334
        %v4559 = vpack.c.b16 %v3353, %v3335
        %v4560 = vpack.c.b16 %v3354, %v3336
        %v4561 = vpack.c.b16 %v3355, %v3337
        %v4562 = vpack.c.b16 %v3356, %v3338
        %v4563 = vpack.c.b16 %v3357, %v3339
        %v4564 = vpack.c.b16 %v3358, %v3340
        %v4565 = vpack.c.b16 %v3359, %v3341
        %v4566 = vpack.c.b16 %v3360, %v3342
        %v4567 = vpack.c.b16 %v3361, %v3343
        %v4568 = vpack.c.b16 %v3362, %v3344
        %v4569 = vpack.c.b16 %v3363, %v3345
        %v4570 = vpack.c.b16 %v3364, %v3346
        %v4571 = vpack.c.b16 %v3365, %v3347
        %v4572 = vpack.c.b16 %v3366, %v3348
        %v4573 = vpack.c.b16 %v3367, %v3349
        %v4574 = vpack.c.b16 %v3386, %v3368
        %v4575 = vpack.c.b16 %v3387, %v3369
        %v4576 = vpack.c.b16 %v3388, %v3370
        %v4577 = vpack.c.b16 %v3389, %v3371
        %v4578 = vpack.c.b16 %v3390, %v3372
        %v4579 = vpack.c.b16 %v3391, %v3373
        %v4580 = vpack.c.b16 %v3392, %v3374
        %v4581 = vpack.c.b16 %v3393, %v3375
        %v4582 = vpack.c.b16 %v3394, %v3376
        %v4583 = vpack.c.b16 %v3395, %v3377
        %v4584 = vpack.c.b16 %v3396, %v3378
        %v4585 = vpack.c.b16 %v3397, %v3379
        %v4586 = vpack.c.b16 %v3398, %v3380
        %v4587 = vpack.c.b16 %v3399, %v3381
        %v4588 = vpack.c.b16 %v3400, %v3382
        %v4589 = vpack.c.b16 %v3401, %v3383
        %v4590 = vpack.c.b16 %v3402, %v3384
        %v4591 = vpack.c.b16 %v3403, %v3385
        %v4592 = vpack.c.b16 %v3422, %v3404
        %v4593 = vpack.c.b16 %v3423, %v3405
        %v4594 = vpack.c.b16 %v3424, %v3406
        %v4595 = vpack.c.b16 %v3425, %v3407
        %v4596 = vpack.c.b16 %v3426, %v3408
        %v4597 = vpack.c.b16 %v3427, %v3409
        %v4598 = vpack.c.b16 %v3428, %v3410
        %v4599 = vpack.c.b16 %v3429, %v3411
        %v4600 = vpack.c.b16 %v3430, %v3412
        %v4601 = vpack.c.b16 %v3431, %v3413
        %v4602 = vpack.c.b16 %v3432, %v3414
        %v4603 = vpack.c.b16 %v3433, %v3415
        %v4604 = vpack.c.b16 %v3434, %v3416
        %v4605 = vpack.c.b16 %v3435, %v3417
        %v4606 = vpack.c.b16 %v3436, %v3418
        %v4607 = vpack.c.b16 %v3437, %v3419
        %v4608 = vpack.c.b16 %v3438, %v3420
        %v4609 = vpack.c.b16 %v3439, %v3421
        %v4610 = vpack.c.b16 %v3458, %v3440
        %v4611 = vpack.c.b16 %v3459, %v3441
        %v4612 = vpack.c.b16 %v3460, %v3442
        %v4613 = vpack.c.b16 %v3461, %v3443
        %v4614 = vpack.c.b16 %v3462, %v3444
        %v4615 = vpack.c.b16 %v3463, %v3445
        %v4616 = vpack.c.b16 %v3464, %v3446
        %v4617 = vpack.c.b16 %v3465, %v3447
        %v4618 = vpack.c.b16 %v3466, %v3448
        %v4619 = vpack.c.b16 %v3467, %v3449
        %v4620 = vpack.c.b16 %v3468, %v3450
        %v4621 = vpack.c.b16 %v3469, %v3451
        %v4622 = vpack.c.b16 %v3470, %v3452
        %v4623 = vpack.c.b16 %v3471, %v3453
        %v4624 = vpack.c.b16 %v3472, %v3454
        %v4625 = vpack.c.b16 %v3473, %v3455
        %v4626 = vpack.c.b16 %v3474, %v3456
        %v4627 = vpack.c.b16 %v3475, %v3457
        %v4628 = vpack.c.b16 %v3494, %v3476
        %v4629 = vpack.c.b16 %v3495, %v3477
        %v4630 = vpack.c.b16 %v3496, %v3478
        %v4631 = vpack.c.b16 %v3497, %v3479
        %v4632 = vpack.c.b16 %v3498, %v3480
        %v4633 = vpack.c.b16 %v3499, %v3481
        %v4634 = vpack.c.b16 %v3500, %v3482
        %v4635 = vpack.c.b16 %v3501, %v3483
        %v4636 = vpack.c.b16 %v3502, %v3484
        %v4637 = vpack.c.b16 %v3503, %v3485
        %v4638 = vpack.c.b16 %v3504, %v3486
        %v4639 = vpack.c.b16 %v3505, %v3487
        %v4640 = vpack.c.b16 %v3506, %v3488
        %v4641 = vpack.c.b16 %v3507, %v3489
        %v4642 = vpack.c.b16 %v3508, %v3490
        %v4643 = vpack.c.b16 %v3509, %v3491
        %v4644 = vpack.c.b16 %v3510, %v3492
        %v4645 = vpack.c.b16 %v3511, %v3493
        %v4646 = vpack.c.b16 %v3530, %v3512
        %v4647 = vpack.c.b16 %v3531, %v3513
        %v4648 = vpack.c.b16 %v3532, %v3514
        %v4649 = vpack.c.b16 %v3533, %v3515
        %v4650 = vpack.c.b16 %v3534, %v3516
        %v4651 = vpack.c.b16 %v3535, %v3517
        %v4652 = vpack.c.b16 %v3536, %v3518
        %v4653 = vpack.c.b16 %v3537, %v3519
        %v4654 = vpack.c.b16 %v3538, %v3520
        %v4655 = vpack.c.b16 %v3539, %v3521
        %v4656 = vpack.c.b16 %v3540, %v3522
        %v4657 = vpack.c.b16 %v3541, %v3523
        %v4658 = vpack.c.b16 %v3542, %v3524
        %v4659 = vpack.c.b16 %v3543, %v3525
        %v4660 = vpack.c.b16 %v3544, %v3526
        %v4661 = vpack.c.b16 %v3545, %v3527
        %v4662 = vpack.c.b16 %v3546, %v3528
        %v4663 = vpack.c.b16 %v3547, %v3529
        %v4664 = vpack.c.b16 %v3566, %v3548
        %v4665 = vpack.c.b16 %v3567, %v3549
        %v4666 = vpack.c.b16 %v3568, %v3550
        %v4667 = vpack.c.b16 %v3569, %v3551
        %v4668 = vpack.c.b16 %v3570, %v3552
        %v4669 = vpack.c.b16 %v3571, %v3553
        %v4670 = vpack.c.b16 %v3572, %v3554
        %v4671 = vpack.c.b16 %v3573, %v3555
        %v4672 = vpack.c.b16 %v3574, %v3556
        %v4673 = vpack.c.b16 %v3575, %v3557
        %v4674 = vpack.c.b16 %v3576, %v3558
        %v4675 = vpack.c.b16 %v3577, %v3559
        %v4676 = vpack.c.b16 %v3578, %v3560
        %v4677 = vpack.c.b16 %v3579, %v3561
        %v4678 = vpack.c.b16 %v3580, %v3562
        %v4679 = vpack.c.b16 %v3581, %v3563
        %v4680 = vpack.c.b16 %v3582, %v3564
        %v4681 = vpack.c.b16 %v3583, %v3565
        %v4682 = vpack.c.b16 %v3602, %v3584
        %v4683 = vpack.c.b16 %v3603, %v3585
        %v4684 = vpack.c.b16 %v3604, %v3586
        %v4685 = vpack.c.b16 %v3605, %v3587
        %v4686 = vpack.c.b16 %v3606, %v3588
        %v4687 = vpack.c.b16 %v3607, %v3589
        %v4688 = vpack.c.b16 %v3608, %v3590
        %v4689 = vpack.c.b16 %v3609, %v3591
        %v4690 = vpack.c.b16 %v3610, %v3592
        %v4691 = vpack.c.b16 %v3611, %v3593
        %v4692 = vpack.c.b16 %v3612, %v3594
        %v4693 = vpack.c.b16 %v3613, %v3595
        %v4694 = vpack.c.b16 %v3614, %v3596
        %v4695 = vpack.c.b16 %v3615, %v3597
        %v4696 = vpack.c.b16 %v3616, %v3598
        %v4697 = vpack.c.b16 %v3617, %v3599
        %v4698 = vpack.c.b16 %v3618, %v3600
        %v4699 = vpack.c.b16 %v3619, %v3601
        %v4700 = vpack.c.b16 %v3638, %v3620
        %v4701 = vpack.c.b16 %v3639, %v3621
        %v4702 = vpack.c.b16 %v3640, %v3622
        %v4703 = vpack.c.b16 %v3641, %v3623
        %v4704 = vpack.c.b16 %v3642, %v3624
        %v4705 = vpack.c.b16 %v3643, %v3625
        %v4706 = vpack.c.b16 %v3644, %v3626
        %v4707 = vpack.c.b16 %v3645, %v3627
        %v4708 = vpack.c.b16 %v3646, %v3628
        %v4709 = vpack.c.b16 %v3647, %v3629
        %v4710 = vpack.c.b16 %v3648, %v3630
        %v4711 = vpack.c.b16 %v3649, %v3631
        %v4712 = vpack.c.b16 %v3650, %v3632
        %v4713 = vpack.c.b16 %v3651, %v3633
        %v4714 = vpack.c.b16 %v3652, %v3634
        %v4715 = vpack.c.b16 %v3653, %v3635
        %v4716 = vpack.c.b16 %v3654, %v3636
        %v4717 = vpack.c.b16 %v3655, %v3637
        %v4718 = vpack.c.b16 %v3674, %v3656
        %v4719 = vpack.c.b16 %v3675, %v3657
        %v4720 = vpack.c.b16 %v3676, %v3658
        %v4721 = vpack.c.b16 %v3677, %v3659
        %v4722 = vpack.c.b16 %v3678, %v3660
        %v4723 = vpack.c.b16 %v3679, %v3661
        %v4724 = vpack.c.b16 %v3680, %v3662
        %v4725 = vpack.c.b16 %v3681, %v3663
        %v4726 = vpack.c.b16 %v3682, %v3664
        %v4727 = vpack.c.b16 %v3683, %v3665
        %v4728 = vpack.c.b16 %v3684, %v3666
        %v4729 = vpack.c.b16 %v3685, %v3667
        %v4730 = vpack.c.b16 %v3686, %v3668
        %v4731 = vpack.c.b16 %v3687, %v3669
        %v4732 = vpack.c.b16 %v3688, %v3670
        %v4733 = vpack.c.b16 %v3689, %v3671
        %v4734 = vpack.c.b16 %v3690, %v3672
        %v4735 = vpack.c.b16 %v3691, %v3673
        %v4736 = vpack.c.b16 %v3710, %v3692
        %v4737 = vpack.c.b16 %v3711, %v3693
        %v4738 = vpack.c.b16 %v3712, %v3694
        %v4739 = vpack.c.b16 %v3713, %v3695
        %v4740 = vpack.c.b16 %v3714, %v3696
        %v4741 = vpack.c.b16 %v3715, %v3697
        %v4742 = vpack.c.b16 %v3716, %v3698
        %v4743 = vpack.c.b16 %v3717, %v3699
        %v4744 = vpack.c.b16 %v3718, %v3700
        %v4745 = vpack.c.b16 %v3719, %v3701
        %v4746 = vpack.c.b16 %v3720, %v3702
        %v4747 = vpack.c.b16 %v3721, %v3703
        %v4748 = vpack.c.b16 %v3722, %v3704
        %v4749 = vpack.c.b16 %v3723, %v3705
        %v4750 = vpack.c.b16 %v3724, %v3706
        %v4751 = vpack.c.b16 %v3725, %v3707
        %v4752 = vpack.c.b16 %v3726, %v3708
        %v4753 = vpack.c.b16 %v3727, %v3709
        %v4754 = vpack.c.b16 %v3746, %v3728
        %v4755 = vpack.c.b16 %v3747, %v3729
        %v4756 = vpack.c.b16 %v3748, %v3730
        %v4757 = vpack.c.b16 %v3749, %v3731
        %v4758 = vpack.c.b16 %v3750, %v3732
        %v4759 = vpack.c.b16 %v3751, %v3733
        %v4760 = vpack.c.b16 %v3752, %v3734
        %v4761 = vpack.c.b16 %v3753, %v3735
        %v4762 = vpack.c.b16 %v3754, %v3736
        %v4763 = vpack.c.b16 %v3755, %v3737
        %v4764 = vpack.c.b16 %v3756, %v3738
        %v4765 = vpack.c.b16 %v3757, %v3739
        %v4766 = vpack.c.b16 %v3758, %v3740
        %v4767 = vpack.c.b16 %v3759, %v3741
        %v4768 = vpack.c.b16 %v3760, %v3742
        %v4769 = vpack.c.b16 %v3761, %v3743
        %v4770 = vpack.c.b16 %v3762, %v3744
        %v4771 = vpack.c.b16 %v3763, %v3745
        %v4772 = vpack.c.b16 %v3782, %v3764
        %v4773 = vpack.c.b16 %v3783, %v3765
        %v4774 = vpack.c.b16 %v3784, %v3766
        %v4775 = vpack.c.b16 %v3785, %v3767
        %v4776 = vpack.c.b16 %v3786, %v3768
        %v4777 = vpack.c.b16 %v3787, %v3769
        %v4778 = vpack.c.b16 %v3788, %v3770
        %v4779 = vpack.c.b16 %v3789, %v3771
        %v4780 = vpack.c.b16 %v3790, %v3772
        %v4781 = vpack.c.b16 %v3791, %v3773
        %v4782 = vpack.c.b16 %v3792, %v3774
        %v4783 = vpack.c.b16 %v3793, %v3775
        %v4784 = vpack.c.b16 %v3794, %v3776
        %v4785 = vpack.c.b16 %v3795, %v3777
        %v4786 = vpack.c.b16 %v3796, %v3778
        %v4787 = vpack.c.b16 %v3797, %v3779
        %v4788 = vpack.c.b16 %v3798, %v3780
        %v4789 = vpack.c.b16 %v3799, %v3781
        %v4790 = vpack.c.b16 %v3818, %v3800
        %v4791 = vpack.c.b16 %v3819, %v3801
        %v4792 = vpack.c.b16 %v3820, %v3802
        %v4793 = vpack.c.b16 %v3821, %v3803
        %v4794 = vpack.c.b16 %v3822, %v3804
        %v4795 = vpack.c.b16 %v3823, %v3805
        %v4796 = vpack.c.b16 %v3824, %v3806
        %v4797 = vpack.c.b16 %v3825, %v3807
        %v4798 = vpack.c.b16 %v3826, %v3808
        %v4799 = vpack.c.b16 %v3827, %v3809
        %v4800 = vpack.c.b16 %v3828, %v3810
        %v4801 = vpack.c.b16 %v3829, %v3811
        %v4802 = vpack.c.b16 %v3830, %v3812
        %v4803 = vpack.c.b16 %v3831, %v3813
        %v4804 = vpack.c.b16 %v3832, %v3814
        %v4805 = vpack.c.b16 %v3833, %v3815
        %v4806 = vpack.c.b16 %v3834, %v3816
        %v4807 = vpack.c.b16 %v3835, %v3817
        %v4808 = vpack.c.b16 %v3854, %v3836
        %v4809 = vpack.c.b16 %v3855, %v3837
        %v4810 = vpack.c.b16 %v3856, %v3838
        %v4811 = vpack.c.b16 %v3857, %v3839
        %v4812 = vpack.c.b16 %v3858, %v3840
        %v4813 = vpack.c.b16 %v3859, %v3841
        %v4814 = vpack.c.b16 %v3860, %v3842
        %v4815 = vpack.c.b16 %v3861, %v3843
        %v4816 = vpack.c.b16 %v3862, %v3844
        %v4817 = vpack.c.b16 %v3863, %v3845
        %v4818 = vpack.c.b16 %v3864, %v3846
        %v4819 = vpack.c.b16 %v3865, %v3847
        %v4820 = vpack.c.b16 %v3866, %v3848
        %v4821 = vpack.c.b16 %v3867, %v3849
        %v4822 = vpack.c.b16 %v3868, %v3850
        %v4823 = vpack.c.b16 %v3869, %v3851
        %v4824 = vpack.c.b16 %v3870, %v3852
        %v4825 = vpack.c.b16 %v3871, %v3853
        %v4826 = vpack.c.b16 %v3890, %v3872
        %v4827 = vpack.c.b16 %v3891, %v3873
        %v4828 = vpack.c.b16 %v3892, %v3874
        %v4829 = vpack.c.b16 %v3893, %v3875
        %v4830 = vpack.c.b16 %v3894, %v3876
        %v4831 = vpack.c.b16 %v3895, %v3877
        %v4832 = vpack.c.b16 %v3896, %v3878
        %v4833 = vpack.c.b16 %v3897, %v3879
        %v4834 = vpack.c.b16 %v3898, %v3880
        %v4835 = vpack.c.b16 %v3899, %v3881
        %v4836 = vpack.c.b16 %v3900, %v3882
        %v4837 = vpack.c.b16 %v3901, %v3883
        %v4838 = vpack.c.b16 %v3902, %v3884
        %v4839 = vpack.c.b16 %v3903, %v3885
        %v4840 = vpack.c.b16 %v3904, %v3886
        %v4841 = vpack.c.b16 %v3905, %v3887
        %v4842 = vpack.c.b16 %v3906, %v3888
        %v4843 = vpack.c.b16 %v3907, %v3889
        %v4844 = vpack.c.b16 %v3926, %v3908
        %v4845 = vpack.c.b16 %v3927, %v3909
        %v4846 = vpack.c.b16 %v3928, %v3910
        %v4847 = vpack.c.b16 %v3929, %v3911
        %v4848 = vpack.c.b16 %v3930, %v3912
        %v4849 = vpack.c.b16 %v3931, %v3913
        %v4850 = vpack.c.b16 %v3932, %v3914
        %v4851 = vpack.c.b16 %v3933, %v3915
        %v4852 = vpack.c.b16 %v3934, %v3916
        %v4853 = vpack.c.b16 %v3935, %v3917
        %v4854 = vpack.c.b16 %v3936, %v3918
        %v4855 = vpack.c.b16 %v3937, %v3919
        %v4856 = vpack.c.b16 %v3938, %v3920
        %v4857 = vpack.c.b16 %v3939, %v3921
        %v4858 = vpack.c.b16 %v3940, %v3922
        %v4859 = vpack.c.b16 %v3941, %v3923
        %v4860 = vpack.c.b16 %v3942, %v3924
        %v4861 = vpack.c.b16 %v3943, %v3925
        %v4862 = vpack.c.b16 %v3962, %v3944
        %v4863 = vpack.c.b16 %v3963, %v3945
        %v4864 = vpack.c.b16 %v3964, %v3946
        %v4865 = vpack.c.b16 %v3965, %v3947
        %v4866 = vpack.c.b16 %v3966, %v3948
        %v4867 = vpack.c.b16 %v3967, %v3949
        %v4868 = vpack.c.b16 %v3968, %v3950
        %v4869 = vpack.c.b16 %v3969, %v3951
        %v4870 = vpack.c.b16 %v3970, %v3952
        %v4871 = vpack.c.b16 %v3971, %v3953
        %v4872 = vpack.c.b16 %v3972, %v3954
        %v4873 = vpack.c.b16 %v3973, %v3955
        %v4874 = vpack.c.b16 %v3974, %v3956
        %v4875 = vpack.c.b16 %v3975, %v3957
        %v4876 = vpack.c.b16 %v3976, %v3958
        %v4877 = vpack.c.b16 %v3977, %v3959
        %v4878 = vpack.c.b16 %v3978, %v3960
        %v4879 = vpack.c.b16 %v3979, %v3961
        %v4880 = vpack.c.b16 %v3998, %v3980
        %v4881 = vpack.c.b16 %v3999, %v3981
        %v4882 = vpack.c.b16 %v4000, %v3982
        %v4883 = vpack.c.b16 %v4001, %v3983
        %v4884 = vpack.c.b16 %v4002, %v3984
        %v4885 = vpack.c.b16 %v4003, %v3985
        %v4886 = vpack.c.b16 %v4004, %v3986
        %v4887 = vpack.c.b16 %v4005, %v3987
        %v4888 = vpack.c.b16 %v4006, %v3988
        %v4889 = vpack.c.b16 %v4007, %v3989
        %v4890 = vpack.c.b16 %v4008, %v3990
        %v4891 = vpack.c.b16 %v4009, %v3991
        %v4892 = vpack.c.b16 %v4010, %v3992
        %v4893 = vpack.c.b16 %v4011, %v3993
        %v4894 = vpack.c.b16 %v4012, %v3994
        %v4895 = vpack.c.b16 %v4013, %v3995
        %v4896 = vpack.c.b16 %v4014, %v3996
        %v4897 = vpack.c.b16 %v4015, %v3997
        %v4898 = vpack.c.b16 %v4034, %v4016
        %v4899 = vpack.c.b16 %v4035, %v4017
        %v4900 = vpack.c.b16 %v4036, %v4018
        %v4901 = vpack.c.b16 %v4037, %v4019
        %v4902 = vpack.c.b16 %v4038, %v4020
        %v4903 = vpack.c.b16 %v4039, %v4021
        %v4904 = vpack.c.b16 %v4040, %v4022
        %v4905 = vpack.c.b16 %v4041, %v4023
        %v4906 = vpack.c.b16 %v4042, %v4024
        %v4907 = vpack.c.b16 %v4043, %v4025
        %v4908 = vpack.c.b16 %v4044, %v4026
        %v4909 = vpack.c.b16 %v4045, %v4027
        %v4910 = vpack.c.b16 %v4046, %v4028
        %v4911 = vpack.c.b16 %v4047, %v4029
        %v4912 = vpack.c.b16 %v4048, %v4030
        %v4913 = vpack.c.b16 %v4049, %v4031
        %v4914 = vpack.c.b16 %v4050, %v4032
        %v4915 = vpack.c.b16 %v4051, %v4033
        %5780 = vmatprep.subr.bf16.mxu0 %v4053
        %5781 = vmatpush1.bf16.msra.mxu0 %v4052
        %5782 = vmatprep.subr.bf16.mxu0 %v4071
        %5783 = vmatpush1.bf16.msra.mxu0 %v4070
        %5784 = vmatprep.subr.bf16.mxu0 %v4089
        %5785 = vmatpush1.bf16.msra.mxu0 %v4088
        %5786 = vmatprep.subr.bf16.mxu0 %v4107
        %5787 = vmatpush1.bf16.msra.mxu0 %v4106
        %5788 = vmatprep.subr.bf16.mxu0 %v4125
        %5789 = vmatpush1.bf16.msra.mxu0 %v4124
        %5790 = vmatprep.subr.bf16.mxu0 %v4143
        %5791 = vmatpush1.bf16.msra.mxu0 %v4142
        %5792 = vmatprep.subr.bf16.mxu0 %v4161
        %5793 = vmatpush1.bf16.msra.mxu0 %v4160
        %5794 = vmatprep.subr.bf16.mxu0 %v4179
        %5795 = vmatpush1.bf16.msra.mxu0 %v4178
        %5796 = vmatprep.subr.bf16.mxu0 %v4197
        %5797 = vmatpush1.bf16.msra.mxu0 %v4196
        %5798 = vmatprep.subr.bf16.mxu0 %v4215
        %5799 = vmatpush1.bf16.msra.mxu0 %v4214
        %5800 = vmatprep.subr.bf16.mxu0 %v4233
        %5801 = vmatpush1.bf16.msra.mxu0 %v4232
        %5802 = vmatprep.subr.bf16.mxu0 %v4251
        %5803 = vmatpush1.bf16.msra.mxu0 %v4250
        %5804 = vmatprep.subr.bf16.mxu0 %v4269
        %5805 = vmatpush1.bf16.msra.mxu0 %v4268
        %5806 = vmatprep.subr.bf16.mxu0 %v4287
        %5807 = vmatpush1.bf16.msra.mxu0 %v4286
        %5808 = vmatprep.subr.bf16.mxu0 %v4305
        %5809 = vmatpush1.bf16.msra.mxu0 %v4304
        %5810 = vmatprep.subr.bf16.mxu0 %v4323
        %5811 = vmatpush1.bf16.msra.mxu0 %v4322
        %5812 = vmatprep.mubr.bf16.mxu0 %v495
        %5813 = vmatmul.mubr.bf16.gmra.mrb[0].mxu0 %v494
        %v5814 = vpop.f32.mrb[0].mxu0
        %v5815 = vadd.f32 %v1373, %v5814
        %v5816 = vpop.f32.mrb[0].mxu0
        %v5817 = vadd.f32 %v1377, %v5816
        %v5818 = vpop.f32.mrb[0].mxu0
        %v5819 = vpop.f32.mrb[0].mxu0
        %5820 = vdwg.mxu0
        %5821 = vmatprep.subr.bf16.mxu0 %v4341
        %5822 = vmatpush1.bf16.msra.mxu0 %v4340
        %5823 = vmatprep.subr.bf16.mxu0 %v4359
        %5824 = vmatpush1.bf16.msra.mxu0 %v4358
        %5825 = vmatprep.subr.bf16.mxu0 %v4377
        %5826 = vmatpush1.bf16.msra.mxu0 %v4376
        %5827 = vmatprep.subr.bf16.mxu0 %v4395
        %5828 = vmatpush1.bf16.msra.mxu0 %v4394
        %5829 = vmatprep.subr.bf16.mxu0 %v4413
        %5830 = vmatpush1.bf16.msra.mxu0 %v4412
        %5831 = vmatprep.subr.bf16.mxu0 %v4431
        %5832 = vmatpush1.bf16.msra.mxu0 %v4430
        %5833 = vmatprep.subr.bf16.mxu0 %v4449
        %5834 = vmatpush1.bf16.msra.mxu0 %v4448
        %5835 = vmatprep.subr.bf16.mxu0 %v4467
        %5836 = vmatpush1.bf16.msra.mxu0 %v4466
        %5837 = vmatprep.subr.bf16.mxu0 %v4485
        %5838 = vmatpush1.bf16.msra.mxu0 %v4484
        %5839 = vmatprep.subr.bf16.mxu0 %v4503
        %5840 = vmatpush1.bf16.msra.mxu0 %v4502
        %5841 = vmatprep.subr.bf16.mxu0 %v4521
        %5842 = vmatpush1.bf16.msra.mxu0 %v4520
        %5843 = vmatprep.subr.bf16.mxu0 %v4539
        %5844 = vmatpush1.bf16.msra.mxu0 %v4538
        %5845 = vmatprep.subr.bf16.mxu0 %v4557
        %5846 = vmatpush1.bf16.msra.mxu0 %v4556
        %5847 = vmatprep.subr.bf16.mxu0 %v4575
        %5848 = vmatpush1.bf16.msra.mxu0 %v4574
        %5849 = vmatprep.subr.bf16.mxu0 %v4593
        %5850 = vmatpush1.bf16.msra.mxu0 %v4592
        %5851 = vmatprep.subr.bf16.mxu0 %v4611
        %5852 = vmatpush1.bf16.msra.mxu0 %v4610
        %5853 = vmatprep.mubr.bf16.mxu0 %v497
        %5854 = vmatmul.mubr.bf16.gmra.mrb[0].mxu0 %v496
        %v5855 = vpop.f32.mrb[0].mxu0
        %v5856 = vadd.f32 %v5815, %v5855
        %v5857 = vpop.f32.mrb[0].mxu0
        %v5858 = vadd.f32 %v5817, %v5857
        %v5859 = vpop.f32.mrb[0].mxu0
        %v5860 = vpop.f32.mrb[0].mxu0
        %5861 = vdwg.mxu0
        %5862 = vmatprep.subr.bf16.mxu0 %v4629
        %5863 = vmatpush1.bf16.msra.mxu0 %v4628
        %5864 = vmatprep.subr.bf16.mxu0 %v4647
        %5865 = vmatpush1.bf16.msra.mxu0 %v4646
        %5866 = vmatprep.subr.bf16.mxu0 %v4665
        %5867 = vmatpush1.bf16.msra.mxu0 %v4664
        %5868 = vmatprep.subr.bf16.mxu0 %v4683
        %5869 = vmatpush1.bf16.msra.mxu0 %v4682
        %5870 = vmatprep.subr.bf16.mxu0 %v4701
        %5871 = vmatpush1.bf16.msra.mxu0 %v4700
        %5872 = vmatprep.subr.bf16.mxu0 %v4719
        %5873 = vmatpush1.bf16.msra.mxu0 %v4718
        %5874 = vmatprep.subr.bf16.mxu0 %v4737
        %5875 = vmatpush1.bf16.msra.mxu0 %v4736
        %5876 = vmatprep.subr.bf16.mxu0 %v4755
        %5877 = vmatpush1.bf16.msra.mxu0 %v4754
        %5878 = vmatprep.subr.bf16.mxu0 %v4773
        %5879 = vmatpush1.bf16.msra.mxu0 %v4772
        %5880 = vmatprep.subr.bf16.mxu0 %v4791
        %5881 = vmatpush1.bf16.msra.mxu0 %v4790
        %5882 = vmatprep.subr.bf16.mxu0 %v4809
        %5883 = vmatpush1.bf16.msra.mxu0 %v4808
        %5884 = vmatprep.subr.bf16.mxu0 %v4827
        %5885 = vmatpush1.bf16.msra.mxu0 %v4826
        %5886 = vmatprep.subr.bf16.mxu0 %v4845
        %5887 = vmatpush1.bf16.msra.mxu0 %v4844
        %5888 = vmatprep.subr.bf16.mxu0 %v4863
        %5889 = vmatpush1.bf16.msra.mxu0 %v4862
        %5890 = vmatprep.subr.bf16.mxu0 %v4881
        %5891 = vmatpush1.bf16.msra.mxu0 %v4880
        %5892 = vmatprep.subr.bf16.mxu0 %v4899
        %5893 = vmatpush1.bf16.msra.mxu0 %v4898
        %5894 = vmatprep.mubr.bf16.mxu0 %v499
        %5895 = vmatmul.mubr.bf16.gmra.mrb[0].mxu0 %v498
        %v5896 = vpop.f32.mrb[0].mxu0
        %v5897 = vadd.f32 %v5856, %v5896
        %v5898 = vpop.f32.mrb[0].mxu0
        %v5899 = vadd.f32 %v5858, %v5898
        %v5900 = vpop.f32.mrb[0].mxu0
        %v5901 = vpop.f32.mrb[0].mxu0
        %5902 = vdwg.mxu0
        %5903 = vmatprep.subr.bf16.mxu0 %v4055
        %5904 = vmatpush1.bf16.msra.mxu0 %v4054
        %5905 = vmatprep.subr.bf16.mxu0 %v4073
        %5906 = vmatpush1.bf16.msra.mxu0 %v4072
        %5907 = vmatprep.subr.bf16.mxu0 %v4091
        %5908 = vmatpush1.bf16.msra.mxu0 %v4090
        %5909 = vmatprep.subr.bf16.mxu0 %v4109
        %5910 = vmatpush1.bf16.msra.mxu0 %v4108
        %5911 = vmatprep.subr.bf16.mxu0 %v4127
        %5912 = vmatpush1.bf16.msra.mxu0 %v4126
        %5913 = vmatprep.subr.bf16.mxu0 %v4145
        %5914 = vmatpush1.bf16.msra.mxu0 %v4144
        %5915 = vmatprep.subr.bf16.mxu0 %v4163
        %5916 = vmatpush1.bf16.msra.mxu0 %v4162
        %5917 = vmatprep.subr.bf16.mxu0 %v4181
        %5918 = vmatpush1.bf16.msra.mxu0 %v4180
        %5919 = vmatprep.subr.bf16.mxu0 %v4199
        %5920 = vmatpush1.bf16.msra.mxu0 %v4198
        %5921 = vmatprep.subr.bf16.mxu0 %v4217
        %5922 = vmatpush1.bf16.msra.mxu0 %v4216
        %5923 = vmatprep.subr.bf16.mxu0 %v4235
        %5924 = vmatpush1.bf16.msra.mxu0 %v4234
        %5925 = vmatprep.subr.bf16.mxu0 %v4253
        %5926 = vmatpush1.bf16.msra.mxu0 %v4252
        %5927 = vmatprep.subr.bf16.mxu0 %v4271
        %5928 = vmatpush1.bf16.msra.mxu0 %v4270
        %5929 = vmatprep.subr.bf16.mxu0 %v4289
        %5930 = vmatpush1.bf16.msra.mxu0 %v4288
        %5931 = vmatprep.subr.bf16.mxu0 %v4307
        %5932 = vmatpush1.bf16.msra.mxu0 %v4306
        %5933 = vmatprep.subr.bf16.mxu0 %v4325
        %5934 = vmatpush1.bf16.msra.mxu0 %v4324
        %5935 = vmatprep.mubr.bf16.mxu0 %v495
        %5936 = vmatmul.mubr.bf16.gmra.mrb[0].mxu0 %v494
        %v5937 = vpop.f32.mrb[0].mxu0
        %v5938 = vadd.f32 %v1381, %v5937
        %v5939 = vpop.f32.mrb[0].mxu0
        %v5940 = vadd.f32 %v1385, %v5939
        %v5941 = vpop.f32.mrb[0].mxu0
        %v5942 = vpop.f32.mrb[0].mxu0
        %5943 = vdwg.mxu0
        %5944 = vmatprep.subr.bf16.mxu0 %v4343
        %5945 = vmatpush1.bf16.msra.mxu0 %v4342
        %5946 = vmatprep.subr.bf16.mxu0 %v4361
        %5947 = vmatpush1.bf16.msra.mxu0 %v4360
        %5948 = vmatprep.subr.bf16.mxu0 %v4379
        %5949 = vmatpush1.bf16.msra.mxu0 %v4378
        %5950 = vmatprep.subr.bf16.mxu0 %v4397
        %5951 = vmatpush1.bf16.msra.mxu0 %v4396
        %5952 = vmatprep.subr.bf16.mxu0 %v4415
        %5953 = vmatpush1.bf16.msra.mxu0 %v4414
        %5954 = vmatprep.subr.bf16.mxu0 %v4433
        %5955 = vmatpush1.bf16.msra.mxu0 %v4432
        %5956 = vmatprep.subr.bf16.mxu0 %v4451
        %5957 = vmatpush1.bf16.msra.mxu0 %v4450
        %5958 = vmatprep.subr.bf16.mxu0 %v4469
        %5959 = vmatpush1.bf16.msra.mxu0 %v4468
        %5960 = vmatprep.subr.bf16.mxu0 %v4487
        %5961 = vmatpush1.bf16.msra.mxu0 %v4486
        %5962 = vmatprep.subr.bf16.mxu0 %v4505
        %5963 = vmatpush1.bf16.msra.mxu0 %v4504
        %5964 = vmatprep.subr.bf16.mxu0 %v4523
        %5965 = vmatpush1.bf16.msra.mxu0 %v4522
        %5966 = vmatprep.subr.bf16.mxu0 %v4541
        %5967 = vmatpush1.bf16.msra.mxu0 %v4540
        %5968 = vmatprep.subr.bf16.mxu0 %v4559
        %5969 = vmatpush1.bf16.msra.mxu0 %v4558
        %5970 = vmatprep.subr.bf16.mxu0 %v4577
        %5971 = vmatpush1.bf16.msra.mxu0 %v4576
        %5972 = vmatprep.subr.bf16.mxu0 %v4595
        %5973 = vmatpush1.bf16.msra.mxu0 %v4594
        %5974 = vmatprep.subr.bf16.mxu0 %v4613
        %5975 = vmatpush1.bf16.msra.mxu0 %v4612
        %5976 = vmatprep.mubr.bf16.mxu0 %v497
        %5977 = vmatmul.mubr.bf16.gmra.mrb[0].mxu0 %v496
        %v5978 = vpop.f32.mrb[0].mxu0
        %v5979 = vadd.f32 %v5938, %v5978
        %v5980 = vpop.f32.mrb[0].mxu0
        %v5981 = vadd.f32 %v5940, %v5980
        %v5982 = vpop.f32.mrb[0].mxu0
        %v5983 = vpop.f32.mrb[0].mxu0
        %5984 = vdwg.mxu0
        %5985 = vmatprep.subr.bf16.mxu0 %v4631
        %5986 = vmatpush1.bf16.msra.mxu0 %v4630
        %5987 = vmatprep.subr.bf16.mxu0 %v4649
        %5988 = vmatpush1.bf16.msra.mxu0 %v4648
        %5989 = vmatprep.subr.bf16.mxu0 %v4667
        %5990 = vmatpush1.bf16.msra.mxu0 %v4666
        %5991 = vmatprep.subr.bf16.mxu0 %v4685
        %5992 = vmatpush1.bf16.msra.mxu0 %v4684
        %5993 = vmatprep.subr.bf16.mxu0 %v4703
        %5994 = vmatpush1.bf16.msra.mxu0 %v4702
        %5995 = vmatprep.subr.bf16.mxu0 %v4721
        %5996 = vmatpush1.bf16.msra.mxu0 %v4720
        %5997 = vmatprep.subr.bf16.mxu0 %v4739
        %5998 = vmatpush1.bf16.msra.mxu0 %v4738
        %5999 = vmatprep.subr.bf16.mxu0 %v4757
        %6000 = vmatpush1.bf16.msra.mxu0 %v4756
        %6001 = vmatprep.subr.bf16.mxu0 %v4775
        %6002 = vmatpush1.bf16.msra.mxu0 %v4774
        %6003 = vmatprep.subr.bf16.mxu0 %v4793
        %6004 = vmatpush1.bf16.msra.mxu0 %v4792
        %6005 = vmatprep.subr.bf16.mxu0 %v4811
        %6006 = vmatpush1.bf16.msra.mxu0 %v4810
        %6007 = vmatprep.subr.bf16.mxu0 %v4829
        %6008 = vmatpush1.bf16.msra.mxu0 %v4828
        %6009 = vmatprep.subr.bf16.mxu0 %v4847
        %6010 = vmatpush1.bf16.msra.mxu0 %v4846
        %6011 = vmatprep.subr.bf16.mxu0 %v4865
        %6012 = vmatpush1.bf16.msra.mxu0 %v4864
        %6013 = vmatprep.subr.bf16.mxu0 %v4883
        %6014 = vmatpush1.bf16.msra.mxu0 %v4882
        %6015 = vmatprep.subr.bf16.mxu0 %v4901
        %6016 = vmatpush1.bf16.msra.mxu0 %v4900
        %6017 = vmatprep.mubr.bf16.mxu0 %v499
        %6018 = vmatmul.mubr.bf16.gmra.mrb[0].mxu0 %v498
        %v6019 = vpop.f32.mrb[0].mxu0
        %v6020 = vadd.f32 %v5979, %v6019
        %v6021 = vpop.f32.mrb[0].mxu0
        %v6022 = vadd.f32 %v5981, %v6021
        %v6023 = vpop.f32.mrb[0].mxu0
        %v6024 = vpop.f32.mrb[0].mxu0
        %6025 = vdwg.mxu0
        %6026 = vmatprep.subr.bf16.mxu0 %v4057
        %6027 = vmatpush1.bf16.msra.mxu0 %v4056
        %6028 = vmatprep.subr.bf16.mxu0 %v4075
        %6029 = vmatpush1.bf16.msra.mxu0 %v4074
        %6030 = vmatprep.subr.bf16.mxu0 %v4093
        %6031 = vmatpush1.bf16.msra.mxu0 %v4092
        %6032 = vmatprep.subr.bf16.mxu0 %v4111
        %6033 = vmatpush1.bf16.msra.mxu0 %v4110
        %6034 = vmatprep.subr.bf16.mxu0 %v4129
        %6035 = vmatpush1.bf16.msra.mxu0 %v4128
        %6036 = vmatprep.subr.bf16.mxu0 %v4147
        %6037 = vmatpush1.bf16.msra.mxu0 %v4146
        %6038 = vmatprep.subr.bf16.mxu0 %v4165
        %6039 = vmatpush1.bf16.msra.mxu0 %v4164
        %6040 = vmatprep.subr.bf16.mxu0 %v4183
        %6041 = vmatpush1.bf16.msra.mxu0 %v4182
        %6042 = vmatprep.subr.bf16.mxu0 %v4201
        %6043 = vmatpush1.bf16.msra.mxu0 %v4200
        %6044 = vmatprep.subr.bf16.mxu0 %v4219
        %6045 = vmatpush1.bf16.msra.mxu0 %v4218
        %6046 = vmatprep.subr.bf16.mxu0 %v4237
        %6047 = vmatpush1.bf16.msra.mxu0 %v4236
        %6048 = vmatprep.subr.bf16.mxu0 %v4255
        %6049 = vmatpush1.bf16.msra.mxu0 %v4254
        %6050 = vmatprep.subr.bf16.mxu0 %v4273
        %6051 = vmatpush1.bf16.msra.mxu0 %v4272
        %6052 = vmatprep.subr.bf16.mxu0 %v4291
        %6053 = vmatpush1.bf16.msra.mxu0 %v4290
        %6054 = vmatprep.subr.bf16.mxu0 %v4309
        %6055 = vmatpush1.bf16.msra.mxu0 %v4308
        %6056 = vmatprep.subr.bf16.mxu0 %v4327
        %6057 = vmatpush1.bf16.msra.mxu0 %v4326
        %6058 = vmatprep.mubr.bf16.mxu0 %v495
        %6059 = vmatmul.mubr.bf16.gmra.mrb[0].mxu0 %v494
        %v6060 = vpop.f32.mrb[0].mxu0
        %v6061 = vadd.f32 %v1389, %v6060
        %v6062 = vpop.f32.mrb[0].mxu0
        %v6063 = vadd.f32 %v1393, %v6062
        %v6064 = vpop.f32.mrb[0].mxu0
        %v6065 = vpop.f32.mrb[0].mxu0
        %6066 = vdwg.mxu0
        %6067 = vmatprep.subr.bf16.mxu0 %v4345
        %6068 = vmatpush1.bf16.msra.mxu0 %v4344
        %6069 = vmatprep.subr.bf16.mxu0 %v4363
        %6070 = vmatpush1.bf16.msra.mxu0 %v4362
        %6071 = vmatprep.subr.bf16.mxu0 %v4381
        %6072 = vmatpush1.bf16.msra.mxu0 %v4380
        %6073 = vmatprep.subr.bf16.mxu0 %v4399
        %6074 = vmatpush1.bf16.msra.mxu0 %v4398
        %6075 = vmatprep.subr.bf16.mxu0 %v4417
        %6076 = vmatpush1.bf16.msra.mxu0 %v4416
        %6077 = vmatprep.subr.bf16.mxu0 %v4435
        %6078 = vmatpush1.bf16.msra.mxu0 %v4434
        %6079 = vmatprep.subr.bf16.mxu0 %v4453
        %6080 = vmatpush1.bf16.msra.mxu0 %v4452
        %6081 = vmatprep.subr.bf16.mxu0 %v4471
        %6082 = vmatpush1.bf16.msra.mxu0 %v4470
        %6083 = vmatprep.subr.bf16.mxu0 %v4489
        %6084 = vmatpush1.bf16.msra.mxu0 %v4488
        %6085 = vmatprep.subr.bf16.mxu0 %v4507
        %6086 = vmatpush1.bf16.msra.mxu0 %v4506
        %6087 = vmatprep.subr.bf16.mxu0 %v4525
        %6088 = vmatpush1.bf16.msra.mxu0 %v4524
        %6089 = vmatprep.subr.bf16.mxu0 %v4543
        %6090 = vmatpush1.bf16.msra.mxu0 %v4542
        %6091 = vmatprep.subr.bf16.mxu0 %v4561
        %6092 = vmatpush1.bf16.msra.mxu0 %v4560
        %6093 = vmatprep.subr.bf16.mxu0 %v4579
        %6094 = vmatpush1.bf16.msra.mxu0 %v4578
        %6095 = vmatprep.subr.bf16.mxu0 %v4597
        %6096 = vmatpush1.bf16.msra.mxu0 %v4596
        %6097 = vmatprep.subr.bf16.mxu0 %v4615
        %6098 = vmatpush1.bf16.msra.mxu0 %v4614
        %6099 = vmatprep.mubr.bf16.mxu0 %v497
        %6100 = vmatmul.mubr.bf16.gmra.mrb[0].mxu0 %v496
        %v6101 = vpop.f32.mrb[0].mxu0
        %v6102 = vadd.f32 %v6061, %v6101
        %v6103 = vpop.f32.mrb[0].mxu0
        %v6104 = vadd.f32 %v6063, %v6103
        %v6105 = vpop.f32.mrb[0].mxu0
        %v6106 = vpop.f32.mrb[0].mxu0
        %6107 = vdwg.mxu0
        %6108 = vmatprep.subr.bf16.mxu0 %v4633
        %6109 = vmatpush1.bf16.msra.mxu0 %v4632
        %6110 = vmatprep.subr.bf16.mxu0 %v4651
        %6111 = vmatpush1.bf16.msra.mxu0 %v4650
        %6112 = vmatprep.subr.bf16.mxu0 %v4669
        %6113 = vmatpush1.bf16.msra.mxu0 %v4668
        %6114 = vmatprep.subr.bf16.mxu0 %v4687
        %6115 = vmatpush1.bf16.msra.mxu0 %v4686
        %6116 = vmatprep.subr.bf16.mxu0 %v4705
        %6117 = vmatpush1.bf16.msra.mxu0 %v4704
        %6118 = vmatprep.subr.bf16.mxu0 %v4723
        %6119 = vmatpush1.bf16.msra.mxu0 %v4722
        %6120 = vmatprep.subr.bf16.mxu0 %v4741
        %6121 = vmatpush1.bf16.msra.mxu0 %v4740
        %6122 = vmatprep.subr.bf16.mxu0 %v4759
        %6123 = vmatpush1.bf16.msra.mxu0 %v4758
        %6124 = vmatprep.subr.bf16.mxu0 %v4777
        %6125 = vmatpush1.bf16.msra.mxu0 %v4776
        %6126 = vmatprep.subr.bf16.mxu0 %v4795
        %6127 = vmatpush1.bf16.msra.mxu0 %v4794
        %6128 = vmatprep.subr.bf16.mxu0 %v4813
        %6129 = vmatpush1.bf16.msra.mxu0 %v4812
        %6130 = vmatprep.subr.bf16.mxu0 %v4831
        %6131 = vmatpush1.bf16.msra.mxu0 %v4830
        %6132 = vmatprep.subr.bf16.mxu0 %v4849
        %6133 = vmatpush1.bf16.msra.mxu0 %v4848
        %6134 = vmatprep.subr.bf16.mxu0 %v4867
        %6135 = vmatpush1.bf16.msra.mxu0 %v4866
        %6136 = vmatprep.subr.bf16.mxu0 %v4885
        %6137 = vmatpush1.bf16.msra.mxu0 %v4884
        %6138 = vmatprep.subr.bf16.mxu0 %v4903
        %6139 = vmatpush1.bf16.msra.mxu0 %v4902
        %6140 = vmatprep.mubr.bf16.mxu0 %v499
        %6141 = vmatmul.mubr.bf16.gmra.mrb[0].mxu0 %v498
        %v6142 = vpop.f32.mrb[0].mxu0
        %v6143 = vadd.f32 %v6102, %v6142
        %v6144 = vpop.f32.mrb[0].mxu0
        %v6145 = vadd.f32 %v6104, %v6144
        %v6146 = vpop.f32.mrb[0].mxu0
        %v6147 = vpop.f32.mrb[0].mxu0
        %6148 = vdwg.mxu0
        %6149 = vmatprep.subr.bf16.mxu0 %v4059
        %6150 = vmatpush1.bf16.msra.mxu0 %v4058
        %6151 = vmatprep.subr.bf16.mxu0 %v4077
        %6152 = vmatpush1.bf16.msra.mxu0 %v4076
        %6153 = vmatprep.subr.bf16.mxu0 %v4095
        %6154 = vmatpush1.bf16.msra.mxu0 %v4094
        %6155 = vmatprep.subr.bf16.mxu0 %v4113
        %6156 = vmatpush1.bf16.msra.mxu0 %v4112
        %6157 = vmatprep.subr.bf16.mxu0 %v4131
        %6158 = vmatpush1.bf16.msra.mxu0 %v4130
        %6159 = vmatprep.subr.bf16.mxu0 %v4149
        %6160 = vmatpush1.bf16.msra.mxu0 %v4148
        %6161 = vmatprep.subr.bf16.mxu0 %v4167
        %6162 = vmatpush1.bf16.msra.mxu0 %v4166
        %6163 = vmatprep.subr.bf16.mxu0 %v4185
        %6164 = vmatpush1.bf16.msra.mxu0 %v4184
        %6165 = vmatprep.subr.bf16.mxu0 %v4203
        %6166 = vmatpush1.bf16.msra.mxu0 %v4202
        %6167 = vmatprep.subr.bf16.mxu0 %v4221
        %6168 = vmatpush1.bf16.msra.mxu0 %v4220
        %6169 = vmatprep.subr.bf16.mxu0 %v4239
        %6170 = vmatpush1.bf16.msra.mxu0 %v4238
        %6171 = vmatprep.subr.bf16.mxu0 %v4257
        %6172 = vmatpush1.bf16.msra.mxu0 %v4256
        %6173 = vmatprep.subr.bf16.mxu0 %v4275
        %6174 = vmatpush1.bf16.msra.mxu0 %v4274
        %6175 = vmatprep.subr.bf16.mxu0 %v4293
        %6176 = vmatpush1.bf16.msra.mxu0 %v4292
        %6177 = vmatprep.subr.bf16.mxu0 %v4311
        %6178 = vmatpush1.bf16.msra.mxu0 %v4310
        %6179 = vmatprep.subr.bf16.mxu0 %v4329
        %6180 = vmatpush1.bf16.msra.mxu0 %v4328
        %6181 = vmatprep.mubr.bf16.mxu0 %v495
        %6182 = vmatmul.mubr.bf16.gmra.mrb[0].mxu0 %v494
        %v6183 = vpop.f32.mrb[0].mxu0
        %v6184 = vadd.f32 %v1397, %v6183
        %v6185 = vpop.f32.mrb[0].mxu0
        %v6186 = vadd.f32 %v1401, %v6185
        %v6187 = vpop.f32.mrb[0].mxu0
        %v6188 = vpop.f32.mrb[0].mxu0
        %6189 = vdwg.mxu0
        %6190 = vmatprep.subr.bf16.mxu0 %v4347
        %6191 = vmatpush1.bf16.msra.mxu0 %v4346
        %6192 = vmatprep.subr.bf16.mxu0 %v4365
        %6193 = vmatpush1.bf16.msra.mxu0 %v4364
        %6194 = vmatprep.subr.bf16.mxu0 %v4383
        %6195 = vmatpush1.bf16.msra.mxu0 %v4382
        %6196 = vmatprep.subr.bf16.mxu0 %v4401
        %6197 = vmatpush1.bf16.msra.mxu0 %v4400
        %6198 = vmatprep.subr.bf16.mxu0 %v4419
        %6199 = vmatpush1.bf16.msra.mxu0 %v4418
        %6200 = vmatprep.subr.bf16.mxu0 %v4437
        %6201 = vmatpush1.bf16.msra.mxu0 %v4436
        %6202 = vmatprep.subr.bf16.mxu0 %v4455
        %6203 = vmatpush1.bf16.msra.mxu0 %v4454
        %6204 = vmatprep.subr.bf16.mxu0 %v4473
        %6205 = vmatpush1.bf16.msra.mxu0 %v4472
        %6206 = vmatprep.subr.bf16.mxu0 %v4491
        %6207 = vmatpush1.bf16.msra.mxu0 %v4490
        %6208 = vmatprep.subr.bf16.mxu0 %v4509
        %6209 = vmatpush1.bf16.msra.mxu0 %v4508
        %6210 = vmatprep.subr.bf16.mxu0 %v4527
        %6211 = vmatpush1.bf16.msra.mxu0 %v4526
        %6212 = vmatprep.subr.bf16.mxu0 %v4545
        %6213 = vmatpush1.bf16.msra.mxu0 %v4544
        %6214 = vmatprep.subr.bf16.mxu0 %v4563
        %6215 = vmatpush1.bf16.msra.mxu0 %v4562
        %6216 = vmatprep.subr.bf16.mxu0 %v4581
        %6217 = vmatpush1.bf16.msra.mxu0 %v4580
        %6218 = vmatprep.subr.bf16.mxu0 %v4599
        %6219 = vmatpush1.bf16.msra.mxu0 %v4598
        %6220 = vmatprep.subr.bf16.mxu0 %v4617
        %6221 = vmatpush1.bf16.msra.mxu0 %v4616
        %6222 = vmatprep.mubr.bf16.mxu0 %v497
        %6223 = vmatmul.mubr.bf16.gmra.mrb[0].mxu0 %v496
        %v6224 = vpop.f32.mrb[0].mxu0
        %v6225 = vadd.f32 %v6184, %v6224
        %v6226 = vpop.f32.mrb[0].mxu0
        %v6227 = vadd.f32 %v6186, %v6226
        %v6228 = vpop.f32.mrb[0].mxu0
        %v6229 = vpop.f32.mrb[0].mxu0
        %6230 = vdwg.mxu0
        %6231 = vmatprep.subr.bf16.mxu0 %v4635
        %6232 = vmatpush1.bf16.msra.mxu0 %v4634
        %6233 = vmatprep.subr.bf16.mxu0 %v4653
        %6234 = vmatpush1.bf16.msra.mxu0 %v4652
        %6235 = vmatprep.subr.bf16.mxu0 %v4671
        %6236 = vmatpush1.bf16.msra.mxu0 %v4670
        %6237 = vmatprep.subr.bf16.mxu0 %v4689
        %6238 = vmatpush1.bf16.msra.mxu0 %v4688
        %6239 = vmatprep.subr.bf16.mxu0 %v4707
        %6240 = vmatpush1.bf16.msra.mxu0 %v4706
        %6241 = vmatprep.subr.bf16.mxu0 %v4725
        %6242 = vmatpush1.bf16.msra.mxu0 %v4724
        %6243 = vmatprep.subr.bf16.mxu0 %v4743
        %6244 = vmatpush1.bf16.msra.mxu0 %v4742
        %6245 = vmatprep.subr.bf16.mxu0 %v4761
        %6246 = vmatpush1.bf16.msra.mxu0 %v4760
        %6247 = vmatprep.subr.bf16.mxu0 %v4779
        %6248 = vmatpush1.bf16.msra.mxu0 %v4778
        %6249 = vmatprep.subr.bf16.mxu0 %v4797
        %6250 = vmatpush1.bf16.msra.mxu0 %v4796
        %6251 = vmatprep.subr.bf16.mxu0 %v4815
        %6252 = vmatpush1.bf16.msra.mxu0 %v4814
        %6253 = vmatprep.subr.bf16.mxu0 %v4833
        %6254 = vmatpush1.bf16.msra.mxu0 %v4832
        %6255 = vmatprep.subr.bf16.mxu0 %v4851
        %6256 = vmatpush1.bf16.msra.mxu0 %v4850
        %6257 = vmatprep.subr.bf16.mxu0 %v4869
        %6258 = vmatpush1.bf16.msra.mxu0 %v4868
        %6259 = vmatprep.subr.bf16.mxu0 %v4887
        %6260 = vmatpush1.bf16.msra.mxu0 %v4886
        %6261 = vmatprep.subr.bf16.mxu0 %v4905
        %6262 = vmatpush1.bf16.msra.mxu0 %v4904
        %6263 = vmatprep.mubr.bf16.mxu0 %v499
        %6264 = vmatmul.mubr.bf16.gmra.mrb[0].mxu0 %v498
        %v6265 = vpop.f32.mrb[0].mxu0
        %v6266 = vadd.f32 %v6225, %v6265
        %v6267 = vpop.f32.mrb[0].mxu0
        %v6268 = vadd.f32 %v6227, %v6267
        %v6269 = vpop.f32.mrb[0].mxu0
        %v6270 = vpop.f32.mrb[0].mxu0
        %6271 = vdwg.mxu0
        %6272 = vmatprep.subr.bf16.mxu0 %v4061
        %6273 = vmatpush1.bf16.msra.mxu0 %v4060
        %6274 = vmatprep.subr.bf16.mxu0 %v4079
        %6275 = vmatpush1.bf16.msra.mxu0 %v4078
        %6276 = vmatprep.subr.bf16.mxu0 %v4097
        %6277 = vmatpush1.bf16.msra.mxu0 %v4096
        %6278 = vmatprep.subr.bf16.mxu0 %v4115
        %6279 = vmatpush1.bf16.msra.mxu0 %v4114
        %6280 = vmatprep.subr.bf16.mxu0 %v4133
        %6281 = vmatpush1.bf16.msra.mxu0 %v4132
        %6282 = vmatprep.subr.bf16.mxu0 %v4151
        %6283 = vmatpush1.bf16.msra.mxu0 %v4150
        %6284 = vmatprep.subr.bf16.mxu0 %v4169
        %6285 = vmatpush1.bf16.msra.mxu0 %v4168
        %6286 = vmatprep.subr.bf16.mxu0 %v4187
        %6287 = vmatpush1.bf16.msra.mxu0 %v4186
        %6288 = vmatprep.subr.bf16.mxu0 %v4205
        %6289 = vmatpush1.bf16.msra.mxu0 %v4204
        %6290 = vmatprep.subr.bf16.mxu0 %v4223
        %6291 = vmatpush1.bf16.msra.mxu0 %v4222
        %6292 = vmatprep.subr.bf16.mxu0 %v4241
        %6293 = vmatpush1.bf16.msra.mxu0 %v4240
        %6294 = vmatprep.subr.bf16.mxu0 %v4259
        %6295 = vmatpush1.bf16.msra.mxu0 %v4258
        %6296 = vmatprep.subr.bf16.mxu0 %v4277
        %6297 = vmatpush1.bf16.msra.mxu0 %v4276
        %6298 = vmatprep.subr.bf16.mxu0 %v4295
        %6299 = vmatpush1.bf16.msra.mxu0 %v4294
        %6300 = vmatprep.subr.bf16.mxu0 %v4313
        %6301 = vmatpush1.bf16.msra.mxu0 %v4312
        %6302 = vmatprep.subr.bf16.mxu0 %v4331
        %6303 = vmatpush1.bf16.msra.mxu0 %v4330
        %6304 = vmatprep.mubr.bf16.mxu0 %v495
        %6305 = vmatmul.mubr.bf16.gmra.mrb[0].mxu0 %v494
        %v6306 = vpop.f32.mrb[0].mxu0
        %v6307 = vadd.f32 %v1405, %v6306
        %v6308 = vpop.f32.mrb[0].mxu0
        %v6309 = vadd.f32 %v1409, %v6308
        %v6310 = vpop.f32.mrb[0].mxu0
        %v6311 = vpop.f32.mrb[0].mxu0
        %6312 = vdwg.mxu0
        %6313 = vmatprep.subr.bf16.mxu0 %v4349
        %6314 = vmatpush1.bf16.msra.mxu0 %v4348
        %6315 = vmatprep.subr.bf16.mxu0 %v4367
        %6316 = vmatpush1.bf16.msra.mxu0 %v4366
        %6317 = vmatprep.subr.bf16.mxu0 %v4385
        %6318 = vmatpush1.bf16.msra.mxu0 %v4384
        %6319 = vmatprep.subr.bf16.mxu0 %v4403
        %6320 = vmatpush1.bf16.msra.mxu0 %v4402
        %6321 = vmatprep.subr.bf16.mxu0 %v4421
        %6322 = vmatpush1.bf16.msra.mxu0 %v4420
        %6323 = vmatprep.subr.bf16.mxu0 %v4439
        %6324 = vmatpush1.bf16.msra.mxu0 %v4438
        %6325 = vmatprep.subr.bf16.mxu0 %v4457
        %6326 = vmatpush1.bf16.msra.mxu0 %v4456
        %6327 = vmatprep.subr.bf16.mxu0 %v4475
        %6328 = vmatpush1.bf16.msra.mxu0 %v4474
        %6329 = vmatprep.subr.bf16.mxu0 %v4493
        %6330 = vmatpush1.bf16.msra.mxu0 %v4492
        %6331 = vmatprep.subr.bf16.mxu0 %v4511
        %6332 = vmatpush1.bf16.msra.mxu0 %v4510
        %6333 = vmatprep.subr.bf16.mxu0 %v4529
        %6334 = vmatpush1.bf16.msra.mxu0 %v4528
        %6335 = vmatprep.subr.bf16.mxu0 %v4547
        %6336 = vmatpush1.bf16.msra.mxu0 %v4546
        %6337 = vmatprep.subr.bf16.mxu0 %v4565
        %6338 = vmatpush1.bf16.msra.mxu0 %v4564
        %6339 = vmatprep.subr.bf16.mxu0 %v4583
        %6340 = vmatpush1.bf16.msra.mxu0 %v4582
        %6341 = vmatprep.subr.bf16.mxu0 %v4601
        %6342 = vmatpush1.bf16.msra.mxu0 %v4600
        %6343 = vmatprep.subr.bf16.mxu0 %v4619
        %6344 = vmatpush1.bf16.msra.mxu0 %v4618
        %6345 = vmatprep.mubr.bf16.mxu0 %v497
        %6346 = vmatmul.mubr.bf16.gmra.mrb[0].mxu0 %v496
        %v6347 = vpop.f32.mrb[0].mxu0
        %v6348 = vadd.f32 %v6307, %v6347
        %v6349 = vpop.f32.mrb[0].mxu0
        %v6350 = vadd.f32 %v6309, %v6349
        %v6351 = vpop.f32.mrb[0].mxu0
        %v6352 = vpop.f32.mrb[0].mxu0
        %6353 = vdwg.mxu0
        %6354 = vmatprep.subr.bf16.mxu0 %v4637
        %6355 = vmatpush1.bf16.msra.mxu0 %v4636
        %6356 = vmatprep.subr.bf16.mxu0 %v4655
        %6357 = vmatpush1.bf16.msra.mxu0 %v4654
        %6358 = vmatprep.subr.bf16.mxu0 %v4673
        %6359 = vmatpush1.bf16.msra.mxu0 %v4672
        %6360 = vmatprep.subr.bf16.mxu0 %v4691
        %6361 = vmatpush1.bf16.msra.mxu0 %v4690
        %6362 = vmatprep.subr.bf16.mxu0 %v4709
        %6363 = vmatpush1.bf16.msra.mxu0 %v4708
        %6364 = vmatprep.subr.bf16.mxu0 %v4727
        %6365 = vmatpush1.bf16.msra.mxu0 %v4726
        %6366 = vmatprep.subr.bf16.mxu0 %v4745
        %6367 = vmatpush1.bf16.msra.mxu0 %v4744
        %6368 = vmatprep.subr.bf16.mxu0 %v4763
        %6369 = vmatpush1.bf16.msra.mxu0 %v4762
        %6370 = vmatprep.subr.bf16.mxu0 %v4781
        %6371 = vmatpush1.bf16.msra.mxu0 %v4780
        %6372 = vmatprep.subr.bf16.mxu0 %v4799
        %6373 = vmatpush1.bf16.msra.mxu0 %v4798
        %6374 = vmatprep.subr.bf16.mxu0 %v4817
        %6375 = vmatpush1.bf16.msra.mxu0 %v4816
        %6376 = vmatprep.subr.bf16.mxu0 %v4835
        %6377 = vmatpush1.bf16.msra.mxu0 %v4834
        %6378 = vmatprep.subr.bf16.mxu0 %v4853
        %6379 = vmatpush1.bf16.msra.mxu0 %v4852
        %6380 = vmatprep.subr.bf16.mxu0 %v4871
        %6381 = vmatpush1.bf16.msra.mxu0 %v4870
        %6382 = vmatprep.subr.bf16.mxu0 %v4889
        %6383 = vmatpush1.bf16.msra.mxu0 %v4888
        %6384 = vmatprep.subr.bf16.mxu0 %v4907
        %6385 = vmatpush1.bf16.msra.mxu0 %v4906
        %6386 = vmatprep.mubr.bf16.mxu0 %v499
        %6387 = vmatmul.mubr.bf16.gmra.mrb[0].mxu0 %v498
        %v6388 = vpop.f32.mrb[0].mxu0
        %v6389 = vadd.f32 %v6348, %v6388
        %v6390 = vpop.f32.mrb[0].mxu0
        %v6391 = vadd.f32 %v6350, %v6390
        %v6392 = vpop.f32.mrb[0].mxu0
        %v6393 = vpop.f32.mrb[0].mxu0
        %6394 = vdwg.mxu0
        %6395 = vmatprep.subr.bf16.mxu0 %v4063
        %6396 = vmatpush1.bf16.msra.mxu0 %v4062
        %6397 = vmatprep.subr.bf16.mxu0 %v4081
        %6398 = vmatpush1.bf16.msra.mxu0 %v4080
        %6399 = vmatprep.subr.bf16.mxu0 %v4099
        %6400 = vmatpush1.bf16.msra.mxu0 %v4098
        %6401 = vmatprep.subr.bf16.mxu0 %v4117
        %6402 = vmatpush1.bf16.msra.mxu0 %v4116
        %6403 = vmatprep.subr.bf16.mxu0 %v4135
        %6404 = vmatpush1.bf16.msra.mxu0 %v4134
        %6405 = vmatprep.subr.bf16.mxu0 %v4153
        %6406 = vmatpush1.bf16.msra.mxu0 %v4152
        %6407 = vmatprep.subr.bf16.mxu0 %v4171
        %6408 = vmatpush1.bf16.msra.mxu0 %v4170
        %6409 = vmatprep.subr.bf16.mxu0 %v4189
        %6410 = vmatpush1.bf16.msra.mxu0 %v4188
        %6411 = vmatprep.subr.bf16.mxu0 %v4207
        %6412 = vmatpush1.bf16.msra.mxu0 %v4206
        %6413 = vmatprep.subr.bf16.mxu0 %v4225
        %6414 = vmatpush1.bf16.msra.mxu0 %v4224
        %6415 = vmatprep.subr.bf16.mxu0 %v4243
        %6416 = vmatpush1.bf16.msra.mxu0 %v4242
        %6417 = vmatprep.subr.bf16.mxu0 %v4261
        %6418 = vmatpush1.bf16.msra.mxu0 %v4260
        %6419 = vmatprep.subr.bf16.mxu0 %v4279
        %6420 = vmatpush1.bf16.msra.mxu0 %v4278
        %6421 = vmatprep.subr.bf16.mxu0 %v4297
        %6422 = vmatpush1.bf16.msra.mxu0 %v4296
        %6423 = vmatprep.subr.bf16.mxu0 %v4315
        %6424 = vmatpush1.bf16.msra.mxu0 %v4314
        %6425 = vmatprep.subr.bf16.mxu0 %v4333
        %6426 = vmatpush1.bf16.msra.mxu0 %v4332
        %6427 = vmatprep.mubr.bf16.mxu0 %v495
        %6428 = vmatmul.mubr.bf16.gmra.mrb[0].mxu0 %v494
        %v6429 = vpop.f32.mrb[0].mxu0
        %v6430 = vadd.f32 %v1413, %v6429
        %v6431 = vpop.f32.mrb[0].mxu0
        %v6432 = vadd.f32 %v1417, %v6431
        %v6433 = vpop.f32.mrb[0].mxu0
        %v6434 = vpop.f32.mrb[0].mxu0
        %6435 = vdwg.mxu0
        %6436 = vmatprep.subr.bf16.mxu0 %v4351
        %6437 = vmatpush1.bf16.msra.mxu0 %v4350
        %6438 = vmatprep.subr.bf16.mxu0 %v4369
        %6439 = vmatpush1.bf16.msra.mxu0 %v4368
        %6440 = vmatprep.subr.bf16.mxu0 %v4387
        %6441 = vmatpush1.bf16.msra.mxu0 %v4386
        %6442 = vmatprep.subr.bf16.mxu0 %v4405
        %6443 = vmatpush1.bf16.msra.mxu0 %v4404
        %6444 = vmatprep.subr.bf16.mxu0 %v4423
        %6445 = vmatpush1.bf16.msra.mxu0 %v4422
        %6446 = vmatprep.subr.bf16.mxu0 %v4441
        %6447 = vmatpush1.bf16.msra.mxu0 %v4440
        %6448 = vmatprep.subr.bf16.mxu0 %v4459
        %6449 = vmatpush1.bf16.msra.mxu0 %v4458
        %6450 = vmatprep.subr.bf16.mxu0 %v4477
        %6451 = vmatpush1.bf16.msra.mxu0 %v4476
        %6452 = vmatprep.subr.bf16.mxu0 %v4495
        %6453 = vmatpush1.bf16.msra.mxu0 %v4494
        %6454 = vmatprep.subr.bf16.mxu0 %v4513
        %6455 = vmatpush1.bf16.msra.mxu0 %v4512
        %6456 = vmatprep.subr.bf16.mxu0 %v4531
        %6457 = vmatpush1.bf16.msra.mxu0 %v4530
        %6458 = vmatprep.subr.bf16.mxu0 %v4549
        %6459 = vmatpush1.bf16.msra.mxu0 %v4548
        %6460 = vmatprep.subr.bf16.mxu0 %v4567
        %6461 = vmatpush1.bf16.msra.mxu0 %v4566
        %6462 = vmatprep.subr.bf16.mxu0 %v4585
        %6463 = vmatpush1.bf16.msra.mxu0 %v4584
        %6464 = vmatprep.subr.bf16.mxu0 %v4603
        %6465 = vmatpush1.bf16.msra.mxu0 %v4602
        %6466 = vmatprep.subr.bf16.mxu0 %v4621
        %6467 = vmatpush1.bf16.msra.mxu0 %v4620
        %6468 = vmatprep.mubr.bf16.mxu0 %v497
        %6469 = vmatmul.mubr.bf16.gmra.mrb[0].mxu0 %v496
        %v6470 = vpop.f32.mrb[0].mxu0
        %v6471 = vadd.f32 %v6430, %v6470
        %v6472 = vpop.f32.mrb[0].mxu0
        %v6473 = vadd.f32 %v6432, %v6472
        %v6474 = vpop.f32.mrb[0].mxu0
        %v6475 = vpop.f32.mrb[0].mxu0
        %6476 = vdwg.mxu0
        %6477 = vmatprep.subr.bf16.mxu0 %v4639
        %6478 = vmatpush1.bf16.msra.mxu0 %v4638
        %6479 = vmatprep.subr.bf16.mxu0 %v4657
        %6480 = vmatpush1.bf16.msra.mxu0 %v4656
        %6481 = vmatprep.subr.bf16.mxu0 %v4675
        %6482 = vmatpush1.bf16.msra.mxu0 %v4674
        %6483 = vmatprep.subr.bf16.mxu0 %v4693
        %6484 = vmatpush1.bf16.msra.mxu0 %v4692
        %6485 = vmatprep.subr.bf16.mxu0 %v4711
        %6486 = vmatpush1.bf16.msra.mxu0 %v4710
        %6487 = vmatprep.subr.bf16.mxu0 %v4729
        %6488 = vmatpush1.bf16.msra.mxu0 %v4728
        %6489 = vmatprep.subr.bf16.mxu0 %v4747
        %6490 = vmatpush1.bf16.msra.mxu0 %v4746
        %6491 = vmatprep.subr.bf16.mxu0 %v4765
        %6492 = vmatpush1.bf16.msra.mxu0 %v4764
        %6493 = vmatprep.subr.bf16.mxu0 %v4783
        %6494 = vmatpush1.bf16.msra.mxu0 %v4782
        %6495 = vmatprep.subr.bf16.mxu0 %v4801
        %6496 = vmatpush1.bf16.msra.mxu0 %v4800
        %6497 = vmatprep.subr.bf16.mxu0 %v4819
        %6498 = vmatpush1.bf16.msra.mxu0 %v4818
        %6499 = vmatprep.subr.bf16.mxu0 %v4837
        %6500 = vmatpush1.bf16.msra.mxu0 %v4836
        %6501 = vmatprep.subr.bf16.mxu0 %v4855
        %6502 = vmatpush1.bf16.msra.mxu0 %v4854
        %6503 = vmatprep.subr.bf16.mxu0 %v4873
        %6504 = vmatpush1.bf16.msra.mxu0 %v4872
        %6505 = vmatprep.subr.bf16.mxu0 %v4891
        %6506 = vmatpush1.bf16.msra.mxu0 %v4890
        %6507 = vmatprep.subr.bf16.mxu0 %v4909
        %6508 = vmatpush1.bf16.msra.mxu0 %v4908
        %6509 = vmatprep.mubr.bf16.mxu0 %v499
        %6510 = vmatmul.mubr.bf16.gmra.mrb[0].mxu0 %v498
        %v6511 = vpop.f32.mrb[0].mxu0
        %v6512 = vadd.f32 %v6471, %v6511
        %v6513 = vpop.f32.mrb[0].mxu0
        %v6514 = vadd.f32 %v6473, %v6513
        %v6515 = vpop.f32.mrb[0].mxu0
        %v6516 = vpop.f32.mrb[0].mxu0
        %6517 = vdwg.mxu0
        %6518 = vmatprep.subr.bf16.mxu0 %v4065
        %6519 = vmatpush1.bf16.msra.mxu0 %v4064
        %6520 = vmatprep.subr.bf16.mxu0 %v4083
        %6521 = vmatpush1.bf16.msra.mxu0 %v4082
        %6522 = vmatprep.subr.bf16.mxu0 %v4101
        %6523 = vmatpush1.bf16.msra.mxu0 %v4100
        %6524 = vmatprep.subr.bf16.mxu0 %v4119
        %6525 = vmatpush1.bf16.msra.mxu0 %v4118
        %6526 = vmatprep.subr.bf16.mxu0 %v4137
        %6527 = vmatpush1.bf16.msra.mxu0 %v4136
        %6528 = vmatprep.subr.bf16.mxu0 %v4155
        %6529 = vmatpush1.bf16.msra.mxu0 %v4154
        %6530 = vmatprep.subr.bf16.mxu0 %v4173
        %6531 = vmatpush1.bf16.msra.mxu0 %v4172
        %6532 = vmatprep.subr.bf16.mxu0 %v4191
        %6533 = vmatpush1.bf16.msra.mxu0 %v4190
        %6534 = vmatprep.subr.bf16.mxu0 %v4209
        %6535 = vmatpush1.bf16.msra.mxu0 %v4208
        %6536 = vmatprep.subr.bf16.mxu0 %v4227
        %6537 = vmatpush1.bf16.msra.mxu0 %v4226
        %6538 = vmatprep.subr.bf16.mxu0 %v4245
        %6539 = vmatpush1.bf16.msra.mxu0 %v4244
        %6540 = vmatprep.subr.bf16.mxu0 %v4263
        %6541 = vmatpush1.bf16.msra.mxu0 %v4262
        %6542 = vmatprep.subr.bf16.mxu0 %v4281
        %6543 = vmatpush1.bf16.msra.mxu0 %v4280
        %6544 = vmatprep.subr.bf16.mxu0 %v4299
        %6545 = vmatpush1.bf16.msra.mxu0 %v4298
        %6546 = vmatprep.subr.bf16.mxu0 %v4317
        %6547 = vmatpush1.bf16.msra.mxu0 %v4316
        %6548 = vmatprep.subr.bf16.mxu0 %v4335
        %6549 = vmatpush1.bf16.msra.mxu0 %v4334
        %6550 = vmatprep.mubr.bf16.mxu0 %v495
        %6551 = vmatmul.mubr.bf16.gmra.mrb[0].mxu0 %v494
        %v6552 = vpop.f32.mrb[0].mxu0
        %v6553 = vadd.f32 %v1421, %v6552
        %v6554 = vpop.f32.mrb[0].mxu0
        %v6555 = vadd.f32 %v1425, %v6554
        %v6556 = vpop.f32.mrb[0].mxu0
        %v6557 = vpop.f32.mrb[0].mxu0
        %6558 = vdwg.mxu0
        %6559 = vmatprep.subr.bf16.mxu0 %v4353
        %6560 = vmatpush1.bf16.msra.mxu0 %v4352
        %6561 = vmatprep.subr.bf16.mxu0 %v4371
        %6562 = vmatpush1.bf16.msra.mxu0 %v4370
        %6563 = vmatprep.subr.bf16.mxu0 %v4389
        %6564 = vmatpush1.bf16.msra.mxu0 %v4388
        %6565 = vmatprep.subr.bf16.mxu0 %v4407
        %6566 = vmatpush1.bf16.msra.mxu0 %v4406
        %6567 = vmatprep.subr.bf16.mxu0 %v4425
        %6568 = vmatpush1.bf16.msra.mxu0 %v4424
        %6569 = vmatprep.subr.bf16.mxu0 %v4443
        %6570 = vmatpush1.bf16.msra.mxu0 %v4442
        %6571 = vmatprep.subr.bf16.mxu0 %v4461
        %6572 = vmatpush1.bf16.msra.mxu0 %v4460
        %6573 = vmatprep.subr.bf16.mxu0 %v4479
        %6574 = vmatpush1.bf16.msra.mxu0 %v4478
        %6575 = vmatprep.subr.bf16.mxu0 %v4497
        %6576 = vmatpush1.bf16.msra.mxu0 %v4496
        %6577 = vmatprep.subr.bf16.mxu0 %v4515
        %6578 = vmatpush1.bf16.msra.mxu0 %v4514
        %6579 = vmatprep.subr.bf16.mxu0 %v4533
        %6580 = vmatpush1.bf16.msra.mxu0 %v4532
        %6581 = vmatprep.subr.bf16.mxu0 %v4551
        %6582 = vmatpush1.bf16.msra.mxu0 %v4550
        %6583 = vmatprep.subr.bf16.mxu0 %v4569
        %6584 = vmatpush1.bf16.msra.mxu0 %v4568
        %6585 = vmatprep.subr.bf16.mxu0 %v4587
        %6586 = vmatpush1.bf16.msra.mxu0 %v4586
        %6587 = vmatprep.subr.bf16.mxu0 %v4605
        %6588 = vmatpush1.bf16.msra.mxu0 %v4604
        %6589 = vmatprep.subr.bf16.mxu0 %v4623
        %6590 = vmatpush1.bf16.msra.mxu0 %v4622
        %6591 = vmatprep.mubr.bf16.mxu0 %v497
        %6592 = vmatmul.mubr.bf16.gmra.mrb[0].mxu0 %v496
        %v6593 = vpop.f32.mrb[0].mxu0
        %v6594 = vadd.f32 %v6553, %v6593
        %v6595 = vpop.f32.mrb[0].mxu0
        %v6596 = vadd.f32 %v6555, %v6595
        %v6597 = vpop.f32.mrb[0].mxu0
        %v6598 = vpop.f32.mrb[0].mxu0
        %6599 = vdwg.mxu0
        %6600 = vmatprep.subr.bf16.mxu0 %v4641
        %6601 = vmatpush1.bf16.msra.mxu0 %v4640
        %6602 = vmatprep.subr.bf16.mxu0 %v4659
        %6603 = vmatpush1.bf16.msra.mxu0 %v4658
        %6604 = vmatprep.subr.bf16.mxu0 %v4677
        %6605 = vmatpush1.bf16.msra.mxu0 %v4676
        %6606 = vmatprep.subr.bf16.mxu0 %v4695
        %6607 = vmatpush1.bf16.msra.mxu0 %v4694
        %6608 = vmatprep.subr.bf16.mxu0 %v4713
        %6609 = vmatpush1.bf16.msra.mxu0 %v4712
        %6610 = vmatprep.subr.bf16.mxu0 %v4731
        %6611 = vmatpush1.bf16.msra.mxu0 %v4730
        %6612 = vmatprep.subr.bf16.mxu0 %v4749
        %6613 = vmatpush1.bf16.msra.mxu0 %v4748
        %6614 = vmatprep.subr.bf16.mxu0 %v4767
        %6615 = vmatpush1.bf16.msra.mxu0 %v4766
        %6616 = vmatprep.subr.bf16.mxu0 %v4785
        %6617 = vmatpush1.bf16.msra.mxu0 %v4784
        %6618 = vmatprep.subr.bf16.mxu0 %v4803
        %6619 = vmatpush1.bf16.msra.mxu0 %v4802
        %6620 = vmatprep.subr.bf16.mxu0 %v4821
        %6621 = vmatpush1.bf16.msra.mxu0 %v4820
        %6622 = vmatprep.subr.bf16.mxu0 %v4839
        %6623 = vmatpush1.bf16.msra.mxu0 %v4838
        %6624 = vmatprep.subr.bf16.mxu0 %v4857
        %6625 = vmatpush1.bf16.msra.mxu0 %v4856
        %6626 = vmatprep.subr.bf16.mxu0 %v4875
        %6627 = vmatpush1.bf16.msra.mxu0 %v4874
        %6628 = vmatprep.subr.bf16.mxu0 %v4893
        %6629 = vmatpush1.bf16.msra.mxu0 %v4892
        %6630 = vmatprep.subr.bf16.mxu0 %v4911
        %6631 = vmatpush1.bf16.msra.mxu0 %v4910
        %6632 = vmatprep.mubr.bf16.mxu0 %v499
        %6633 = vmatmul.mubr.bf16.gmra.mrb[0].mxu0 %v498
        %v6634 = vpop.f32.mrb[0].mxu0
        %v6635 = vadd.f32 %v6594, %v6634
        %v6636 = vpop.f32.mrb[0].mxu0
        %v6637 = vadd.f32 %v6596, %v6636
        %v6638 = vpop.f32.mrb[0].mxu0
        %v6639 = vpop.f32.mrb[0].mxu0
        %6640 = vdwg.mxu0
        %6641 = vmatprep.subr.bf16.mxu0 %v4067
        %6642 = vmatpush1.bf16.msra.mxu0 %v4066
        %6643 = vmatprep.subr.bf16.mxu0 %v4085
        %6644 = vmatpush1.bf16.msra.mxu0 %v4084
        %6645 = vmatprep.subr.bf16.mxu0 %v4103
        %6646 = vmatpush1.bf16.msra.mxu0 %v4102
        %6647 = vmatprep.subr.bf16.mxu0 %v4121
        %6648 = vmatpush1.bf16.msra.mxu0 %v4120
        %6649 = vmatprep.subr.bf16.mxu0 %v4139
        %6650 = vmatpush1.bf16.msra.mxu0 %v4138
        %6651 = vmatprep.subr.bf16.mxu0 %v4157
        %6652 = vmatpush1.bf16.msra.mxu0 %v4156
        %6653 = vmatprep.subr.bf16.mxu0 %v4175
        %6654 = vmatpush1.bf16.msra.mxu0 %v4174
        %6655 = vmatprep.subr.bf16.mxu0 %v4193
        %6656 = vmatpush1.bf16.msra.mxu0 %v4192
        %6657 = vmatprep.subr.bf16.mxu0 %v4211
        %6658 = vmatpush1.bf16.msra.mxu0 %v4210
        %6659 = vmatprep.subr.bf16.mxu0 %v4229
        %6660 = vmatpush1.bf16.msra.mxu0 %v4228
        %6661 = vmatprep.subr.bf16.mxu0 %v4247
        %6662 = vmatpush1.bf16.msra.mxu0 %v4246
        %6663 = vmatprep.subr.bf16.mxu0 %v4265
        %6664 = vmatpush1.bf16.msra.mxu0 %v4264
        %6665 = vmatprep.subr.bf16.mxu0 %v4283
        %6666 = vmatpush1.bf16.msra.mxu0 %v4282
        %6667 = vmatprep.subr.bf16.mxu0 %v4301
        %6668 = vmatpush1.bf16.msra.mxu0 %v4300
        %6669 = vmatprep.subr.bf16.mxu0 %v4319
        %6670 = vmatpush1.bf16.msra.mxu0 %v4318
        %6671 = vmatprep.subr.bf16.mxu0 %v4337
        %6672 = vmatpush1.bf16.msra.mxu0 %v4336
        %6673 = vmatprep.mubr.bf16.mxu0 %v495
        %6674 = vmatmul.mubr.bf16.gmra.mrb[0].mxu0 %v494
        %v6675 = vpop.f32.mrb[0].mxu0
        %v6676 = vadd.f32 %v1429, %v6675
        %v6677 = vpop.f32.mrb[0].mxu0
        %v6678 = vadd.f32 %v1433, %v6677
        %v6679 = vpop.f32.mrb[0].mxu0
        %v6680 = vpop.f32.mrb[0].mxu0
        %6681 = vdwg.mxu0
        %6682 = vmatprep.subr.bf16.mxu0 %v4355
        %6683 = vmatpush1.bf16.msra.mxu0 %v4354
        %6684 = vmatprep.subr.bf16.mxu0 %v4373
        %6685 = vmatpush1.bf16.msra.mxu0 %v4372
        %6686 = vmatprep.subr.bf16.mxu0 %v4391
        %6687 = vmatpush1.bf16.msra.mxu0 %v4390
        %6688 = vmatprep.subr.bf16.mxu0 %v4409
        %6689 = vmatpush1.bf16.msra.mxu0 %v4408
        %6690 = vmatprep.subr.bf16.mxu0 %v4427
        %6691 = vmatpush1.bf16.msra.mxu0 %v4426
        %6692 = vmatprep.subr.bf16.mxu0 %v4445
        %6693 = vmatpush1.bf16.msra.mxu0 %v4444
        %6694 = vmatprep.subr.bf16.mxu0 %v4463
        %6695 = vmatpush1.bf16.msra.mxu0 %v4462
        %6696 = vmatprep.subr.bf16.mxu0 %v4481
        %6697 = vmatpush1.bf16.msra.mxu0 %v4480
        %6698 = vmatprep.subr.bf16.mxu0 %v4499
        %6699 = vmatpush1.bf16.msra.mxu0 %v4498
        %6700 = vmatprep.subr.bf16.mxu0 %v4517
        %6701 = vmatpush1.bf16.msra.mxu0 %v4516
        %6702 = vmatprep.subr.bf16.mxu0 %v4535
        %6703 = vmatpush1.bf16.msra.mxu0 %v4534
        %6704 = vmatprep.subr.bf16.mxu0 %v4553
        %6705 = vmatpush1.bf16.msra.mxu0 %v4552
        %6706 = vmatprep.subr.bf16.mxu0 %v4571
        %6707 = vmatpush1.bf16.msra.mxu0 %v4570
        %6708 = vmatprep.subr.bf16.mxu0 %v4589
        %6709 = vmatpush1.bf16.msra.mxu0 %v4588
        %6710 = vmatprep.subr.bf16.mxu0 %v4607
        %6711 = vmatpush1.bf16.msra.mxu0 %v4606
        %6712 = vmatprep.subr.bf16.mxu0 %v4625
        %6713 = vmatpush1.bf16.msra.mxu0 %v4624
        %6714 = vmatprep.mubr.bf16.mxu0 %v497
        %6715 = vmatmul.mubr.bf16.gmra.mrb[0].mxu0 %v496
        %v6716 = vpop.f32.mrb[0].mxu0
        %v6717 = vadd.f32 %v6676, %v6716
        %v6718 = vpop.f32.mrb[0].mxu0
        %v6719 = vadd.f32 %v6678, %v6718
        %v6720 = vpop.f32.mrb[0].mxu0
        %v6721 = vpop.f32.mrb[0].mxu0
        %6722 = vdwg.mxu0
        %6723 = vmatprep.subr.bf16.mxu0 %v4643
        %6724 = vmatpush1.bf16.msra.mxu0 %v4642
        %6725 = vmatprep.subr.bf16.mxu0 %v4661
        %6726 = vmatpush1.bf16.msra.mxu0 %v4660
        %6727 = vmatprep.subr.bf16.mxu0 %v4679
        %6728 = vmatpush1.bf16.msra.mxu0 %v4678
        %6729 = vmatprep.subr.bf16.mxu0 %v4697
        %6730 = vmatpush1.bf16.msra.mxu0 %v4696
        %6731 = vmatprep.subr.bf16.mxu0 %v4715
        %6732 = vmatpush1.bf16.msra.mxu0 %v4714
        %6733 = vmatprep.subr.bf16.mxu0 %v4733
        %6734 = vmatpush1.bf16.msra.mxu0 %v4732
        %6735 = vmatprep.subr.bf16.mxu0 %v4751
        %6736 = vmatpush1.bf16.msra.mxu0 %v4750
        %6737 = vmatprep.subr.bf16.mxu0 %v4769
        %6738 = vmatpush1.bf16.msra.mxu0 %v4768
        %6739 = vmatprep.subr.bf16.mxu0 %v4787
        %6740 = vmatpush1.bf16.msra.mxu0 %v4786
        %6741 = vmatprep.subr.bf16.mxu0 %v4805
        %6742 = vmatpush1.bf16.msra.mxu0 %v4804
        %6743 = vmatprep.subr.bf16.mxu0 %v4823
        %6744 = vmatpush1.bf16.msra.mxu0 %v4822
        %6745 = vmatprep.subr.bf16.mxu0 %v4841
        %6746 = vmatpush1.bf16.msra.mxu0 %v4840
        %6747 = vmatprep.subr.bf16.mxu0 %v4859
        %6748 = vmatpush1.bf16.msra.mxu0 %v4858
        %6749 = vmatprep.subr.bf16.mxu0 %v4877
        %6750 = vmatpush1.bf16.msra.mxu0 %v4876
        %6751 = vmatprep.subr.bf16.mxu0 %v4895
        %6752 = vmatpush1.bf16.msra.mxu0 %v4894
        %6753 = vmatprep.subr.bf16.mxu0 %v4913
        %6754 = vmatpush1.bf16.msra.mxu0 %v4912
        %6755 = vmatprep.mubr.bf16.mxu0 %v499
        %6756 = vmatmul.mubr.bf16.gmra.mrb[0].mxu0 %v498
        %v6757 = vpop.f32.mrb[0].mxu0
        %v6758 = vadd.f32 %v6717, %v6757
        %v6759 = vpop.f32.mrb[0].mxu0
        %v6760 = vadd.f32 %v6719, %v6759
        %v6761 = vpop.f32.mrb[0].mxu0
        %v6762 = vpop.f32.mrb[0].mxu0
        %6763 = vdwg.mxu0
        %6764 = vmatprep.subr.bf16.mxu0 %v4069
        %6765 = vmatpush1.bf16.msra.mxu0 %v4068
        %6766 = vmatprep.subr.bf16.mxu0 %v4087
        %6767 = vmatpush1.bf16.msra.mxu0 %v4086
        %6768 = vmatprep.subr.bf16.mxu0 %v4105
        %6769 = vmatpush1.bf16.msra.mxu0 %v4104
        %6770 = vmatprep.subr.bf16.mxu0 %v4123
        %6771 = vmatpush1.bf16.msra.mxu0 %v4122
        %6772 = vmatprep.subr.bf16.mxu0 %v4141
        %6773 = vmatpush1.bf16.msra.mxu0 %v4140
        %6774 = vmatprep.subr.bf16.mxu0 %v4159
        %6775 = vmatpush1.bf16.msra.mxu0 %v4158
        %6776 = vmatprep.subr.bf16.mxu0 %v4177
        %6777 = vmatpush1.bf16.msra.mxu0 %v4176
        %6778 = vmatprep.subr.bf16.mxu0 %v4195
        %6779 = vmatpush1.bf16.msra.mxu0 %v4194
        %6780 = vmatprep.subr.bf16.mxu0 %v4213
        %6781 = vmatpush1.bf16.msra.mxu0 %v4212
        %6782 = vmatprep.subr.bf16.mxu0 %v4231
        %6783 = vmatpush1.bf16.msra.mxu0 %v4230
        %6784 = vmatprep.subr.bf16.mxu0 %v4249
        %6785 = vmatpush1.bf16.msra.mxu0 %v4248
        %6786 = vmatprep.subr.bf16.mxu0 %v4267
        %6787 = vmatpush1.bf16.msra.mxu0 %v4266
        %6788 = vmatprep.subr.bf16.mxu0 %v4285
        %6789 = vmatpush1.bf16.msra.mxu0 %v4284
        %6790 = vmatprep.subr.bf16.mxu0 %v4303
        %6791 = vmatpush1.bf16.msra.mxu0 %v4302
        %6792 = vmatprep.subr.bf16.mxu0 %v4321
        %6793 = vmatpush1.bf16.msra.mxu0 %v4320
        %6794 = vmatprep.subr.bf16.mxu0 %v4339
        %6795 = vmatpush1.bf16.msra.mxu0 %v4338
        %6796 = vmatprep.mubr.bf16.mxu0 %v495
        %6797 = vmatmul.mubr.bf16.gmra.mrb[0].mxu0 %v494
        %v6798 = vpop.f32.mrb[0].mxu0
        %v6799 = vadd.f32 %v1437, %v6798
        %v6800 = vpop.f32.mrb[0].mxu0
        %v6801 = vadd.f32 %v1441, %v6800
        %v6802 = vpop.f32.mrb[0].mxu0
        %v6803 = vpop.f32.mrb[0].mxu0
        %6804 = vdwg.mxu0
        %6805 = vmatprep.subr.bf16.mxu0 %v4357
        %6806 = vmatpush1.bf16.msra.mxu0 %v4356
        %6807 = vmatprep.subr.bf16.mxu0 %v4375
        %6808 = vmatpush1.bf16.msra.mxu0 %v4374
        %6809 = vmatprep.subr.bf16.mxu0 %v4393
        %6810 = vmatpush1.bf16.msra.mxu0 %v4392
        %6811 = vmatprep.subr.bf16.mxu0 %v4411
        %6812 = vmatpush1.bf16.msra.mxu0 %v4410
        %6813 = vmatprep.subr.bf16.mxu0 %v4429
        %6814 = vmatpush1.bf16.msra.mxu0 %v4428
        %6815 = vmatprep.subr.bf16.mxu0 %v4447
        %6816 = vmatpush1.bf16.msra.mxu0 %v4446
        %6817 = vmatprep.subr.bf16.mxu0 %v4465
        %6818 = vmatpush1.bf16.msra.mxu0 %v4464
        %6819 = vmatprep.subr.bf16.mxu0 %v4483
        %6820 = vmatpush1.bf16.msra.mxu0 %v4482
        %6821 = vmatprep.subr.bf16.mxu0 %v4501
        %6822 = vmatpush1.bf16.msra.mxu0 %v4500
        %6823 = vmatprep.subr.bf16.mxu0 %v4519
        %6824 = vmatpush1.bf16.msra.mxu0 %v4518
        %6825 = vmatprep.subr.bf16.mxu0 %v4537
        %6826 = vmatpush1.bf16.msra.mxu0 %v4536
        %6827 = vmatprep.subr.bf16.mxu0 %v4555
        %6828 = vmatpush1.bf16.msra.mxu0 %v4554
        %6829 = vmatprep.subr.bf16.mxu0 %v4573
        %6830 = vmatpush1.bf16.msra.mxu0 %v4572
        %6831 = vmatprep.subr.bf16.mxu0 %v4591
        %6832 = vmatpush1.bf16.msra.mxu0 %v4590
        %6833 = vmatprep.subr.bf16.mxu0 %v4609
        %6834 = vmatpush1.bf16.msra.mxu0 %v4608
        %6835 = vmatprep.subr.bf16.mxu0 %v4627
        %6836 = vmatpush1.bf16.msra.mxu0 %v4626
        %6837 = vmatprep.mubr.bf16.mxu0 %v497
        %6838 = vmatmul.mubr.bf16.gmra.mrb[0].mxu0 %v496
        %v6839 = vpop.f32.mrb[0].mxu0
        %v6840 = vadd.f32 %v6799, %v6839
        %v6841 = vpop.f32.mrb[0].mxu0
        %v6842 = vadd.f32 %v6801, %v6841
        %v6843 = vpop.f32.mrb[0].mxu0
        %v6844 = vpop.f32.mrb[0].mxu0
        %6845 = vdwg.mxu0
        %6846 = vmatprep.subr.bf16.mxu0 %v4645
        %6847 = vmatpush1.bf16.msra.mxu0 %v4644
        %6848 = vmatprep.subr.bf16.mxu0 %v4663
        %6849 = vmatpush1.bf16.msra.mxu0 %v4662
        %6850 = vmatprep.subr.bf16.mxu0 %v4681
        %6851 = vmatpush1.bf16.msra.mxu0 %v4680
        %6852 = vmatprep.subr.bf16.mxu0 %v4699
        %6853 = vmatpush1.bf16.msra.mxu0 %v4698
        %6854 = vmatprep.subr.bf16.mxu0 %v4717
        %6855 = vmatpush1.bf16.msra.mxu0 %v4716
        %6856 = vmatprep.subr.bf16.mxu0 %v4735
        %6857 = vmatpush1.bf16.msra.mxu0 %v4734
        %6858 = vmatprep.subr.bf16.mxu0 %v4753
        %6859 = vmatpush1.bf16.msra.mxu0 %v4752
        %6860 = vmatprep.subr.bf16.mxu0 %v4771
        %6861 = vmatpush1.bf16.msra.mxu0 %v4770
        %6862 = vmatprep.subr.bf16.mxu0 %v4789
        %6863 = vmatpush1.bf16.msra.mxu0 %v4788
        %6864 = vmatprep.subr.bf16.mxu0 %v4807
        %6865 = vmatpush1.bf16.msra.mxu0 %v4806
        %6866 = vmatprep.subr.bf16.mxu0 %v4825
        %6867 = vmatpush1.bf16.msra.mxu0 %v4824
        %6868 = vmatprep.subr.bf16.mxu0 %v4843
        %6869 = vmatpush1.bf16.msra.mxu0 %v4842
        %6870 = vmatprep.subr.bf16.mxu0 %v4861
        %6871 = vmatpush1.bf16.msra.mxu0 %v4860
        %6872 = vmatprep.subr.bf16.mxu0 %v4879
        %6873 = vmatpush1.bf16.msra.mxu0 %v4878
        %6874 = vmatprep.subr.bf16.mxu0 %v4897
        %6875 = vmatpush1.bf16.msra.mxu0 %v4896
        %6876 = vmatprep.subr.bf16.mxu0 %v4915
        %6877 = vmatpush1.bf16.msra.mxu0 %v4914
        %6878 = vmatprep.mubr.bf16.mxu0 %v499
        %6879 = vmatmul.mubr.bf16.gmra.mrb[0].mxu0 %v498
        %v6880 = vpop.f32.mrb[0].mxu0
        %v6881 = vadd.f32 %v6840, %v6880
        %v6882 = vpop.f32.mrb[0].mxu0
        %v6883 = vadd.f32 %v6842, %v6882
        %v6884 = vpop.f32.mrb[0].mxu0
        %v6885 = vpop.f32.mrb[0].mxu0
        %6886 = vdwg.mxu0
        %v6887 = vpack.c.bf16 %v5897, %v5897
        %v6888 = vpack.c.bf16 %v5899, %v5899
        %v6889 = vpack.c.bf16 %v6020, %v6020
        %v6890 = vpack.c.bf16 %v6022, %v6022
        %v6891 = vpack.c.bf16 %v6143, %v6143
        %v6892 = vpack.c.bf16 %v6145, %v6145
        %v6893 = vpack.c.bf16 %v6266, %v6266
        %v6894 = vpack.c.bf16 %v6268, %v6268
        %v6895 = vpack.c.bf16 %v6389, %v6389
        %v6896 = vpack.c.bf16 %v6391, %v6391
        %v6897 = vpack.c.bf16 %v6512, %v6512
        %v6898 = vpack.c.bf16 %v6514, %v6514
        %v6899 = vpack.c.bf16 %v6635, %v6635
        %v6900 = vpack.c.bf16 %v6637, %v6637
        %v6901 = vpack.c.bf16 %v6758, %v6758
        %v6902 = vpack.c.bf16 %v6760, %v6760
        %v6903 = vpack.c.bf16 %v6881, %v6881
        %v6904 = vpack.c.bf16 %v6883, %v6883
        %v6923 = vunpack.c.l.b16 %v6887
        %v6924 = vunpack.c.l.b16 %v6888
        %v6925 = vunpack.c.l.b16 %v6889
        %v6926 = vunpack.c.l.b16 %v6890
        %v6927 = vunpack.c.l.b16 %v6891
        %v6928 = vunpack.c.l.b16 %v6892
        %v6929 = vunpack.c.l.b16 %v6893
        %v6930 = vunpack.c.l.b16 %v6894
        %v6931 = vunpack.c.l.b16 %v6895
        %v6932 = vunpack.c.l.b16 %v6896
        %v6933 = vunpack.c.l.b16 %v6897
        %v6934 = vunpack.c.l.b16 %v6898
        %v6935 = vunpack.c.l.b16 %v6899
        %v6936 = vunpack.c.l.b16 %v6900
        %v6937 = vunpack.c.l.b16 %v6901
        %v6938 = vunpack.c.l.b16 %v6902
        %v6939 = vunpack.c.l.b16 %v6903
        %v6940 = vunpack.c.l.b16 %v6904
        %v6941 = vpack.c.b16 %v6924, %v6923
        %v6942 = vpack.c.b16 %v6926, %v6925
        %v6943 = vpack.c.b16 %v6928, %v6927
        %v6944 = vpack.c.b16 %v6930, %v6929
        %v6945 = vpack.c.b16 %v6932, %v6931
        %v6946 = vpack.c.b16 %v6934, %v6933
        %v6947 = vpack.c.b16 %v6936, %v6935
        %v6948 = vpack.c.b16 %v6938, %v6937
        %v6949 = vpack.c.b16 %v6940, %v6939
        %6959 = vst [vmem:[#allocation2] sm:$0xff] %v6941
        %6960 = vst [vmem:[#allocation2 + $0x8] sm:$0xff] %v6942
        %6961 = vst [vmem:[#allocation2 + $0x10] sm:$0xff] %v6943
        %6962 = vst [vmem:[#allocation2 + $0x18] sm:$0xff] %v6944
        %6963 = vst [vmem:[#allocation2 + $0x20] sm:$0xff] %v6945
        %6964 = vst [vmem:[#allocation2 + $0x28] sm:$0xff] %v6946
        %6965 = vst [vmem:[#allocation2 + $0x30] sm:$0xff] %v6947
        %6966 = vst [vmem:[#allocation2 + $0x38] sm:$0xff] %v6948
        %6967 = vst [vmem:[#allocation2 + $0x40] sm:$0xff] %v6949
        %v6968 = vld [vmem:[#allocation2] sm:$0xf]
        %v6969 = vld [vmem:[#allocation2 + $0x18] sm:$0xf]
        %v6970 = vld [vmem:[#allocation2 + $0x30] sm:$0xf]
        %vm6971 = vcmask 523264
        %v6973 = vsel %vm6971, %v6968, 0
        %v6976 = vsel %vm6971, %v6969, 0
        %6978 = vmatprep.subr.bf16.mxu0 0
        %6979 = vmatpush1.bf16.xpose.msra.mxu0 %v6976
        %6980 = vmatprep.subr.bf16.mxu0 0
        %6981 = vmatpush1.bf16.xpose.msra.mxu0 0
        %6982 = vmatprep.subr.bf16.mxu0 0
        %6983 = vmatpush1.bf16.xpose.msra.mxu0 0
        %6984 = vmatprep.subr.bf16.mxu0 0
        %6985 = vmatpush1.bf16.xpose.msra.mxu0 0
        %6986 = vmatprep.subr.bf16.mxu0 0
        %6987 = vmatpush1.bf16.xpose.msra.mxu0 0
        %6988 = vmatprep.subr.bf16.mxu0 0
        %6989 = vmatpush1.bf16.xpose.msra.mxu0 0
        %6990 = vmatprep.subr.bf16.mxu0 0
        %6991 = vmatpush1.bf16.xpose.msra.mxu0 0
        %6992 = vmatprep.subr.bf16.mxu0 0
        %6993 = vmatpush1.bf16.xpose.msra.mxu0 0
        %6994 = vmatprep.subr.bf16.mxu0 0
        %6995 = vmatpush1.bf16.xpose.msra.mxu0 0
        %6996 = vmatprep.subr.bf16.mxu0 0
        %6997 = vmatpush1.bf16.xpose.msra.mxu0 0
        %6998 = vmatprep.subr.bf16.mxu0 0
        %6999 = vmatpush1.bf16.xpose.msra.mxu0 0
        %7000 = vmatprep.subr.bf16.mxu0 0
        %7001 = vmatpush1.bf16.xpose.msra.mxu0 0
        %7002 = vmatprep.subr.bf16.mxu0 0
        %7003 = vmatpush1.bf16.xpose.msra.mxu0 0
        %7004 = vmatprep.subr.bf16.mxu0 0
        %7005 = vmatpush1.bf16.xpose.msra.mxu0 0
        %7006 = vmatprep.subr.bf16.mxu0 0
        %7007 = vmatpush1.bf16.xpose.msra.mxu0 0
        %7008 = vmatprep.subr.bf16.mxu0 0
        %7009 = vmatpush1.bf16.xpose.msra.mxu0 0
        %7010 = vmatprep.mubr.bf16.mxu0 0
        %7011 = vmatmul.mubr.bf16.gmra.mrb[0].mxu0 %v6973
        %v7012 = vpop.f32.mrb[0].mxu0
        %v7013 = vadd.f32 0.0, %v7012
        %v7014 = vpop.f32.mrb[0].mxu0
        %v7015 = vpop.f32.mrb[0].mxu0
        %v7016 = vpop.f32.mrb[0].mxu0
        %7017 = vdwg.mxu0
        %vm7018 = vcmask 64512
        %v7019 = vsel %vm7018, %v7013, -inf
        %7020 = vmax.xlane.f32.xlu0 %v7019
        %v7021 = vpop.xlane.xlu0 %7020
        %v7022 = vsub.f32 %v7013, %v7021
        %v7023 = vmul.f32 %v7022, 1.442695
        %v7024 = vpow.pop %v7023
        %v7025 = vsel %vm7018, %v7024, 0.0
        %7026 = vadd.xlane.f32.xlu0 %v7025
        %v7027 = vpop.xlane.xlu0 %7026
        %v7028 = vrcp.pop %v7027
        %v7029 = vmul.f32 %v7024, %v7028
        %v7030 = vpack.c.bf16 %v7029, %v7029
        %v7032 = vsel %vm7018, %v7030, 0
        %vm7034 = vcmask 1043456
        %v7036 = vsel %vm7034, %v6970, 0
        %7038 = vmatprep.subr.bf16.mxu0 0
        %7039 = vmatpush1.bf16.msra.mxu0 %v7036
        %7040 = vmatprep.subr.bf16.mxu0 0
        %7041 = vmatpush1.bf16.msra.mxu0 0
        %7042 = vmatprep.subr.bf16.mxu0 0
        %7043 = vmatpush1.bf16.msra.mxu0 0
        %7044 = vmatprep.subr.bf16.mxu0 0
        %7045 = vmatpush1.bf16.msra.mxu0 0
        %7046 = vmatprep.subr.bf16.mxu0 0
        %7047 = vmatpush1.bf16.msra.mxu0 0
        %7048 = vmatprep.subr.bf16.mxu0 0
        %7049 = vmatpush1.bf16.msra.mxu0 0
        %7050 = vmatprep.subr.bf16.mxu0 0
        %7051 = vmatpush1.bf16.msra.mxu0 0
        %7052 = vmatprep.subr.bf16.mxu0 0
        %7053 = vmatpush1.bf16.msra.mxu0 0
        %7054 = vmatprep.subr.bf16.mxu0 0
        %7055 = vmatpush1.bf16.msra.mxu0 0
        %7056 = vmatprep.subr.bf16.mxu0 0
        %7057 = vmatpush1.bf16.msra.mxu0 0
        %7058 = vmatprep.subr.bf16.mxu0 0
        %7059 = vmatpush1.bf16.msra.mxu0 0
        %7060 = vmatprep.subr.bf16.mxu0 0
        %7061 = vmatpush1.bf16.msra.mxu0 0
        %7062 = vmatprep.subr.bf16.mxu0 0
        %7063 = vmatpush1.bf16.msra.mxu0 0
        %7064 = vmatprep.subr.bf16.mxu0 0
        %7065 = vmatpush1.bf16.msra.mxu0 0
        %7066 = vmatprep.subr.bf16.mxu0 0
        %7067 = vmatpush1.bf16.msra.mxu0 0
        %7068 = vmatprep.subr.bf16.mxu0 0
        %7069 = vmatpush1.bf16.msra.mxu0 0
        %7070 = vmatprep.mubr.bf16.mxu0 0
        %7071 = vmatmul.mubr.bf16.gmra.mrb[0].mxu0 %v7032
        %v7072 = vpop.f32.mrb[0].mxu0
        %v7073 = vadd.f32 0.0, %v7072
        %v7074 = vpop.f32.mrb[0].mxu0
        %v7075 = vpop.f32.mrb[0].mxu0
        %v7076 = vpop.f32.mrb[0].mxu0
        %7077 = vdwg.mxu0
        %v7079 = vunpack.c.l.b16 %v6968
        %v7080 = vpack.c.b16 %v7079, %v7079
        %7081 = vrot.lane.b32.xlu0 %v7080, 64
        %v7082 = vpop.permute.xlu0 %7081
        %v7084 = vunpack.c.l.b16 %v6969
        %v7085 = vpack.c.b16 %v7084, %v7084
        %7086 = vrot.lane.b32.xlu0 %v7085, 64
        %v7087 = vpop.permute.xlu0 %7086
        %v7089 = vsel %vm6971, %v7082, 0
        %v7092 = vsel %vm6971, %v7087, 0
        %7094 = vmatprep.subr.bf16.mxu0 0
        %7095 = vmatpush1.bf16.xpose.msra.mxu0 %v7092
        %7096 = vmatprep.subr.bf16.mxu0 0
        %7097 = vmatpush1.bf16.xpose.msra.mxu0 0
        %7098 = vmatprep.subr.bf16.mxu0 0
        %7099 = vmatpush1.bf16.xpose.msra.mxu0 0
        %7100 = vmatprep.subr.bf16.mxu0 0
        %7101 = vmatpush1.bf16.xpose.msra.mxu0 0
        %7102 = vmatprep.subr.bf16.mxu0 0
        %7103 = vmatpush1.bf16.xpose.msra.mxu0 0
        %7104 = vmatprep.subr.bf16.mxu0 0
        %7105 = vmatpush1.bf16.xpose.msra.mxu0 0
        %7106 = vmatprep.subr.bf16.mxu0 0
        %7107 = vmatpush1.bf16.xpose.msra.mxu0 0
        %7108 = vmatprep.subr.bf16.mxu0 0
        %7109 = vmatpush1.bf16.xpose.msra.mxu0 0
        %7110 = vmatprep.subr.bf16.mxu0 0
        %7111 = vmatpush1.bf16.xpose.msra.mxu0 0
        %7112 = vmatprep.subr.bf16.mxu0 0
        %7113 = vmatpush1.bf16.xpose.msra.mxu0 0
        %7114 = vmatprep.subr.bf16.mxu0 0
        %7115 = vmatpush1.bf16.xpose.msra.mxu0 0
        %7116 = vmatprep.subr.bf16.mxu0 0
        %7117 = vmatpush1.bf16.xpose.msra.mxu0 0
        %7118 = vmatprep.subr.bf16.mxu0 0
        %7119 = vmatpush1.bf16.xpose.msra.mxu0 0
        %7120 = vmatprep.subr.bf16.mxu0 0
        %7121 = vmatpush1.bf16.xpose.msra.mxu0 0
        %7122 = vmatprep.subr.bf16.mxu0 0
        %7123 = vmatpush1.bf16.xpose.msra.mxu0 0
        %7124 = vmatprep.subr.bf16.mxu0 0
        %7125 = vmatpush1.bf16.xpose.msra.mxu0 0
        %7126 = vmatprep.mubr.bf16.mxu0 0
        %7127 = vmatmul.mubr.bf16.gmra.mrb[0].mxu0 %v7089
        %v7128 = vpop.f32.mrb[0].mxu0
        %v7129 = vadd.f32 0.0, %v7128
        %v7130 = vpop.f32.mrb[0].mxu0
        %v7131 = vpop.f32.mrb[0].mxu0
        %v7132 = vpop.f32.mrb[0].mxu0
        %7133 = vdwg.mxu0
        %v7134 = vsel %vm7018, %v7129, -inf
        %7135 = vmax.xlane.f32.xlu0 %v7134
        %v7136 = vpop.xlane.xlu0 %7135
        %v7137 = vsub.f32 %v7129, %v7136
        %v7138 = vmul.f32 %v7137, 1.442695
        %v7139 = vpow.pop %v7138
        %v7140 = vsel %vm7018, %v7139, 0.0
        %7141 = vadd.xlane.f32.xlu0 %v7140
        %v7142 = vpop.xlane.xlu0 %7141
        %v7143 = vrcp.pop %v7142
        %v7144 = vmul.f32 %v7139, %v7143
        %v7145 = vpack.c.bf16 %v7144, %v7144
        %v7147 = vunpack.c.l.b16 %v6970
        %v7148 = vpack.c.b16 %v7147, %v7147
        %7149 = vrot.lane.b32.xlu0 %v7148, 64
        %v7150 = vpop.permute.xlu0 %7149
        %v7152 = vsel %vm7018, %v7145, 0
        %v7155 = vsel %vm7034, %v7150, 0
        %7157 = vmatprep.subr.bf16.mxu0 0
        %7158 = vmatpush1.bf16.msra.mxu0 %v7155
        %7159 = vmatprep.subr.bf16.mxu0 0
        %7160 = vmatpush1.bf16.msra.mxu0 0
        %7161 = vmatprep.subr.bf16.mxu0 0
        %7162 = vmatpush1.bf16.msra.mxu0 0
        %7163 = vmatprep.subr.bf16.mxu0 0
        %7164 = vmatpush1.bf16.msra.mxu0 0
        %7165 = vmatprep.subr.bf16.mxu0 0
        %7166 = vmatpush1.bf16.msra.mxu0 0
        %7167 = vmatprep.subr.bf16.mxu0 0
        %7168 = vmatpush1.bf16.msra.mxu0 0
        %7169 = vmatprep.subr.bf16.mxu0 0
        %7170 = vmatpush1.bf16.msra.mxu0 0
        %7171 = vmatprep.subr.bf16.mxu0 0
        %7172 = vmatpush1.bf16.msra.mxu0 0
        %7173 = vmatprep.subr.bf16.mxu0 0
        %7174 = vmatpush1.bf16.msra.mxu0 0
        %7175 = vmatprep.subr.bf16.mxu0 0
        %7176 = vmatpush1.bf16.msra.mxu0 0
        %7177 = vmatprep.subr.bf16.mxu0 0
        %7178 = vmatpush1.bf16.msra.mxu0 0
        %7179 = vmatprep.subr.bf16.mxu0 0
        %7180 = vmatpush1.bf16.msra.mxu0 0
        %7181 = vmatprep.subr.bf16.mxu0 0
        %7182 = vmatpush1.bf16.msra.mxu0 0
        %7183 = vmatprep.subr.bf16.mxu0 0
        %7184 = vmatpush1.bf16.msra.mxu0 0
        %7185 = vmatprep.subr.bf16.mxu0 0
        %7186 = vmatpush1.bf16.msra.mxu0 0
        %7187 = vmatprep.subr.bf16.mxu0 0
        %7188 = vmatpush1.bf16.msra.mxu0 0
        %7189 = vmatprep.mubr.bf16.mxu0 0
        %7190 = vmatmul.mubr.bf16.gmra.mrb[0].mxu0 %v7152
        %v7191 = vpop.f32.mrb[0].mxu0
        %v7192 = vadd.f32 0.0, %v7191
        %v7193 = vpop.f32.mrb[0].mxu0
        %v7194 = vpop.f32.mrb[0].mxu0
        %v7195 = vpop.f32.mrb[0].mxu0
        %7196 = vdwg.mxu0
        %7198 = vrot.lane.b32.xlu0 %v7192, 64
        %v7199 = vpop.permute.xlu0 %7198
        %v7201 = vsel %vm6971, %v7073, %v7199
        %v7202 = vpack.c.bf16 %v7201, %v7201
        %7203 = vst [vmem:[#allocation3] sm:$0xf] %v7202
        %v7204 = vld [vmem:[#allocation2 + $0x4] sm:$0xf]
        %v7205 = vld [vmem:[#allocation2 + $0x1c] sm:$0xf]
        %v7206 = vld [vmem:[#allocation2 + $0x34] sm:$0xf]
        %v7208 = vsel %vm6971, %v7204, 0
        %v7211 = vsel %vm6971, %v7205, 0
        %7213 = vmatprep.subr.bf16.mxu0 0
        %7214 = vmatpush1.bf16.xpose.msra.mxu0 %v7211
        %7215 = vmatprep.subr.bf16.mxu0 0
        %7216 = vmatpush1.bf16.xpose.msra.mxu0 0
        %7217 = vmatprep.subr.bf16.mxu0 0
        %7218 = vmatpush1.bf16.xpose.msra.mxu0 0
        %7219 = vmatprep.subr.bf16.mxu0 0
        %7220 = vmatpush1.bf16.xpose.msra.mxu0 0
        %7221 = vmatprep.subr.bf16.mxu0 0
        %7222 = vmatpush1.bf16.xpose.msra.mxu0 0
        %7223 = vmatprep.subr.bf16.mxu0 0
        %7224 = vmatpush1.bf16.xpose.msra.mxu0 0
        %7225 = vmatprep.subr.bf16.mxu0 0
        %7226 = vmatpush1.bf16.xpose.msra.mxu0 0
        %7227 = vmatprep.subr.bf16.mxu0 0
        %7228 = vmatpush1.bf16.xpose.msra.mxu0 0
        %7229 = vmatprep.subr.bf16.mxu0 0
        %7230 = vmatpush1.bf16.xpose.msra.mxu0 0
        %7231 = vmatprep.subr.bf16.mxu0 0
        %7232 = vmatpush1.bf16.xpose.msra.mxu0 0
        %7233 = vmatprep.subr.bf16.mxu0 0
        %7234 = vmatpush1.bf16.xpose.msra.mxu0 0
        %7235 = vmatprep.subr.bf16.mxu0 0
        %7236 = vmatpush1.bf16.xpose.msra.mxu0 0
        %7237 = vmatprep.subr.bf16.mxu0 0
        %7238 = vmatpush1.bf16.xpose.msra.mxu0 0
        %7239 = vmatprep.subr.bf16.mxu0 0
        %7240 = vmatpush1.bf16.xpose.msra.mxu0 0
        %7241 = vmatprep.subr.bf16.mxu0 0
        %7242 = vmatpush1.bf16.xpose.msra.mxu0 0
        %7243 = vmatprep.subr.bf16.mxu0 0
        %7244 = vmatpush1.bf16.xpose.msra.mxu0 0
        %7245 = vmatprep.mubr.bf16.mxu0 0
        %7246 = vmatmul.mubr.bf16.gmra.mrb[0].mxu0 %v7208
        %v7247 = vpop.f32.mrb[0].mxu0
        %v7248 = vadd.f32 0.0, %v7247
        %v7249 = vpop.f32.mrb[0].mxu0
        %v7250 = vpop.f32.mrb[0].mxu0
        %v7251 = vpop.f32.mrb[0].mxu0
        %7252 = vdwg.mxu0
        %v7253 = vsel %vm7018, %v7248, -inf
        %7254 = vmax.xlane.f32.xlu0 %v7253
        %v7255 = vpop.xlane.xlu0 %7254
        %v7256 = vsub.f32 %v7248, %v7255
        %v7257 = vmul.f32 %v7256, 1.442695
        %v7258 = vpow.pop %v7257
        %v7259 = vsel %vm7018, %v7258, 0.0
        %7260 = vadd.xlane.f32.xlu0 %v7259
        %v7261 = vpop.xlane.xlu0 %7260
        %v7262 = vrcp.pop %v7261
        %v7263 = vmul.f32 %v7258, %v7262
        %v7264 = vpack.c.bf16 %v7263, %v7263
        %v7266 = vsel %vm7018, %v7264, 0
        %v7269 = vsel %vm7034, %v7206, 0
        %7271 = vmatprep.subr.bf16.mxu0 0
        %7272 = vmatpush1.bf16.msra.mxu0 %v7269
        %7273 = vmatprep.subr.bf16.mxu0 0
        %7274 = vmatpush1.bf16.msra.mxu0 0
        %7275 = vmatprep.subr.bf16.mxu0 0
        %7276 = vmatpush1.bf16.msra.mxu0 0
        %7277 = vmatprep.subr.bf16.mxu0 0
        %7278 = vmatpush1.bf16.msra.mxu0 0
        %7279 = vmatprep.subr.bf16.mxu0 0
        %7280 = vmatpush1.bf16.msra.mxu0 0
        %7281 = vmatprep.subr.bf16.mxu0 0
        %7282 = vmatpush1.bf16.msra.mxu0 0
        %7283 = vmatprep.subr.bf16.mxu0 0
        %7284 = vmatpush1.bf16.msra.mxu0 0
        %7285 = vmatprep.subr.bf16.mxu0 0
        %7286 = vmatpush1.bf16.msra.mxu0 0
        %7287 = vmatprep.subr.bf16.mxu0 0
        %7288 = vmatpush1.bf16.msra.mxu0 0
        %7289 = vmatprep.subr.bf16.mxu0 0
        %7290 = vmatpush1.bf16.msra.mxu0 0
        %7291 = vmatprep.subr.bf16.mxu0 0
        %7292 = vmatpush1.bf16.msra.mxu0 0
        %7293 = vmatprep.subr.bf16.mxu0 0
        %7294 = vmatpush1.bf16.msra.mxu0 0
        %7295 = vmatprep.subr.bf16.mxu0 0
        %7296 = vmatpush1.bf16.msra.mxu0 0
        %7297 = vmatprep.subr.bf16.mxu0 0
        %7298 = vmatpush1.bf16.msra.mxu0 0
        %7299 = vmatprep.subr.bf16.mxu0 0
        %7300 = vmatpush1.bf16.msra.mxu0 0
        %7301 = vmatprep.subr.bf16.mxu0 0
        %7302 = vmatpush1.bf16.msra.mxu0 0
        %7303 = vmatprep.mubr.bf16.mxu0 0
        %7304 = vmatmul.mubr.bf16.gmra.mrb[0].mxu0 %v7266
        %v7305 = vpop.f32.mrb[0].mxu0
        %v7306 = vadd.f32 0.0, %v7305
        %v7307 = vpop.f32.mrb[0].mxu0
        %v7308 = vpop.f32.mrb[0].mxu0
        %v7309 = vpop.f32.mrb[0].mxu0
        %7310 = vdwg.mxu0
        %v7312 = vunpack.c.l.b16 %v7204
        %v7313 = vpack.c.b16 %v7312, %v7312
        %7314 = vrot.lane.b32.xlu0 %v7313, 64
        %v7315 = vpop.permute.xlu0 %7314
        %v7317 = vunpack.c.l.b16 %v7205
        %v7318 = vpack.c.b16 %v7317, %v7317
        %7319 = vrot.lane.b32.xlu0 %v7318, 64
        %v7320 = vpop.permute.xlu0 %7319
        %v7322 = vsel %vm6971, %v7315, 0
        %v7325 = vsel %vm6971, %v7320, 0
        %7327 = vmatprep.subr.bf16.mxu0 0
        %7328 = vmatpush1.bf16.xpose.msra.mxu0 %v7325
        %7329 = vmatprep.subr.bf16.mxu0 0
        %7330 = vmatpush1.bf16.xpose.msra.mxu0 0
        %7331 = vmatprep.subr.bf16.mxu0 0
        %7332 = vmatpush1.bf16.xpose.msra.mxu0 0
        %7333 = vmatprep.subr.bf16.mxu0 0
        %7334 = vmatpush1.bf16.xpose.msra.mxu0 0
        %7335 = vmatprep.subr.bf16.mxu0 0
        %7336 = vmatpush1.bf16.xpose.msra.mxu0 0
        %7337 = vmatprep.subr.bf16.mxu0 0
        %7338 = vmatpush1.bf16.xpose.msra.mxu0 0
        %7339 = vmatprep.subr.bf16.mxu0 0
        %7340 = vmatpush1.bf16.xpose.msra.mxu0 0
        %7341 = vmatprep.subr.bf16.mxu0 0
        %7342 = vmatpush1.bf16.xpose.msra.mxu0 0
        %7343 = vmatprep.subr.bf16.mxu0 0
        %7344 = vmatpush1.bf16.xpose.msra.mxu0 0
        %7345 = vmatprep.subr.bf16.mxu0 0
        %7346 = vmatpush1.bf16.xpose.msra.mxu0 0
        %7347 = vmatprep.subr.bf16.mxu0 0
        %7348 = vmatpush1.bf16.xpose.msra.mxu0 0
        %7349 = vmatprep.subr.bf16.mxu0 0
        %7350 = vmatpush1.bf16.xpose.msra.mxu0 0
        %7351 = vmatprep.subr.bf16.mxu0 0
        %7352 = vmatpush1.bf16.xpose.msra.mxu0 0
        %7353 = vmatprep.subr.bf16.mxu0 0
        %7354 = vmatpush1.bf16.xpose.msra.mxu0 0
        %7355 = vmatprep.subr.bf16.mxu0 0
        %7356 = vmatpush1.bf16.xpose.msra.mxu0 0
        %7357 = vmatprep.subr.bf16.mxu0 0
        %7358 = vmatpush1.bf16.xpose.msra.mxu0 0
        %7359 = vmatprep.mubr.bf16.mxu0 0
        %7360 = vmatmul.mubr.bf16.gmra.mrb[0].mxu0 %v7322
        %v7361 = vpop.f32.mrb[0].mxu0
        %v7362 = vadd.f32 0.0, %v7361
        %v7363 = vpop.f32.mrb[0].mxu0
        %v7364 = vpop.f32.mrb[0].mxu0
        %v7365 = vpop.f32.mrb[0].mxu0
        %7366 = vdwg.mxu0
        %v7367 = vsel %vm7018, %v7362, -inf
        %7368 = vmax.xlane.f32.xlu0 %v7367
        %v7369 = vpop.xlane.xlu0 %7368
        %v7370 = vsub.f32 %v7362, %v7369
        %v7371 = vmul.f32 %v7370, 1.442695
        %v7372 = vpow.pop %v7371
        %v7373 = vsel %vm7018, %v7372, 0.0
        %7374 = vadd.xlane.f32.xlu0 %v7373
        %v7375 = vpop.xlane.xlu0 %7374
        %v7376 = vrcp.pop %v7375
        %v7377 = vmul.f32 %v7372, %v7376
        %v7378 = vpack.c.bf16 %v7377, %v7377
        %v7380 = vunpack.c.l.b16 %v7206
        %v7381 = vpack.c.b16 %v7380, %v7380
        %7382 = vrot.lane.b32.xlu0 %v7381, 64
        %v7383 = vpop.permute.xlu0 %7382
        %v7385 = vsel %vm7018, %v7378, 0
        %v7388 = vsel %vm7034, %v7383, 0
        %7390 = vmatprep.subr.bf16.mxu0 0
        %7391 = vmatpush1.bf16.msra.mxu0 %v7388
        %7392 = vmatprep.subr.bf16.mxu0 0
        %7393 = vmatpush1.bf16.msra.mxu0 0
        %7394 = vmatprep.subr.bf16.mxu0 0
        %7395 = vmatpush1.bf16.msra.mxu0 0
        %7396 = vmatprep.subr.bf16.mxu0 0
        %7397 = vmatpush1.bf16.msra.mxu0 0
        %7398 = vmatprep.subr.bf16.mxu0 0
        %7399 = vmatpush1.bf16.msra.mxu0 0
        %7400 = vmatprep.subr.bf16.mxu0 0
        %7401 = vmatpush1.bf16.msra.mxu0 0
        %7402 = vmatprep.subr.bf16.mxu0 0
        %7403 = vmatpush1.bf16.msra.mxu0 0
        %7404 = vmatprep.subr.bf16.mxu0 0
        %7405 = vmatpush1.bf16.msra.mxu0 0
        %7406 = vmatprep.subr.bf16.mxu0 0
        %7407 = vmatpush1.bf16.msra.mxu0 0
        %7408 = vmatprep.subr.bf16.mxu0 0
        %7409 = vmatpush1.bf16.msra.mxu0 0
        %7410 = vmatprep.subr.bf16.mxu0 0
        %7411 = vmatpush1.bf16.msra.mxu0 0
        %7412 = vmatprep.subr.bf16.mxu0 0
        %7413 = vmatpush1.bf16.msra.mxu0 0
        %7414 = vmatprep.subr.bf16.mxu0 0
        %7415 = vmatpush1.bf16.msra.mxu0 0
        %7416 = vmatprep.subr.bf16.mxu0 0
        %7417 = vmatpush1.bf16.msra.mxu0 0
        %7418 = vmatprep.subr.bf16.mxu0 0
        %7419 = vmatpush1.bf16.msra.mxu0 0
        %7420 = vmatprep.subr.bf16.mxu0 0
        %7421 = vmatpush1.bf16.msra.mxu0 0
        %7422 = vmatprep.mubr.bf16.mxu0 0
        %7423 = vmatmul.mubr.bf16.gmra.mrb[0].mxu0 %v7385
        %v7424 = vpop.f32.mrb[0].mxu0
        %v7425 = vadd.f32 0.0, %v7424
        %v7426 = vpop.f32.mrb[0].mxu0
        %v7427 = vpop.f32.mrb[0].mxu0
        %v7428 = vpop.f32.mrb[0].mxu0
        %7429 = vdwg.mxu0
        %7431 = vrot.lane.b32.xlu0 %v7425, 64
        %v7432 = vpop.permute.xlu0 %7431
        %v7434 = vsel %vm6971, %v7306, %v7432
        %v7435 = vpack.c.bf16 %v7434, %v7434
        %7436 = vst [vmem:[#allocation3 + $0x4] sm:$0xf] %v7435
        %v7437 = vld [vmem:[#allocation2 + $0x8] sm:$0xf]
        %v7438 = vld [vmem:[#allocation2 + $0x20] sm:$0xf]
        %v7439 = vld [vmem:[#allocation2 + $0x38] sm:$0xf]
        %v7441 = vsel %vm6971, %v7437, 0
        %v7444 = vsel %vm6971, %v7438, 0
        %7446 = vmatprep.subr.bf16.mxu0 0
        %7447 = vmatpush1.bf16.xpose.msra.mxu0 %v7444
        %7448 = vmatprep.subr.bf16.mxu0 0
        %7449 = vmatpush1.bf16.xpose.msra.mxu0 0
        %7450 = vmatprep.subr.bf16.mxu0 0
        %7451 = vmatpush1.bf16.xpose.msra.mxu0 0
        %7452 = vmatprep.subr.bf16.mxu0 0
        %7453 = vmatpush1.bf16.xpose.msra.mxu0 0
        %7454 = vmatprep.subr.bf16.mxu0 0
        %7455 = vmatpush1.bf16.xpose.msra.mxu0 0
        %7456 = vmatprep.subr.bf16.mxu0 0
        %7457 = vmatpush1.bf16.xpose.msra.mxu0 0
        %7458 = vmatprep.subr.bf16.mxu0 0
        %7459 = vmatpush1.bf16.xpose.msra.mxu0 0
        %7460 = vmatprep.subr.bf16.mxu0 0
        %7461 = vmatpush1.bf16.xpose.msra.mxu0 0
        %7462 = vmatprep.subr.bf16.mxu0 0
        %7463 = vmatpush1.bf16.xpose.msra.mxu0 0
        %7464 = vmatprep.subr.bf16.mxu0 0
        %7465 = vmatpush1.bf16.xpose.msra.mxu0 0
        %7466 = vmatprep.subr.bf16.mxu0 0
        %7467 = vmatpush1.bf16.xpose.msra.mxu0 0
        %7468 = vmatprep.subr.bf16.mxu0 0
        %7469 = vmatpush1.bf16.xpose.msra.mxu0 0
        %7470 = vmatprep.subr.bf16.mxu0 0
        %7471 = vmatpush1.bf16.xpose.msra.mxu0 0
        %7472 = vmatprep.subr.bf16.mxu0 0
        %7473 = vmatpush1.bf16.xpose.msra.mxu0 0
        %7474 = vmatprep.subr.bf16.mxu0 0
        %7475 = vmatpush1.bf16.xpose.msra.mxu0 0
        %7476 = vmatprep.subr.bf16.mxu0 0
        %7477 = vmatpush1.bf16.xpose.msra.mxu0 0
        %7478 = vmatprep.mubr.bf16.mxu0 0
        %7479 = vmatmul.mubr.bf16.gmra.mrb[0].mxu0 %v7441
        %v7480 = vpop.f32.mrb[0].mxu0
        %v7481 = vadd.f32 0.0, %v7480
        %v7482 = vpop.f32.mrb[0].mxu0
        %v7483 = vpop.f32.mrb[0].mxu0
        %v7484 = vpop.f32.mrb[0].mxu0
        %7485 = vdwg.mxu0
        %v7486 = vsel %vm7018, %v7481, -inf
        %7487 = vmax.xlane.f32.xlu0 %v7486
        %v7488 = vpop.xlane.xlu0 %7487
        %v7489 = vsub.f32 %v7481, %v7488
        %v7490 = vmul.f32 %v7489, 1.442695
        %v7491 = vpow.pop %v7490
        %v7492 = vsel %vm7018, %v7491, 0.0
        %7493 = vadd.xlane.f32.xlu0 %v7492
        %v7494 = vpop.xlane.xlu0 %7493
        %v7495 = vrcp.pop %v7494
        %v7496 = vmul.f32 %v7491, %v7495
        %v7497 = vpack.c.bf16 %v7496, %v7496
        %v7499 = vsel %vm7018, %v7497, 0
        %v7502 = vsel %vm7034, %v7439, 0
        %7504 = vmatprep.subr.bf16.mxu0 0
        %7505 = vmatpush1.bf16.msra.mxu0 %v7502
        %7506 = vmatprep.subr.bf16.mxu0 0
        %7507 = vmatpush1.bf16.msra.mxu0 0
        %7508 = vmatprep.subr.bf16.mxu0 0
        %7509 = vmatpush1.bf16.msra.mxu0 0
        %7510 = vmatprep.subr.bf16.mxu0 0
        %7511 = vmatpush1.bf16.msra.mxu0 0
        %7512 = vmatprep.subr.bf16.mxu0 0
        %7513 = vmatpush1.bf16.msra.mxu0 0
        %7514 = vmatprep.subr.bf16.mxu0 0
        %7515 = vmatpush1.bf16.msra.mxu0 0
        %7516 = vmatprep.subr.bf16.mxu0 0
        %7517 = vmatpush1.bf16.msra.mxu0 0
        %7518 = vmatprep.subr.bf16.mxu0 0
        %7519 = vmatpush1.bf16.msra.mxu0 0
        %7520 = vmatprep.subr.bf16.mxu0 0
        %7521 = vmatpush1.bf16.msra.mxu0 0
        %7522 = vmatprep.subr.bf16.mxu0 0
        %7523 = vmatpush1.bf16.msra.mxu0 0
        %7524 = vmatprep.subr.bf16.mxu0 0
        %7525 = vmatpush1.bf16.msra.mxu0 0
        %7526 = vmatprep.subr.bf16.mxu0 0
        %7527 = vmatpush1.bf16.msra.mxu0 0
        %7528 = vmatprep.subr.bf16.mxu0 0
        %7529 = vmatpush1.bf16.msra.mxu0 0
        %7530 = vmatprep.subr.bf16.mxu0 0
        %7531 = vmatpush1.bf16.msra.mxu0 0
        %7532 = vmatprep.subr.bf16.mxu0 0
        %7533 = vmatpush1.bf16.msra.mxu0 0
        %7534 = vmatprep.subr.bf16.mxu0 0
        %7535 = vmatpush1.bf16.msra.mxu0 0
        %7536 = vmatprep.mubr.bf16.mxu0 0
        %7537 = vmatmul.mubr.bf16.gmra.mrb[0].mxu0 %v7499
        %v7538 = vpop.f32.mrb[0].mxu0
        %v7539 = vadd.f32 0.0, %v7538
        %v7540 = vpop.f32.mrb[0].mxu0
        %v7541 = vpop.f32.mrb[0].mxu0
        %v7542 = vpop.f32.mrb[0].mxu0
        %7543 = vdwg.mxu0
        %v7545 = vunpack.c.l.b16 %v7437
        %v7546 = vpack.c.b16 %v7545, %v7545
        %7547 = vrot.lane.b32.xlu0 %v7546, 64
        %v7548 = vpop.permute.xlu0 %7547
        %v7550 = vunpack.c.l.b16 %v7438
        %v7551 = vpack.c.b16 %v7550, %v7550
        %7552 = vrot.lane.b32.xlu0 %v7551, 64
        %v7553 = vpop.permute.xlu0 %7552
        %v7555 = vsel %vm6971, %v7548, 0
        %v7558 = vsel %vm6971, %v7553, 0
        %7560 = vmatprep.subr.bf16.mxu0 0
        %7561 = vmatpush1.bf16.xpose.msra.mxu0 %v7558
        %7562 = vmatprep.subr.bf16.mxu0 0
        %7563 = vmatpush1.bf16.xpose.msra.mxu0 0
        %7564 = vmatprep.subr.bf16.mxu0 0
        %7565 = vmatpush1.bf16.xpose.msra.mxu0 0
        %7566 = vmatprep.subr.bf16.mxu0 0
        %7567 = vmatpush1.bf16.xpose.msra.mxu0 0
        %7568 = vmatprep.subr.bf16.mxu0 0
        %7569 = vmatpush1.bf16.xpose.msra.mxu0 0
        %7570 = vmatprep.subr.bf16.mxu0 0
        %7571 = vmatpush1.bf16.xpose.msra.mxu0 0
        %7572 = vmatprep.subr.bf16.mxu0 0
        %7573 = vmatpush1.bf16.xpose.msra.mxu0 0
        %7574 = vmatprep.subr.bf16.mxu0 0
        %7575 = vmatpush1.bf16.xpose.msra.mxu0 0
        %7576 = vmatprep.subr.bf16.mxu0 0
        %7577 = vmatpush1.bf16.xpose.msra.mxu0 0
        %7578 = vmatprep.subr.bf16.mxu0 0
        %7579 = vmatpush1.bf16.xpose.msra.mxu0 0
        %7580 = vmatprep.subr.bf16.mxu0 0
        %7581 = vmatpush1.bf16.xpose.msra.mxu0 0
        %7582 = vmatprep.subr.bf16.mxu0 0
        %7583 = vmatpush1.bf16.xpose.msra.mxu0 0
        %7584 = vmatprep.subr.bf16.mxu0 0
        %7585 = vmatpush1.bf16.xpose.msra.mxu0 0
        %7586 = vmatprep.subr.bf16.mxu0 0
        %7587 = vmatpush1.bf16.xpose.msra.mxu0 0
        %7588 = vmatprep.subr.bf16.mxu0 0
        %7589 = vmatpush1.bf16.xpose.msra.mxu0 0
        %7590 = vmatprep.subr.bf16.mxu0 0
        %7591 = vmatpush1.bf16.xpose.msra.mxu0 0
        %7592 = vmatprep.mubr.bf16.mxu0 0
        %7593 = vmatmul.mubr.bf16.gmra.mrb[0].mxu0 %v7555
        %v7594 = vpop.f32.mrb[0].mxu0
        %v7595 = vadd.f32 0.0, %v7594
        %v7596 = vpop.f32.mrb[0].mxu0
        %v7597 = vpop.f32.mrb[0].mxu0
        %v7598 = vpop.f32.mrb[0].mxu0
        %7599 = vdwg.mxu0
        %v7600 = vsel %vm7018, %v7595, -inf
        %7601 = vmax.xlane.f32.xlu0 %v7600
        %v7602 = vpop.xlane.xlu0 %7601
        %v7603 = vsub.f32 %v7595, %v7602
        %v7604 = vmul.f32 %v7603, 1.442695
        %v7605 = vpow.pop %v7604
        %v7606 = vsel %vm7018, %v7605, 0.0
        %7607 = vadd.xlane.f32.xlu0 %v7606
        %v7608 = vpop.xlane.xlu0 %7607
        %v7609 = vrcp.pop %v7608
        %v7610 = vmul.f32 %v7605, %v7609
        %v7611 = vpack.c.bf16 %v7610, %v7610
        %v7613 = vunpack.c.l.b16 %v7439
        %v7614 = vpack.c.b16 %v7613, %v7613
        %7615 = vrot.lane.b32.xlu0 %v7614, 64
        %v7616 = vpop.permute.xlu0 %7615
        %v7618 = vsel %vm7018, %v7611, 0
        %v7621 = vsel %vm7034, %v7616, 0
        %7623 = vmatprep.subr.bf16.mxu0 0
        %7624 = vmatpush1.bf16.msra.mxu0 %v7621
        %7625 = vmatprep.subr.bf16.mxu0 0
        %7626 = vmatpush1.bf16.msra.mxu0 0
        %7627 = vmatprep.subr.bf16.mxu0 0
        %7628 = vmatpush1.bf16.msra.mxu0 0
        %7629 = vmatprep.subr.bf16.mxu0 0
        %7630 = vmatpush1.bf16.msra.mxu0 0
        %7631 = vmatprep.subr.bf16.mxu0 0
        %7632 = vmatpush1.bf16.msra.mxu0 0
        %7633 = vmatprep.subr.bf16.mxu0 0
        %7634 = vmatpush1.bf16.msra.mxu0 0
        %7635 = vmatprep.subr.bf16.mxu0 0
        %7636 = vmatpush1.bf16.msra.mxu0 0
        %7637 = vmatprep.subr.bf16.mxu0 0
        %7638 = vmatpush1.bf16.msra.mxu0 0
        %7639 = vmatprep.subr.bf16.mxu0 0
        %7640 = vmatpush1.bf16.msra.mxu0 0
        %7641 = vmatprep.subr.bf16.mxu0 0
        %7642 = vmatpush1.bf16.msra.mxu0 0
        %7643 = vmatprep.subr.bf16.mxu0 0
        %7644 = vmatpush1.bf16.msra.mxu0 0
        %7645 = vmatprep.subr.bf16.mxu0 0
        %7646 = vmatpush1.bf16.msra.mxu0 0
        %7647 = vmatprep.subr.bf16.mxu0 0
        %7648 = vmatpush1.bf16.msra.mxu0 0
        %7649 = vmatprep.subr.bf16.mxu0 0
        %7650 = vmatpush1.bf16.msra.mxu0 0
        %7651 = vmatprep.subr.bf16.mxu0 0
        %7652 = vmatpush1.bf16.msra.mxu0 0
        %7653 = vmatprep.subr.bf16.mxu0 0
        %7654 = vmatpush1.bf16.msra.mxu0 0
        %7655 = vmatprep.mubr.bf16.mxu0 0
        %7656 = vmatmul.mubr.bf16.gmra.mrb[0].mxu0 %v7618
        %v7657 = vpop.f32.mrb[0].mxu0
        %v7658 = vadd.f32 0.0, %v7657
        %v7659 = vpop.f32.mrb[0].mxu0
        %v7660 = vpop.f32.mrb[0].mxu0
        %v7661 = vpop.f32.mrb[0].mxu0
        %7662 = vdwg.mxu0
        %7664 = vrot.lane.b32.xlu0 %v7658, 64
        %v7665 = vpop.permute.xlu0 %7664
        %v7667 = vsel %vm6971, %v7539, %v7665
        %v7668 = vpack.c.bf16 %v7667, %v7667
        %7669 = vst [vmem:[#allocation3 + $0x8] sm:$0xf] %v7668
        %v7670 = vld [vmem:[#allocation2 + $0xc] sm:$0xf]
        %v7671 = vld [vmem:[#allocation2 + $0x24] sm:$0xf]
        %v7672 = vld [vmem:[#allocation2 + $0x3c] sm:$0xf]
        %v7674 = vsel %vm6971, %v7670, 0
        %v7677 = vsel %vm6971, %v7671, 0
        %7679 = vmatprep.subr.bf16.mxu0 0
        %7680 = vmatpush1.bf16.xpose.msra.mxu0 %v7677
        %7681 = vmatprep.subr.bf16.mxu0 0
        %7682 = vmatpush1.bf16.xpose.msra.mxu0 0
        %7683 = vmatprep.subr.bf16.mxu0 0
        %7684 = vmatpush1.bf16.xpose.msra.mxu0 0
        %7685 = vmatprep.subr.bf16.mxu0 0
        %7686 = vmatpush1.bf16.xpose.msra.mxu0 0
        %7687 = vmatprep.subr.bf16.mxu0 0
        %7688 = vmatpush1.bf16.xpose.msra.mxu0 0
        %7689 = vmatprep.subr.bf16.mxu0 0
        %7690 = vmatpush1.bf16.xpose.msra.mxu0 0
        %7691 = vmatprep.subr.bf16.mxu0 0
        %7692 = vmatpush1.bf16.xpose.msra.mxu0 0
        %7693 = vmatprep.subr.bf16.mxu0 0
        %7694 = vmatpush1.bf16.xpose.msra.mxu0 0
        %7695 = vmatprep.subr.bf16.mxu0 0
        %7696 = vmatpush1.bf16.xpose.msra.mxu0 0
        %7697 = vmatprep.subr.bf16.mxu0 0
        %7698 = vmatpush1.bf16.xpose.msra.mxu0 0
        %7699 = vmatprep.subr.bf16.mxu0 0
        %7700 = vmatpush1.bf16.xpose.msra.mxu0 0
        %7701 = vmatprep.subr.bf16.mxu0 0
        %7702 = vmatpush1.bf16.xpose.msra.mxu0 0
        %7703 = vmatprep.subr.bf16.mxu0 0
        %7704 = vmatpush1.bf16.xpose.msra.mxu0 0
        %7705 = vmatprep.subr.bf16.mxu0 0
        %7706 = vmatpush1.bf16.xpose.msra.mxu0 0
        %7707 = vmatprep.subr.bf16.mxu0 0
        %7708 = vmatpush1.bf16.xpose.msra.mxu0 0
        %7709 = vmatprep.subr.bf16.mxu0 0
        %7710 = vmatpush1.bf16.xpose.msra.mxu0 0
        %7711 = vmatprep.mubr.bf16.mxu0 0
        %7712 = vmatmul.mubr.bf16.gmra.mrb[0].mxu0 %v7674
        %v7713 = vpop.f32.mrb[0].mxu0
        %v7714 = vadd.f32 0.0, %v7713
        %v7715 = vpop.f32.mrb[0].mxu0
        %v7716 = vpop.f32.mrb[0].mxu0
        %v7717 = vpop.f32.mrb[0].mxu0
        %7718 = vdwg.mxu0
        %v7719 = vsel %vm7018, %v7714, -inf
        %7720 = vmax.xlane.f32.xlu0 %v7719
        %v7721 = vpop.xlane.xlu0 %7720
        %v7722 = vsub.f32 %v7714, %v7721
        %v7723 = vmul.f32 %v7722, 1.442695
        %v7724 = vpow.pop %v7723
        %v7725 = vsel %vm7018, %v7724, 0.0
        %7726 = vadd.xlane.f32.xlu0 %v7725
        %v7727 = vpop.xlane.xlu0 %7726
        %v7728 = vrcp.pop %v7727
        %v7729 = vmul.f32 %v7724, %v7728
        %v7730 = vpack.c.bf16 %v7729, %v7729
        %v7732 = vsel %vm7018, %v7730, 0
        %v7735 = vsel %vm7034, %v7672, 0
        %7737 = vmatprep.subr.bf16.mxu0 0
        %7738 = vmatpush1.bf16.msra.mxu0 %v7735
        %7739 = vmatprep.subr.bf16.mxu0 0
        %7740 = vmatpush1.bf16.msra.mxu0 0
        %7741 = vmatprep.subr.bf16.mxu0 0
        %7742 = vmatpush1.bf16.msra.mxu0 0
        %7743 = vmatprep.subr.bf16.mxu0 0
        %7744 = vmatpush1.bf16.msra.mxu0 0
        %7745 = vmatprep.subr.bf16.mxu0 0
        %7746 = vmatpush1.bf16.msra.mxu0 0
        %7747 = vmatprep.subr.bf16.mxu0 0
        %7748 = vmatpush1.bf16.msra.mxu0 0
        %7749 = vmatprep.subr.bf16.mxu0 0
        %7750 = vmatpush1.bf16.msra.mxu0 0
        %7751 = vmatprep.subr.bf16.mxu0 0
        %7752 = vmatpush1.bf16.msra.mxu0 0
        %7753 = vmatprep.subr.bf16.mxu0 0
        %7754 = vmatpush1.bf16.msra.mxu0 0
        %7755 = vmatprep.subr.bf16.mxu0 0
        %7756 = vmatpush1.bf16.msra.mxu0 0
        %7757 = vmatprep.subr.bf16.mxu0 0
        %7758 = vmatpush1.bf16.msra.mxu0 0
        %7759 = vmatprep.subr.bf16.mxu0 0
        %7760 = vmatpush1.bf16.msra.mxu0 0
        %7761 = vmatprep.subr.bf16.mxu0 0
        %7762 = vmatpush1.bf16.msra.mxu0 0
        %7763 = vmatprep.subr.bf16.mxu0 0
        %7764 = vmatpush1.bf16.msra.mxu0 0
        %7765 = vmatprep.subr.bf16.mxu0 0
        %7766 = vmatpush1.bf16.msra.mxu0 0
        %7767 = vmatprep.subr.bf16.mxu0 0
        %7768 = vmatpush1.bf16.msra.mxu0 0
        %7769 = vmatprep.mubr.bf16.mxu0 0
        %7770 = vmatmul.mubr.bf16.gmra.mrb[0].mxu0 %v7732
        %v7771 = vpop.f32.mrb[0].mxu0
        %v7772 = vadd.f32 0.0, %v7771
        %v7773 = vpop.f32.mrb[0].mxu0
        %v7774 = vpop.f32.mrb[0].mxu0
        %v7775 = vpop.f32.mrb[0].mxu0
        %7776 = vdwg.mxu0
        %v7778 = vunpack.c.l.b16 %v7670
        %v7779 = vpack.c.b16 %v7778, %v7778
        %7780 = vrot.lane.b32.xlu0 %v7779, 64
        %v7781 = vpop.permute.xlu0 %7780
        %v7783 = vunpack.c.l.b16 %v7671
        %v7784 = vpack.c.b16 %v7783, %v7783
        %7785 = vrot.lane.b32.xlu0 %v7784, 64
        %v7786 = vpop.permute.xlu0 %7785
        %v7788 = vsel %vm6971, %v7781, 0
        %v7791 = vsel %vm6971, %v7786, 0
        %7793 = vmatprep.subr.bf16.mxu0 0
        %7794 = vmatpush1.bf16.xpose.msra.mxu0 %v7791
        %7795 = vmatprep.subr.bf16.mxu0 0
        %7796 = vmatpush1.bf16.xpose.msra.mxu0 0
        %7797 = vmatprep.subr.bf16.mxu0 0
        %7798 = vmatpush1.bf16.xpose.msra.mxu0 0
        %7799 = vmatprep.subr.bf16.mxu0 0
        %7800 = vmatpush1.bf16.xpose.msra.mxu0 0
        %7801 = vmatprep.subr.bf16.mxu0 0
        %7802 = vmatpush1.bf16.xpose.msra.mxu0 0
        %7803 = vmatprep.subr.bf16.mxu0 0
        %7804 = vmatpush1.bf16.xpose.msra.mxu0 0
        %7805 = vmatprep.subr.bf16.mxu0 0
        %7806 = vmatpush1.bf16.xpose.msra.mxu0 0
        %7807 = vmatprep.subr.bf16.mxu0 0
        %7808 = vmatpush1.bf16.xpose.msra.mxu0 0
        %7809 = vmatprep.subr.bf16.mxu0 0
        %7810 = vmatpush1.bf16.xpose.msra.mxu0 0
        %7811 = vmatprep.subr.bf16.mxu0 0
        %7812 = vmatpush1.bf16.xpose.msra.mxu0 0
        %7813 = vmatprep.subr.bf16.mxu0 0
        %7814 = vmatpush1.bf16.xpose.msra.mxu0 0
        %7815 = vmatprep.subr.bf16.mxu0 0
        %7816 = vmatpush1.bf16.xpose.msra.mxu0 0
        %7817 = vmatprep.subr.bf16.mxu0 0
        %7818 = vmatpush1.bf16.xpose.msra.mxu0 0
        %7819 = vmatprep.subr.bf16.mxu0 0
        %7820 = vmatpush1.bf16.xpose.msra.mxu0 0
        %7821 = vmatprep.subr.bf16.mxu0 0
        %7822 = vmatpush1.bf16.xpose.msra.mxu0 0
        %7823 = vmatprep.subr.bf16.mxu0 0
        %7824 = vmatpush1.bf16.xpose.msra.mxu0 0
        %7825 = vmatprep.mubr.bf16.mxu0 0
        %7826 = vmatmul.mubr.bf16.gmra.mrb[0].mxu0 %v7788
        %v7827 = vpop.f32.mrb[0].mxu0
        %v7828 = vadd.f32 0.0, %v7827
        %v7829 = vpop.f32.mrb[0].mxu0
        %v7830 = vpop.f32.mrb[0].mxu0
        %v7831 = vpop.f32.mrb[0].mxu0
        %7832 = vdwg.mxu0
        %v7833 = vsel %vm7018, %v7828, -inf
        %7834 = vmax.xlane.f32.xlu0 %v7833
        %v7835 = vpop.xlane.xlu0 %7834
        %v7836 = vsub.f32 %v7828, %v7835
        %v7837 = vmul.f32 %v7836, 1.442695
        %v7838 = vpow.pop %v7837
        %v7839 = vsel %vm7018, %v7838, 0.0
        %7840 = vadd.xlane.f32.xlu0 %v7839
        %v7841 = vpop.xlane.xlu0 %7840
        %v7842 = vrcp.pop %v7841
        %v7843 = vmul.f32 %v7838, %v7842
        %v7844 = vpack.c.bf16 %v7843, %v7843
        %v7846 = vunpack.c.l.b16 %v7672
        %v7847 = vpack.c.b16 %v7846, %v7846
        %7848 = vrot.lane.b32.xlu0 %v7847, 64
        %v7849 = vpop.permute.xlu0 %7848
        %v7851 = vsel %vm7018, %v7844, 0
        %v7854 = vsel %vm7034, %v7849, 0
        %7856 = vmatprep.subr.bf16.mxu0 0
        %7857 = vmatpush1.bf16.msra.mxu0 %v7854
        %7858 = vmatprep.subr.bf16.mxu0 0
        %7859 = vmatpush1.bf16.msra.mxu0 0
        %7860 = vmatprep.subr.bf16.mxu0 0
        %7861 = vmatpush1.bf16.msra.mxu0 0
        %7862 = vmatprep.subr.bf16.mxu0 0
        %7863 = vmatpush1.bf16.msra.mxu0 0
        %7864 = vmatprep.subr.bf16.mxu0 0
        %7865 = vmatpush1.bf16.msra.mxu0 0
        %7866 = vmatprep.subr.bf16.mxu0 0
        %7867 = vmatpush1.bf16.msra.mxu0 0
        %7868 = vmatprep.subr.bf16.mxu0 0
        %7869 = vmatpush1.bf16.msra.mxu0 0
        %7870 = vmatprep.subr.bf16.mxu0 0
        %7871 = vmatpush1.bf16.msra.mxu0 0
        %7872 = vmatprep.subr.bf16.mxu0 0
        %7873 = vmatpush1.bf16.msra.mxu0 0
        %7874 = vmatprep.subr.bf16.mxu0 0
        %7875 = vmatpush1.bf16.msra.mxu0 0
        %7876 = vmatprep.subr.bf16.mxu0 0
        %7877 = vmatpush1.bf16.msra.mxu0 0
        %7878 = vmatprep.subr.bf16.mxu0 0
        %7879 = vmatpush1.bf16.msra.mxu0 0
        %7880 = vmatprep.subr.bf16.mxu0 0
        %7881 = vmatpush1.bf16.msra.mxu0 0
        %7882 = vmatprep.subr.bf16.mxu0 0
        %7883 = vmatpush1.bf16.msra.mxu0 0
        %7884 = vmatprep.subr.bf16.mxu0 0
        %7885 = vmatpush1.bf16.msra.mxu0 0
        %7886 = vmatprep.subr.bf16.mxu0 0
        %7887 = vmatpush1.bf16.msra.mxu0 0
        %7888 = vmatprep.mubr.bf16.mxu0 0
        %7889 = vmatmul.mubr.bf16.gmra.mrb[0].mxu0 %v7851
        %v7890 = vpop.f32.mrb[0].mxu0
        %v7891 = vadd.f32 0.0, %v7890
        %v7892 = vpop.f32.mrb[0].mxu0
        %v7893 = vpop.f32.mrb[0].mxu0
        %v7894 = vpop.f32.mrb[0].mxu0
        %7895 = vdwg.mxu0
        %7897 = vrot.lane.b32.xlu0 %v7891, 64
        %v7898 = vpop.permute.xlu0 %7897
        %v7900 = vsel %vm6971, %v7772, %v7898
        %v7901 = vpack.c.bf16 %v7900, %v7900
        %7902 = vst [vmem:[#allocation3 + $0xc] sm:$0xf] %v7901
        %v7903 = vld [vmem:[#allocation2 + $0x10] sm:$0xf]
        %v7904 = vld [vmem:[#allocation2 + $0x28] sm:$0xf]
        %v7905 = vld [vmem:[#allocation2 + $0x40] sm:$0xf]
        %v7907 = vsel %vm6971, %v7903, 0
        %v7910 = vsel %vm6971, %v7904, 0
        %7912 = vmatprep.subr.bf16.mxu0 0
        %7913 = vmatpush1.bf16.xpose.msra.mxu0 %v7910
        %7914 = vmatprep.subr.bf16.mxu0 0
        %7915 = vmatpush1.bf16.xpose.msra.mxu0 0
        %7916 = vmatprep.subr.bf16.mxu0 0
        %7917 = vmatpush1.bf16.xpose.msra.mxu0 0
        %7918 = vmatprep.subr.bf16.mxu0 0
        %7919 = vmatpush1.bf16.xpose.msra.mxu0 0
        %7920 = vmatprep.subr.bf16.mxu0 0
        %7921 = vmatpush1.bf16.xpose.msra.mxu0 0
        %7922 = vmatprep.subr.bf16.mxu0 0
        %7923 = vmatpush1.bf16.xpose.msra.mxu0 0
        %7924 = vmatprep.subr.bf16.mxu0 0
        %7925 = vmatpush1.bf16.xpose.msra.mxu0 0
        %7926 = vmatprep.subr.bf16.mxu0 0
        %7927 = vmatpush1.bf16.xpose.msra.mxu0 0
        %7928 = vmatprep.subr.bf16.mxu0 0
        %7929 = vmatpush1.bf16.xpose.msra.mxu0 0
        %7930 = vmatprep.subr.bf16.mxu0 0
        %7931 = vmatpush1.bf16.xpose.msra.mxu0 0
        %7932 = vmatprep.subr.bf16.mxu0 0
        %7933 = vmatpush1.bf16.xpose.msra.mxu0 0
        %7934 = vmatprep.subr.bf16.mxu0 0
        %7935 = vmatpush1.bf16.xpose.msra.mxu0 0
        %7936 = vmatprep.subr.bf16.mxu0 0
        %7937 = vmatpush1.bf16.xpose.msra.mxu0 0
        %7938 = vmatprep.subr.bf16.mxu0 0
        %7939 = vmatpush1.bf16.xpose.msra.mxu0 0
        %7940 = vmatprep.subr.bf16.mxu0 0
        %7941 = vmatpush1.bf16.xpose.msra.mxu0 0
        %7942 = vmatprep.subr.bf16.mxu0 0
        %7943 = vmatpush1.bf16.xpose.msra.mxu0 0
        %7944 = vmatprep.mubr.bf16.mxu0 0
        %7945 = vmatmul.mubr.bf16.gmra.mrb[0].mxu0 %v7907
        %v7946 = vpop.f32.mrb[0].mxu0
        %v7947 = vadd.f32 0.0, %v7946
        %v7948 = vpop.f32.mrb[0].mxu0
        %v7949 = vpop.f32.mrb[0].mxu0
        %v7950 = vpop.f32.mrb[0].mxu0
        %7951 = vdwg.mxu0
        %v7952 = vsel %vm7018, %v7947, -inf
        %7953 = vmax.xlane.f32.xlu0 %v7952
        %v7954 = vpop.xlane.xlu0 %7953
        %v7955 = vsub.f32 %v7947, %v7954
        %v7956 = vmul.f32 %v7955, 1.442695
        %v7957 = vpow.pop %v7956
        %v7958 = vsel %vm7018, %v7957, 0.0
        %7959 = vadd.xlane.f32.xlu0 %v7958
        %v7960 = vpop.xlane.xlu0 %7959
        %v7961 = vrcp.pop %v7960
        %v7962 = vmul.f32 %v7957, %v7961
        %v7963 = vpack.c.bf16 %v7962, %v7962
        %v7965 = vsel %vm7018, %v7963, 0
        %v7968 = vsel %vm7034, %v7905, 0
        %7970 = vmatprep.subr.bf16.mxu0 0
        %7971 = vmatpush1.bf16.msra.mxu0 %v7968
        %7972 = vmatprep.subr.bf16.mxu0 0
        %7973 = vmatpush1.bf16.msra.mxu0 0
        %7974 = vmatprep.subr.bf16.mxu0 0
        %7975 = vmatpush1.bf16.msra.mxu0 0
        %7976 = vmatprep.subr.bf16.mxu0 0
        %7977 = vmatpush1.bf16.msra.mxu0 0
        %7978 = vmatprep.subr.bf16.mxu0 0
        %7979 = vmatpush1.bf16.msra.mxu0 0
        %7980 = vmatprep.subr.bf16.mxu0 0
        %7981 = vmatpush1.bf16.msra.mxu0 0
        %7982 = vmatprep.subr.bf16.mxu0 0
        %7983 = vmatpush1.bf16.msra.mxu0 0
        %7984 = vmatprep.subr.bf16.mxu0 0
        %7985 = vmatpush1.bf16.msra.mxu0 0
        %7986 = vmatprep.subr.bf16.mxu0 0
        %7987 = vmatpush1.bf16.msra.mxu0 0
        %7988 = vmatprep.subr.bf16.mxu0 0
        %7989 = vmatpush1.bf16.msra.mxu0 0
        %7990 = vmatprep.subr.bf16.mxu0 0
        %7991 = vmatpush1.bf16.msra.mxu0 0
        %7992 = vmatprep.subr.bf16.mxu0 0
        %7993 = vmatpush1.bf16.msra.mxu0 0
        %7994 = vmatprep.subr.bf16.mxu0 0
        %7995 = vmatpush1.bf16.msra.mxu0 0
        %7996 = vmatprep.subr.bf16.mxu0 0
        %7997 = vmatpush1.bf16.msra.mxu0 0
        %7998 = vmatprep.subr.bf16.mxu0 0
        %7999 = vmatpush1.bf16.msra.mxu0 0
        %8000 = vmatprep.subr.bf16.mxu0 0
        %8001 = vmatpush1.bf16.msra.mxu0 0
        %8002 = vmatprep.mubr.bf16.mxu0 0
        %8003 = vmatmul.mubr.bf16.gmra.mrb[0].mxu0 %v7965
        %v8004 = vpop.f32.mrb[0].mxu0
        %v8005 = vadd.f32 0.0, %v8004
        %v8006 = vpop.f32.mrb[0].mxu0
        %v8007 = vpop.f32.mrb[0].mxu0
        %v8008 = vpop.f32.mrb[0].mxu0
        %8009 = vdwg.mxu0
        %v8011 = vunpack.c.l.b16 %v7903
        %v8012 = vpack.c.b16 %v8011, %v8011
        %8013 = vrot.lane.b32.xlu0 %v8012, 64
        %v8014 = vpop.permute.xlu0 %8013
        %v8016 = vunpack.c.l.b16 %v7904
        %v8017 = vpack.c.b16 %v8016, %v8016
        %8018 = vrot.lane.b32.xlu0 %v8017, 64
        %v8019 = vpop.permute.xlu0 %8018
        %v8021 = vsel %vm6971, %v8014, 0
        %v8024 = vsel %vm6971, %v8019, 0
        %8026 = vmatprep.subr.bf16.mxu0 0
        %8027 = vmatpush1.bf16.xpose.msra.mxu0 %v8024
        %8028 = vmatprep.subr.bf16.mxu0 0
        %8029 = vmatpush1.bf16.xpose.msra.mxu0 0
        %8030 = vmatprep.subr.bf16.mxu0 0
        %8031 = vmatpush1.bf16.xpose.msra.mxu0 0
        %8032 = vmatprep.subr.bf16.mxu0 0
        %8033 = vmatpush1.bf16.xpose.msra.mxu0 0
        %8034 = vmatprep.subr.bf16.mxu0 0
        %8035 = vmatpush1.bf16.xpose.msra.mxu0 0
        %8036 = vmatprep.subr.bf16.mxu0 0
        %8037 = vmatpush1.bf16.xpose.msra.mxu0 0
        %8038 = vmatprep.subr.bf16.mxu0 0
        %8039 = vmatpush1.bf16.xpose.msra.mxu0 0
        %8040 = vmatprep.subr.bf16.mxu0 0
        %8041 = vmatpush1.bf16.xpose.msra.mxu0 0
        %8042 = vmatprep.subr.bf16.mxu0 0
        %8043 = vmatpush1.bf16.xpose.msra.mxu0 0
        %8044 = vmatprep.subr.bf16.mxu0 0
        %8045 = vmatpush1.bf16.xpose.msra.mxu0 0
        %8046 = vmatprep.subr.bf16.mxu0 0
        %8047 = vmatpush1.bf16.xpose.msra.mxu0 0
        %8048 = vmatprep.subr.bf16.mxu0 0
        %8049 = vmatpush1.bf16.xpose.msra.mxu0 0
        %8050 = vmatprep.subr.bf16.mxu0 0
        %8051 = vmatpush1.bf16.xpose.msra.mxu0 0
        %8052 = vmatprep.subr.bf16.mxu0 0
        %8053 = vmatpush1.bf16.xpose.msra.mxu0 0
        %8054 = vmatprep.subr.bf16.mxu0 0
        %8055 = vmatpush1.bf16.xpose.msra.mxu0 0
        %8056 = vmatprep.subr.bf16.mxu0 0
        %8057 = vmatpush1.bf16.xpose.msra.mxu0 0
        %8058 = vmatprep.mubr.bf16.mxu0 0
        %8059 = vmatmul.mubr.bf16.gmra.mrb[0].mxu0 %v8021
        %v8060 = vpop.f32.mrb[0].mxu0
        %v8061 = vadd.f32 0.0, %v8060
        %v8062 = vpop.f32.mrb[0].mxu0
        %v8063 = vpop.f32.mrb[0].mxu0
        %v8064 = vpop.f32.mrb[0].mxu0
        %8065 = vdwg.mxu0
        %v8066 = vsel %vm7018, %v8061, -inf
        %8067 = vmax.xlane.f32.xlu0 %v8066
        %v8068 = vpop.xlane.xlu0 %8067
        %v8069 = vsub.f32 %v8061, %v8068
        %v8070 = vmul.f32 %v8069, 1.442695
        %v8071 = vpow.pop %v8070
        %v8072 = vsel %vm7018, %v8071, 0.0
        %8073 = vadd.xlane.f32.xlu0 %v8072
        %v8074 = vpop.xlane.xlu0 %8073
        %v8075 = vrcp.pop %v8074
        %v8076 = vmul.f32 %v8071, %v8075
        %v8077 = vpack.c.bf16 %v8076, %v8076
        %v8079 = vunpack.c.l.b16 %v7905
        %v8080 = vpack.c.b16 %v8079, %v8079
        %8081 = vrot.lane.b32.xlu0 %v8080, 64
        %v8082 = vpop.permute.xlu0 %8081
        %v8084 = vsel %vm7018, %v8077, 0
        %v8087 = vsel %vm7034, %v8082, 0
        %8089 = vmatprep.subr.bf16.mxu0 0
        %8090 = vmatpush1.bf16.msra.mxu0 %v8087
        %8091 = vmatprep.subr.bf16.mxu0 0
        %8092 = vmatpush1.bf16.msra.mxu0 0
        %8093 = vmatprep.subr.bf16.mxu0 0
        %8094 = vmatpush1.bf16.msra.mxu0 0
        %8095 = vmatprep.subr.bf16.mxu0 0
        %8096 = vmatpush1.bf16.msra.mxu0 0
        %8097 = vmatprep.subr.bf16.mxu0 0
        %8098 = vmatpush1.bf16.msra.mxu0 0
        %8099 = vmatprep.subr.bf16.mxu0 0
        %8100 = vmatpush1.bf16.msra.mxu0 0
        %8101 = vmatprep.subr.bf16.mxu0 0
        %8102 = vmatpush1.bf16.msra.mxu0 0
        %8103 = vmatprep.subr.bf16.mxu0 0
        %8104 = vmatpush1.bf16.msra.mxu0 0
        %8105 = vmatprep.subr.bf16.mxu0 0
        %8106 = vmatpush1.bf16.msra.mxu0 0
        %8107 = vmatprep.subr.bf16.mxu0 0
        %8108 = vmatpush1.bf16.msra.mxu0 0
        %8109 = vmatprep.subr.bf16.mxu0 0
        %8110 = vmatpush1.bf16.msra.mxu0 0
        %8111 = vmatprep.subr.bf16.mxu0 0
        %8112 = vmatpush1.bf16.msra.mxu0 0
        %8113 = vmatprep.subr.bf16.mxu0 0
        %8114 = vmatpush1.bf16.msra.mxu0 0
        %8115 = vmatprep.subr.bf16.mxu0 0
        %8116 = vmatpush1.bf16.msra.mxu0 0
        %8117 = vmatprep.subr.bf16.mxu0 0
        %8118 = vmatpush1.bf16.msra.mxu0 0
        %8119 = vmatprep.subr.bf16.mxu0 0
        %8120 = vmatpush1.bf16.msra.mxu0 0
        %8121 = vmatprep.mubr.bf16.mxu0 0
        %8122 = vmatmul.mubr.bf16.gmra.mrb[0].mxu0 %v8084
        %v8123 = vpop.f32.mrb[0].mxu0
        %v8124 = vadd.f32 0.0, %v8123
        %v8125 = vpop.f32.mrb[0].mxu0
        %v8126 = vpop.f32.mrb[0].mxu0
        %v8127 = vpop.f32.mrb[0].mxu0
        %8128 = vdwg.mxu0
        %8130 = vrot.lane.b32.xlu0 %v8124, 64
        %v8131 = vpop.permute.xlu0 %8130
        %v8133 = vsel %vm6971, %v8005, %v8131
        %v8134 = vpack.c.bf16 %v8133, %v8133
        %8135 = vst [vmem:[#allocation3 + $0x10] sm:$0xf] %v8134
        %v8136 = vld [vmem:[#allocation2 + $0x14] sm:$0xf]
        %v8137 = vld [vmem:[#allocation2 + $0x2c] sm:$0xf]
        %v8138 = vld [vmem:[#allocation2 + $0x44] sm:$0xf]
        %v8140 = vsel %vm6971, %v8136, 0
        %v8143 = vsel %vm6971, %v8137, 0
        %8145 = vmatprep.subr.bf16.mxu0 0
        %8146 = vmatpush1.bf16.xpose.msra.mxu0 %v8143
        %8147 = vmatprep.subr.bf16.mxu0 0
        %8148 = vmatpush1.bf16.xpose.msra.mxu0 0
        %8149 = vmatprep.subr.bf16.mxu0 0
        %8150 = vmatpush1.bf16.xpose.msra.mxu0 0
        %8151 = vmatprep.subr.bf16.mxu0 0
        %8152 = vmatpush1.bf16.xpose.msra.mxu0 0
        %8153 = vmatprep.subr.bf16.mxu0 0
        %8154 = vmatpush1.bf16.xpose.msra.mxu0 0
        %8155 = vmatprep.subr.bf16.mxu0 0
        %8156 = vmatpush1.bf16.xpose.msra.mxu0 0
        %8157 = vmatprep.subr.bf16.mxu0 0
        %8158 = vmatpush1.bf16.xpose.msra.mxu0 0
        %8159 = vmatprep.subr.bf16.mxu0 0
        %8160 = vmatpush1.bf16.xpose.msra.mxu0 0
        %8161 = vmatprep.subr.bf16.mxu0 0
        %8162 = vmatpush1.bf16.xpose.msra.mxu0 0
        %8163 = vmatprep.subr.bf16.mxu0 0
        %8164 = vmatpush1.bf16.xpose.msra.mxu0 0
        %8165 = vmatprep.subr.bf16.mxu0 0
        %8166 = vmatpush1.bf16.xpose.msra.mxu0 0
        %8167 = vmatprep.subr.bf16.mxu0 0
        %8168 = vmatpush1.bf16.xpose.msra.mxu0 0
        %8169 = vmatprep.subr.bf16.mxu0 0
        %8170 = vmatpush1.bf16.xpose.msra.mxu0 0
        %8171 = vmatprep.subr.bf16.mxu0 0
        %8172 = vmatpush1.bf16.xpose.msra.mxu0 0
        %8173 = vmatprep.subr.bf16.mxu0 0
        %8174 = vmatpush1.bf16.xpose.msra.mxu0 0
        %8175 = vmatprep.subr.bf16.mxu0 0
        %8176 = vmatpush1.bf16.xpose.msra.mxu0 0
        %8177 = vmatprep.mubr.bf16.mxu0 0
        %8178 = vmatmul.mubr.bf16.gmra.mrb[0].mxu0 %v8140
        %v8179 = vpop.f32.mrb[0].mxu0
        %v8180 = vadd.f32 0.0, %v8179
        %v8181 = vpop.f32.mrb[0].mxu0
        %v8182 = vpop.f32.mrb[0].mxu0
        %v8183 = vpop.f32.mrb[0].mxu0
        %8184 = vdwg.mxu0
        %v8185 = vsel %vm7018, %v8180, -inf
        %8186 = vmax.xlane.f32.xlu0 %v8185
        %v8187 = vpop.xlane.xlu0 %8186
        %v8188 = vsub.f32 %v8180, %v8187
        %v8189 = vmul.f32 %v8188, 1.442695
        %v8190 = vpow.pop %v8189
        %v8191 = vsel %vm7018, %v8190, 0.0
        %8192 = vadd.xlane.f32.xlu0 %v8191
        %v8193 = vpop.xlane.xlu0 %8192
        %v8194 = vrcp.pop %v8193
        %v8195 = vmul.f32 %v8190, %v8194
        %v8196 = vpack.c.bf16 %v8195, %v8195
        %v8198 = vsel %vm7018, %v8196, 0
        %v8201 = vsel %vm7034, %v8138, 0
        %8203 = vmatprep.subr.bf16.mxu0 0
        %8204 = vmatpush1.bf16.msra.mxu0 %v8201
        %8205 = vmatprep.subr.bf16.mxu0 0
        %8206 = vmatpush1.bf16.msra.mxu0 0
        %8207 = vmatprep.subr.bf16.mxu0 0
        %8208 = vmatpush1.bf16.msra.mxu0 0
        %8209 = vmatprep.subr.bf16.mxu0 0
        %8210 = vmatpush1.bf16.msra.mxu0 0
        %8211 = vmatprep.subr.bf16.mxu0 0
        %8212 = vmatpush1.bf16.msra.mxu0 0
        %8213 = vmatprep.subr.bf16.mxu0 0
        %8214 = vmatpush1.bf16.msra.mxu0 0
        %8215 = vmatprep.subr.bf16.mxu0 0
        %8216 = vmatpush1.bf16.msra.mxu0 0
        %8217 = vmatprep.subr.bf16.mxu0 0
        %8218 = vmatpush1.bf16.msra.mxu0 0
        %8219 = vmatprep.subr.bf16.mxu0 0
        %8220 = vmatpush1.bf16.msra.mxu0 0
        %8221 = vmatprep.subr.bf16.mxu0 0
        %8222 = vmatpush1.bf16.msra.mxu0 0
        %8223 = vmatprep.subr.bf16.mxu0 0
        %8224 = vmatpush1.bf16.msra.mxu0 0
        %8225 = vmatprep.subr.bf16.mxu0 0
        %8226 = vmatpush1.bf16.msra.mxu0 0
        %8227 = vmatprep.subr.bf16.mxu0 0
        %8228 = vmatpush1.bf16.msra.mxu0 0
        %8229 = vmatprep.subr.bf16.mxu0 0
        %8230 = vmatpush1.bf16.msra.mxu0 0
        %8231 = vmatprep.subr.bf16.mxu0 0
        %8232 = vmatpush1.bf16.msra.mxu0 0
        %8233 = vmatprep.subr.bf16.mxu0 0
        %8234 = vmatpush1.bf16.msra.mxu0 0
        %8235 = vmatprep.mubr.bf16.mxu0 0
        %8236 = vmatmul.mubr.bf16.gmra.mrb[0].mxu0 %v8198
        %v8237 = vpop.f32.mrb[0].mxu0
        %v8238 = vadd.f32 0.0, %v8237
        %v8239 = vpop.f32.mrb[0].mxu0
        %v8240 = vpop.f32.mrb[0].mxu0
        %v8241 = vpop.f32.mrb[0].mxu0
        %8242 = vdwg.mxu0
        %v8244 = vunpack.c.l.b16 %v8136
        %v8245 = vpack.c.b16 %v8244, %v8244
        %8246 = vrot.lane.b32.xlu0 %v8245, 64
        %v8247 = vpop.permute.xlu0 %8246
        %v8249 = vunpack.c.l.b16 %v8137
        %v8250 = vpack.c.b16 %v8249, %v8249
        %8251 = vrot.lane.b32.xlu0 %v8250, 64
        %v8252 = vpop.permute.xlu0 %8251
        %v8254 = vsel %vm6971, %v8247, 0
        %v8257 = vsel %vm6971, %v8252, 0
        %8259 = vmatprep.subr.bf16.mxu0 0
        %8260 = vmatpush1.bf16.xpose.msra.mxu0 %v8257
        %8261 = vmatprep.subr.bf16.mxu0 0
        %8262 = vmatpush1.bf16.xpose.msra.mxu0 0
        %8263 = vmatprep.subr.bf16.mxu0 0
        %8264 = vmatpush1.bf16.xpose.msra.mxu0 0
        %8265 = vmatprep.subr.bf16.mxu0 0
        %8266 = vmatpush1.bf16.xpose.msra.mxu0 0
        %8267 = vmatprep.subr.bf16.mxu0 0
        %8268 = vmatpush1.bf16.xpose.msra.mxu0 0
        %8269 = vmatprep.subr.bf16.mxu0 0
        %8270 = vmatpush1.bf16.xpose.msra.mxu0 0
        %8271 = vmatprep.subr.bf16.mxu0 0
        %8272 = vmatpush1.bf16.xpose.msra.mxu0 0
        %8273 = vmatprep.subr.bf16.mxu0 0
        %8274 = vmatpush1.bf16.xpose.msra.mxu0 0
        %8275 = vmatprep.subr.bf16.mxu0 0
        %8276 = vmatpush1.bf16.xpose.msra.mxu0 0
        %8277 = vmatprep.subr.bf16.mxu0 0
        %8278 = vmatpush1.bf16.xpose.msra.mxu0 0
        %8279 = vmatprep.subr.bf16.mxu0 0
        %8280 = vmatpush1.bf16.xpose.msra.mxu0 0
        %8281 = vmatprep.subr.bf16.mxu0 0
        %8282 = vmatpush1.bf16.xpose.msra.mxu0 0
        %8283 = vmatprep.subr.bf16.mxu0 0
        %8284 = vmatpush1.bf16.xpose.msra.mxu0 0
        %8285 = vmatprep.subr.bf16.mxu0 0
        %8286 = vmatpush1.bf16.xpose.msra.mxu0 0
        %8287 = vmatprep.subr.bf16.mxu0 0
        %8288 = vmatpush1.bf16.xpose.msra.mxu0 0
        %8289 = vmatprep.subr.bf16.mxu0 0
        %8290 = vmatpush1.bf16.xpose.msra.mxu0 0
        %8291 = vmatprep.mubr.bf16.mxu0 0
        %8292 = vmatmul.mubr.bf16.gmra.mrb[0].mxu0 %v8254
        %v8293 = vpop.f32.mrb[0].mxu0
        %v8294 = vadd.f32 0.0, %v8293
        %v8295 = vpop.f32.mrb[0].mxu0
        %v8296 = vpop.f32.mrb[0].mxu0
        %v8297 = vpop.f32.mrb[0].mxu0
        %8298 = vdwg.mxu0
        %v8299 = vsel %vm7018, %v8294, -inf
        %8300 = vmax.xlane.f32.xlu0 %v8299
        %v8301 = vpop.xlane.xlu0 %8300
        %v8302 = vsub.f32 %v8294, %v8301
        %v8303 = vmul.f32 %v8302, 1.442695
        %v8304 = vpow.pop %v8303
        %v8305 = vsel %vm7018, %v8304, 0.0
        %8306 = vadd.xlane.f32.xlu0 %v8305
        %v8307 = vpop.xlane.xlu0 %8306
        %v8308 = vrcp.pop %v8307
        %v8309 = vmul.f32 %v8304, %v8308
        %v8310 = vpack.c.bf16 %v8309, %v8309
        %v8312 = vunpack.c.l.b16 %v8138
        %v8313 = vpack.c.b16 %v8312, %v8312
        %8314 = vrot.lane.b32.xlu0 %v8313, 64
        %v8315 = vpop.permute.xlu0 %8314
        %v8317 = vsel %vm7018, %v8310, 0
        %v8320 = vsel %vm7034, %v8315, 0
        %8322 = vmatprep.subr.bf16.mxu0 0
        %8323 = vmatpush1.bf16.msra.mxu0 %v8320
        %8324 = vmatprep.subr.bf16.mxu0 0
        %8325 = vmatpush1.bf16.msra.mxu0 0
        %8326 = vmatprep.subr.bf16.mxu0 0
        %8327 = vmatpush1.bf16.msra.mxu0 0
        %8328 = vmatprep.subr.bf16.mxu0 0
        %8329 = vmatpush1.bf16.msra.mxu0 0
        %8330 = vmatprep.subr.bf16.mxu0 0
        %8331 = vmatpush1.bf16.msra.mxu0 0
        %8332 = vmatprep.subr.bf16.mxu0 0
        %8333 = vmatpush1.bf16.msra.mxu0 0
        %8334 = vmatprep.subr.bf16.mxu0 0
        %8335 = vmatpush1.bf16.msra.mxu0 0
        %8336 = vmatprep.subr.bf16.mxu0 0
        %8337 = vmatpush1.bf16.msra.mxu0 0
        %8338 = vmatprep.subr.bf16.mxu0 0
        %8339 = vmatpush1.bf16.msra.mxu0 0
        %8340 = vmatprep.subr.bf16.mxu0 0
        %8341 = vmatpush1.bf16.msra.mxu0 0
        %8342 = vmatprep.subr.bf16.mxu0 0
        %8343 = vmatpush1.bf16.msra.mxu0 0
        %8344 = vmatprep.subr.bf16.mxu0 0
        %8345 = vmatpush1.bf16.msra.mxu0 0
        %8346 = vmatprep.subr.bf16.mxu0 0
        %8347 = vmatpush1.bf16.msra.mxu0 0
        %8348 = vmatprep.subr.bf16.mxu0 0
        %8349 = vmatpush1.bf16.msra.mxu0 0
        %8350 = vmatprep.subr.bf16.mxu0 0
        %8351 = vmatpush1.bf16.msra.mxu0 0
        %8352 = vmatprep.subr.bf16.mxu0 0
        %8353 = vmatpush1.bf16.msra.mxu0 0
        %8354 = vmatprep.mubr.bf16.mxu0 0
        %8355 = vmatmul.mubr.bf16.gmra.mrb[0].mxu0 %v8317
        %v8356 = vpop.f32.mrb[0].mxu0
        %v8357 = vadd.f32 0.0, %v8356
        %v8358 = vpop.f32.mrb[0].mxu0
        %v8359 = vpop.f32.mrb[0].mxu0
        %v8360 = vpop.f32.mrb[0].mxu0
        %8361 = vdwg.mxu0
        %8363 = vrot.lane.b32.xlu0 %v8357, 64
        %v8364 = vpop.permute.xlu0 %8363
        %v8366 = vsel %vm6971, %v8238, %v8364
        %v8367 = vpack.c.bf16 %v8366, %v8366
        %8368 = vst [vmem:[#allocation3 + $0x14] sm:$0xf] %v8367
        %v8369 = vld [vmem:[#allocation3] sm:$0xff]
        %v8370 = vld [vmem:[#allocation3 + $0x8] sm:$0xff]
        %v8371 = vld [vmem:[#allocation3 + $0x10] sm:$0xff]
        %v8372 = vld [vmem:[#allocation13] sm:$0xff]
        %v8373 = vld [vmem:[#allocation13 + $0x8] sm:$0xff]
        %v8374 = vld [vmem:[#allocation13 + $0x10] sm:$0xff]
        %v8375 = vld [vmem:[#allocation13 + $0x18] sm:$0xff]
        %v8376 = vld [vmem:[#allocation13 + $0x20] sm:$0xff]
        %v8377 = vld [vmem:[#allocation13 + $0x28] sm:$0xff]
        %v8378 = vld [vmem:[#allocation13 + $0x30] sm:$0xff]
        %v8379 = vld [vmem:[#allocation13 + $0x38] sm:$0xff]
        %v8380 = vld [vmem:[#allocation13 + $0x40] sm:$0xff]
        %v8381 = vld [vmem:[#allocation13 + $0x48] sm:$0xff]
        %v8382 = vld [vmem:[#allocation13 + $0x50] sm:$0xff]
        %v8383 = vld [vmem:[#allocation13 + $0x58] sm:$0xff]
        %v8384 = vld [vmem:[#allocation13 + $0x60] sm:$0xff]
        %v8385 = vld [vmem:[#allocation13 + $0x68] sm:$0xff]
        %v8386 = vld [vmem:[#allocation13 + $0x70] sm:$0xff]
        %v8387 = vld [vmem:[#allocation13 + $0x78] sm:$0xff]
        %v8388 = vld [vmem:[#allocation13 + $0x80] sm:$0xff]
        %v8389 = vld [vmem:[#allocation13 + $0x88] sm:$0xff]
        %v8390 = vld [vmem:[#allocation13 + $0x90] sm:$0xff]
        %v8391 = vld [vmem:[#allocation13 + $0x98] sm:$0xff]
        %v8392 = vld [vmem:[#allocation13 + $0xa0] sm:$0xff]
        %v8393 = vld [vmem:[#allocation13 + $0xa8] sm:$0xff]
        %v8394 = vld [vmem:[#allocation13 + $0xb0] sm:$0xff]
        %v8395 = vld [vmem:[#allocation13 + $0xb8] sm:$0xff]
        %v8396 = vld [vmem:[#allocation13 + $0xc0] sm:$0xff]
        %v8397 = vld [vmem:[#allocation13 + $0xc8] sm:$0xff]
        %v8398 = vld [vmem:[#allocation13 + $0xd0] sm:$0xff]
        %v8399 = vld [vmem:[#allocation13 + $0xd8] sm:$0xff]
        %v8400 = vld [vmem:[#allocation13 + $0xe0] sm:$0xff]
        %v8401 = vld [vmem:[#allocation13 + $0xe8] sm:$0xff]
        %v8402 = vld [vmem:[#allocation13 + $0xf0] sm:$0xff]
        %v8403 = vld [vmem:[#allocation13 + $0xf8] sm:$0xff]
        %v8404 = vld [vmem:[#allocation13 + $0x100] sm:$0xff]
        %v8405 = vld [vmem:[#allocation13 + $0x108] sm:$0xff]
        %v8406 = vld [vmem:[#allocation13 + $0x110] sm:$0xff]
        %v8407 = vld [vmem:[#allocation13 + $0x118] sm:$0xff]
        %v8408 = vld [vmem:[#allocation13 + $0x120] sm:$0xff]
        %v8409 = vld [vmem:[#allocation13 + $0x128] sm:$0xff]
        %v8410 = vld [vmem:[#allocation13 + $0x130] sm:$0xff]
        %v8411 = vld [vmem:[#allocation13 + $0x138] sm:$0xff]
        %v8412 = vld [vmem:[#allocation13 + $0x140] sm:$0xff]
        %v8413 = vld [vmem:[#allocation13 + $0x148] sm:$0xff]
        %v8414 = vld [vmem:[#allocation13 + $0x150] sm:$0xff]
        %v8415 = vld [vmem:[#allocation13 + $0x158] sm:$0xff]
        %v8416 = vld [vmem:[#allocation13 + $0x160] sm:$0xff]
        %v8417 = vld [vmem:[#allocation13 + $0x168] sm:$0xff]
        %v8418 = vld [vmem:[#allocation13 + $0x170] sm:$0xff]
        %v8419 = vld [vmem:[#allocation13 + $0x178] sm:$0xff]
        %v8420 = vld [vmem:[#allocation13 + $0x180] sm:$0xff]
        %v8421 = vld [vmem:[#allocation13 + $0x188] sm:$0xff]
        %v8422 = vld [vmem:[#allocation13 + $0x190] sm:$0xff]
        %v8423 = vld [vmem:[#allocation13 + $0x198] sm:$0xff]
        %v8424 = vld [vmem:[#allocation13 + $0x1a0] sm:$0xff]
        %v8425 = vld [vmem:[#allocation13 + $0x1a8] sm:$0xff]
        %v8426 = vld [vmem:[#allocation13 + $0x1b0] sm:$0xff]
        %v8427 = vld [vmem:[#allocation13 + $0x1b8] sm:$0xff]
        %v8428 = vld [vmem:[#allocation13 + $0x1c0] sm:$0xff]
        %v8429 = vld [vmem:[#allocation13 + $0x1c8] sm:$0xff]
        %v8430 = vld [vmem:[#allocation13 + $0x1d0] sm:$0xff]
        %v8431 = vld [vmem:[#allocation13 + $0x1d8] sm:$0xff]
        %v8432 = vld [vmem:[#allocation13 + $0x1e0] sm:$0xff]
        %v8433 = vld [vmem:[#allocation13 + $0x1e8] sm:$0xff]
        %v8434 = vld [vmem:[#allocation13 + $0x1f0] sm:$0xff]
        %v8435 = vld [vmem:[#allocation13 + $0x1f8] sm:$0xff]
        %v8436 = vld [vmem:[#allocation13 + $0x200] sm:$0xff]
        %v8437 = vld [vmem:[#allocation13 + $0x208] sm:$0xff]
        %v8438 = vld [vmem:[#allocation13 + $0x210] sm:$0xff]
        %v8439 = vld [vmem:[#allocation13 + $0x218] sm:$0xff]
        %v8440 = vld [vmem:[#allocation13 + $0x220] sm:$0xff]
        %v8441 = vld [vmem:[#allocation13 + $0x228] sm:$0xff]
        %v8442 = vld [vmem:[#allocation13 + $0x230] sm:$0xff]
        %v8443 = vld [vmem:[#allocation13 + $0x238] sm:$0xff]
        %v8444 = vld [vmem:[#allocation13 + $0x240] sm:$0xff]
        %v8445 = vld [vmem:[#allocation13 + $0x248] sm:$0xff]
        %v8446 = vld [vmem:[#allocation13 + $0x250] sm:$0xff]
        %v8447 = vld [vmem:[#allocation13 + $0x258] sm:$0xff]
        %v8448 = vld [vmem:[#allocation13 + $0x260] sm:$0xff]
        %v8449 = vld [vmem:[#allocation13 + $0x268] sm:$0xff]
        %v8450 = vld [vmem:[#allocation13 + $0x270] sm:$0xff]
        %v8451 = vld [vmem:[#allocation13 + $0x278] sm:$0xff]
        %v8452 = vld [vmem:[#allocation13 + $0x280] sm:$0xff]
        %v8453 = vld [vmem:[#allocation13 + $0x288] sm:$0xff]
        %v8454 = vld [vmem:[#allocation13 + $0x290] sm:$0xff]
        %v8455 = vld [vmem:[#allocation13 + $0x298] sm:$0xff]
        %v8456 = vld [vmem:[#allocation13 + $0x2a0] sm:$0xff]
        %v8457 = vld [vmem:[#allocation13 + $0x2a8] sm:$0xff]
        %v8458 = vld [vmem:[#allocation13 + $0x2b0] sm:$0xff]
        %v8459 = vld [vmem:[#allocation13 + $0x2b8] sm:$0xff]
        %v8460 = vld [vmem:[#allocation13 + $0x2c0] sm:$0xff]
        %v8461 = vld [vmem:[#allocation13 + $0x2c8] sm:$0xff]
        %v8462 = vld [vmem:[#allocation13 + $0x2d0] sm:$0xff]
        %v8463 = vld [vmem:[#allocation13 + $0x2d8] sm:$0xff]
        %v8464 = vld [vmem:[#allocation13 + $0x2e0] sm:$0xff]
        %v8465 = vld [vmem:[#allocation13 + $0x2e8] sm:$0xff]
        %v8466 = vld [vmem:[#allocation13 + $0x2f0] sm:$0xff]
        %v8467 = vld [vmem:[#allocation13 + $0x2f8] sm:$0xff]
        %v8468 = vld [vmem:[#allocation13 + $0x300] sm:$0xff]
        %v8469 = vld [vmem:[#allocation13 + $0x308] sm:$0xff]
        %v8470 = vld [vmem:[#allocation13 + $0x310] sm:$0xff]
        %v8471 = vld [vmem:[#allocation13 + $0x318] sm:$0xff]
        %v8472 = vld [vmem:[#allocation13 + $0x320] sm:$0xff]
        %v8473 = vld [vmem:[#allocation13 + $0x328] sm:$0xff]
        %v8474 = vld [vmem:[#allocation13 + $0x330] sm:$0xff]
        %v8475 = vld [vmem:[#allocation13 + $0x338] sm:$0xff]
        %v8476 = vld [vmem:[#allocation13 + $0x340] sm:$0xff]
        %v8477 = vld [vmem:[#allocation13 + $0x348] sm:$0xff]
        %v8478 = vld [vmem:[#allocation13 + $0x350] sm:$0xff]
        %v8479 = vld [vmem:[#allocation13 + $0x358] sm:$0xff]
        %v8480 = vld [vmem:[#allocation13 + $0x360] sm:$0xff]
        %v8481 = vld [vmem:[#allocation13 + $0x368] sm:$0xff]
        %v8482 = vld [vmem:[#allocation13 + $0x370] sm:$0xff]
        %v8483 = vld [vmem:[#allocation13 + $0x378] sm:$0xff]
        %v8484 = vld [vmem:[#allocation13 + $0x380] sm:$0xff]
        %v8485 = vld [vmem:[#allocation13 + $0x388] sm:$0xff]
        %v8486 = vld [vmem:[#allocation13 + $0x390] sm:$0xff]
        %v8487 = vld [vmem:[#allocation13 + $0x398] sm:$0xff]
        %v8488 = vld [vmem:[#allocation13 + $0x3a0] sm:$0xff]
        %v8489 = vld [vmem:[#allocation13 + $0x3a8] sm:$0xff]
        %v8490 = vld [vmem:[#allocation13 + $0x3b0] sm:$0xff]
        %v8491 = vld [vmem:[#allocation13 + $0x3b8] sm:$0xff]
        %v8492 = vld [vmem:[#allocation13 + $0x3c0] sm:$0xff]
        %v8493 = vld [vmem:[#allocation13 + $0x3c8] sm:$0xff]
        %v8494 = vld [vmem:[#allocation13 + $0x3d0] sm:$0xff]
        %v8495 = vld [vmem:[#allocation13 + $0x3d8] sm:$0xff]
        %v8496 = vld [vmem:[#allocation13 + $0x3e0] sm:$0xff]
        %v8497 = vld [vmem:[#allocation13 + $0x3e8] sm:$0xff]
        %v8498 = vld [vmem:[#allocation13 + $0x3f0] sm:$0xff]
        %v8499 = vld [vmem:[#allocation13 + $0x3f8] sm:$0xff]
        %v8500 = vld [vmem:[#allocation13 + $0x400] sm:$0xff]
        %v8501 = vld [vmem:[#allocation13 + $0x408] sm:$0xff]
        %v8502 = vld [vmem:[#allocation13 + $0x410] sm:$0xff]
        %v8503 = vld [vmem:[#allocation13 + $0x418] sm:$0xff]
        %v8504 = vld [vmem:[#allocation13 + $0x420] sm:$0xff]
        %v8505 = vld [vmem:[#allocation13 + $0x428] sm:$0xff]
        %v8506 = vld [vmem:[#allocation13 + $0x430] sm:$0xff]
        %v8507 = vld [vmem:[#allocation13 + $0x438] sm:$0xff]
        %v8508 = vld [vmem:[#allocation13 + $0x440] sm:$0xff]
        %v8509 = vld [vmem:[#allocation13 + $0x448] sm:$0xff]
        %v8510 = vld [vmem:[#allocation13 + $0x450] sm:$0xff]
        %v8511 = vld [vmem:[#allocation13 + $0x458] sm:$0xff]
        %v8512 = vld [vmem:[#allocation13 + $0x460] sm:$0xff]
        %v8513 = vld [vmem:[#allocation13 + $0x468] sm:$0xff]
        %v8514 = vld [vmem:[#allocation13 + $0x470] sm:$0xff]
        %v8515 = vld [vmem:[#allocation13 + $0x478] sm:$0xff]
        %v8516 = vld [vmem:[#allocation13 + $0x480] sm:$0xff]
        %v8517 = vld [vmem:[#allocation13 + $0x488] sm:$0xff]
        %v8518 = vld [vmem:[#allocation13 + $0x490] sm:$0xff]
        %v8519 = vld [vmem:[#allocation13 + $0x498] sm:$0xff]
        %v8520 = vld [vmem:[#allocation13 + $0x4a0] sm:$0xff]
        %v8521 = vld [vmem:[#allocation13 + $0x4a8] sm:$0xff]
        %v8522 = vld [vmem:[#allocation13 + $0x4b0] sm:$0xff]
        %v8523 = vld [vmem:[#allocation13 + $0x4b8] sm:$0xff]
        %v8524 = vld [vmem:[#allocation13 + $0x4c0] sm:$0xff]
        %v8525 = vld [vmem:[#allocation13 + $0x4c8] sm:$0xff]
        %v8526 = vld [vmem:[#allocation13 + $0x4d0] sm:$0xff]
        %v8527 = vld [vmem:[#allocation13 + $0x4d8] sm:$0xff]
        %v8528 = vld [vmem:[#allocation13 + $0x4e0] sm:$0xff]
        %v8529 = vld [vmem:[#allocation13 + $0x4e8] sm:$0xff]
        %v8530 = vld [vmem:[#allocation13 + $0x4f0] sm:$0xff]
        %v8531 = vld [vmem:[#allocation13 + $0x4f8] sm:$0xff]
        %v8532 = vld [vmem:[#allocation13 + $0x500] sm:$0xff]
        %v8533 = vld [vmem:[#allocation13 + $0x508] sm:$0xff]
        %v8534 = vld [vmem:[#allocation13 + $0x510] sm:$0xff]
        %v8535 = vld [vmem:[#allocation13 + $0x518] sm:$0xff]
        %v8536 = vld [vmem:[#allocation13 + $0x520] sm:$0xff]
        %v8537 = vld [vmem:[#allocation13 + $0x528] sm:$0xff]
        %v8538 = vld [vmem:[#allocation13 + $0x530] sm:$0xff]
        %v8539 = vld [vmem:[#allocation13 + $0x538] sm:$0xff]
        %v8540 = vld [vmem:[#allocation13 + $0x540] sm:$0xff]
        %v8541 = vld [vmem:[#allocation13 + $0x548] sm:$0xff]
        %v8542 = vld [vmem:[#allocation13 + $0x550] sm:$0xff]
        %v8543 = vld [vmem:[#allocation13 + $0x558] sm:$0xff]
        %v8544 = vld [vmem:[#allocation13 + $0x560] sm:$0xff]
        %v8545 = vld [vmem:[#allocation13 + $0x568] sm:$0xff]
        %v8546 = vld [vmem:[#allocation13 + $0x570] sm:$0xff]
        %v8547 = vld [vmem:[#allocation13 + $0x578] sm:$0xff]
        %v8548 = vld [vmem:[#allocation13 + $0x580] sm:$0xff]
        %v8549 = vld [vmem:[#allocation13 + $0x588] sm:$0xff]
        %v8550 = vld [vmem:[#allocation13 + $0x590] sm:$0xff]
        %v8551 = vld [vmem:[#allocation13 + $0x598] sm:$0xff]
        %v8552 = vld [vmem:[#allocation13 + $0x5a0] sm:$0xff]
        %v8553 = vld [vmem:[#allocation13 + $0x5a8] sm:$0xff]
        %v8554 = vld [vmem:[#allocation13 + $0x5b0] sm:$0xff]
        %v8555 = vld [vmem:[#allocation13 + $0x5b8] sm:$0xff]
        %v8556 = vld [vmem:[#allocation13 + $0x5c0] sm:$0xff]
        %v8557 = vld [vmem:[#allocation13 + $0x5c8] sm:$0xff]
        %v8558 = vld [vmem:[#allocation13 + $0x5d0] sm:$0xff]
        %v8559 = vld [vmem:[#allocation13 + $0x5d8] sm:$0xff]
        %v8560 = vld [vmem:[#allocation13 + $0x5e0] sm:$0xff]
        %v8561 = vld [vmem:[#allocation13 + $0x5e8] sm:$0xff]
        %v8562 = vld [vmem:[#allocation13 + $0x5f0] sm:$0xff]
        %v8563 = vld [vmem:[#allocation13 + $0x5f8] sm:$0xff]
        %v8564 = vld [vmem:[#allocation13 + $0x600] sm:$0xff]
        %v8565 = vld [vmem:[#allocation13 + $0x608] sm:$0xff]
        %v8566 = vld [vmem:[#allocation13 + $0x610] sm:$0xff]
        %v8567 = vld [vmem:[#allocation13 + $0x618] sm:$0xff]
        %v8568 = vld [vmem:[#allocation13 + $0x620] sm:$0xff]
        %v8569 = vld [vmem:[#allocation13 + $0x628] sm:$0xff]
        %v8570 = vld [vmem:[#allocation13 + $0x630] sm:$0xff]
        %v8571 = vld [vmem:[#allocation13 + $0x638] sm:$0xff]
        %v8572 = vld [vmem:[#allocation13 + $0x640] sm:$0xff]
        %v8573 = vld [vmem:[#allocation13 + $0x648] sm:$0xff]
        %v8574 = vld [vmem:[#allocation13 + $0x650] sm:$0xff]
        %v8575 = vld [vmem:[#allocation13 + $0x658] sm:$0xff]
        %v8576 = vld [vmem:[#allocation13 + $0x660] sm:$0xff]
        %v8577 = vld [vmem:[#allocation13 + $0x668] sm:$0xff]
        %v8578 = vld [vmem:[#allocation13 + $0x670] sm:$0xff]
        %v8579 = vld [vmem:[#allocation13 + $0x678] sm:$0xff]
        %v8580 = vld [vmem:[#allocation13 + $0x680] sm:$0xff]
        %v8581 = vld [vmem:[#allocation13 + $0x688] sm:$0xff]
        %v8582 = vld [vmem:[#allocation13 + $0x690] sm:$0xff]
        %v8583 = vld [vmem:[#allocation13 + $0x698] sm:$0xff]
        %v8584 = vld [vmem:[#allocation13 + $0x6a0] sm:$0xff]
        %v8585 = vld [vmem:[#allocation13 + $0x6a8] sm:$0xff]
        %v8586 = vld [vmem:[#allocation13 + $0x6b0] sm:$0xff]
        %v8587 = vld [vmem:[#allocation13 + $0x6b8] sm:$0xff]
        %v8588 = vld [vmem:[#allocation13 + $0x6c0] sm:$0xff]
        %v8589 = vld [vmem:[#allocation13 + $0x6c8] sm:$0xff]
        %v8590 = vld [vmem:[#allocation13 + $0x6d0] sm:$0xff]
        %v8591 = vld [vmem:[#allocation13 + $0x6d8] sm:$0xff]
        %v8592 = vld [vmem:[#allocation13 + $0x6e0] sm:$0xff]
        %v8593 = vld [vmem:[#allocation13 + $0x6e8] sm:$0xff]
        %v8594 = vld [vmem:[#allocation13 + $0x6f0] sm:$0xff]
        %v8595 = vld [vmem:[#allocation13 + $0x6f8] sm:$0xff]
        %v8596 = vld [vmem:[#allocation13 + $0x700] sm:$0xff]
        %v8597 = vld [vmem:[#allocation13 + $0x708] sm:$0xff]
        %v8598 = vld [vmem:[#allocation13 + $0x710] sm:$0xff]
        %v8599 = vld [vmem:[#allocation13 + $0x718] sm:$0xff]
        %v8600 = vld [vmem:[#allocation13 + $0x720] sm:$0xff]
        %v8601 = vld [vmem:[#allocation13 + $0x728] sm:$0xff]
        %v8602 = vld [vmem:[#allocation13 + $0x730] sm:$0xff]
        %v8603 = vld [vmem:[#allocation13 + $0x738] sm:$0xff]
        %v8604 = vld [vmem:[#allocation13 + $0x740] sm:$0xff]
        %v8605 = vld [vmem:[#allocation13 + $0x748] sm:$0xff]
        %v8606 = vld [vmem:[#allocation13 + $0x750] sm:$0xff]
        %v8607 = vld [vmem:[#allocation13 + $0x758] sm:$0xff]
        %v8608 = vld [vmem:[#allocation13 + $0x760] sm:$0xff]
        %v8609 = vld [vmem:[#allocation13 + $0x768] sm:$0xff]
        %v8610 = vld [vmem:[#allocation13 + $0x770] sm:$0xff]
        %v8611 = vld [vmem:[#allocation13 + $0x778] sm:$0xff]
        %v8612 = vld [vmem:[#allocation13 + $0x780] sm:$0xff]
        %v8613 = vld [vmem:[#allocation13 + $0x788] sm:$0xff]
        %v8614 = vld [vmem:[#allocation13 + $0x790] sm:$0xff]
        %v8615 = vld [vmem:[#allocation13 + $0x798] sm:$0xff]
        %v8616 = vld [vmem:[#allocation13 + $0x7a0] sm:$0xff]
        %v8617 = vld [vmem:[#allocation13 + $0x7a8] sm:$0xff]
        %v8618 = vld [vmem:[#allocation13 + $0x7b0] sm:$0xff]
        %v8619 = vld [vmem:[#allocation13 + $0x7b8] sm:$0xff]
        %v8620 = vld [vmem:[#allocation13 + $0x7c0] sm:$0xff]
        %v8621 = vld [vmem:[#allocation13 + $0x7c8] sm:$0xff]
        %v8622 = vld [vmem:[#allocation13 + $0x7d0] sm:$0xff]
        %v8623 = vld [vmem:[#allocation13 + $0x7d8] sm:$0xff]
        %v8624 = vld [vmem:[#allocation13 + $0x7e0] sm:$0xff]
        %v8625 = vld [vmem:[#allocation13 + $0x7e8] sm:$0xff]
        %v8626 = vld [vmem:[#allocation13 + $0x7f0] sm:$0xff]
        %v8627 = vld [vmem:[#allocation13 + $0x7f8] sm:$0xff]
        %v8628 = vld [vmem:[#allocation13 + $0x800] sm:$0xff]
        %v8629 = vld [vmem:[#allocation13 + $0x808] sm:$0xff]
        %v8630 = vld [vmem:[#allocation13 + $0x810] sm:$0xff]
        %v8631 = vld [vmem:[#allocation13 + $0x818] sm:$0xff]
        %v8632 = vld [vmem:[#allocation13 + $0x820] sm:$0xff]
        %v8633 = vld [vmem:[#allocation13 + $0x828] sm:$0xff]
        %v8634 = vld [vmem:[#allocation13 + $0x830] sm:$0xff]
        %v8635 = vld [vmem:[#allocation13 + $0x838] sm:$0xff]
        %v8636 = vld [vmem:[#allocation13 + $0x840] sm:$0xff]
        %v8637 = vld [vmem:[#allocation13 + $0x848] sm:$0xff]
        %v8638 = vld [vmem:[#allocation13 + $0x850] sm:$0xff]
        %v8639 = vld [vmem:[#allocation13 + $0x858] sm:$0xff]
        %v8640 = vld [vmem:[#allocation13 + $0x860] sm:$0xff]
        %v8641 = vld [vmem:[#allocation13 + $0x868] sm:$0xff]
        %v8642 = vld [vmem:[#allocation13 + $0x870] sm:$0xff]
        %v8643 = vld [vmem:[#allocation13 + $0x878] sm:$0xff]
        %v8644 = vld [vmem:[#allocation13 + $0x880] sm:$0xff]
        %v8645 = vld [vmem:[#allocation13 + $0x888] sm:$0xff]
        %v8646 = vld [vmem:[#allocation13 + $0x890] sm:$0xff]
        %v8647 = vld [vmem:[#allocation13 + $0x898] sm:$0xff]
        %v8648 = vld [vmem:[#allocation13 + $0x8a0] sm:$0xff]
        %v8649 = vld [vmem:[#allocation13 + $0x8a8] sm:$0xff]
        %v8650 = vld [vmem:[#allocation13 + $0x8b0] sm:$0xff]
        %v8651 = vld [vmem:[#allocation13 + $0x8b8] sm:$0xff]
        %v8652 = vld [vmem:[#allocation13 + $0x8c0] sm:$0xff]
        %v8653 = vld [vmem:[#allocation13 + $0x8c8] sm:$0xff]
        %v8654 = vld [vmem:[#allocation13 + $0x8d0] sm:$0xff]
        %v8655 = vld [vmem:[#allocation13 + $0x8d8] sm:$0xff]
        %v8656 = vld [vmem:[#allocation13 + $0x8e0] sm:$0xff]
        %v8657 = vld [vmem:[#allocation13 + $0x8e8] sm:$0xff]
        %v8658 = vld [vmem:[#allocation13 + $0x8f0] sm:$0xff]
        %v8659 = vld [vmem:[#allocation13 + $0x8f8] sm:$0xff]
        %v8660 = vld [vmem:[#allocation15] sm:$0x3f]
        %v8662 = vlaneseq
        %v8663 = vshrl.u32 %v8662, 7
        %v8664 = vsub.s32 0, %v8663
        %v8665 = vrot.slane %v8660, %v8664
        %v8666 = vlaneseq
        %v8667 = vshrl.u32 %v8666, 7
        %v8668 = vsub.s32 1, %v8667
        %v8669 = vrot.slane %v8660, %v8668
        %v8670 = vlaneseq
        %v8671 = vshrl.u32 %v8670, 7
        %v8672 = vsub.s32 2, %v8671
        %v8673 = vrot.slane %v8660, %v8672
        %v8674 = vlaneseq
        %v8675 = vshrl.u32 %v8674, 7
        %v8676 = vsub.s32 3, %v8675
        %v8677 = vrot.slane %v8660, %v8676
        %v8678 = vlaneseq
        %v8679 = vshrl.u32 %v8678, 7
        %v8680 = vsub.s32 4, %v8679
        %v8681 = vrot.slane %v8660, %v8680
        %v8682 = vlaneseq
        %v8683 = vshrl.u32 %v8682, 7
        %v8684 = vsub.s32 5, %v8683
        %v8685 = vrot.slane %v8660, %v8684
        %v8695 = vunpack.c.l.b16 %v8369
        %v8696 = vunpack.c.h.b16 %v8369
        %v8697 = vunpack.c.l.b16 %v8370
        %v8698 = vunpack.c.h.b16 %v8370
        %v8699 = vunpack.c.l.b16 %v8371
        %v8700 = vunpack.c.h.b16 %v8371
        %v8701 = vpack.c.b16 %v8695, %v8695
        %v8702 = vpack.c.b16 %v8696, %v8696
        %v8703 = vpack.c.b16 %v8697, %v8697
        %v8704 = vpack.c.b16 %v8698, %v8698
        %v8705 = vpack.c.b16 %v8699, %v8699
        %v8706 = vpack.c.b16 %v8700, %v8700
        %v9001 = vunpack.c.l.b16 %v8372
        %v9002 = vunpack.c.h.b16 %v8372
        %v9003 = vunpack.c.l.b16 %v8373
        %v9004 = vunpack.c.h.b16 %v8373
        %v9005 = vunpack.c.l.b16 %v8374
        %v9006 = vunpack.c.h.b16 %v8374
        %v9007 = vunpack.c.l.b16 %v8375
        %v9008 = vunpack.c.h.b16 %v8375
        %v9009 = vunpack.c.l.b16 %v8376
        %v9010 = vunpack.c.h.b16 %v8376
        %v9011 = vunpack.c.l.b16 %v8377
        %v9012 = vunpack.c.h.b16 %v8377
        %v9013 = vunpack.c.l.b16 %v8378
        %v9014 = vunpack.c.h.b16 %v8378
        %v9015 = vunpack.c.l.b16 %v8379
        %v9016 = vunpack.c.h.b16 %v8379
        %v9017 = vunpack.c.l.b16 %v8380
        %v9018 = vunpack.c.h.b16 %v8380
        %v9019 = vunpack.c.l.b16 %v8381
        %v9020 = vunpack.c.h.b16 %v8381
        %v9021 = vunpack.c.l.b16 %v8382
        %v9022 = vunpack.c.h.b16 %v8382
        %v9023 = vunpack.c.l.b16 %v8383
        %v9024 = vunpack.c.h.b16 %v8383
        %v9025 = vunpack.c.l.b16 %v8384
        %v9026 = vunpack.c.h.b16 %v8384
        %v9027 = vunpack.c.l.b16 %v8385
        %v9028 = vunpack.c.h.b16 %v8385
        %v9029 = vunpack.c.l.b16 %v8386
        %v9030 = vunpack.c.h.b16 %v8386
        %v9031 = vunpack.c.l.b16 %v8387
        %v9032 = vunpack.c.h.b16 %v8387
        %v9033 = vunpack.c.l.b16 %v8388
        %v9034 = vunpack.c.h.b16 %v8388
        %v9035 = vunpack.c.l.b16 %v8389
        %v9036 = vunpack.c.h.b16 %v8389
        %v9037 = vunpack.c.l.b16 %v8390
        %v9038 = vunpack.c.h.b16 %v8390
        %v9039 = vunpack.c.l.b16 %v8391
        %v9040 = vunpack.c.h.b16 %v8391
        %v9041 = vunpack.c.l.b16 %v8392
        %v9042 = vunpack.c.h.b16 %v8392
        %v9043 = vunpack.c.l.b16 %v8393
        %v9044 = vunpack.c.h.b16 %v8393
        %v9045 = vunpack.c.l.b16 %v8394
        %v9046 = vunpack.c.h.b16 %v8394
        %v9047 = vunpack.c.l.b16 %v8395
        %v9048 = vunpack.c.h.b16 %v8395
        %v9049 = vunpack.c.l.b16 %v8396
        %v9050 = vunpack.c.h.b16 %v8396
        %v9051 = vunpack.c.l.b16 %v8397
        %v9052 = vunpack.c.h.b16 %v8397
        %v9053 = vunpack.c.l.b16 %v8398
        %v9054 = vunpack.c.h.b16 %v8398
        %v9055 = vunpack.c.l.b16 %v8399
        %v9056 = vunpack.c.h.b16 %v8399
        %v9057 = vunpack.c.l.b16 %v8400
        %v9058 = vunpack.c.h.b16 %v8400
        %v9059 = vunpack.c.l.b16 %v8401
        %v9060 = vunpack.c.h.b16 %v8401
        %v9061 = vunpack.c.l.b16 %v8402
        %v9062 = vunpack.c.h.b16 %v8402
        %v9063 = vunpack.c.l.b16 %v8403
        %v9064 = vunpack.c.h.b16 %v8403
        %v9065 = vunpack.c.l.b16 %v8404
        %v9066 = vunpack.c.h.b16 %v8404
        %v9067 = vunpack.c.l.b16 %v8405
        %v9068 = vunpack.c.h.b16 %v8405
        %v9069 = vunpack.c.l.b16 %v8406
        %v9070 = vunpack.c.h.b16 %v8406
        %v9071 = vunpack.c.l.b16 %v8407
        %v9072 = vunpack.c.h.b16 %v8407
        %v9073 = vunpack.c.l.b16 %v8408
        %v9074 = vunpack.c.h.b16 %v8408
        %v9075 = vunpack.c.l.b16 %v8409
        %v9076 = vunpack.c.h.b16 %v8409
        %v9077 = vunpack.c.l.b16 %v8410
        %v9078 = vunpack.c.h.b16 %v8410
        %v9079 = vunpack.c.l.b16 %v8411
        %v9080 = vunpack.c.h.b16 %v8411
        %v9081 = vunpack.c.l.b16 %v8412
        %v9082 = vunpack.c.h.b16 %v8412
        %v9083 = vunpack.c.l.b16 %v8413
        %v9084 = vunpack.c.h.b16 %v8413
        %v9085 = vunpack.c.l.b16 %v8414
        %v9086 = vunpack.c.h.b16 %v8414
        %v9087 = vunpack.c.l.b16 %v8415
        %v9088 = vunpack.c.h.b16 %v8415
        %v9089 = vunpack.c.l.b16 %v8416
        %v9090 = vunpack.c.h.b16 %v8416
        %v9091 = vunpack.c.l.b16 %v8417
        %v9092 = vunpack.c.h.b16 %v8417
        %v9093 = vunpack.c.l.b16 %v8418
        %v9094 = vunpack.c.h.b16 %v8418
        %v9095 = vunpack.c.l.b16 %v8419
        %v9096 = vunpack.c.h.b16 %v8419
        %v9097 = vunpack.c.l.b16 %v8420
        %v9098 = vunpack.c.h.b16 %v8420
        %v9099 = vunpack.c.l.b16 %v8421
        %v9100 = vunpack.c.h.b16 %v8421
        %v9101 = vunpack.c.l.b16 %v8422
        %v9102 = vunpack.c.h.b16 %v8422
        %v9103 = vunpack.c.l.b16 %v8423
        %v9104 = vunpack.c.h.b16 %v8423
        %v9105 = vunpack.c.l.b16 %v8424
        %v9106 = vunpack.c.h.b16 %v8424
        %v9107 = vunpack.c.l.b16 %v8425
        %v9108 = vunpack.c.h.b16 %v8425
        %v9109 = vunpack.c.l.b16 %v8426
        %v9110 = vunpack.c.h.b16 %v8426
        %v9111 = vunpack.c.l.b16 %v8427
        %v9112 = vunpack.c.h.b16 %v8427
        %v9113 = vunpack.c.l.b16 %v8428
        %v9114 = vunpack.c.h.b16 %v8428
        %v9115 = vunpack.c.l.b16 %v8429
        %v9116 = vunpack.c.h.b16 %v8429
        %v9117 = vunpack.c.l.b16 %v8430
        %v9118 = vunpack.c.h.b16 %v8430
        %v9119 = vunpack.c.l.b16 %v8431
        %v9120 = vunpack.c.h.b16 %v8431
        %v9121 = vunpack.c.l.b16 %v8432
        %v9122 = vunpack.c.h.b16 %v8432
        %v9123 = vunpack.c.l.b16 %v8433
        %v9124 = vunpack.c.h.b16 %v8433
        %v9125 = vunpack.c.l.b16 %v8434
        %v9126 = vunpack.c.h.b16 %v8434
        %v9127 = vunpack.c.l.b16 %v8435
        %v9128 = vunpack.c.h.b16 %v8435
        %v9129 = vunpack.c.l.b16 %v8436
        %v9130 = vunpack.c.h.b16 %v8436
        %v9131 = vunpack.c.l.b16 %v8437
        %v9132 = vunpack.c.h.b16 %v8437
        %v9133 = vunpack.c.l.b16 %v8438
        %v9134 = vunpack.c.h.b16 %v8438
        %v9135 = vunpack.c.l.b16 %v8439
        %v9136 = vunpack.c.h.b16 %v8439
        %v9137 = vunpack.c.l.b16 %v8440
        %v9138 = vunpack.c.h.b16 %v8440
        %v9139 = vunpack.c.l.b16 %v8441
        %v9140 = vunpack.c.h.b16 %v8441
        %v9141 = vunpack.c.l.b16 %v8442
        %v9142 = vunpack.c.h.b16 %v8442
        %v9143 = vunpack.c.l.b16 %v8443
        %v9144 = vunpack.c.h.b16 %v8443
        %v9145 = vunpack.c.l.b16 %v8444
        %v9146 = vunpack.c.h.b16 %v8444
        %v9147 = vunpack.c.l.b16 %v8445
        %v9148 = vunpack.c.h.b16 %v8445
        %v9149 = vunpack.c.l.b16 %v8446
        %v9150 = vunpack.c.h.b16 %v8446
        %v9151 = vunpack.c.l.b16 %v8447
        %v9152 = vunpack.c.h.b16 %v8447
        %v9153 = vunpack.c.l.b16 %v8448
        %v9154 = vunpack.c.h.b16 %v8448
        %v9155 = vunpack.c.l.b16 %v8449
        %v9156 = vunpack.c.h.b16 %v8449
        %v9157 = vunpack.c.l.b16 %v8450
        %v9158 = vunpack.c.h.b16 %v8450
        %v9159 = vunpack.c.l.b16 %v8451
        %v9160 = vunpack.c.h.b16 %v8451
        %v9161 = vunpack.c.l.b16 %v8452
        %v9162 = vunpack.c.h.b16 %v8452
        %v9163 = vunpack.c.l.b16 %v8453
        %v9164 = vunpack.c.h.b16 %v8453
        %v9165 = vunpack.c.l.b16 %v8454
        %v9166 = vunpack.c.h.b16 %v8454
        %v9167 = vunpack.c.l.b16 %v8455
        %v9168 = vunpack.c.h.b16 %v8455
        %v9169 = vunpack.c.l.b16 %v8456
        %v9170 = vunpack.c.h.b16 %v8456
        %v9171 = vunpack.c.l.b16 %v8457
        %v9172 = vunpack.c.h.b16 %v8457
        %v9173 = vunpack.c.l.b16 %v8458
        %v9174 = vunpack.c.h.b16 %v8458
        %v9175 = vunpack.c.l.b16 %v8459
        %v9176 = vunpack.c.h.b16 %v8459
        %v9177 = vunpack.c.l.b16 %v8460
        %v9178 = vunpack.c.h.b16 %v8460
        %v9179 = vunpack.c.l.b16 %v8461
        %v9180 = vunpack.c.h.b16 %v8461
        %v9181 = vunpack.c.l.b16 %v8462
        %v9182 = vunpack.c.h.b16 %v8462
        %v9183 = vunpack.c.l.b16 %v8463
        %v9184 = vunpack.c.h.b16 %v8463
        %v9185 = vunpack.c.l.b16 %v8464
        %v9186 = vunpack.c.h.b16 %v8464
        %v9187 = vunpack.c.l.b16 %v8465
        %v9188 = vunpack.c.h.b16 %v8465
        %v9189 = vunpack.c.l.b16 %v8466
        %v9190 = vunpack.c.h.b16 %v8466
        %v9191 = vunpack.c.l.b16 %v8467
        %v9192 = vunpack.c.h.b16 %v8467
        %v9193 = vunpack.c.l.b16 %v8468
        %v9194 = vunpack.c.h.b16 %v8468
        %v9195 = vunpack.c.l.b16 %v8469
        %v9196 = vunpack.c.h.b16 %v8469
        %v9197 = vunpack.c.l.b16 %v8470
        %v9198 = vunpack.c.h.b16 %v8470
        %v9199 = vunpack.c.l.b16 %v8471
        %v9200 = vunpack.c.h.b16 %v8471
        %v9201 = vunpack.c.l.b16 %v8472
        %v9202 = vunpack.c.h.b16 %v8472
        %v9203 = vunpack.c.l.b16 %v8473
        %v9204 = vunpack.c.h.b16 %v8473
        %v9205 = vunpack.c.l.b16 %v8474
        %v9206 = vunpack.c.h.b16 %v8474
        %v9207 = vunpack.c.l.b16 %v8475
        %v9208 = vunpack.c.h.b16 %v8475
        %v9209 = vunpack.c.l.b16 %v8476
        %v9210 = vunpack.c.h.b16 %v8476
        %v9211 = vunpack.c.l.b16 %v8477
        %v9212 = vunpack.c.h.b16 %v8477
        %v9213 = vunpack.c.l.b16 %v8478
        %v9214 = vunpack.c.h.b16 %v8478
        %v9215 = vunpack.c.l.b16 %v8479
        %v9216 = vunpack.c.h.b16 %v8479
        %v9217 = vunpack.c.l.b16 %v8480
        %v9218 = vunpack.c.h.b16 %v8480
        %v9219 = vunpack.c.l.b16 %v8481
        %v9220 = vunpack.c.h.b16 %v8481
        %v9221 = vunpack.c.l.b16 %v8482
        %v9222 = vunpack.c.h.b16 %v8482
        %v9223 = vunpack.c.l.b16 %v8483
        %v9224 = vunpack.c.h.b16 %v8483
        %v9225 = vunpack.c.l.b16 %v8484
        %v9226 = vunpack.c.h.b16 %v8484
        %v9227 = vunpack.c.l.b16 %v8485
        %v9228 = vunpack.c.h.b16 %v8485
        %v9229 = vunpack.c.l.b16 %v8486
        %v9230 = vunpack.c.h.b16 %v8486
        %v9231 = vunpack.c.l.b16 %v8487
        %v9232 = vunpack.c.h.b16 %v8487
        %v9233 = vunpack.c.l.b16 %v8488
        %v9234 = vunpack.c.h.b16 %v8488
        %v9235 = vunpack.c.l.b16 %v8489
        %v9236 = vunpack.c.h.b16 %v8489
        %v9237 = vunpack.c.l.b16 %v8490
        %v9238 = vunpack.c.h.b16 %v8490
        %v9239 = vunpack.c.l.b16 %v8491
        %v9240 = vunpack.c.h.b16 %v8491
        %v9241 = vunpack.c.l.b16 %v8492
        %v9242 = vunpack.c.h.b16 %v8492
        %v9243 = vunpack.c.l.b16 %v8493
        %v9244 = vunpack.c.h.b16 %v8493
        %v9245 = vunpack.c.l.b16 %v8494
        %v9246 = vunpack.c.h.b16 %v8494
        %v9247 = vunpack.c.l.b16 %v8495
        %v9248 = vunpack.c.h.b16 %v8495
        %v9249 = vunpack.c.l.b16 %v8496
        %v9250 = vunpack.c.h.b16 %v8496
        %v9251 = vunpack.c.l.b16 %v8497
        %v9252 = vunpack.c.h.b16 %v8497
        %v9253 = vunpack.c.l.b16 %v8498
        %v9254 = vunpack.c.h.b16 %v8498
        %v9255 = vunpack.c.l.b16 %v8499
        %v9256 = vunpack.c.h.b16 %v8499
        %v9257 = vunpack.c.l.b16 %v8500
        %v9258 = vunpack.c.h.b16 %v8500
        %v9259 = vunpack.c.l.b16 %v8501
        %v9260 = vunpack.c.h.b16 %v8501
        %v9261 = vunpack.c.l.b16 %v8502
        %v9262 = vunpack.c.h.b16 %v8502
        %v9263 = vunpack.c.l.b16 %v8503
        %v9264 = vunpack.c.h.b16 %v8503
        %v9265 = vunpack.c.l.b16 %v8504
        %v9266 = vunpack.c.h.b16 %v8504
        %v9267 = vunpack.c.l.b16 %v8505
        %v9268 = vunpack.c.h.b16 %v8505
        %v9269 = vunpack.c.l.b16 %v8506
        %v9270 = vunpack.c.h.b16 %v8506
        %v9271 = vunpack.c.l.b16 %v8507
        %v9272 = vunpack.c.h.b16 %v8507
        %v9273 = vunpack.c.l.b16 %v8508
        %v9274 = vunpack.c.h.b16 %v8508
        %v9275 = vunpack.c.l.b16 %v8509
        %v9276 = vunpack.c.h.b16 %v8509
        %v9277 = vunpack.c.l.b16 %v8510
        %v9278 = vunpack.c.h.b16 %v8510
        %v9279 = vunpack.c.l.b16 %v8511
        %v9280 = vunpack.c.h.b16 %v8511
        %v9281 = vunpack.c.l.b16 %v8512
        %v9282 = vunpack.c.h.b16 %v8512
        %v9283 = vunpack.c.l.b16 %v8513
        %v9284 = vunpack.c.h.b16 %v8513
        %v9285 = vunpack.c.l.b16 %v8514
        %v9286 = vunpack.c.h.b16 %v8514
        %v9287 = vunpack.c.l.b16 %v8515
        %v9288 = vunpack.c.h.b16 %v8515
        %v9289 = vunpack.c.l.b16 %v8516
        %v9290 = vunpack.c.h.b16 %v8516
        %v9291 = vunpack.c.l.b16 %v8517
        %v9292 = vunpack.c.h.b16 %v8517
        %v9293 = vunpack.c.l.b16 %v8518
        %v9294 = vunpack.c.h.b16 %v8518
        %v9295 = vunpack.c.l.b16 %v8519
        %v9296 = vunpack.c.h.b16 %v8519
        %v9297 = vunpack.c.l.b16 %v8520
        %v9298 = vunpack.c.h.b16 %v8520
        %v9299 = vunpack.c.l.b16 %v8521
        %v9300 = vunpack.c.h.b16 %v8521
        %v9301 = vunpack.c.l.b16 %v8522
        %v9302 = vunpack.c.h.b16 %v8522
        %v9303 = vunpack.c.l.b16 %v8523
        %v9304 = vunpack.c.h.b16 %v8523
        %v9305 = vunpack.c.l.b16 %v8524
        %v9306 = vunpack.c.h.b16 %v8524
        %v9307 = vunpack.c.l.b16 %v8525
        %v9308 = vunpack.c.h.b16 %v8525
        %v9309 = vunpack.c.l.b16 %v8526
        %v9310 = vunpack.c.h.b16 %v8526
        %v9311 = vunpack.c.l.b16 %v8527
        %v9312 = vunpack.c.h.b16 %v8527
        %v9313 = vunpack.c.l.b16 %v8528
        %v9314 = vunpack.c.h.b16 %v8528
        %v9315 = vunpack.c.l.b16 %v8529
        %v9316 = vunpack.c.h.b16 %v8529
        %v9317 = vunpack.c.l.b16 %v8530
        %v9318 = vunpack.c.h.b16 %v8530
        %v9319 = vunpack.c.l.b16 %v8531
        %v9320 = vunpack.c.h.b16 %v8531
        %v9321 = vunpack.c.l.b16 %v8532
        %v9322 = vunpack.c.h.b16 %v8532
        %v9323 = vunpack.c.l.b16 %v8533
        %v9324 = vunpack.c.h.b16 %v8533
        %v9325 = vunpack.c.l.b16 %v8534
        %v9326 = vunpack.c.h.b16 %v8534
        %v9327 = vunpack.c.l.b16 %v8535
        %v9328 = vunpack.c.h.b16 %v8535
        %v9329 = vunpack.c.l.b16 %v8536
        %v9330 = vunpack.c.h.b16 %v8536
        %v9331 = vunpack.c.l.b16 %v8537
        %v9332 = vunpack.c.h.b16 %v8537
        %v9333 = vunpack.c.l.b16 %v8538
        %v9334 = vunpack.c.h.b16 %v8538
        %v9335 = vunpack.c.l.b16 %v8539
        %v9336 = vunpack.c.h.b16 %v8539
        %v9337 = vunpack.c.l.b16 %v8540
        %v9338 = vunpack.c.h.b16 %v8540
        %v9339 = vunpack.c.l.b16 %v8541
        %v9340 = vunpack.c.h.b16 %v8541
        %v9341 = vunpack.c.l.b16 %v8542
        %v9342 = vunpack.c.h.b16 %v8542
        %v9343 = vunpack.c.l.b16 %v8543
        %v9344 = vunpack.c.h.b16 %v8543
        %v9345 = vunpack.c.l.b16 %v8544
        %v9346 = vunpack.c.h.b16 %v8544
        %v9347 = vunpack.c.l.b16 %v8545
        %v9348 = vunpack.c.h.b16 %v8545
        %v9349 = vunpack.c.l.b16 %v8546
        %v9350 = vunpack.c.h.b16 %v8546
        %v9351 = vunpack.c.l.b16 %v8547
        %v9352 = vunpack.c.h.b16 %v8547
        %v9353 = vunpack.c.l.b16 %v8548
        %v9354 = vunpack.c.h.b16 %v8548
        %v9355 = vunpack.c.l.b16 %v8549
        %v9356 = vunpack.c.h.b16 %v8549
        %v9357 = vunpack.c.l.b16 %v8550
        %v9358 = vunpack.c.h.b16 %v8550
        %v9359 = vunpack.c.l.b16 %v8551
        %v9360 = vunpack.c.h.b16 %v8551
        %v9361 = vunpack.c.l.b16 %v8552
        %v9362 = vunpack.c.h.b16 %v8552
        %v9363 = vunpack.c.l.b16 %v8553
        %v9364 = vunpack.c.h.b16 %v8553
        %v9365 = vunpack.c.l.b16 %v8554
        %v9366 = vunpack.c.h.b16 %v8554
        %v9367 = vunpack.c.l.b16 %v8555
        %v9368 = vunpack.c.h.b16 %v8555
        %v9369 = vunpack.c.l.b16 %v8556
        %v9370 = vunpack.c.h.b16 %v8556
        %v9371 = vunpack.c.l.b16 %v8557
        %v9372 = vunpack.c.h.b16 %v8557
        %v9373 = vunpack.c.l.b16 %v8558
        %v9374 = vunpack.c.h.b16 %v8558
        %v9375 = vunpack.c.l.b16 %v8559
        %v9376 = vunpack.c.h.b16 %v8559
        %v9377 = vunpack.c.l.b16 %v8560
        %v9378 = vunpack.c.h.b16 %v8560
        %v9379 = vunpack.c.l.b16 %v8561
        %v9380 = vunpack.c.h.b16 %v8561
        %v9381 = vunpack.c.l.b16 %v8562
        %v9382 = vunpack.c.h.b16 %v8562
        %v9383 = vunpack.c.l.b16 %v8563
        %v9384 = vunpack.c.h.b16 %v8563
        %v9385 = vunpack.c.l.b16 %v8564
        %v9386 = vunpack.c.h.b16 %v8564
        %v9387 = vunpack.c.l.b16 %v8565
        %v9388 = vunpack.c.h.b16 %v8565
        %v9389 = vunpack.c.l.b16 %v8566
        %v9390 = vunpack.c.h.b16 %v8566
        %v9391 = vunpack.c.l.b16 %v8567
        %v9392 = vunpack.c.h.b16 %v8567
        %v9393 = vunpack.c.l.b16 %v8568
        %v9394 = vunpack.c.h.b16 %v8568
        %v9395 = vunpack.c.l.b16 %v8569
        %v9396 = vunpack.c.h.b16 %v8569
        %v9397 = vunpack.c.l.b16 %v8570
        %v9398 = vunpack.c.h.b16 %v8570
        %v9399 = vunpack.c.l.b16 %v8571
        %v9400 = vunpack.c.h.b16 %v8571
        %v9401 = vunpack.c.l.b16 %v8572
        %v9402 = vunpack.c.h.b16 %v8572
        %v9403 = vunpack.c.l.b16 %v8573
        %v9404 = vunpack.c.h.b16 %v8573
        %v9405 = vunpack.c.l.b16 %v8574
        %v9406 = vunpack.c.h.b16 %v8574
        %v9407 = vunpack.c.l.b16 %v8575
        %v9408 = vunpack.c.h.b16 %v8575
        %v9409 = vunpack.c.l.b16 %v8576
        %v9410 = vunpack.c.h.b16 %v8576
        %v9411 = vunpack.c.l.b16 %v8577
        %v9412 = vunpack.c.h.b16 %v8577
        %v9413 = vunpack.c.l.b16 %v8578
        %v9414 = vunpack.c.h.b16 %v8578
        %v9415 = vunpack.c.l.b16 %v8579
        %v9416 = vunpack.c.h.b16 %v8579
        %v9417 = vunpack.c.l.b16 %v8580
        %v9418 = vunpack.c.h.b16 %v8580
        %v9419 = vunpack.c.l.b16 %v8581
        %v9420 = vunpack.c.h.b16 %v8581
        %v9421 = vunpack.c.l.b16 %v8582
        %v9422 = vunpack.c.h.b16 %v8582
        %v9423 = vunpack.c.l.b16 %v8583
        %v9424 = vunpack.c.h.b16 %v8583
        %v9425 = vunpack.c.l.b16 %v8584
        %v9426 = vunpack.c.h.b16 %v8584
        %v9427 = vunpack.c.l.b16 %v8585
        %v9428 = vunpack.c.h.b16 %v8585
        %v9429 = vunpack.c.l.b16 %v8586
        %v9430 = vunpack.c.h.b16 %v8586
        %v9431 = vunpack.c.l.b16 %v8587
        %v9432 = vunpack.c.h.b16 %v8587
        %v9433 = vunpack.c.l.b16 %v8588
        %v9434 = vunpack.c.h.b16 %v8588
        %v9435 = vunpack.c.l.b16 %v8589
        %v9436 = vunpack.c.h.b16 %v8589
        %v9437 = vunpack.c.l.b16 %v8590
        %v9438 = vunpack.c.h.b16 %v8590
        %v9439 = vunpack.c.l.b16 %v8591
        %v9440 = vunpack.c.h.b16 %v8591
        %v9441 = vunpack.c.l.b16 %v8592
        %v9442 = vunpack.c.h.b16 %v8592
        %v9443 = vunpack.c.l.b16 %v8593
        %v9444 = vunpack.c.h.b16 %v8593
        %v9445 = vunpack.c.l.b16 %v8594
        %v9446 = vunpack.c.h.b16 %v8594
        %v9447 = vunpack.c.l.b16 %v8595
        %v9448 = vunpack.c.h.b16 %v8595
        %v9449 = vunpack.c.l.b16 %v8596
        %v9450 = vunpack.c.h.b16 %v8596
        %v9451 = vunpack.c.l.b16 %v8597
        %v9452 = vunpack.c.h.b16 %v8597
        %v9453 = vunpack.c.l.b16 %v8598
        %v9454 = vunpack.c.h.b16 %v8598
        %v9455 = vunpack.c.l.b16 %v8599
        %v9456 = vunpack.c.h.b16 %v8599
        %v9457 = vunpack.c.l.b16 %v8600
        %v9458 = vunpack.c.h.b16 %v8600
        %v9459 = vunpack.c.l.b16 %v8601
        %v9460 = vunpack.c.h.b16 %v8601
        %v9461 = vunpack.c.l.b16 %v8602
        %v9462 = vunpack.c.h.b16 %v8602
        %v9463 = vunpack.c.l.b16 %v8603
        %v9464 = vunpack.c.h.b16 %v8603
        %v9465 = vunpack.c.l.b16 %v8604
        %v9466 = vunpack.c.h.b16 %v8604
        %v9467 = vunpack.c.l.b16 %v8605
        %v9468 = vunpack.c.h.b16 %v8605
        %v9469 = vunpack.c.l.b16 %v8606
        %v9470 = vunpack.c.h.b16 %v8606
        %v9471 = vunpack.c.l.b16 %v8607
        %v9472 = vunpack.c.h.b16 %v8607
        %v9473 = vunpack.c.l.b16 %v8608
        %v9474 = vunpack.c.h.b16 %v8608
        %v9475 = vunpack.c.l.b16 %v8609
        %v9476 = vunpack.c.h.b16 %v8609
        %v9477 = vunpack.c.l.b16 %v8610
        %v9478 = vunpack.c.h.b16 %v8610
        %v9479 = vunpack.c.l.b16 %v8611
        %v9480 = vunpack.c.h.b16 %v8611
        %v9481 = vunpack.c.l.b16 %v8612
        %v9482 = vunpack.c.h.b16 %v8612
        %v9483 = vunpack.c.l.b16 %v8613
        %v9484 = vunpack.c.h.b16 %v8613
        %v9485 = vunpack.c.l.b16 %v8614
        %v9486 = vunpack.c.h.b16 %v8614
        %v9487 = vunpack.c.l.b16 %v8615
        %v9488 = vunpack.c.h.b16 %v8615
        %v9489 = vunpack.c.l.b16 %v8616
        %v9490 = vunpack.c.h.b16 %v8616
        %v9491 = vunpack.c.l.b16 %v8617
        %v9492 = vunpack.c.h.b16 %v8617
        %v9493 = vunpack.c.l.b16 %v8618
        %v9494 = vunpack.c.h.b16 %v8618
        %v9495 = vunpack.c.l.b16 %v8619
        %v9496 = vunpack.c.h.b16 %v8619
        %v9497 = vunpack.c.l.b16 %v8620
        %v9498 = vunpack.c.h.b16 %v8620
        %v9499 = vunpack.c.l.b16 %v8621
        %v9500 = vunpack.c.h.b16 %v8621
        %v9501 = vunpack.c.l.b16 %v8622
        %v9502 = vunpack.c.h.b16 %v8622
        %v9503 = vunpack.c.l.b16 %v8623
        %v9504 = vunpack.c.h.b16 %v8623
        %v9505 = vunpack.c.l.b16 %v8624
        %v9506 = vunpack.c.h.b16 %v8624
        %v9507 = vunpack.c.l.b16 %v8625
        %v9508 = vunpack.c.h.b16 %v8625
        %v9509 = vunpack.c.l.b16 %v8626
        %v9510 = vunpack.c.h.b16 %v8626
        %v9511 = vunpack.c.l.b16 %v8627
        %v9512 = vunpack.c.h.b16 %v8627
        %v9513 = vunpack.c.l.b16 %v8628
        %v9514 = vunpack.c.h.b16 %v8628
        %v9515 = vunpack.c.l.b16 %v8629
        %v9516 = vunpack.c.h.b16 %v8629
        %v9517 = vunpack.c.l.b16 %v8630
        %v9518 = vunpack.c.h.b16 %v8630
        %v9519 = vunpack.c.l.b16 %v8631
        %v9520 = vunpack.c.h.b16 %v8631
        %v9521 = vunpack.c.l.b16 %v8632
        %v9522 = vunpack.c.h.b16 %v8632
        %v9523 = vunpack.c.l.b16 %v8633
        %v9524 = vunpack.c.h.b16 %v8633
        %v9525 = vunpack.c.l.b16 %v8634
        %v9526 = vunpack.c.h.b16 %v8634
        %v9527 = vunpack.c.l.b16 %v8635
        %v9528 = vunpack.c.h.b16 %v8635
        %v9529 = vunpack.c.l.b16 %v8636
        %v9530 = vunpack.c.h.b16 %v8636
        %v9531 = vunpack.c.l.b16 %v8637
        %v9532 = vunpack.c.h.b16 %v8637
        %v9533 = vunpack.c.l.b16 %v8638
        %v9534 = vunpack.c.h.b16 %v8638
        %v9535 = vunpack.c.l.b16 %v8639
        %v9536 = vunpack.c.h.b16 %v8639
        %v9537 = vunpack.c.l.b16 %v8640
        %v9538 = vunpack.c.h.b16 %v8640
        %v9539 = vunpack.c.l.b16 %v8641
        %v9540 = vunpack.c.h.b16 %v8641
        %v9541 = vunpack.c.l.b16 %v8642
        %v9542 = vunpack.c.h.b16 %v8642
        %v9543 = vunpack.c.l.b16 %v8643
        %v9544 = vunpack.c.h.b16 %v8643
        %v9545 = vunpack.c.l.b16 %v8644
        %v9546 = vunpack.c.h.b16 %v8644
        %v9547 = vunpack.c.l.b16 %v8645
        %v9548 = vunpack.c.h.b16 %v8645
        %v9549 = vunpack.c.l.b16 %v8646
        %v9550 = vunpack.c.h.b16 %v8646
        %v9551 = vunpack.c.l.b16 %v8647
        %v9552 = vunpack.c.h.b16 %v8647
        %v9553 = vunpack.c.l.b16 %v8648
        %v9554 = vunpack.c.h.b16 %v8648
        %v9555 = vunpack.c.l.b16 %v8649
        %v9556 = vunpack.c.h.b16 %v8649
        %v9557 = vunpack.c.l.b16 %v8650
        %v9558 = vunpack.c.h.b16 %v8650
        %v9559 = vunpack.c.l.b16 %v8651
        %v9560 = vunpack.c.h.b16 %v8651
        %v9561 = vunpack.c.l.b16 %v8652
        %v9562 = vunpack.c.h.b16 %v8652
        %v9563 = vunpack.c.l.b16 %v8653
        %v9564 = vunpack.c.h.b16 %v8653
        %v9565 = vunpack.c.l.b16 %v8654
        %v9566 = vunpack.c.h.b16 %v8654
        %v9567 = vunpack.c.l.b16 %v8655
        %v9568 = vunpack.c.h.b16 %v8655
        %v9569 = vunpack.c.l.b16 %v8656
        %v9570 = vunpack.c.h.b16 %v8656
        %v9571 = vunpack.c.l.b16 %v8657
        %v9572 = vunpack.c.h.b16 %v8657
        %v9573 = vunpack.c.l.b16 %v8658
        %v9574 = vunpack.c.h.b16 %v8658
        %v9575 = vunpack.c.l.b16 %v8659
        %v9576 = vunpack.c.h.b16 %v8659
        %v9577 = vpack.c.b16 %v9007, %v9001
        %v9578 = vpack.c.b16 %v9008, %v9002
        %v9579 = vpack.c.b16 %v9009, %v9003
        %v9580 = vpack.c.b16 %v9010, %v9004
        %v9581 = vpack.c.b16 %v9011, %v9005
        %v9582 = vpack.c.b16 %v9012, %v9006
        %v9583 = vpack.c.b16 %v9019, %v9013
        %v9584 = vpack.c.b16 %v9020, %v9014
        %v9585 = vpack.c.b16 %v9021, %v9015
        %v9586 = vpack.c.b16 %v9022, %v9016
        %v9587 = vpack.c.b16 %v9023, %v9017
        %v9588 = vpack.c.b16 %v9024, %v9018
        %v9589 = vpack.c.b16 %v9031, %v9025
        %v9590 = vpack.c.b16 %v9032, %v9026
        %v9591 = vpack.c.b16 %v9033, %v9027
        %v9592 = vpack.c.b16 %v9034, %v9028
        %v9593 = vpack.c.b16 %v9035, %v9029
        %v9594 = vpack.c.b16 %v9036, %v9030
        %v9595 = vpack.c.b16 %v9043, %v9037
        %v9596 = vpack.c.b16 %v9044, %v9038
        %v9597 = vpack.c.b16 %v9045, %v9039
        %v9598 = vpack.c.b16 %v9046, %v9040
        %v9599 = vpack.c.b16 %v9047, %v9041
        %v9600 = vpack.c.b16 %v9048, %v9042
        %v9601 = vpack.c.b16 %v9055, %v9049
        %v9602 = vpack.c.b16 %v9056, %v9050
        %v9603 = vpack.c.b16 %v9057, %v9051
        %v9604 = vpack.c.b16 %v9058, %v9052
        %v9605 = vpack.c.b16 %v9059, %v9053
        %v9606 = vpack.c.b16 %v9060, %v9054
        %v9607 = vpack.c.b16 %v9067, %v9061
        %v9608 = vpack.c.b16 %v9068, %v9062
        %v9609 = vpack.c.b16 %v9069, %v9063
        %v9610 = vpack.c.b16 %v9070, %v9064
        %v9611 = vpack.c.b16 %v9071, %v9065
        %v9612 = vpack.c.b16 %v9072, %v9066
        %v9613 = vpack.c.b16 %v9079, %v9073
        %v9614 = vpack.c.b16 %v9080, %v9074
        %v9615 = vpack.c.b16 %v9081, %v9075
        %v9616 = vpack.c.b16 %v9082, %v9076
        %v9617 = vpack.c.b16 %v9083, %v9077
        %v9618 = vpack.c.b16 %v9084, %v9078
        %v9619 = vpack.c.b16 %v9091, %v9085
        %v9620 = vpack.c.b16 %v9092, %v9086
        %v9621 = vpack.c.b16 %v9093, %v9087
        %v9622 = vpack.c.b16 %v9094, %v9088
        %v9623 = vpack.c.b16 %v9095, %v9089
        %v9624 = vpack.c.b16 %v9096, %v9090
        %v9625 = vpack.c.b16 %v9103, %v9097
        %v9626 = vpack.c.b16 %v9104, %v9098
        %v9627 = vpack.c.b16 %v9105, %v9099
        %v9628 = vpack.c.b16 %v9106, %v9100
        %v9629 = vpack.c.b16 %v9107, %v9101
        %v9630 = vpack.c.b16 %v9108, %v9102
        %v9631 = vpack.c.b16 %v9115, %v9109
        %v9632 = vpack.c.b16 %v9116, %v9110
        %v9633 = vpack.c.b16 %v9117, %v9111
        %v9634 = vpack.c.b16 %v9118, %v9112
        %v9635 = vpack.c.b16 %v9119, %v9113
        %v9636 = vpack.c.b16 %v9120, %v9114
        %v9637 = vpack.c.b16 %v9127, %v9121
        %v9638 = vpack.c.b16 %v9128, %v9122
        %v9639 = vpack.c.b16 %v9129, %v9123
        %v9640 = vpack.c.b16 %v9130, %v9124
        %v9641 = vpack.c.b16 %v9131, %v9125
        %v9642 = vpack.c.b16 %v9132, %v9126
        %v9643 = vpack.c.b16 %v9139, %v9133
        %v9644 = vpack.c.b16 %v9140, %v9134
        %v9645 = vpack.c.b16 %v9141, %v9135
        %v9646 = vpack.c.b16 %v9142, %v9136
        %v9647 = vpack.c.b16 %v9143, %v9137
        %v9648 = vpack.c.b16 %v9144, %v9138
        %v9649 = vpack.c.b16 %v9151, %v9145
        %v9650 = vpack.c.b16 %v9152, %v9146
        %v9651 = vpack.c.b16 %v9153, %v9147
        %v9652 = vpack.c.b16 %v9154, %v9148
        %v9653 = vpack.c.b16 %v9155, %v9149
        %v9654 = vpack.c.b16 %v9156, %v9150
        %v9655 = vpack.c.b16 %v9163, %v9157
        %v9656 = vpack.c.b16 %v9164, %v9158
        %v9657 = vpack.c.b16 %v9165, %v9159
        %v9658 = vpack.c.b16 %v9166, %v9160
        %v9659 = vpack.c.b16 %v9167, %v9161
        %v9660 = vpack.c.b16 %v9168, %v9162
        %v9661 = vpack.c.b16 %v9175, %v9169
        %v9662 = vpack.c.b16 %v9176, %v9170
        %v9663 = vpack.c.b16 %v9177, %v9171
        %v9664 = vpack.c.b16 %v9178, %v9172
        %v9665 = vpack.c.b16 %v9179, %v9173
        %v9666 = vpack.c.b16 %v9180, %v9174
        %v9667 = vpack.c.b16 %v9187, %v9181
        %v9668 = vpack.c.b16 %v9188, %v9182
        %v9669 = vpack.c.b16 %v9189, %v9183
        %v9670 = vpack.c.b16 %v9190, %v9184
        %v9671 = vpack.c.b16 %v9191, %v9185
        %v9672 = vpack.c.b16 %v9192, %v9186
        %v9673 = vpack.c.b16 %v9199, %v9193
        %v9674 = vpack.c.b16 %v9200, %v9194
        %v9675 = vpack.c.b16 %v9201, %v9195
        %v9676 = vpack.c.b16 %v9202, %v9196
        %v9677 = vpack.c.b16 %v9203, %v9197
        %v9678 = vpack.c.b16 %v9204, %v9198
        %v9679 = vpack.c.b16 %v9211, %v9205
        %v9680 = vpack.c.b16 %v9212, %v9206
        %v9681 = vpack.c.b16 %v9213, %v9207
        %v9682 = vpack.c.b16 %v9214, %v9208
        %v9683 = vpack.c.b16 %v9215, %v9209
        %v9684 = vpack.c.b16 %v9216, %v9210
        %v9685 = vpack.c.b16 %v9223, %v9217
        %v9686 = vpack.c.b16 %v9224, %v9218
        %v9687 = vpack.c.b16 %v9225, %v9219
        %v9688 = vpack.c.b16 %v9226, %v9220
        %v9689 = vpack.c.b16 %v9227, %v9221
        %v9690 = vpack.c.b16 %v9228, %v9222
        %v9691 = vpack.c.b16 %v9235, %v9229
        %v9692 = vpack.c.b16 %v9236, %v9230
        %v9693 = vpack.c.b16 %v9237, %v9231
        %v9694 = vpack.c.b16 %v9238, %v9232
        %v9695 = vpack.c.b16 %v9239, %v9233
        %v9696 = vpack.c.b16 %v9240, %v9234
        %v9697 = vpack.c.b16 %v9247, %v9241
        %v9698 = vpack.c.b16 %v9248, %v9242
        %v9699 = vpack.c.b16 %v9249, %v9243
        %v9700 = vpack.c.b16 %v9250, %v9244
        %v9701 = vpack.c.b16 %v9251, %v9245
        %v9702 = vpack.c.b16 %v9252, %v9246
        %v9703 = vpack.c.b16 %v9259, %v9253
        %v9704 = vpack.c.b16 %v9260, %v9254
        %v9705 = vpack.c.b16 %v9261, %v9255
        %v9706 = vpack.c.b16 %v9262, %v9256
        %v9707 = vpack.c.b16 %v9263, %v9257
        %v9708 = vpack.c.b16 %v9264, %v9258
        %v9709 = vpack.c.b16 %v9271, %v9265
        %v9710 = vpack.c.b16 %v9272, %v9266
        %v9711 = vpack.c.b16 %v9273, %v9267
        %v9712 = vpack.c.b16 %v9274, %v9268
        %v9713 = vpack.c.b16 %v9275, %v9269
        %v9714 = vpack.c.b16 %v9276, %v9270
        %v9715 = vpack.c.b16 %v9283, %v9277
        %v9716 = vpack.c.b16 %v9284, %v9278
        %v9717 = vpack.c.b16 %v9285, %v9279
        %v9718 = vpack.c.b16 %v9286, %v9280
        %v9719 = vpack.c.b16 %v9287, %v9281
        %v9720 = vpack.c.b16 %v9288, %v9282
        %v9721 = vpack.c.b16 %v9295, %v9289
        %v9722 = vpack.c.b16 %v9296, %v9290
        %v9723 = vpack.c.b16 %v9297, %v9291
        %v9724 = vpack.c.b16 %v9298, %v9292
        %v9725 = vpack.c.b16 %v9299, %v9293
        %v9726 = vpack.c.b16 %v9300, %v9294
        %v9727 = vpack.c.b16 %v9307, %v9301
        %v9728 = vpack.c.b16 %v9308, %v9302
        %v9729 = vpack.c.b16 %v9309, %v9303
        %v9730 = vpack.c.b16 %v9310, %v9304
        %v9731 = vpack.c.b16 %v9311, %v9305
        %v9732 = vpack.c.b16 %v9312, %v9306
        %v9733 = vpack.c.b16 %v9319, %v9313
        %v9734 = vpack.c.b16 %v9320, %v9314
        %v9735 = vpack.c.b16 %v9321, %v9315
        %v9736 = vpack.c.b16 %v9322, %v9316
        %v9737 = vpack.c.b16 %v9323, %v9317
        %v9738 = vpack.c.b16 %v9324, %v9318
        %v9739 = vpack.c.b16 %v9331, %v9325
        %v9740 = vpack.c.b16 %v9332, %v9326
        %v9741 = vpack.c.b16 %v9333, %v9327
        %v9742 = vpack.c.b16 %v9334, %v9328
        %v9743 = vpack.c.b16 %v9335, %v9329
        %v9744 = vpack.c.b16 %v9336, %v9330
        %v9745 = vpack.c.b16 %v9343, %v9337
        %v9746 = vpack.c.b16 %v9344, %v9338
        %v9747 = vpack.c.b16 %v9345, %v9339
        %v9748 = vpack.c.b16 %v9346, %v9340
        %v9749 = vpack.c.b16 %v9347, %v9341
        %v9750 = vpack.c.b16 %v9348, %v9342
        %v9751 = vpack.c.b16 %v9355, %v9349
        %v9752 = vpack.c.b16 %v9356, %v9350
        %v9753 = vpack.c.b16 %v9357, %v9351
        %v9754 = vpack.c.b16 %v9358, %v9352
        %v9755 = vpack.c.b16 %v9359, %v9353
        %v9756 = vpack.c.b16 %v9360, %v9354
        %v9757 = vpack.c.b16 %v9367, %v9361
        %v9758 = vpack.c.b16 %v9368, %v9362
        %v9759 = vpack.c.b16 %v9369, %v9363
        %v9760 = vpack.c.b16 %v9370, %v9364
        %v9761 = vpack.c.b16 %v9371, %v9365
        %v9762 = vpack.c.b16 %v9372, %v9366
        %v9763 = vpack.c.b16 %v9379, %v9373
        %v9764 = vpack.c.b16 %v9380, %v9374
        %v9765 = vpack.c.b16 %v9381, %v9375
        %v9766 = vpack.c.b16 %v9382, %v9376
        %v9767 = vpack.c.b16 %v9383, %v9377
        %v9768 = vpack.c.b16 %v9384, %v9378
        %v9769 = vpack.c.b16 %v9391, %v9385
        %v9770 = vpack.c.b16 %v9392, %v9386
        %v9771 = vpack.c.b16 %v9393, %v9387
        %v9772 = vpack.c.b16 %v9394, %v9388
        %v9773 = vpack.c.b16 %v9395, %v9389
        %v9774 = vpack.c.b16 %v9396, %v9390
        %v9775 = vpack.c.b16 %v9403, %v9397
        %v9776 = vpack.c.b16 %v9404, %v9398
        %v9777 = vpack.c.b16 %v9405, %v9399
        %v9778 = vpack.c.b16 %v9406, %v9400
        %v9779 = vpack.c.b16 %v9407, %v9401
        %v9780 = vpack.c.b16 %v9408, %v9402
        %v9781 = vpack.c.b16 %v9415, %v9409
        %v9782 = vpack.c.b16 %v9416, %v9410
        %v9783 = vpack.c.b16 %v9417, %v9411
        %v9784 = vpack.c.b16 %v9418, %v9412
        %v9785 = vpack.c.b16 %v9419, %v9413
        %v9786 = vpack.c.b16 %v9420, %v9414
        %v9787 = vpack.c.b16 %v9427, %v9421
        %v9788 = vpack.c.b16 %v9428, %v9422
        %v9789 = vpack.c.b16 %v9429, %v9423
        %v9790 = vpack.c.b16 %v9430, %v9424
        %v9791 = vpack.c.b16 %v9431, %v9425
        %v9792 = vpack.c.b16 %v9432, %v9426
        %v9793 = vpack.c.b16 %v9439, %v9433
        %v9794 = vpack.c.b16 %v9440, %v9434
        %v9795 = vpack.c.b16 %v9441, %v9435
        %v9796 = vpack.c.b16 %v9442, %v9436
        %v9797 = vpack.c.b16 %v9443, %v9437
        %v9798 = vpack.c.b16 %v9444, %v9438
        %v9799 = vpack.c.b16 %v9451, %v9445
        %v9800 = vpack.c.b16 %v9452, %v9446
        %v9801 = vpack.c.b16 %v9453, %v9447
        %v9802 = vpack.c.b16 %v9454, %v9448
        %v9803 = vpack.c.b16 %v9455, %v9449
        %v9804 = vpack.c.b16 %v9456, %v9450
        %v9805 = vpack.c.b16 %v9463, %v9457
        %v9806 = vpack.c.b16 %v9464, %v9458
        %v9807 = vpack.c.b16 %v9465, %v9459
        %v9808 = vpack.c.b16 %v9466, %v9460
        %v9809 = vpack.c.b16 %v9467, %v9461
        %v9810 = vpack.c.b16 %v9468, %v9462
        %v9811 = vpack.c.b16 %v9475, %v9469
        %v9812 = vpack.c.b16 %v9476, %v9470
        %v9813 = vpack.c.b16 %v9477, %v9471
        %v9814 = vpack.c.b16 %v9478, %v9472
        %v9815 = vpack.c.b16 %v9479, %v9473
        %v9816 = vpack.c.b16 %v9480, %v9474
        %v9817 = vpack.c.b16 %v9487, %v9481
        %v9818 = vpack.c.b16 %v9488, %v9482
        %v9819 = vpack.c.b16 %v9489, %v9483
        %v9820 = vpack.c.b16 %v9490, %v9484
        %v9821 = vpack.c.b16 %v9491, %v9485
        %v9822 = vpack.c.b16 %v9492, %v9486
        %v9823 = vpack.c.b16 %v9499, %v9493
        %v9824 = vpack.c.b16 %v9500, %v9494
        %v9825 = vpack.c.b16 %v9501, %v9495
        %v9826 = vpack.c.b16 %v9502, %v9496
        %v9827 = vpack.c.b16 %v9503, %v9497
        %v9828 = vpack.c.b16 %v9504, %v9498
        %v9829 = vpack.c.b16 %v9511, %v9505
        %v9830 = vpack.c.b16 %v9512, %v9506
        %v9831 = vpack.c.b16 %v9513, %v9507
        %v9832 = vpack.c.b16 %v9514, %v9508
        %v9833 = vpack.c.b16 %v9515, %v9509
        %v9834 = vpack.c.b16 %v9516, %v9510
        %v9835 = vpack.c.b16 %v9523, %v9517
        %v9836 = vpack.c.b16 %v9524, %v9518
        %v9837 = vpack.c.b16 %v9525, %v9519
        %v9838 = vpack.c.b16 %v9526, %v9520
        %v9839 = vpack.c.b16 %v9527, %v9521
        %v9840 = vpack.c.b16 %v9528, %v9522
        %v9841 = vpack.c.b16 %v9535, %v9529
        %v9842 = vpack.c.b16 %v9536, %v9530
        %v9843 = vpack.c.b16 %v9537, %v9531
        %v9844 = vpack.c.b16 %v9538, %v9532
        %v9845 = vpack.c.b16 %v9539, %v9533
        %v9846 = vpack.c.b16 %v9540, %v9534
        %v9847 = vpack.c.b16 %v9547, %v9541
        %v9848 = vpack.c.b16 %v9548, %v9542
        %v9849 = vpack.c.b16 %v9549, %v9543
        %v9850 = vpack.c.b16 %v9550, %v9544
        %v9851 = vpack.c.b16 %v9551, %v9545
        %v9852 = vpack.c.b16 %v9552, %v9546
        %v9853 = vpack.c.b16 %v9559, %v9553
        %v9854 = vpack.c.b16 %v9560, %v9554
        %v9855 = vpack.c.b16 %v9561, %v9555
        %v9856 = vpack.c.b16 %v9562, %v9556
        %v9857 = vpack.c.b16 %v9563, %v9557
        %v9858 = vpack.c.b16 %v9564, %v9558
        %v9859 = vpack.c.b16 %v9571, %v9565
        %v9860 = vpack.c.b16 %v9572, %v9566
        %v9861 = vpack.c.b16 %v9573, %v9567
        %v9862 = vpack.c.b16 %v9574, %v9568
        %v9863 = vpack.c.b16 %v9575, %v9569
        %v9864 = vpack.c.b16 %v9576, %v9570
        %10153 = vmatprep.subr.bf16.mxu0 %v9578
        %10154 = vmatpush1.bf16.msra.mxu0 %v9577
        %10155 = vmatprep.subr.bf16.mxu0 %v9584
        %10156 = vmatpush1.bf16.msra.mxu0 %v9583
        %10157 = vmatprep.subr.bf16.mxu0 %v9590
        %10158 = vmatpush1.bf16.msra.mxu0 %v9589
        %10159 = vmatprep.subr.bf16.mxu0 %v9596
        %10160 = vmatpush1.bf16.msra.mxu0 %v9595
        %10161 = vmatprep.subr.bf16.mxu0 %v9602
        %10162 = vmatpush1.bf16.msra.mxu0 %v9601
        %10163 = vmatprep.subr.bf16.mxu0 %v9608
        %10164 = vmatpush1.bf16.msra.mxu0 %v9607
        %10165 = vmatprep.subr.bf16.mxu0 %v9614
        %10166 = vmatpush1.bf16.msra.mxu0 %v9613
        %10167 = vmatprep.subr.bf16.mxu0 %v9620
        %10168 = vmatpush1.bf16.msra.mxu0 %v9619
        %10169 = vmatprep.subr.bf16.mxu0 %v9626
        %10170 = vmatpush1.bf16.msra.mxu0 %v9625
        %10171 = vmatprep.subr.bf16.mxu0 %v9632
        %10172 = vmatpush1.bf16.msra.mxu0 %v9631
        %10173 = vmatprep.subr.bf16.mxu0 %v9638
        %10174 = vmatpush1.bf16.msra.mxu0 %v9637
        %10175 = vmatprep.subr.bf16.mxu0 %v9644
        %10176 = vmatpush1.bf16.msra.mxu0 %v9643
        %10177 = vmatprep.subr.bf16.mxu0 %v9650
        %10178 = vmatpush1.bf16.msra.mxu0 %v9649
        %10179 = vmatprep.subr.bf16.mxu0 %v9656
        %10180 = vmatpush1.bf16.msra.mxu0 %v9655
        %10181 = vmatprep.subr.bf16.mxu0 %v9662
        %10182 = vmatpush1.bf16.msra.mxu0 %v9661
        %10183 = vmatprep.subr.bf16.mxu0 %v9668
        %10184 = vmatpush1.bf16.msra.mxu0 %v9667
        %10185 = vmatprep.mubr.bf16.mxu0 %v8702
        %10186 = vmatmul.mubr.bf16.gmra.mrb[0].mxu0 %v8701
        %v10187 = vpop.f32.mrb[0].mxu0
        %v10188 = vadd.f32 %v8665, %v10187
        %v10189 = vpop.f32.mrb[0].mxu0
        %v10190 = vadd.f32 %v8669, %v10189
        %v10191 = vpop.f32.mrb[0].mxu0
        %v10192 = vpop.f32.mrb[0].mxu0
        %10193 = vdwg.mxu0
        %10194 = vmatprep.subr.bf16.mxu0 %v9674
        %10195 = vmatpush1.bf16.msra.mxu0 %v9673
        %10196 = vmatprep.subr.bf16.mxu0 %v9680
        %10197 = vmatpush1.bf16.msra.mxu0 %v9679
        %10198 = vmatprep.subr.bf16.mxu0 %v9686
        %10199 = vmatpush1.bf16.msra.mxu0 %v9685
        %10200 = vmatprep.subr.bf16.mxu0 %v9692
        %10201 = vmatpush1.bf16.msra.mxu0 %v9691
        %10202 = vmatprep.subr.bf16.mxu0 %v9698
        %10203 = vmatpush1.bf16.msra.mxu0 %v9697
        %10204 = vmatprep.subr.bf16.mxu0 %v9704
        %10205 = vmatpush1.bf16.msra.mxu0 %v9703
        %10206 = vmatprep.subr.bf16.mxu0 %v9710
        %10207 = vmatpush1.bf16.msra.mxu0 %v9709
        %10208 = vmatprep.subr.bf16.mxu0 %v9716
        %10209 = vmatpush1.bf16.msra.mxu0 %v9715
        %10210 = vmatprep.subr.bf16.mxu0 %v9722
        %10211 = vmatpush1.bf16.msra.mxu0 %v9721
        %10212 = vmatprep.subr.bf16.mxu0 %v9728
        %10213 = vmatpush1.bf16.msra.mxu0 %v9727
        %10214 = vmatprep.subr.bf16.mxu0 %v9734
        %10215 = vmatpush1.bf16.msra.mxu0 %v9733
        %10216 = vmatprep.subr.bf16.mxu0 %v9740
        %10217 = vmatpush1.bf16.msra.mxu0 %v9739
        %10218 = vmatprep.subr.bf16.mxu0 %v9746
        %10219 = vmatpush1.bf16.msra.mxu0 %v9745
        %10220 = vmatprep.subr.bf16.mxu0 %v9752
        %10221 = vmatpush1.bf16.msra.mxu0 %v9751
        %10222 = vmatprep.subr.bf16.mxu0 %v9758
        %10223 = vmatpush1.bf16.msra.mxu0 %v9757
        %10224 = vmatprep.subr.bf16.mxu0 %v9764
        %10225 = vmatpush1.bf16.msra.mxu0 %v9763
        %10226 = vmatprep.mubr.bf16.mxu0 %v8704
        %10227 = vmatmul.mubr.bf16.gmra.mrb[0].mxu0 %v8703
        %v10228 = vpop.f32.mrb[0].mxu0
        %v10229 = vadd.f32 %v10188, %v10228
        %v10230 = vpop.f32.mrb[0].mxu0
        %v10231 = vadd.f32 %v10190, %v10230
        %v10232 = vpop.f32.mrb[0].mxu0
        %v10233 = vpop.f32.mrb[0].mxu0
        %10234 = vdwg.mxu0
        %10235 = vmatprep.subr.bf16.mxu0 %v9770
        %10236 = vmatpush1.bf16.msra.mxu0 %v9769
        %10237 = vmatprep.subr.bf16.mxu0 %v9776
        %10238 = vmatpush1.bf16.msra.mxu0 %v9775
        %10239 = vmatprep.subr.bf16.mxu0 %v9782
        %10240 = vmatpush1.bf16.msra.mxu0 %v9781
        %10241 = vmatprep.subr.bf16.mxu0 %v9788
        %10242 = vmatpush1.bf16.msra.mxu0 %v9787
        %10243 = vmatprep.subr.bf16.mxu0 %v9794
        %10244 = vmatpush1.bf16.msra.mxu0 %v9793
        %10245 = vmatprep.subr.bf16.mxu0 %v9800
        %10246 = vmatpush1.bf16.msra.mxu0 %v9799
        %10247 = vmatprep.subr.bf16.mxu0 %v9806
        %10248 = vmatpush1.bf16.msra.mxu0 %v9805
        %10249 = vmatprep.subr.bf16.mxu0 %v9812
        %10250 = vmatpush1.bf16.msra.mxu0 %v9811
        %10251 = vmatprep.subr.bf16.mxu0 %v9818
        %10252 = vmatpush1.bf16.msra.mxu0 %v9817
        %10253 = vmatprep.subr.bf16.mxu0 %v9824
        %10254 = vmatpush1.bf16.msra.mxu0 %v9823
        %10255 = vmatprep.subr.bf16.mxu0 %v9830
        %10256 = vmatpush1.bf16.msra.mxu0 %v9829
        %10257 = vmatprep.subr.bf16.mxu0 %v9836
        %10258 = vmatpush1.bf16.msra.mxu0 %v9835
        %10259 = vmatprep.subr.bf16.mxu0 %v9842
        %10260 = vmatpush1.bf16.msra.mxu0 %v9841
        %10261 = vmatprep.subr.bf16.mxu0 %v9848
        %10262 = vmatpush1.bf16.msra.mxu0 %v9847
        %10263 = vmatprep.subr.bf16.mxu0 %v9854
        %10264 = vmatpush1.bf16.msra.mxu0 %v9853
        %10265 = vmatprep.subr.bf16.mxu0 %v9860
        %10266 = vmatpush1.bf16.msra.mxu0 %v9859
        %10267 = vmatprep.mubr.bf16.mxu0 %v8706
        %10268 = vmatmul.mubr.bf16.gmra.mrb[0].mxu0 %v8705
        %v10269 = vpop.f32.mrb[0].mxu0
        %v10270 = vadd.f32 %v10229, %v10269
        %v10271 = vpop.f32.mrb[0].mxu0
        %v10272 = vadd.f32 %v10231, %v10271
        %v10273 = vpop.f32.mrb[0].mxu0
        %v10274 = vpop.f32.mrb[0].mxu0
        %10275 = vdwg.mxu0
        %10276 = vmatprep.subr.bf16.mxu0 %v9580
        %10277 = vmatpush1.bf16.msra.mxu0 %v9579
        %10278 = vmatprep.subr.bf16.mxu0 %v9586
        %10279 = vmatpush1.bf16.msra.mxu0 %v9585
        %10280 = vmatprep.subr.bf16.mxu0 %v9592
        %10281 = vmatpush1.bf16.msra.mxu0 %v9591
        %10282 = vmatprep.subr.bf16.mxu0 %v9598
        %10283 = vmatpush1.bf16.msra.mxu0 %v9597
        %10284 = vmatprep.subr.bf16.mxu0 %v9604
        %10285 = vmatpush1.bf16.msra.mxu0 %v9603
        %10286 = vmatprep.subr.bf16.mxu0 %v9610
        %10287 = vmatpush1.bf16.msra.mxu0 %v9609
        %10288 = vmatprep.subr.bf16.mxu0 %v9616
        %10289 = vmatpush1.bf16.msra.mxu0 %v9615
        %10290 = vmatprep.subr.bf16.mxu0 %v9622
        %10291 = vmatpush1.bf16.msra.mxu0 %v9621
        %10292 = vmatprep.subr.bf16.mxu0 %v9628
        %10293 = vmatpush1.bf16.msra.mxu0 %v9627
        %10294 = vmatprep.subr.bf16.mxu0 %v9634
        %10295 = vmatpush1.bf16.msra.mxu0 %v9633
        %10296 = vmatprep.subr.bf16.mxu0 %v9640
        %10297 = vmatpush1.bf16.msra.mxu0 %v9639
        %10298 = vmatprep.subr.bf16.mxu0 %v9646
        %10299 = vmatpush1.bf16.msra.mxu0 %v9645
        %10300 = vmatprep.subr.bf16.mxu0 %v9652
        %10301 = vmatpush1.bf16.msra.mxu0 %v9651
        %10302 = vmatprep.subr.bf16.mxu0 %v9658
        %10303 = vmatpush1.bf16.msra.mxu0 %v9657
        %10304 = vmatprep.subr.bf16.mxu0 %v9664
        %10305 = vmatpush1.bf16.msra.mxu0 %v9663
        %10306 = vmatprep.subr.bf16.mxu0 %v9670
        %10307 = vmatpush1.bf16.msra.mxu0 %v9669
        %10308 = vmatprep.mubr.bf16.mxu0 %v8702
        %10309 = vmatmul.mubr.bf16.gmra.mrb[0].mxu0 %v8701
        %v10310 = vpop.f32.mrb[0].mxu0
        %v10311 = vadd.f32 %v8673, %v10310
        %v10312 = vpop.f32.mrb[0].mxu0
        %v10313 = vadd.f32 %v8677, %v10312
        %v10314 = vpop.f32.mrb[0].mxu0
        %v10315 = vpop.f32.mrb[0].mxu0
        %10316 = vdwg.mxu0
        %10317 = vmatprep.subr.bf16.mxu0 %v9676
        %10318 = vmatpush1.bf16.msra.mxu0 %v9675
        %10319 = vmatprep.subr.bf16.mxu0 %v9682
        %10320 = vmatpush1.bf16.msra.mxu0 %v9681
        %10321 = vmatprep.subr.bf16.mxu0 %v9688
        %10322 = vmatpush1.bf16.msra.mxu0 %v9687
        %10323 = vmatprep.subr.bf16.mxu0 %v9694
        %10324 = vmatpush1.bf16.msra.mxu0 %v9693
        %10325 = vmatprep.subr.bf16.mxu0 %v9700
        %10326 = vmatpush1.bf16.msra.mxu0 %v9699
        %10327 = vmatprep.subr.bf16.mxu0 %v9706
        %10328 = vmatpush1.bf16.msra.mxu0 %v9705
        %10329 = vmatprep.subr.bf16.mxu0 %v9712
        %10330 = vmatpush1.bf16.msra.mxu0 %v9711
        %10331 = vmatprep.subr.bf16.mxu0 %v9718
        %10332 = vmatpush1.bf16.msra.mxu0 %v9717
        %10333 = vmatprep.subr.bf16.mxu0 %v9724
        %10334 = vmatpush1.bf16.msra.mxu0 %v9723
        %10335 = vmatprep.subr.bf16.mxu0 %v9730
        %10336 = vmatpush1.bf16.msra.mxu0 %v9729
        %10337 = vmatprep.subr.bf16.mxu0 %v9736
        %10338 = vmatpush1.bf16.msra.mxu0 %v9735
        %10339 = vmatprep.subr.bf16.mxu0 %v9742
        %10340 = vmatpush1.bf16.msra.mxu0 %v9741
        %10341 = vmatprep.subr.bf16.mxu0 %v9748
        %10342 = vmatpush1.bf16.msra.mxu0 %v9747
        %10343 = vmatprep.subr.bf16.mxu0 %v9754
        %10344 = vmatpush1.bf16.msra.mxu0 %v9753
        %10345 = vmatprep.subr.bf16.mxu0 %v9760
        %10346 = vmatpush1.bf16.msra.mxu0 %v9759
        %10347 = vmatprep.subr.bf16.mxu0 %v9766
        %10348 = vmatpush1.bf16.msra.mxu0 %v9765
        %10349 = vmatprep.mubr.bf16.mxu0 %v8704
        %10350 = vmatmul.mubr.bf16.gmra.mrb[0].mxu0 %v8703
        %v10351 = vpop.f32.mrb[0].mxu0
        %v10352 = vadd.f32 %v10311, %v10351
        %v10353 = vpop.f32.mrb[0].mxu0
        %v10354 = vadd.f32 %v10313, %v10353
        %v10355 = vpop.f32.mrb[0].mxu0
        %v10356 = vpop.f32.mrb[0].mxu0
        %10357 = vdwg.mxu0
        %10358 = vmatprep.subr.bf16.mxu0 %v9772
        %10359 = vmatpush1.bf16.msra.mxu0 %v9771
        %10360 = vmatprep.subr.bf16.mxu0 %v9778
        %10361 = vmatpush1.bf16.msra.mxu0 %v9777
        %10362 = vmatprep.subr.bf16.mxu0 %v9784
        %10363 = vmatpush1.bf16.msra.mxu0 %v9783
        %10364 = vmatprep.subr.bf16.mxu0 %v9790
        %10365 = vmatpush1.bf16.msra.mxu0 %v9789
        %10366 = vmatprep.subr.bf16.mxu0 %v9796
        %10367 = vmatpush1.bf16.msra.mxu0 %v9795
        %10368 = vmatprep.subr.bf16.mxu0 %v9802
        %10369 = vmatpush1.bf16.msra.mxu0 %v9801
        %10370 = vmatprep.subr.bf16.mxu0 %v9808
        %10371 = vmatpush1.bf16.msra.mxu0 %v9807
        %10372 = vmatprep.subr.bf16.mxu0 %v9814
        %10373 = vmatpush1.bf16.msra.mxu0 %v9813
        %10374 = vmatprep.subr.bf16.mxu0 %v9820
        %10375 = vmatpush1.bf16.msra.mxu0 %v9819
        %10376 = vmatprep.subr.bf16.mxu0 %v9826
        %10377 = vmatpush1.bf16.msra.mxu0 %v9825
        %10378 = vmatprep.subr.bf16.mxu0 %v9832
        %10379 = vmatpush1.bf16.msra.mxu0 %v9831
        %10380 = vmatprep.subr.bf16.mxu0 %v9838
        %10381 = vmatpush1.bf16.msra.mxu0 %v9837
        %10382 = vmatprep.subr.bf16.mxu0 %v9844
        %10383 = vmatpush1.bf16.msra.mxu0 %v9843
        %10384 = vmatprep.subr.bf16.mxu0 %v9850
        %10385 = vmatpush1.bf16.msra.mxu0 %v9849
        %10386 = vmatprep.subr.bf16.mxu0 %v9856
        %10387 = vmatpush1.bf16.msra.mxu0 %v9855
        %10388 = vmatprep.subr.bf16.mxu0 %v9862
        %10389 = vmatpush1.bf16.msra.mxu0 %v9861
        %10390 = vmatprep.mubr.bf16.mxu0 %v8706
        %10391 = vmatmul.mubr.bf16.gmra.mrb[0].mxu0 %v8705
        %v10392 = vpop.f32.mrb[0].mxu0
        %v10393 = vadd.f32 %v10352, %v10392
        %v10394 = vpop.f32.mrb[0].mxu0
        %v10395 = vadd.f32 %v10354, %v10394
        %v10396 = vpop.f32.mrb[0].mxu0
        %v10397 = vpop.f32.mrb[0].mxu0
        %10398 = vdwg.mxu0
        %10399 = vmatprep.subr.bf16.mxu0 %v9582
        %10400 = vmatpush1.bf16.msra.mxu0 %v9581
        %10401 = vmatprep.subr.bf16.mxu0 %v9588
        %10402 = vmatpush1.bf16.msra.mxu0 %v9587
        %10403 = vmatprep.subr.bf16.mxu0 %v9594
        %10404 = vmatpush1.bf16.msra.mxu0 %v9593
        %10405 = vmatprep.subr.bf16.mxu0 %v9600
        %10406 = vmatpush1.bf16.msra.mxu0 %v9599
        %10407 = vmatprep.subr.bf16.mxu0 %v9606
        %10408 = vmatpush1.bf16.msra.mxu0 %v9605
        %10409 = vmatprep.subr.bf16.mxu0 %v9612
        %10410 = vmatpush1.bf16.msra.mxu0 %v9611
        %10411 = vmatprep.subr.bf16.mxu0 %v9618
        %10412 = vmatpush1.bf16.msra.mxu0 %v9617
        %10413 = vmatprep.subr.bf16.mxu0 %v9624
        %10414 = vmatpush1.bf16.msra.mxu0 %v9623
        %10415 = vmatprep.subr.bf16.mxu0 %v9630
        %10416 = vmatpush1.bf16.msra.mxu0 %v9629
        %10417 = vmatprep.subr.bf16.mxu0 %v9636
        %10418 = vmatpush1.bf16.msra.mxu0 %v9635
        %10419 = vmatprep.subr.bf16.mxu0 %v9642
        %10420 = vmatpush1.bf16.msra.mxu0 %v9641
        %10421 = vmatprep.subr.bf16.mxu0 %v9648
        %10422 = vmatpush1.bf16.msra.mxu0 %v9647
        %10423 = vmatprep.subr.bf16.mxu0 %v9654
        %10424 = vmatpush1.bf16.msra.mxu0 %v9653
        %10425 = vmatprep.subr.bf16.mxu0 %v9660
        %10426 = vmatpush1.bf16.msra.mxu0 %v9659
        %10427 = vmatprep.subr.bf16.mxu0 %v9666
        %10428 = vmatpush1.bf16.msra.mxu0 %v9665
        %10429 = vmatprep.subr.bf16.mxu0 %v9672
        %10430 = vmatpush1.bf16.msra.mxu0 %v9671
        %10431 = vmatprep.mubr.bf16.mxu0 %v8702
        %10432 = vmatmul.mubr.bf16.gmra.mrb[0].mxu0 %v8701
        %v10433 = vpop.f32.mrb[0].mxu0
        %v10434 = vadd.f32 %v8681, %v10433
        %v10435 = vpop.f32.mrb[0].mxu0
        %v10436 = vadd.f32 %v8685, %v10435
        %v10437 = vpop.f32.mrb[0].mxu0
        %v10438 = vpop.f32.mrb[0].mxu0
        %10439 = vdwg.mxu0
        %10440 = vmatprep.subr.bf16.mxu0 %v9678
        %10441 = vmatpush1.bf16.msra.mxu0 %v9677
        %10442 = vmatprep.subr.bf16.mxu0 %v9684
        %10443 = vmatpush1.bf16.msra.mxu0 %v9683
        %10444 = vmatprep.subr.bf16.mxu0 %v9690
        %10445 = vmatpush1.bf16.msra.mxu0 %v9689
        %10446 = vmatprep.subr.bf16.mxu0 %v9696
        %10447 = vmatpush1.bf16.msra.mxu0 %v9695
        %10448 = vmatprep.subr.bf16.mxu0 %v9702
        %10449 = vmatpush1.bf16.msra.mxu0 %v9701
        %10450 = vmatprep.subr.bf16.mxu0 %v9708
        %10451 = vmatpush1.bf16.msra.mxu0 %v9707
        %10452 = vmatprep.subr.bf16.mxu0 %v9714
        %10453 = vmatpush1.bf16.msra.mxu0 %v9713
        %10454 = vmatprep.subr.bf16.mxu0 %v9720
        %10455 = vmatpush1.bf16.msra.mxu0 %v9719
        %10456 = vmatprep.subr.bf16.mxu0 %v9726
        %10457 = vmatpush1.bf16.msra.mxu0 %v9725
        %10458 = vmatprep.subr.bf16.mxu0 %v9732
        %10459 = vmatpush1.bf16.msra.mxu0 %v9731
        %10460 = vmatprep.subr.bf16.mxu0 %v9738
        %10461 = vmatpush1.bf16.msra.mxu0 %v9737
        %10462 = vmatprep.subr.bf16.mxu0 %v9744
        %10463 = vmatpush1.bf16.msra.mxu0 %v9743
        %10464 = vmatprep.subr.bf16.mxu0 %v9750
        %10465 = vmatpush1.bf16.msra.mxu0 %v9749
        %10466 = vmatprep.subr.bf16.mxu0 %v9756
        %10467 = vmatpush1.bf16.msra.mxu0 %v9755
        %10468 = vmatprep.subr.bf16.mxu0 %v9762
        %10469 = vmatpush1.bf16.msra.mxu0 %v9761
        %10470 = vmatprep.subr.bf16.mxu0 %v9768
        %10471 = vmatpush1.bf16.msra.mxu0 %v9767
        %10472 = vmatprep.mubr.bf16.mxu0 %v8704
        %10473 = vmatmul.mubr.bf16.gmra.mrb[0].mxu0 %v8703
        %v10474 = vpop.f32.mrb[0].mxu0
        %v10475 = vadd.f32 %v10434, %v10474
        %v10476 = vpop.f32.mrb[0].mxu0
        %v10477 = vadd.f32 %v10436, %v10476
        %v10478 = vpop.f32.mrb[0].mxu0
        %v10479 = vpop.f32.mrb[0].mxu0
        %10480 = vdwg.mxu0
        %10481 = vmatprep.subr.bf16.mxu0 %v9774
        %10482 = vmatpush1.bf16.msra.mxu0 %v9773
        %10483 = vmatprep.subr.bf16.mxu0 %v9780
        %10484 = vmatpush1.bf16.msra.mxu0 %v9779
        %10485 = vmatprep.subr.bf16.mxu0 %v9786
        %10486 = vmatpush1.bf16.msra.mxu0 %v9785
        %10487 = vmatprep.subr.bf16.mxu0 %v9792
        %10488 = vmatpush1.bf16.msra.mxu0 %v9791
        %10489 = vmatprep.subr.bf16.mxu0 %v9798
        %10490 = vmatpush1.bf16.msra.mxu0 %v9797
        %10491 = vmatprep.subr.bf16.mxu0 %v9804
        %10492 = vmatpush1.bf16.msra.mxu0 %v9803
        %10493 = vmatprep.subr.bf16.mxu0 %v9810
        %10494 = vmatpush1.bf16.msra.mxu0 %v9809
        %10495 = vmatprep.subr.bf16.mxu0 %v9816
        %10496 = vmatpush1.bf16.msra.mxu0 %v9815
        %10497 = vmatprep.subr.bf16.mxu0 %v9822
        %10498 = vmatpush1.bf16.msra.mxu0 %v9821
        %10499 = vmatprep.subr.bf16.mxu0 %v9828
        %10500 = vmatpush1.bf16.msra.mxu0 %v9827
        %10501 = vmatprep.subr.bf16.mxu0 %v9834
        %10502 = vmatpush1.bf16.msra.mxu0 %v9833
        %10503 = vmatprep.subr.bf16.mxu0 %v9840
        %10504 = vmatpush1.bf16.msra.mxu0 %v9839
        %10505 = vmatprep.subr.bf16.mxu0 %v9846
        %10506 = vmatpush1.bf16.msra.mxu0 %v9845
        %10507 = vmatprep.subr.bf16.mxu0 %v9852
        %10508 = vmatpush1.bf16.msra.mxu0 %v9851
        %10509 = vmatprep.subr.bf16.mxu0 %v9858
        %10510 = vmatpush1.bf16.msra.mxu0 %v9857
        %10511 = vmatprep.subr.bf16.mxu0 %v9864
        %10512 = vmatpush1.bf16.msra.mxu0 %v9863
        %10513 = vmatprep.mubr.bf16.mxu0 %v8706
        %10514 = vmatmul.mubr.bf16.gmra.mrb[0].mxu0 %v8705
        %v10515 = vpop.f32.mrb[0].mxu0
        %v10516 = vadd.f32 %v10475, %v10515
        %v10517 = vpop.f32.mrb[0].mxu0
        %v10518 = vadd.f32 %v10477, %v10517
        %v10519 = vpop.f32.mrb[0].mxu0
        %v10520 = vpop.f32.mrb[0].mxu0
        %10521 = vdwg.mxu0
        %10522 = vst [vmem:[%s373] sm:$0xff] %v10270
        %10523 = vst [vmem:[%s373 + $0x8] sm:$0xff] %v10272
        %10524 = vst [vmem:[%s373 + $0x10] sm:$0xff] %v10393
        %10525 = vst [vmem:[%s373 + $0x18] sm:$0xff] %v10395
        %10526 = vst [vmem:[%s373 + $0x20] sm:$0xff] %v10516
        %10527 = vst [vmem:[%s373 + $0x28] sm:$0xff] %v10518
        %s10528 = sand.u32 %s187, 1
        %s10529 = scalar_lea.sflag [#allocation6], %s10528
        %s10530 = sand.u32 %s187, 1
        %s10531 = smul.addr %s10530, 48
        %s10532 = scalar_lea.vmem [#allocation16], %s10531
        // Predicated region
        $region77: #{tpu_custom_call.1} parent=47 // pred_check
          %p10533 = pneg %p197
        $region78: #{tpu_custom_call.1} parent=47 // pred_check_branch
          %10535 = sbr.rel (%p10533) target = $region80
        $region79: #{tpu_custom_call.1} parent=47 // pred_region
          %s10537 = ssub.s32 768, 768
          %10538 = vsyncadd %s10529, %s10537
          %s10539 = smul.addr %s27, 6
          %s10540 = smul.addr %s10539, 128
          %s10541 = scalar_lea.hbm %s7, %s10540
          %s10543 = sshll.u32 %s10532, 4
          %s10544 = int_to_ptr.vmem [resolvable:$true] %s10543
          %10546 = dma.vmem_to_hbm [thread:$0]  %s10544, 768, %s10541, %s10529
        $region80: #{tpu_custom_call.1} parent=47 // pred_fallthru
          _
      $region48: #{tpu_custom_call.1} parent=5 // pred_fallthru
        _
      %p10547 = scmp.le.s32.totalorder 2, %s22
      // Predicated region
      $region81: #{tpu_custom_call.1} parent=5 // pred_check
        %p10548 = pneg %p10547
      $region82: #{tpu_custom_call.1} parent=5 // pred_check_branch
        %10550 = sbr.rel (%p10548) target = $region84
      $region83: #{tpu_custom_call.1} parent=5 // pred_region
        %s10551 = ssub.s32 %s22, 2
        // Predicated region
        $region85: #{tpu_custom_call.1} parent=83 // pred_check
          %p10552 = pneg %p203
        $region86: #{tpu_custom_call.1} parent=83 // pred_check_branch
          %10554 = sbr.rel (%p10552) target = $region88
        $region87: #{tpu_custom_call.1} parent=83 // pred_region
          %s10555 = sand.u32 %s188, 1
          %s10556 = scalar_lea.sflag [#allocation6], %s10555
          %s10557 = sand.u32 %s188, 1
          %s10558 = smul.addr %s10557, 48
          %s10559 = scalar_lea.vmem [#allocation16], %s10558
          %10560 = dma.done %s10556, 768
        $region88: #{tpu_custom_call.1} parent=83 // pred_fallthru
          _
      $region84: #{tpu_custom_call.1} parent=5 // pred_fallthru
        _
    $region6: #{tpu_custom_call.1} parent=1 // loop_footer
      %s26 = sadd.s32 1, %s22
    $region7: #{tpu_custom_call.1} parent=1 // loop_footer_branch
      %21 = sbr.rel target = $region3
    $region8: #{tpu_custom_call.1} parent=1 // loop_exit
      _
    %10561 = vsyncpa [#allocation5], 1
    %s10562 = scalar_lea.sflag [#allocation5], 1
    %10563 = vsyncpa %s10562, 1
    %10564 = vsyncpa [#allocation8], 1
    %10565 = vsyncpa [#allocation11], 1
    %10566 = vsyncpa [#allocation14], 1
    %10567 = vsyncpa [#allocation6], 1
    %s10568 = scalar_lea.sflag [#allocation6], 1
    %10569 = vsyncpa %s10568, 1

</llo_original>
